<compile_context>
chip_gen: v7x
topology: tpu7x:2x2x1
jax: 0.10.0
libtpu: 0.0.40
codegen_flags: <defaults>
</compile_context>

<pallas_src>
import functools

import jax
import jax.numpy as jnp
import numpy as np
from jax.experimental import pallas as pl
from jax.experimental.pallas import tpu as pltpu

HID = 256        # hidden_size hard-coded to 256 throughout the torch module
NUM_OPT = 5      # 5 candidate answers
LAYER_NUM = 3    # GIN layers
E = 1.0          # self-loop weight

# BatchNorm1d in eval mode with default buffers / affine params: x * 1/sqrt(1+eps)
BN_SCALE = float(1.0 / np.sqrt(1.0 + 1e-5))


def _vmem():
    return pl.BlockSpec(memory_space=pltpu.MemorySpace.VMEM)


def _mcan_layer_norm(x, eps=1e-6):
    # NOTE: this is the MCAN custom LayerNorm(size=256): (x-mean)/(std+eps) with
    # unbiased std (ddof=1) and identity affine params.  It intentionally differs
    # from torch.nn.LayerNorm (which adds eps to the *variance*).
    mean = jnp.mean(x, axis=-1, keepdims=True)
    var = jnp.sum((x - mean) ** 2, axis=-1, keepdims=True) / (x.shape[-1] - 1)
    return (x - mean) * (1.0 / (jnp.sqrt(var) + eps))


# ---------------------------------------------------------------------------
# Single fused kernel: 5 option fusion heads + 3 GIN chain runs + graph losses
# ---------------------------------------------------------------------------
def gcs_forward_kernel(
        # data
        v_ref, q_ref, a_ref, tgt_ref,
        # fusion-head params (BN scales pre-folded into wm / wl at init time)
        wm_ref, bm_ref, wl_ref, bl_ref,
        # GIN chain "qv" params (adj learner shared across layers, MLP per layer)
        qv_we1, qv_be1, qv_we2, qv_be2, qv_w1s, qv_b1s, qv_w2s, qv_b2s,
        # GIN chain "t" params (serves BOTH the q chain and the gt-answer chain)
        t_we1, t_be1, t_we2, t_be2, t_w1s, t_b1s, t_w2s, t_b2s,
        # GIN chain "v" params
        vv_we1, vv_be1, vv_we2, vv_be2, vv_w1s, vv_b1s, vv_w2s, vv_b2s,
        # outputs
        logits_ref, loss_ref,
        *, e, layer_num):
    b = v_ref.shape[0]
    s = BN_SCALE
    bf16 = jnp.bfloat16

    # ---- eval-mode BatchNorms (constant scale) on the GIN-feeding paths ------
    v_bn = v_ref[...] * s                         # [B,256]   BN_image
    q_bn3 = q_ref[...] * s                        # [5,B,256] BN_q per option

    # fusion_QV = fusion_BN(proj_norm(v_bn + q_bn)); the fusion_BN scale is folded
    # into the head weights, so the un-scaled LayerNorm output feeds the head.
    ln3 = _mcan_layer_norm(q_bn3 + v_bn[None, :, :])          # [5,B,256]

    # ---- fusion head: all 5 options as one [5B,256] slab ----------------------
    # cat((a_bn, fqv), -1) @ Wm == a_raw @ (s*Wm[:256]) + ln @ (s*Wm[256:])
    # (both BN scales pre-folded into wm at init); weight read at the dot site.
    a_all = a_ref[...].reshape(NUM_OPT * b, HID)              # tile-preserving reshape
    ln_all = ln3.reshape(NUM_OPT * b, HID)
    h = (jnp.dot(a_all.astype(bf16), wm_ref[0:HID, :],
                 preferred_element_type=jnp.float32)
         + jnp.dot(ln_all.astype(bf16), wm_ref[HID:2 * HID, :],
                   preferred_element_type=jnp.float32)
         + bm_ref[...])
    h = jnp.maximum(h, 0.0)                       # ReLU; final_BN folded into wl

    # final_mlp_linear (256 -> 1): VPU multiply + lane reduce, natural [5B,1] store
    logits_ref[...] = (jnp.sum(h * wl_ref[...], axis=-1, keepdims=True)
                       + bl_ref[...])

    # ---- gather ground-truth answer reps (a_rep[b, ans_targets[b]]) -----------
    tgt = tgt_ref[...]                            # [B,1] int32
    a_gt = jnp.zeros((b, HID), jnp.float32)
    for o in range(NUM_OPT):
        a_gt = a_gt + (tgt == o).astype(jnp.float32) * a_ref[o]
    a_gt = a_gt * s                               # BN_a applied on the gathered answer

    # torch keeps the variables from the LAST option-loop iteration for the GIN
    last = NUM_OPT - 1
    fqv_last = ln3[last] * s                      # fusion_BN for the GIN qv input
    q_bn_last = q_bn3[last]

    # ---- GIN chains -------------------------------------------------------------
    rows = jax.lax.broadcasted_iota(jnp.int32, (b, b), 0)
    cols = jax.lax.broadcasted_iota(jnp.int32, (b, b), 1)
    e_eye = (rows == cols).astype(jnp.float32) * e            # shared by all chains/layers

    def run_chains(x, we1_ref, be1_ref, we2_ref, be2_ref,
                   w1s_ref, b1s_ref, w2s_ref, b2s_ref, num_graphs):
        # x: [num_graphs*B, 256] node features of `num_graphs` independent graphs
        # stacked along rows.  Dense 256x256 matmuls run on the stacked slab
        # (fewer, fatter MXU ops); only Gram/threshold/aggregation is per-graph.
        acc = jnp.zeros_like(x)
        for i in range(layer_num):
            # AdjLearner_intra: h = ReLU(X We1 + b); h = ReLU(h We2 + b)
            hh = jnp.maximum(
                jnp.dot(x.astype(bf16), we1_ref[...],
                        preferred_element_type=jnp.float32) + be1_ref[...], 0.0)
            hh = jnp.maximum(
                jnp.dot(hh.astype(bf16), we2_ref[...],
                        preferred_element_type=jnp.float32) + be2_ref[...], 0.0)
            aggs = []
            for g in range(num_graphs):
                hg = hh[g * b:(g + 1) * b, :].astype(bf16)
                xg = x[g * b:(g + 1) * b, :]
                # adj = h h^T; bf16 operands (adj only feeds the mean threshold)
                adj = jax.lax.dot_general(hg, hg, (((1,), (1,)), ((), ())),
                                          preferred_element_type=jnp.float32)
                # adj_onehot: threshold at the full-matrix mean (strict '>'), + I*e
                adj_b = (adj > jnp.mean(adj)).astype(jnp.float32) + e_eye
                # (adj + I*e) @ X; bf16 operands, f32 accumulation
                aggs.append(jnp.dot(adj_b.astype(bf16), xg.astype(bf16),
                                    preferred_element_type=jnp.float32))
            agg = aggs[0] if num_graphs == 1 else jnp.concatenate(aggs, axis=0)
            # MLP(2, 256, 256, 256): Linear -> ReLU -> Linear
            m = jnp.maximum(
                jnp.dot(agg.astype(bf16), w1s_ref[i],
                        preferred_element_type=jnp.float32) + b1s_ref[i], 0.0)
            x = jnp.dot(m.astype(bf16), w2s_ref[i],
                        preferred_element_type=jnp.float32) + b2s_ref[i]
            acc = acc + x
        return acc / float(layer_num)

    gin_qv = run_chains(fqv_last, qv_we1, qv_be1, qv_we2, qv_be2,
                        qv_w1s, qv_b1s, qv_w2s, qv_b2s, 1)
    gin_v = run_chains(v_bn, vv_we1, vv_be1, vv_we2, vv_be2,
                       vv_w1s, vv_b1s, vv_w2s, vv_b2s, 1)
    # Q chain and gt-answer chain share every t-parameter: run them merged [2B,256]
    gin_qa = run_chains(jnp.concatenate([q_bn_last, a_gt], axis=0),
                        t_we1, t_be1, t_we2, t_be2,
                        t_w1s, t_b1s, t_w2s, t_b2s, 2)
    gin_q = gin_qa[0:b, :]
    gin_a = gin_qa[b:2 * b, :]

    # ---- MSE graph losses (epilogue, while results are still in VMEM) ----------
    loss_ref[0] = jnp.mean((gin_qv - gin_a) ** 2)
    loss_ref[1] = jnp.mean((gin_q - gin_a) ** 2)
    loss_ref[2] = jnp.mean((gin_v - gin_a) ** 2)


# ---------------------------------------------------------------------------
# deterministic parameter construction (PyTorch-style uniform fan-in init)
# matmul weights stored in bf16 (MXU-native, halves HBM traffic); biases f32.
# ---------------------------------------------------------------------------
def _linear(key, fan_in, fan_out):
    k1, k2 = jax.random.split(key)
    bound = 1.0 / np.sqrt(fan_in)
    w = jax.random.uniform(k1, (fan_in, fan_out), jnp.float32, -bound, bound)
    b = jax.random.uniform(k2, (1, fan_out), jnp.float32, -bound, bound)
    return w, b


def _gin_chain_params(key):
    keys = jax.random.split(key, 2 + 2 * LAYER_NUM)
    we1, be1 = _linear(keys[0], HID, HID)
    we2, be2 = _linear(keys[1], HID, HID)
    w1s, b1s, w2s, b2s = [], [], [], []
    for i in range(LAYER_NUM):
        w1, b1 = _linear(keys[2 + 2 * i], HID, HID)
        w2, b2 = _linear(keys[3 + 2 * i], HID, HID)
        w1s.append(w1); b1s.append(b1); w2s.append(w2); b2s.append(b2)
    return dict(we1=we1.astype(jnp.bfloat16), be1=be1,
                we2=we2.astype(jnp.bfloat16), be2=be2,
                w1s=jnp.stack(w1s).astype(jnp.bfloat16), b1s=jnp.stack(b1s),
                w2s=jnp.stack(w2s).astype(jnp.bfloat16), b2s=jnp.stack(b2s))


def init_params(key):
    k_head, k_lin, k_qv, k_t, k_v = jax.random.split(key, 5)
    wm, bm = _linear(k_head, 2 * HID, HID)          # final_mlp Linear(512, 256)
    wl, bl = _linear(k_lin, HID, 1)                 # final_mlp_linear Linear(256, 1)
    return dict(
        head=dict(
            # BN_a / fusion_BN eval-mode scales folded into the 512->256 weight and
            # the final_BN scale folded into the 256->1 weight (init-time, free).
            wm=(wm * BN_SCALE).astype(jnp.bfloat16),
            bm=bm,
            wl_row=(wl.T * BN_SCALE),               # [1,256] f32 (used on the VPU)
            bl=bl),                                 # [1,1]  f32
        gin_qv=_gin_chain_params(k_qv),             # adj_learner_qv + mlp_qv_list
        gin_t=_gin_chain_params(k_t),               # adj_learner_t  + mlp_t_list
        gin_v=_gin_chain_params(k_v),               # adj_learner_v  + mlp_v_list
    )


# ---------------------------------------------------------------------------
# forward (eval / isTrain=False path)
#   v_rep  : [B, 256]      post-AttFlat image representation (shared across options)
#   q_reps : [5, B, 256]   post-AttFlat query representation per option
#   a_reps : [5, B, 256]   post-AttFlat option representation per option
# ---------------------------------------------------------------------------
def graph_cross_sample_debias_forward(v_rep, q_reps, a_reps, ans_targets, epoch, params):
    b = v_rep.shape[0]
    tgt = ans_targets.astype(jnp.int32).reshape(b, 1)

    head = params["head"]
    chain_args = []
    for name in ("gin_qv", "gin_t", "gin_v"):
        c = params[name]
        chain_args += [c["we1"], c["be1"], c["we2"], c["be2"],
                       c["w1s"], c["b1s"], c["w2s"], c["b2s"]]

    logits_col, losses = pl.pallas_call(
        functools.partial(gcs_forward_kernel, e=E, layer_num=LAYER_NUM),
        out_shape=(
            jax.ShapeDtypeStruct((NUM_OPT * b, 1), jnp.float32),   # logits, natural layout
            jax.ShapeDtypeStruct((3,), jnp.float32),               # the 3 graph losses
        ),
        in_specs=[_vmem()] * (8 + 24),
        out_specs=(_vmem(),
                   pl.BlockSpec(memory_space=pltpu.MemorySpace.SMEM)),
    )(v_rep, q_reps, a_reps, tgt,
      head["wm"], head["bm"], head["wl_row"], head["bl"],
      *chain_args)

    # rows of logits_col are [opt0 b0..b_{B-1}, opt1 ..., ...] -> [B, 5] like torch
    logits = logits_col.reshape(NUM_OPT, b).T
    predict_idx = jnp.argmax(logits, axis=1)                   # torch.max(out, 1)[1]

    loss_graph, loss_graph_q, loss_graph_v = losses[0], losses[1], losses[2]
    margin = jnp.minimum(0.2 + 0.1 * (epoch - 1), 2.0)         # jit-safe (traced epoch OK)
    final_loss = (loss_graph
                  + jnp.maximum(0.0, loss_graph - loss_graph_q + margin)
                  + jnp.maximum(0.0, loss_graph - loss_graph_v + margin))

    return logits, predict_idx, final_loss, (loss_graph, loss_graph_q, loss_graph_v)


if __name__ == "__main__":
    B = 8          # batch size == number of graph nodes in the cross-sample GIN
    epoch = 3

    root = jax.random.PRNGKey(0)
    k_p, k_v, k_q, k_a, k_t = jax.random.split(root, 5)

    params = init_params(k_p)
    v_rep = jax.random.normal(k_v, (B, HID), jnp.float32)
    q_reps = jax.random.normal(k_q, (NUM_OPT, B, HID), jnp.float32)
    a_reps = jax.random.normal(k_a, (NUM_OPT, B, HID), jnp.float32)
    ans_targets = jax.random.randint(k_t, (B,), 0, NUM_OPT)

    fwd = jax.jit(graph_cross_sample_debias_forward)
    out, predict_idx, final_loss, (lg, lq, lv) = fwd(
        v_rep, q_reps, a_reps, ans_targets, epoch, params)

    jax.block_until_ready((out, predict_idx, final_loss, lg, lq, lv))
    print("KERNEL_OK")
</pallas_src>

<mosaic_0001>
module attributes {stable_mosaic.version = 11 : i64} {
  func.func @gcs_forward_kernel(%arg0: memref<8x256xf32, #tpu.memory_space<vmem>>, %arg1: memref<5x8x256xf32, #tpu.memory_space<vmem>>, %arg2: memref<5x8x256xf32, #tpu.memory_space<vmem>>, %arg3: memref<8x1xi32, #tpu.memory_space<vmem>>, %arg4: memref<512x256xbf16, #tpu.memory_space<vmem>>, %arg5: memref<1x256xf32, #tpu.memory_space<vmem>>, %arg6: memref<1x256xf32, #tpu.memory_space<vmem>>, %arg7: memref<1x1xf32, #tpu.memory_space<vmem>>, %arg8: memref<256x256xbf16, #tpu.memory_space<vmem>>, %arg9: memref<1x256xf32, #tpu.memory_space<vmem>>, %arg10: memref<256x256xbf16, #tpu.memory_space<vmem>>, %arg11: memref<1x256xf32, #tpu.memory_space<vmem>>, %arg12: memref<3x256x256xbf16, #tpu.memory_space<vmem>>, %arg13: memref<3x1x256xf32, #tpu.memory_space<vmem>>, %arg14: memref<3x256x256xbf16, #tpu.memory_space<vmem>>, %arg15: memref<3x1x256xf32, #tpu.memory_space<vmem>>, %arg16: memref<256x256xbf16, #tpu.memory_space<vmem>>, %arg17: memref<1x256xf32, #tpu.memory_space<vmem>>, %arg18: memref<256x256xbf16, #tpu.memory_space<vmem>>, %arg19: memref<1x256xf32, #tpu.memory_space<vmem>>, %arg20: memref<3x256x256xbf16, #tpu.memory_space<vmem>>, %arg21: memref<3x1x256xf32, #tpu.memory_space<vmem>>, %arg22: memref<3x256x256xbf16, #tpu.memory_space<vmem>>, %arg23: memref<3x1x256xf32, #tpu.memory_space<vmem>>, %arg24: memref<256x256xbf16, #tpu.memory_space<vmem>>, %arg25: memref<1x256xf32, #tpu.memory_space<vmem>>, %arg26: memref<256x256xbf16, #tpu.memory_space<vmem>>, %arg27: memref<1x256xf32, #tpu.memory_space<vmem>>, %arg28: memref<3x256x256xbf16, #tpu.memory_space<vmem>>, %arg29: memref<3x1x256xf32, #tpu.memory_space<vmem>>, %arg30: memref<3x256x256xbf16, #tpu.memory_space<vmem>>, %arg31: memref<3x1x256xf32, #tpu.memory_space<vmem>>, %arg32: memref<40x1xf32, #tpu.memory_space<vmem>>, %arg33: memref<3xf32, #tpu.memory_space<smem>>) attributes {dimension_semantics = [], scalar_prefetch = 0 : i64, scratch_operands = 0 : i64, tpu.core_type = #tpu.core_type<tc>} {
    %c0 = arith.constant 0 : index
    %c0_0 = arith.constant 0 : index
    %0 = vector.load %arg0[%c0, %c0_0] : memref<8x256xf32, #tpu.memory_space<vmem>>, vector<8x256xf32>
    %cst = arith.constant 0.999994993 : f32
    %1 = vector.broadcast %cst : f32 to vector<8x256xf32>
    %2 = arith.mulf %0, %1 : vector<8x256xf32>
    %c0_1 = arith.constant 0 : index
    %c0_2 = arith.constant 0 : index
    %c0_3 = arith.constant 0 : index
    %3 = vector.load %arg1[%c0_1, %c0_2, %c0_3] : memref<5x8x256xf32, #tpu.memory_space<vmem>>, vector<5x8x256xf32>
    %cst_4 = arith.constant 0.999994993 : f32
    %4 = vector.broadcast %cst_4 : f32 to vector<5x8x256xf32>
    %5 = arith.mulf %3, %4 : vector<5x8x256xf32>
    %6 = vector.shape_cast %2 : vector<8x256xf32> to vector<1x8x256xf32>
    %7 = vector.broadcast %6 : vector<1x8x256xf32> to vector<5x8x256xf32>
    %8 = arith.addf %5, %7 : vector<5x8x256xf32>
    %cst_5 = arith.constant dense<0.000000e+00> : vector<5x8xf32>
    %9 = vector.multi_reduction <add>, %8, %cst_5 [2] : vector<5x8x256xf32> to vector<5x8xf32>
    %10 = vector.shape_cast %9 : vector<5x8xf32> to vector<5x8x1xf32>
    %cst_6 = arith.constant 2.560000e+02 : f32
    %11 = vector.broadcast %cst_6 : f32 to vector<5x8x1xf32>
    %12 = arith.divf %10, %11 : vector<5x8x1xf32>
    %13 = vector.broadcast %12 : vector<5x8x1xf32> to vector<5x8x256xf32>
    %14 = arith.subf %8, %13 : vector<5x8x256xf32>
    %15 = arith.mulf %14, %14 : vector<5x8x256xf32>
    %cst_7 = arith.constant dense<0.000000e+00> : vector<5x8xf32>
    %16 = vector.multi_reduction <add>, %15, %cst_7 [2] : vector<5x8x256xf32> to vector<5x8xf32>
    %17 = vector.shape_cast %16 : vector<5x8xf32> to vector<5x8x1xf32>
    %cst_8 = arith.constant 2.550000e+02 : f32
    %18 = vector.broadcast %cst_8 : f32 to vector<5x8x1xf32>
    %19 = arith.divf %17, %18 : vector<5x8x1xf32>
    %20 = vector.broadcast %12 : vector<5x8x1xf32> to vector<5x8x256xf32>
    %21 = arith.subf %8, %20 : vector<5x8x256xf32>
    %22 = math.sqrt %19 : vector<5x8x1xf32>
    %cst_9 = arith.constant 9.99999997E-7 : f32
    %23 = vector.broadcast %cst_9 : f32 to vector<5x8x1xf32>
    %24 = arith.addf %22, %23 : vector<5x8x1xf32>
    %cst_10 = arith.constant 1.000000e+00 : f32
    %25 = vector.broadcast %cst_10 : f32 to vector<5x8x1xf32>
    %26 = arith.divf %25, %24 : vector<5x8x1xf32>
    %27 = vector.broadcast %26 : vector<5x8x1xf32> to vector<5x8x256xf32>
    %28 = arith.mulf %21, %27 : vector<5x8x256xf32>
    %c0_11 = arith.constant 0 : index
    %c0_12 = arith.constant 0 : index
    %c0_13 = arith.constant 0 : index
    %29 = vector.load %arg2[%c0_11, %c0_12, %c0_13] : memref<5x8x256xf32, #tpu.memory_space<vmem>>, vector<5x8x256xf32>
    %30 = vector.shape_cast %29 : vector<5x8x256xf32> to vector<40x256xf32>
    %31 = vector.shape_cast %28 : vector<5x8x256xf32> to vector<40x256xf32>
    %32 = arith.truncf %30 : vector<40x256xf32> to vector<40x256xbf16>
    %c0_14 = arith.constant 0 : index
    %c0_15 = arith.constant 0 : index
    %33 = vector.load %arg4[%c0_14, %c0_15] : memref<512x256xbf16, #tpu.memory_space<vmem>>, vector<256x256xbf16>
    %cst_16 = arith.constant dense<0.000000e+00> : vector<40x256xf32>
    %34 = tpu.matmul %32, %33, %cst_16 {dimension_numbers = #tpu.dot_dimension_numbers<[1], [0], [0], [1], [0, 0, 1, 1], [], []>} : vector<40x256xbf16>, vector<256x256xbf16>, vector<40x256xf32> -> vector<40x256xf32>
    %35 = arith.truncf %31 : vector<40x256xf32> to vector<40x256xbf16>
    %c256 = arith.constant 256 : index
    %c0_17 = arith.constant 0 : index
    %36 = vector.load %arg4[%c256, %c0_17] : memref<512x256xbf16, #tpu.memory_space<vmem>>, vector<256x256xbf16>
    %cst_18 = arith.constant dense<0.000000e+00> : vector<40x256xf32>
    %37 = tpu.matmul %35, %36, %cst_18 {dimension_numbers = #tpu.dot_dimension_numbers<[1], [0], [0], [1], [0, 0, 1, 1], [], []>} : vector<40x256xbf16>, vector<256x256xbf16>, vector<40x256xf32> -> vector<40x256xf32>
    %38 = arith.addf %34, %37 : vector<40x256xf32>
    %c0_19 = arith.constant 0 : index
    %c0_20 = arith.constant 0 : index
    %39 = vector.load %arg5[%c0_19, %c0_20] : memref<1x256xf32, #tpu.memory_space<vmem>>, vector<1x256xf32>
    %40 = vector.broadcast %39 : vector<1x256xf32> to vector<40x256xf32>
    %41 = arith.addf %38, %40 : vector<40x256xf32>
    %cst_21 = arith.constant 0.000000e+00 : f32
    %42 = vector.broadcast %cst_21 : f32 to vector<40x256xf32>
    %43 = arith.maximumf %41, %42 : vector<40x256xf32>
    %c0_22 = arith.constant 0 : index
    %c0_23 = arith.constant 0 : index
    %44 = vector.load %arg6[%c0_22, %c0_23] : memref<1x256xf32, #tpu.memory_space<vmem>>, vector<1x256xf32>
    %45 = vector.broadcast %44 : vector<1x256xf32> to vector<40x256xf32>
    %46 = arith.mulf %43, %45 : vector<40x256xf32>
    %cst_24 = arith.constant dense<0.000000e+00> : vector<40xf32>
    %47 = vector.multi_reduction <add>, %46, %cst_24 [1] : vector<40x256xf32> to vector<40xf32>
    %48 = vector.shape_cast %47 : vector<40xf32> to vector<40x1xf32>
    %c0_25 = arith.constant 0 : index
    %c0_26 = arith.constant 0 : index
    %49 = vector.load %arg7[%c0_25, %c0_26] : memref<1x1xf32, #tpu.memory_space<vmem>>, vector<1x1xf32>
    %50 = vector.broadcast %49 : vector<1x1xf32> to vector<40x1xf32>
    %51 = arith.addf %48, %50 : vector<40x1xf32>
    %c0_27 = arith.constant 0 : index
    %c0_28 = arith.constant 0 : index
    %52 = vector.load %arg32[%c0_27, %c0_28] : memref<40x1xf32, #tpu.memory_space<vmem>>, vector<40x1xf32>
    tpu.vector_store %arg32[%c0_27, %c0_28], %51 {strides = array<i32>} : memref<40x1xf32, #tpu.memory_space<vmem>>, vector<40x1xf32>,
    %c0_29 = arith.constant 0 : index
    %c0_30 = arith.constant 0 : index
    %53 = vector.load %arg3[%c0_29, %c0_30] : memref<8x1xi32, #tpu.memory_space<vmem>>, vector<8x1xi32>
    %cst_31 = arith.constant 0.000000e+00 : f32
    %54 = vector.broadcast %cst_31 : f32 to vector<8x256xf32>
    %c0_i32 = arith.constant 0 : i32
    %55 = vector.broadcast %c0_i32 : i32 to vector<8x1xi32>
    %56 = arith.cmpi eq, %53, %55 : vector<8x1xi32>
    %57 = arith.extui %56 : vector<8x1xi1> to vector<8x1xi32>
    %58 = arith.sitofp %57 : vector<8x1xi32> to vector<8x1xf32>
    %c0_32 = arith.constant 0 : index
    %c0_33 = arith.constant 0 : index
    %c0_34 = arith.constant 0 : index
    %59 = vector.load %arg2[%c0_32, %c0_33, %c0_34] : memref<5x8x256xf32, #tpu.memory_space<vmem>>, vector<1x8x256xf32>
    %60 = vector.shape_cast %59 : vector<1x8x256xf32> to vector<8x256xf32>
    %61 = vector.broadcast %58 : vector<8x1xf32> to vector<8x256xf32>
    %62 = arith.mulf %61, %60 : vector<8x256xf32>
    %63 = arith.addf %54, %62 : vector<8x256xf32>
    %c1_i32 = arith.constant 1 : i32
    %64 = vector.broadcast %c1_i32 : i32 to vector<8x1xi32>
    %65 = arith.cmpi eq, %53, %64 : vector<8x1xi32>
    %66 = arith.extui %65 : vector<8x1xi1> to vector<8x1xi32>
    %67 = arith.sitofp %66 : vector<8x1xi32> to vector<8x1xf32>
    %c1 = arith.constant 1 : index
    %c0_35 = arith.constant 0 : index
    %c0_36 = arith.constant 0 : index
    %68 = vector.load %arg2[%c1, %c0_35, %c0_36] : memref<5x8x256xf32, #tpu.memory_space<vmem>>, vector<1x8x256xf32>
    %69 = vector.shape_cast %68 : vector<1x8x256xf32> to vector<8x256xf32>
    %70 = vector.broadcast %67 : vector<8x1xf32> to vector<8x256xf32>
    %71 = arith.mulf %70, %69 : vector<8x256xf32>
    %72 = arith.addf %63, %71 : vector<8x256xf32>
    %c2_i32 = arith.constant 2 : i32
    %73 = vector.broadcast %c2_i32 : i32 to vector<8x1xi32>
    %74 = arith.cmpi eq, %53, %73 : vector<8x1xi32>
    %75 = arith.extui %74 : vector<8x1xi1> to vector<8x1xi32>
    %76 = arith.sitofp %75 : vector<8x1xi32> to vector<8x1xf32>
    %c2 = arith.constant 2 : index
    %c0_37 = arith.constant 0 : index
    %c0_38 = arith.constant 0 : index
    %77 = vector.load %arg2[%c2, %c0_37, %c0_38] : memref<5x8x256xf32, #tpu.memory_space<vmem>>, vector<1x8x256xf32>
    %78 = vector.shape_cast %77 : vector<1x8x256xf32> to vector<8x256xf32>
    %79 = vector.broadcast %76 : vector<8x1xf32> to vector<8x256xf32>
    %80 = arith.mulf %79, %78 : vector<8x256xf32>
    %81 = arith.addf %72, %80 : vector<8x256xf32>
    %c3_i32 = arith.constant 3 : i32
    %82 = vector.broadcast %c3_i32 : i32 to vector<8x1xi32>
    %83 = arith.cmpi eq, %53, %82 : vector<8x1xi32>
    %84 = arith.extui %83 : vector<8x1xi1> to vector<8x1xi32>
    %85 = arith.sitofp %84 : vector<8x1xi32> to vector<8x1xf32>
    %c3 = arith.constant 3 : index
    %c0_39 = arith.constant 0 : index
    %c0_40 = arith.constant 0 : index
    %86 = vector.load %arg2[%c3, %c0_39, %c0_40] : memref<5x8x256xf32, #tpu.memory_space<vmem>>, vector<1x8x256xf32>
    %87 = vector.shape_cast %86 : vector<1x8x256xf32> to vector<8x256xf32>
    %88 = vector.broadcast %85 : vector<8x1xf32> to vector<8x256xf32>
    %89 = arith.mulf %88, %87 : vector<8x256xf32>
    %90 = arith.addf %81, %89 : vector<8x256xf32>
    %c4_i32 = arith.constant 4 : i32
    %91 = vector.broadcast %c4_i32 : i32 to vector<8x1xi32>
    %92 = arith.cmpi eq, %53, %91 : vector<8x1xi32>
    %93 = arith.extui %92 : vector<8x1xi1> to vector<8x1xi32>
    %94 = arith.sitofp %93 : vector<8x1xi32> to vector<8x1xf32>
    %c4 = arith.constant 4 : index
    %c0_41 = arith.constant 0 : index
    %c0_42 = arith.constant 0 : index
    %95 = vector.load %arg2[%c4, %c0_41, %c0_42] : memref<5x8x256xf32, #tpu.memory_space<vmem>>, vector<1x8x256xf32>
    %96 = vector.shape_cast %95 : vector<1x8x256xf32> to vector<8x256xf32>
    %97 = vector.broadcast %94 : vector<8x1xf32> to vector<8x256xf32>
    %98 = arith.mulf %97, %96 : vector<8x256xf32>
    %99 = arith.addf %90, %98 : vector<8x256xf32>
    %cst_43 = arith.constant 0.999994993 : f32
    %100 = vector.broadcast %cst_43 : f32 to vector<8x256xf32>
    %101 = arith.mulf %99, %100 : vector<8x256xf32>
    %102 = vector.extract_strided_slice %28 {offsets = [4, 0, 0], sizes = [1, 8, 256], strides = [1, 1, 1]} : vector<5x8x256xf32> to vector<1x8x256xf32>
    %103 = vector.shape_cast %102 : vector<1x8x256xf32> to vector<8x256xf32>
    %cst_44 = arith.constant 0.999994993 : f32
    %104 = vector.broadcast %cst_44 : f32 to vector<8x256xf32>
    %105 = arith.mulf %103, %104 : vector<8x256xf32>
    %106 = vector.extract_strided_slice %5 {offsets = [4, 0, 0], sizes = [1, 8, 256], strides = [1, 1, 1]} : vector<5x8x256xf32> to vector<1x8x256xf32>
    %107 = vector.shape_cast %106 : vector<1x8x256xf32> to vector<8x256xf32>
    %108 = tpu.iota {dimensions = array<i32: 0>} : vector<8x8xi32>
    %109 = tpu.iota {dimensions = array<i32: 1>} : vector<8x8xi32>
    %110 = arith.cmpi eq, %108, %109 : vector<8x8xi32>
    %111 = arith.extui %110 : vector<8x8xi1> to vector<8x8xi32>
    %112 = arith.sitofp %111 : vector<8x8xi32> to vector<8x8xf32>
    %cst_45 = arith.constant 1.000000e+00 : f32
    %113 = vector.broadcast %cst_45 : f32 to vector<8x8xf32>
    %114 = arith.mulf %112, %113 : vector<8x8xf32>
    %cst_46 = arith.constant 0.000000e+00 : f32
    %115 = vector.broadcast %cst_46 : f32 to vector<8x256xf32>
    %116 = arith.truncf %105 : vector<8x256xf32> to vector<8x256xbf16>
    %c0_47 = arith.constant 0 : index
    %c0_48 = arith.constant 0 : index
    %117 = vector.load %arg8[%c0_47, %c0_48] : memref<256x256xbf16, #tpu.memory_space<vmem>>, vector<256x256xbf16>
    %cst_49 = arith.constant dense<0.000000e+00> : vector<8x256xf32>
    %118 = tpu.matmul %116, %117, %cst_49 {dimension_numbers = #tpu.dot_dimension_numbers<[1], [0], [0], [1], [0, 0, 1, 1], [], []>} : vector<8x256xbf16>, vector<256x256xbf16>, vector<8x256xf32> -> vector<8x256xf32>
    %c0_50 = arith.constant 0 : index
    %c0_51 = arith.constant 0 : index
    %119 = vector.load %arg9[%c0_50, %c0_51] : memref<1x256xf32, #tpu.memory_space<vmem>>, vector<1x256xf32>
    %120 = vector.broadcast %119 : vector<1x256xf32> to vector<8x256xf32>
    %121 = arith.addf %118, %120 : vector<8x256xf32>
    %cst_52 = arith.constant 0.000000e+00 : f32
    %122 = vector.broadcast %cst_52 : f32 to vector<8x256xf32>
    %123 = arith.maximumf %121, %122 : vector<8x256xf32>
    %124 = arith.truncf %123 : vector<8x256xf32> to vector<8x256xbf16>
    %c0_53 = arith.constant 0 : index
    %c0_54 = arith.constant 0 : index
    %125 = vector.load %arg10[%c0_53, %c0_54] : memref<256x256xbf16, #tpu.memory_space<vmem>>, vector<256x256xbf16>
    %cst_55 = arith.constant dense<0.000000e+00> : vector<8x256xf32>
    %126 = tpu.matmul %124, %125, %cst_55 {dimension_numbers = #tpu.dot_dimension_numbers<[1], [0], [0], [1], [0, 0, 1, 1], [], []>} : vector<8x256xbf16>, vector<256x256xbf16>, vector<8x256xf32> -> vector<8x256xf32>
    %c0_56 = arith.constant 0 : index
    %c0_57 = arith.constant 0 : index
    %127 = vector.load %arg11[%c0_56, %c0_57] : memref<1x256xf32, #tpu.memory_space<vmem>>, vector<1x256xf32>
    %128 = vector.broadcast %127 : vector<1x256xf32> to vector<8x256xf32>
    %129 = arith.addf %126, %128 : vector<8x256xf32>
    %cst_58 = arith.constant 0.000000e+00 : f32
    %130 = vector.broadcast %cst_58 : f32 to vector<8x256xf32>
    %131 = arith.maximumf %129, %130 : vector<8x256xf32>
    %132 = arith.truncf %131 : vector<8x256xf32> to vector<8x256xbf16>
    %cst_59 = arith.constant dense<0.000000e+00> : vector<8x8xf32>
    %133 = tpu.matmul %132, %132, %cst_59 {dimension_numbers = #tpu.dot_dimension_numbers<[1], [1], [0], [0], [0, 0, 1, 0], [], []>} : vector<8x256xbf16>, vector<8x256xbf16>, vector<8x8xf32> -> vector<8x8xf32>
    %134 = vector.shape_cast %133 : vector<8x8xf32> to vector<1x8x8xf32>
    %cst_60 = arith.constant dense<0.000000e+00> : vector<1xf32>
    %135 = vector.multi_reduction <add>, %134, %cst_60 [1, 2] : vector<1x8x8xf32> to vector<1xf32>
    %136 = vector.shape_cast %135 : vector<1xf32> to vector<1x1x1xf32>
    %137 = vector.extract %136[0, 0, 0] : f32 from vector<1x1x1xf32>
    %cst_61 = arith.constant 6.400000e+01 : f32
    %138 = arith.divf %137, %cst_61 : f32
    %139 = vector.broadcast %138 : f32 to vector<8x8xf32>
    %140 = arith.cmpf ogt, %133, %139 : vector<8x8xf32>
    %141 = arith.extui %140 : vector<8x8xi1> to vector<8x8xi32>
    %142 = arith.sitofp %141 : vector<8x8xi32> to vector<8x8xf32>
    %143 = arith.addf %142, %114 : vector<8x8xf32>
    %144 = arith.truncf %143 : vector<8x8xf32> to vector<8x8xbf16>
    %145 = arith.truncf %105 : vector<8x256xf32> to vector<8x256xbf16>
    %cst_62 = arith.constant dense<0.000000e+00> : vector<8x256xf32>
    %146 = tpu.matmul %144, %145, %cst_62 {dimension_numbers = #tpu.dot_dimension_numbers<[1], [0], [0], [1], [0, 0, 1, 1], [], []>} : vector<8x8xbf16>, vector<8x256xbf16>, vector<8x256xf32> -> vector<8x256xf32>
    %147 = arith.truncf %146 : vector<8x256xf32> to vector<8x256xbf16>
    %c0_63 = arith.constant 0 : index
    %c0_64 = arith.constant 0 : index
    %c0_65 = arith.constant 0 : index
    %148 = vector.load %arg12[%c0_63, %c0_64, %c0_65] : memref<3x256x256xbf16, #tpu.memory_space<vmem>>, vector<1x256x256xbf16>
    %149 = vector.shape_cast %148 : vector<1x256x256xbf16> to vector<256x256xbf16>
    %cst_66 = arith.constant dense<0.000000e+00> : vector<8x256xf32>
    %150 = tpu.matmul %147, %149, %cst_66 {dimension_numbers = #tpu.dot_dimension_numbers<[1], [0], [0], [1], [0, 0, 1, 1], [], []>} : vector<8x256xbf16>, vector<256x256xbf16>, vector<8x256xf32> -> vector<8x256xf32>
    %c0_67 = arith.constant 0 : index
    %c0_68 = arith.constant 0 : index
    %c0_69 = arith.constant 0 : index
    %151 = vector.load %arg13[%c0_67, %c0_68, %c0_69] : memref<3x1x256xf32, #tpu.memory_space<vmem>>, vector<1x1x256xf32>
    %152 = vector.shape_cast %151 : vector<1x1x256xf32> to vector<1x256xf32>
    %153 = vector.broadcast %152 : vector<1x256xf32> to vector<8x256xf32>
    %154 = arith.addf %150, %153 : vector<8x256xf32>
    %cst_70 = arith.constant 0.000000e+00 : f32
    %155 = vector.broadcast %cst_70 : f32 to vector<8x256xf32>
    %156 = arith.maximumf %154, %155 : vector<8x256xf32>
    %157 = arith.truncf %156 : vector<8x256xf32> to vector<8x256xbf16>
    %c0_71 = arith.constant 0 : index
    %c0_72 = arith.constant 0 : index
    %c0_73 = arith.constant 0 : index
    %158 = vector.load %arg14[%c0_71, %c0_72, %c0_73] : memref<3x256x256xbf16, #tpu.memory_space<vmem>>, vector<1x256x256xbf16>
    %159 = vector.shape_cast %158 : vector<1x256x256xbf16> to vector<256x256xbf16>
    %cst_74 = arith.constant dense<0.000000e+00> : vector<8x256xf32>
    %160 = tpu.matmul %157, %159, %cst_74 {dimension_numbers = #tpu.dot_dimension_numbers<[1], [0], [0], [1], [0, 0, 1, 1], [], []>} : vector<8x256xbf16>, vector<256x256xbf16>, vector<8x256xf32> -> vector<8x256xf32>
    %c0_75 = arith.constant 0 : index
    %c0_76 = arith.constant 0 : index
    %c0_77 = arith.constant 0 : index
    %161 = vector.load %arg15[%c0_75, %c0_76, %c0_77] : memref<3x1x256xf32, #tpu.memory_space<vmem>>, vector<1x1x256xf32>
    %162 = vector.shape_cast %161 : vector<1x1x256xf32> to vector<1x256xf32>
    %163 = vector.broadcast %162 : vector<1x256xf32> to vector<8x256xf32>
    %164 = arith.addf %160, %163 : vector<8x256xf32>
    %165 = arith.addf %115, %164 : vector<8x256xf32>
    %166 = arith.truncf %164 : vector<8x256xf32> to vector<8x256xbf16>
    %c0_78 = arith.constant 0 : index
    %c0_79 = arith.constant 0 : index
    %167 = vector.load %arg8[%c0_78, %c0_79] : memref<256x256xbf16, #tpu.memory_space<vmem>>, vector<256x256xbf16>
    %cst_80 = arith.constant dense<0.000000e+00> : vector<8x256xf32>
    %168 = tpu.matmul %166, %167, %cst_80 {dimension_numbers = #tpu.dot_dimension_numbers<[1], [0], [0], [1], [0, 0, 1, 1], [], []>} : vector<8x256xbf16>, vector<256x256xbf16>, vector<8x256xf32> -> vector<8x256xf32>
    %c0_81 = arith.constant 0 : index
    %c0_82 = arith.constant 0 : index
    %169 = vector.load %arg9[%c0_81, %c0_82] : memref<1x256xf32, #tpu.memory_space<vmem>>, vector<1x256xf32>
    %170 = vector.broadcast %169 : vector<1x256xf32> to vector<8x256xf32>
    %171 = arith.addf %168, %170 : vector<8x256xf32>
    %cst_83 = arith.constant 0.000000e+00 : f32
    %172 = vector.broadcast %cst_83 : f32 to vector<8x256xf32>
    %173 = arith.maximumf %171, %172 : vector<8x256xf32>
    %174 = arith.truncf %173 : vector<8x256xf32> to vector<8x256xbf16>
    %c0_84 = arith.constant 0 : index
    %c0_85 = arith.constant 0 : index
    %175 = vector.load %arg10[%c0_84, %c0_85] : memref<256x256xbf16, #tpu.memory_space<vmem>>, vector<256x256xbf16>
    %cst_86 = arith.constant dense<0.000000e+00> : vector<8x256xf32>
    %176 = tpu.matmul %174, %175, %cst_86 {dimension_numbers = #tpu.dot_dimension_numbers<[1], [0], [0], [1], [0, 0, 1, 1], [], []>} : vector<8x256xbf16>, vector<256x256xbf16>, vector<8x256xf32> -> vector<8x256xf32>
    %c0_87 = arith.constant 0 : index
    %c0_88 = arith.constant 0 : index
    %177 = vector.load %arg11[%c0_87, %c0_88] : memref<1x256xf32, #tpu.memory_space<vmem>>, vector<1x256xf32>
    %178 = vector.broadcast %177 : vector<1x256xf32> to vector<8x256xf32>
    %179 = arith.addf %176, %178 : vector<8x256xf32>
    %cst_89 = arith.constant 0.000000e+00 : f32
    %180 = vector.broadcast %cst_89 : f32 to vector<8x256xf32>
    %181 = arith.maximumf %179, %180 : vector<8x256xf32>
    %182 = arith.truncf %181 : vector<8x256xf32> to vector<8x256xbf16>
    %cst_90 = arith.constant dense<0.000000e+00> : vector<8x8xf32>
    %183 = tpu.matmul %182, %182, %cst_90 {dimension_numbers = #tpu.dot_dimension_numbers<[1], [1], [0], [0], [0, 0, 1, 0], [], []>} : vector<8x256xbf16>, vector<8x256xbf16>, vector<8x8xf32> -> vector<8x8xf32>
    %184 = vector.shape_cast %183 : vector<8x8xf32> to vector<1x8x8xf32>
    %cst_91 = arith.constant dense<0.000000e+00> : vector<1xf32>
    %185 = vector.multi_reduction <add>, %184, %cst_91 [1, 2] : vector<1x8x8xf32> to vector<1xf32>
    %186 = vector.shape_cast %185 : vector<1xf32> to vector<1x1x1xf32>
    %187 = vector.extract %186[0, 0, 0] : f32 from vector<1x1x1xf32>
    %cst_92 = arith.constant 6.400000e+01 : f32
    %188 = arith.divf %187, %cst_92 : f32
    %189 = vector.broadcast %188 : f32 to vector<8x8xf32>
    %190 = arith.cmpf ogt, %183, %189 : vector<8x8xf32>
    %191 = arith.extui %190 : vector<8x8xi1> to vector<8x8xi32>
    %192 = arith.sitofp %191 : vector<8x8xi32> to vector<8x8xf32>
    %193 = arith.addf %192, %114 : vector<8x8xf32>
    %194 = arith.truncf %193 : vector<8x8xf32> to vector<8x8xbf16>
    %195 = arith.truncf %164 : vector<8x256xf32> to vector<8x256xbf16>
    %cst_93 = arith.constant dense<0.000000e+00> : vector<8x256xf32>
    %196 = tpu.matmul %194, %195, %cst_93 {dimension_numbers = #tpu.dot_dimension_numbers<[1], [0], [0], [1], [0, 0, 1, 1], [], []>} : vector<8x8xbf16>, vector<8x256xbf16>, vector<8x256xf32> -> vector<8x256xf32>
    %197 = arith.truncf %196 : vector<8x256xf32> to vector<8x256xbf16>
    %c1_94 = arith.constant 1 : index
    %c0_95 = arith.constant 0 : index
    %c0_96 = arith.constant 0 : index
    %198 = vector.load %arg12[%c1_94, %c0_95, %c0_96] : memref<3x256x256xbf16, #tpu.memory_space<vmem>>, vector<1x256x256xbf16>
    %199 = vector.shape_cast %198 : vector<1x256x256xbf16> to vector<256x256xbf16>
    %cst_97 = arith.constant dense<0.000000e+00> : vector<8x256xf32>
    %200 = tpu.matmul %197, %199, %cst_97 {dimension_numbers = #tpu.dot_dimension_numbers<[1], [0], [0], [1], [0, 0, 1, 1], [], []>} : vector<8x256xbf16>, vector<256x256xbf16>, vector<8x256xf32> -> vector<8x256xf32>
    %c1_98 = arith.constant 1 : index
    %c0_99 = arith.constant 0 : index
    %c0_100 = arith.constant 0 : index
    %201 = vector.load %arg13[%c1_98, %c0_99, %c0_100] : memref<3x1x256xf32, #tpu.memory_space<vmem>>, vector<1x1x256xf32>
    %202 = vector.shape_cast %201 : vector<1x1x256xf32> to vector<1x256xf32>
    %203 = vector.broadcast %202 : vector<1x256xf32> to vector<8x256xf32>
    %204 = arith.addf %200, %203 : vector<8x256xf32>
    %cst_101 = arith.constant 0.000000e+00 : f32
    %205 = vector.broadcast %cst_101 : f32 to vector<8x256xf32>
    %206 = arith.maximumf %204, %205 : vector<8x256xf32>
    %207 = arith.truncf %206 : vector<8x256xf32> to vector<8x256xbf16>
    %c1_102 = arith.constant 1 : index
    %c0_103 = arith.constant 0 : index
    %c0_104 = arith.constant 0 : index
    %208 = vector.load %arg14[%c1_102, %c0_103, %c0_104] : memref<3x256x256xbf16, #tpu.memory_space<vmem>>, vector<1x256x256xbf16>
    %209 = vector.shape_cast %208 : vector<1x256x256xbf16> to vector<256x256xbf16>
    %cst_105 = arith.constant dense<0.000000e+00> : vector<8x256xf32>
    %210 = tpu.matmul %207, %209, %cst_105 {dimension_numbers = #tpu.dot_dimension_numbers<[1], [0], [0], [1], [0, 0, 1, 1], [], []>} : vector<8x256xbf16>, vector<256x256xbf16>, vector<8x256xf32> -> vector<8x256xf32>
    %c1_106 = arith.constant 1 : index
    %c0_107 = arith.constant 0 : index
    %c0_108 = arith.constant 0 : index
    %211 = vector.load %arg15[%c1_106, %c0_107, %c0_108] : memref<3x1x256xf32, #tpu.memory_space<vmem>>, vector<1x1x256xf32>
    %212 = vector.shape_cast %211 : vector<1x1x256xf32> to vector<1x256xf32>
    %213 = vector.broadcast %212 : vector<1x256xf32> to vector<8x256xf32>
    %214 = arith.addf %210, %213 : vector<8x256xf32>
    %215 = arith.addf %165, %214 : vector<8x256xf32>
    %216 = arith.truncf %214 : vector<8x256xf32> to vector<8x256xbf16>
    %c0_109 = arith.constant 0 : index
    %c0_110 = arith.constant 0 : index
    %217 = vector.load %arg8[%c0_109, %c0_110] : memref<256x256xbf16, #tpu.memory_space<vmem>>, vector<256x256xbf16>
    %cst_111 = arith.constant dense<0.000000e+00> : vector<8x256xf32>
    %218 = tpu.matmul %216, %217, %cst_111 {dimension_numbers = #tpu.dot_dimension_numbers<[1], [0], [0], [1], [0, 0, 1, 1], [], []>} : vector<8x256xbf16>, vector<256x256xbf16>, vector<8x256xf32> -> vector<8x256xf32>
    %c0_112 = arith.constant 0 : index
    %c0_113 = arith.constant 0 : index
    %219 = vector.load %arg9[%c0_112, %c0_113] : memref<1x256xf32, #tpu.memory_space<vmem>>, vector<1x256xf32>
    %220 = vector.broadcast %219 : vector<1x256xf32> to vector<8x256xf32>
    %221 = arith.addf %218, %220 : vector<8x256xf32>
    %cst_114 = arith.constant 0.000000e+00 : f32
    %222 = vector.broadcast %cst_114 : f32 to vector<8x256xf32>
    %223 = arith.maximumf %221, %222 : vector<8x256xf32>
    %224 = arith.truncf %223 : vector<8x256xf32> to vector<8x256xbf16>
    %c0_115 = arith.constant 0 : index
    %c0_116 = arith.constant 0 : index
    %225 = vector.load %arg10[%c0_115, %c0_116] : memref<256x256xbf16, #tpu.memory_space<vmem>>, vector<256x256xbf16>
    %cst_117 = arith.constant dense<0.000000e+00> : vector<8x256xf32>
    %226 = tpu.matmul %224, %225, %cst_117 {dimension_numbers = #tpu.dot_dimension_numbers<[1], [0], [0], [1], [0, 0, 1, 1], [], []>} : vector<8x256xbf16>, vector<256x256xbf16>, vector<8x256xf32> -> vector<8x256xf32>
    %c0_118 = arith.constant 0 : index
    %c0_119 = arith.constant 0 : index
    %227 = vector.load %arg11[%c0_118, %c0_119] : memref<1x256xf32, #tpu.memory_space<vmem>>, vector<1x256xf32>
    %228 = vector.broadcast %227 : vector<1x256xf32> to vector<8x256xf32>
    %229 = arith.addf %226, %228 : vector<8x256xf32>
    %cst_120 = arith.constant 0.000000e+00 : f32
    %230 = vector.broadcast %cst_120 : f32 to vector<8x256xf32>
    %231 = arith.maximumf %229, %230 : vector<8x256xf32>
    %232 = arith.truncf %231 : vector<8x256xf32> to vector<8x256xbf16>
    %cst_121 = arith.constant dense<0.000000e+00> : vector<8x8xf32>
    %233 = tpu.matmul %232, %232, %cst_121 {dimension_numbers = #tpu.dot_dimension_numbers<[1], [1], [0], [0], [0, 0, 1, 0], [], []>} : vector<8x256xbf16>, vector<8x256xbf16>, vector<8x8xf32> -> vector<8x8xf32>
    %234 = vector.shape_cast %233 : vector<8x8xf32> to vector<1x8x8xf32>
    %cst_122 = arith.constant dense<0.000000e+00> : vector<1xf32>
    %235 = vector.multi_reduction <add>, %234, %cst_122 [1, 2] : vector<1x8x8xf32> to vector<1xf32>
    %236 = vector.shape_cast %235 : vector<1xf32> to vector<1x1x1xf32>
    %237 = vector.extract %236[0, 0, 0] : f32 from vector<1x1x1xf32>
    %cst_123 = arith.constant 6.400000e+01 : f32
    %238 = arith.divf %237, %cst_123 : f32
    %239 = vector.broadcast %238 : f32 to vector<8x8xf32>
    %240 = arith.cmpf ogt, %233, %239 : vector<8x8xf32>
    %241 = arith.extui %240 : vector<8x8xi1> to vector<8x8xi32>
    %242 = arith.sitofp %241 : vector<8x8xi32> to vector<8x8xf32>
    %243 = arith.addf %242, %114 : vector<8x8xf32>
    %244 = arith.truncf %243 : vector<8x8xf32> to vector<8x8xbf16>
    %245 = arith.truncf %214 : vector<8x256xf32> to vector<8x256xbf16>
    %cst_124 = arith.constant dense<0.000000e+00> : vector<8x256xf32>
    %246 = tpu.matmul %244, %245, %cst_124 {dimension_numbers = #tpu.dot_dimension_numbers<[1], [0], [0], [1], [0, 0, 1, 1], [], []>} : vector<8x8xbf16>, vector<8x256xbf16>, vector<8x256xf32> -> vector<8x256xf32>
    %247 = arith.truncf %246 : vector<8x256xf32> to vector<8x256xbf16>
    %c2_125 = arith.constant 2 : index
    %c0_126 = arith.constant 0 : index
    %c0_127 = arith.constant 0 : index
    %248 = vector.load %arg12[%c2_125, %c0_126, %c0_127] : memref<3x256x256xbf16, #tpu.memory_space<vmem>>, vector<1x256x256xbf16>
    %249 = vector.shape_cast %248 : vector<1x256x256xbf16> to vector<256x256xbf16>
    %cst_128 = arith.constant dense<0.000000e+00> : vector<8x256xf32>
    %250 = tpu.matmul %247, %249, %cst_128 {dimension_numbers = #tpu.dot_dimension_numbers<[1], [0], [0], [1], [0, 0, 1, 1], [], []>} : vector<8x256xbf16>, vector<256x256xbf16>, vector<8x256xf32> -> vector<8x256xf32>
    %c2_129 = arith.constant 2 : index
    %c0_130 = arith.constant 0 : index
    %c0_131 = arith.constant 0 : index
    %251 = vector.load %arg13[%c2_129, %c0_130, %c0_131] : memref<3x1x256xf32, #tpu.memory_space<vmem>>, vector<1x1x256xf32>
    %252 = vector.shape_cast %251 : vector<1x1x256xf32> to vector<1x256xf32>
    %253 = vector.broadcast %252 : vector<1x256xf32> to vector<8x256xf32>
    %254 = arith.addf %250, %253 : vector<8x256xf32>
    %cst_132 = arith.constant 0.000000e+00 : f32
    %255 = vector.broadcast %cst_132 : f32 to vector<8x256xf32>
    %256 = arith.maximumf %254, %255 : vector<8x256xf32>
    %257 = arith.truncf %256 : vector<8x256xf32> to vector<8x256xbf16>
    %c2_133 = arith.constant 2 : index
    %c0_134 = arith.constant 0 : index
    %c0_135 = arith.constant 0 : index
    %258 = vector.load %arg14[%c2_133, %c0_134, %c0_135] : memref<3x256x256xbf16, #tpu.memory_space<vmem>>, vector<1x256x256xbf16>
    %259 = vector.shape_cast %258 : vector<1x256x256xbf16> to vector<256x256xbf16>
    %cst_136 = arith.constant dense<0.000000e+00> : vector<8x256xf32>
    %260 = tpu.matmul %257, %259, %cst_136 {dimension_numbers = #tpu.dot_dimension_numbers<[1], [0], [0], [1], [0, 0, 1, 1], [], []>} : vector<8x256xbf16>, vector<256x256xbf16>, vector<8x256xf32> -> vector<8x256xf32>
    %c2_137 = arith.constant 2 : index
    %c0_138 = arith.constant 0 : index
    %c0_139 = arith.constant 0 : index
    %261 = vector.load %arg15[%c2_137, %c0_138, %c0_139] : memref<3x1x256xf32, #tpu.memory_space<vmem>>, vector<1x1x256xf32>
    %262 = vector.shape_cast %261 : vector<1x1x256xf32> to vector<1x256xf32>
    %263 = vector.broadcast %262 : vector<1x256xf32> to vector<8x256xf32>
    %264 = arith.addf %260, %263 : vector<8x256xf32>
    %265 = arith.addf %215, %264 : vector<8x256xf32>
    %cst_140 = arith.constant 3.000000e+00 : f32
    %266 = vector.broadcast %cst_140 : f32 to vector<8x256xf32>
    %267 = arith.divf %265, %266 : vector<8x256xf32>
    %cst_141 = arith.constant 0.000000e+00 : f32
    %268 = vector.broadcast %cst_141 : f32 to vector<8x256xf32>
    %269 = arith.truncf %2 : vector<8x256xf32> to vector<8x256xbf16>
    %c0_142 = arith.constant 0 : index
    %c0_143 = arith.constant 0 : index
    %270 = vector.load %arg24[%c0_142, %c0_143] : memref<256x256xbf16, #tpu.memory_space<vmem>>, vector<256x256xbf16>
    %cst_144 = arith.constant dense<0.000000e+00> : vector<8x256xf32>
    %271 = tpu.matmul %269, %270, %cst_144 {dimension_numbers = #tpu.dot_dimension_numbers<[1], [0], [0], [1], [0, 0, 1, 1], [], []>} : vector<8x256xbf16>, vector<256x256xbf16>, vector<8x256xf32> -> vector<8x256xf32>
    %c0_145 = arith.constant 0 : index
    %c0_146 = arith.constant 0 : index
    %272 = vector.load %arg25[%c0_145, %c0_146] : memref<1x256xf32, #tpu.memory_space<vmem>>, vector<1x256xf32>
    %273 = vector.broadcast %272 : vector<1x256xf32> to vector<8x256xf32>
    %274 = arith.addf %271, %273 : vector<8x256xf32>
    %cst_147 = arith.constant 0.000000e+00 : f32
    %275 = vector.broadcast %cst_147 : f32 to vector<8x256xf32>
    %276 = arith.maximumf %274, %275 : vector<8x256xf32>
    %277 = arith.truncf %276 : vector<8x256xf32> to vector<8x256xbf16>
    %c0_148 = arith.constant 0 : index
    %c0_149 = arith.constant 0 : index
    %278 = vector.load %arg26[%c0_148, %c0_149] : memref<256x256xbf16, #tpu.memory_space<vmem>>, vector<256x256xbf16>
    %cst_150 = arith.constant dense<0.000000e+00> : vector<8x256xf32>
    %279 = tpu.matmul %277, %278, %cst_150 {dimension_numbers = #tpu.dot_dimension_numbers<[1], [0], [0], [1], [0, 0, 1, 1], [], []>} : vector<8x256xbf16>, vector<256x256xbf16>, vector<8x256xf32> -> vector<8x256xf32>
    %c0_151 = arith.constant 0 : index
    %c0_152 = arith.constant 0 : index
    %280 = vector.load %arg27[%c0_151, %c0_152] : memref<1x256xf32, #tpu.memory_space<vmem>>, vector<1x256xf32>
    %281 = vector.broadcast %280 : vector<1x256xf32> to vector<8x256xf32>
    %282 = arith.addf %279, %281 : vector<8x256xf32>
    %cst_153 = arith.constant 0.000000e+00 : f32
    %283 = vector.broadcast %cst_153 : f32 to vector<8x256xf32>
    %284 = arith.maximumf %282, %283 : vector<8x256xf32>
    %285 = arith.truncf %284 : vector<8x256xf32> to vector<8x256xbf16>
    %cst_154 = arith.constant dense<0.000000e+00> : vector<8x8xf32>
    %286 = tpu.matmul %285, %285, %cst_154 {dimension_numbers = #tpu.dot_dimension_numbers<[1], [1], [0], [0], [0, 0, 1, 0], [], []>} : vector<8x256xbf16>, vector<8x256xbf16>, vector<8x8xf32> -> vector<8x8xf32>
    %287 = vector.shape_cast %286 : vector<8x8xf32> to vector<1x8x8xf32>
    %cst_155 = arith.constant dense<0.000000e+00> : vector<1xf32>
    %288 = vector.multi_reduction <add>, %287, %cst_155 [1, 2] : vector<1x8x8xf32> to vector<1xf32>
    %289 = vector.shape_cast %288 : vector<1xf32> to vector<1x1x1xf32>
    %290 = vector.extract %289[0, 0, 0] : f32 from vector<1x1x1xf32>
    %cst_156 = arith.constant 6.400000e+01 : f32
    %291 = arith.divf %290, %cst_156 : f32
    %292 = vector.broadcast %291 : f32 to vector<8x8xf32>
    %293 = arith.cmpf ogt, %286, %292 : vector<8x8xf32>
    %294 = arith.extui %293 : vector<8x8xi1> to vector<8x8xi32>
    %295 = arith.sitofp %294 : vector<8x8xi32> to vector<8x8xf32>
    %296 = arith.addf %295, %114 : vector<8x8xf32>
    %297 = arith.truncf %296 : vector<8x8xf32> to vector<8x8xbf16>
    %298 = arith.truncf %2 : vector<8x256xf32> to vector<8x256xbf16>
    %cst_157 = arith.constant dense<0.000000e+00> : vector<8x256xf32>
    %299 = tpu.matmul %297, %298, %cst_157 {dimension_numbers = #tpu.dot_dimension_numbers<[1], [0], [0], [1], [0, 0, 1, 1], [], []>} : vector<8x8xbf16>, vector<8x256xbf16>, vector<8x256xf32> -> vector<8x256xf32>
    %300 = arith.truncf %299 : vector<8x256xf32> to vector<8x256xbf16>
    %c0_158 = arith.constant 0 : index
    %c0_159 = arith.constant 0 : index
    %c0_160 = arith.constant 0 : index
    %301 = vector.load %arg28[%c0_158, %c0_159, %c0_160] : memref<3x256x256xbf16, #tpu.memory_space<vmem>>, vector<1x256x256xbf16>
    %302 = vector.shape_cast %301 : vector<1x256x256xbf16> to vector<256x256xbf16>
    %cst_161 = arith.constant dense<0.000000e+00> : vector<8x256xf32>
    %303 = tpu.matmul %300, %302, %cst_161 {dimension_numbers = #tpu.dot_dimension_numbers<[1], [0], [0], [1], [0, 0, 1, 1], [], []>} : vector<8x256xbf16>, vector<256x256xbf16>, vector<8x256xf32> -> vector<8x256xf32>
    %c0_162 = arith.constant 0 : index
    %c0_163 = arith.constant 0 : index
    %c0_164 = arith.constant 0 : index
    %304 = vector.load %arg29[%c0_162, %c0_163, %c0_164] : memref<3x1x256xf32, #tpu.memory_space<vmem>>, vector<1x1x256xf32>
    %305 = vector.shape_cast %304 : vector<1x1x256xf32> to vector<1x256xf32>
    %306 = vector.broadcast %305 : vector<1x256xf32> to vector<8x256xf32>
    %307 = arith.addf %303, %306 : vector<8x256xf32>
    %cst_165 = arith.constant 0.000000e+00 : f32
    %308 = vector.broadcast %cst_165 : f32 to vector<8x256xf32>
    %309 = arith.maximumf %307, %308 : vector<8x256xf32>
    %310 = arith.truncf %309 : vector<8x256xf32> to vector<8x256xbf16>
    %c0_166 = arith.constant 0 : index
    %c0_167 = arith.constant 0 : index
    %c0_168 = arith.constant 0 : index
    %311 = vector.load %arg30[%c0_166, %c0_167, %c0_168] : memref<3x256x256xbf16, #tpu.memory_space<vmem>>, vector<1x256x256xbf16>
    %312 = vector.shape_cast %311 : vector<1x256x256xbf16> to vector<256x256xbf16>
    %cst_169 = arith.constant dense<0.000000e+00> : vector<8x256xf32>
    %313 = tpu.matmul %310, %312, %cst_169 {dimension_numbers = #tpu.dot_dimension_numbers<[1], [0], [0], [1], [0, 0, 1, 1], [], []>} : vector<8x256xbf16>, vector<256x256xbf16>, vector<8x256xf32> -> vector<8x256xf32>
    %c0_170 = arith.constant 0 : index
    %c0_171 = arith.constant 0 : index
    %c0_172 = arith.constant 0 : index
    %314 = vector.load %arg31[%c0_170, %c0_171, %c0_172] : memref<3x1x256xf32, #tpu.memory_space<vmem>>, vector<1x1x256xf32>
    %315 = vector.shape_cast %314 : vector<1x1x256xf32> to vector<1x256xf32>
    %316 = vector.broadcast %315 : vector<1x256xf32> to vector<8x256xf32>
    %317 = arith.addf %313, %316 : vector<8x256xf32>
    %318 = arith.addf %268, %317 : vector<8x256xf32>
    %319 = arith.truncf %317 : vector<8x256xf32> to vector<8x256xbf16>
    %c0_173 = arith.constant 0 : index
    %c0_174 = arith.constant 0 : index
    %320 = vector.load %arg24[%c0_173, %c0_174] : memref<256x256xbf16, #tpu.memory_space<vmem>>, vector<256x256xbf16>
    %cst_175 = arith.constant dense<0.000000e+00> : vector<8x256xf32>
    %321 = tpu.matmul %319, %320, %cst_175 {dimension_numbers = #tpu.dot_dimension_numbers<[1], [0], [0], [1], [0, 0, 1, 1], [], []>} : vector<8x256xbf16>, vector<256x256xbf16>, vector<8x256xf32> -> vector<8x256xf32>
    %c0_176 = arith.constant 0 : index
    %c0_177 = arith.constant 0 : index
    %322 = vector.load %arg25[%c0_176, %c0_177] : memref<1x256xf32, #tpu.memory_space<vmem>>, vector<1x256xf32>
    %323 = vector.broadcast %322 : vector<1x256xf32> to vector<8x256xf32>
    %324 = arith.addf %321, %323 : vector<8x256xf32>
    %cst_178 = arith.constant 0.000000e+00 : f32
    %325 = vector.broadcast %cst_178 : f32 to vector<8x256xf32>
    %326 = arith.maximumf %324, %325 : vector<8x256xf32>
    %327 = arith.truncf %326 : vector<8x256xf32> to vector<8x256xbf16>
    %c0_179 = arith.constant 0 : index
    %c0_180 = arith.constant 0 : index
    %328 = vector.load %arg26[%c0_179, %c0_180] : memref<256x256xbf16, #tpu.memory_space<vmem>>, vector<256x256xbf16>
    %cst_181 = arith.constant dense<0.000000e+00> : vector<8x256xf32>
    %329 = tpu.matmul %327, %328, %cst_181 {dimension_numbers = #tpu.dot_dimension_numbers<[1], [0], [0], [1], [0, 0, 1, 1], [], []>} : vector<8x256xbf16>, vector<256x256xbf16>, vector<8x256xf32> -> vector<8x256xf32>
    %c0_182 = arith.constant 0 : index
    %c0_183 = arith.constant 0 : index
    %330 = vector.load %arg27[%c0_182, %c0_183] : memref<1x256xf32, #tpu.memory_space<vmem>>, vector<1x256xf32>
    %331 = vector.broadcast %330 : vector<1x256xf32> to vector<8x256xf32>
    %332 = arith.addf %329, %331 : vector<8x256xf32>
    %cst_184 = arith.constant 0.000000e+00 : f32
    %333 = vector.broadcast %cst_184 : f32 to vector<8x256xf32>
    %334 = arith.maximumf %332, %333 : vector<8x256xf32>
    %335 = arith.truncf %334 : vector<8x256xf32> to vector<8x256xbf16>
    %cst_185 = arith.constant dense<0.000000e+00> : vector<8x8xf32>
    %336 = tpu.matmul %335, %335, %cst_185 {dimension_numbers = #tpu.dot_dimension_numbers<[1], [1], [0], [0], [0, 0, 1, 0], [], []>} : vector<8x256xbf16>, vector<8x256xbf16>, vector<8x8xf32> -> vector<8x8xf32>
    %337 = vector.shape_cast %336 : vector<8x8xf32> to vector<1x8x8xf32>
    %cst_186 = arith.constant dense<0.000000e+00> : vector<1xf32>
    %338 = vector.multi_reduction <add>, %337, %cst_186 [1, 2] : vector<1x8x8xf32> to vector<1xf32>
    %339 = vector.shape_cast %338 : vector<1xf32> to vector<1x1x1xf32>
    %340 = vector.extract %339[0, 0, 0] : f32 from vector<1x1x1xf32>
    %cst_187 = arith.constant 6.400000e+01 : f32
    %341 = arith.divf %340, %cst_187 : f32
    %342 = vector.broadcast %341 : f32 to vector<8x8xf32>
    %343 = arith.cmpf ogt, %336, %342 : vector<8x8xf32>
    %344 = arith.extui %343 : vector<8x8xi1> to vector<8x8xi32>
    %345 = arith.sitofp %344 : vector<8x8xi32> to vector<8x8xf32>
    %346 = arith.addf %345, %114 : vector<8x8xf32>
    %347 = arith.truncf %346 : vector<8x8xf32> to vector<8x8xbf16>
    %348 = arith.truncf %317 : vector<8x256xf32> to vector<8x256xbf16>
    %cst_188 = arith.constant dense<0.000000e+00> : vector<8x256xf32>
    %349 = tpu.matmul %347, %348, %cst_188 {dimension_numbers = #tpu.dot_dimension_numbers<[1], [0], [0], [1], [0, 0, 1, 1], [], []>} : vector<8x8xbf16>, vector<8x256xbf16>, vector<8x256xf32> -> vector<8x256xf32>
    %350 = arith.truncf %349 : vector<8x256xf32> to vector<8x256xbf16>
    %c1_189 = arith.constant 1 : index
    %c0_190 = arith.constant 0 : index
    %c0_191 = arith.constant 0 : index
    %351 = vector.load %arg28[%c1_189, %c0_190, %c0_191] : memref<3x256x256xbf16, #tpu.memory_space<vmem>>, vector<1x256x256xbf16>
    %352 = vector.shape_cast %351 : vector<1x256x256xbf16> to vector<256x256xbf16>
    %cst_192 = arith.constant dense<0.000000e+00> : vector<8x256xf32>
    %353 = tpu.matmul %350, %352, %cst_192 {dimension_numbers = #tpu.dot_dimension_numbers<[1], [0], [0], [1], [0, 0, 1, 1], [], []>} : vector<8x256xbf16>, vector<256x256xbf16>, vector<8x256xf32> -> vector<8x256xf32>
    %c1_193 = arith.constant 1 : index
    %c0_194 = arith.constant 0 : index
    %c0_195 = arith.constant 0 : index
    %354 = vector.load %arg29[%c1_193, %c0_194, %c0_195] : memref<3x1x256xf32, #tpu.memory_space<vmem>>, vector<1x1x256xf32>
    %355 = vector.shape_cast %354 : vector<1x1x256xf32> to vector<1x256xf32>
    %356 = vector.broadcast %355 : vector<1x256xf32> to vector<8x256xf32>
    %357 = arith.addf %353, %356 : vector<8x256xf32>
    %cst_196 = arith.constant 0.000000e+00 : f32
    %358 = vector.broadcast %cst_196 : f32 to vector<8x256xf32>
    %359 = arith.maximumf %357, %358 : vector<8x256xf32>
    %360 = arith.truncf %359 : vector<8x256xf32> to vector<8x256xbf16>
    %c1_197 = arith.constant 1 : index
    %c0_198 = arith.constant 0 : index
    %c0_199 = arith.constant 0 : index
    %361 = vector.load %arg30[%c1_197, %c0_198, %c0_199] : memref<3x256x256xbf16, #tpu.memory_space<vmem>>, vector<1x256x256xbf16>
    %362 = vector.shape_cast %361 : vector<1x256x256xbf16> to vector<256x256xbf16>
    %cst_200 = arith.constant dense<0.000000e+00> : vector<8x256xf32>
    %363 = tpu.matmul %360, %362, %cst_200 {dimension_numbers = #tpu.dot_dimension_numbers<[1], [0], [0], [1], [0, 0, 1, 1], [], []>} : vector<8x256xbf16>, vector<256x256xbf16>, vector<8x256xf32> -> vector<8x256xf32>
    %c1_201 = arith.constant 1 : index
    %c0_202 = arith.constant 0 : index
    %c0_203 = arith.constant 0 : index
    %364 = vector.load %arg31[%c1_201, %c0_202, %c0_203] : memref<3x1x256xf32, #tpu.memory_space<vmem>>, vector<1x1x256xf32>
    %365 = vector.shape_cast %364 : vector<1x1x256xf32> to vector<1x256xf32>
    %366 = vector.broadcast %365 : vector<1x256xf32> to vector<8x256xf32>
    %367 = arith.addf %363, %366 : vector<8x256xf32>
    %368 = arith.addf %318, %367 : vector<8x256xf32>
    %369 = arith.truncf %367 : vector<8x256xf32> to vector<8x256xbf16>
    %c0_204 = arith.constant 0 : index
    %c0_205 = arith.constant 0 : index
    %370 = vector.load %arg24[%c0_204, %c0_205] : memref<256x256xbf16, #tpu.memory_space<vmem>>, vector<256x256xbf16>
    %cst_206 = arith.constant dense<0.000000e+00> : vector<8x256xf32>
    %371 = tpu.matmul %369, %370, %cst_206 {dimension_numbers = #tpu.dot_dimension_numbers<[1], [0], [0], [1], [0, 0, 1, 1], [], []>} : vector<8x256xbf16>, vector<256x256xbf16>, vector<8x256xf32> -> vector<8x256xf32>
    %c0_207 = arith.constant 0 : index
    %c0_208 = arith.constant 0 : index
    %372 = vector.load %arg25[%c0_207, %c0_208] : memref<1x256xf32, #tpu.memory_space<vmem>>, vector<1x256xf32>
    %373 = vector.broadcast %372 : vector<1x256xf32> to vector<8x256xf32>
    %374 = arith.addf %371, %373 : vector<8x256xf32>
    %cst_209 = arith.constant 0.000000e+00 : f32
    %375 = vector.broadcast %cst_209 : f32 to vector<8x256xf32>
    %376 = arith.maximumf %374, %375 : vector<8x256xf32>
    %377 = arith.truncf %376 : vector<8x256xf32> to vector<8x256xbf16>
    %c0_210 = arith.constant 0 : index
    %c0_211 = arith.constant 0 : index
    %378 = vector.load %arg26[%c0_210, %c0_211] : memref<256x256xbf16, #tpu.memory_space<vmem>>, vector<256x256xbf16>
    %cst_212 = arith.constant dense<0.000000e+00> : vector<8x256xf32>
    %379 = tpu.matmul %377, %378, %cst_212 {dimension_numbers = #tpu.dot_dimension_numbers<[1], [0], [0], [1], [0, 0, 1, 1], [], []>} : vector<8x256xbf16>, vector<256x256xbf16>, vector<8x256xf32> -> vector<8x256xf32>
    %c0_213 = arith.constant 0 : index
    %c0_214 = arith.constant 0 : index
    %380 = vector.load %arg27[%c0_213, %c0_214] : memref<1x256xf32, #tpu.memory_space<vmem>>, vector<1x256xf32>
    %381 = vector.broadcast %380 : vector<1x256xf32> to vector<8x256xf32>
    %382 = arith.addf %379, %381 : vector<8x256xf32>
    %cst_215 = arith.constant 0.000000e+00 : f32
    %383 = vector.broadcast %cst_215 : f32 to vector<8x256xf32>
    %384 = arith.maximumf %382, %383 : vector<8x256xf32>
    %385 = arith.truncf %384 : vector<8x256xf32> to vector<8x256xbf16>
    %cst_216 = arith.constant dense<0.000000e+00> : vector<8x8xf32>
    %386 = tpu.matmul %385, %385, %cst_216 {dimension_numbers = #tpu.dot_dimension_numbers<[1], [1], [0], [0], [0, 0, 1, 0], [], []>} : vector<8x256xbf16>, vector<8x256xbf16>, vector<8x8xf32> -> vector<8x8xf32>
    %387 = vector.shape_cast %386 : vector<8x8xf32> to vector<1x8x8xf32>
    %cst_217 = arith.constant dense<0.000000e+00> : vector<1xf32>
    %388 = vector.multi_reduction <add>, %387, %cst_217 [1, 2] : vector<1x8x8xf32> to vector<1xf32>
    %389 = vector.shape_cast %388 : vector<1xf32> to vector<1x1x1xf32>
    %390 = vector.extract %389[0, 0, 0] : f32 from vector<1x1x1xf32>
    %cst_218 = arith.constant 6.400000e+01 : f32
    %391 = arith.divf %390, %cst_218 : f32
    %392 = vector.broadcast %391 : f32 to vector<8x8xf32>
    %393 = arith.cmpf ogt, %386, %392 : vector<8x8xf32>
    %394 = arith.extui %393 : vector<8x8xi1> to vector<8x8xi32>
    %395 = arith.sitofp %394 : vector<8x8xi32> to vector<8x8xf32>
    %396 = arith.addf %395, %114 : vector<8x8xf32>
    %397 = arith.truncf %396 : vector<8x8xf32> to vector<8x8xbf16>
    %398 = arith.truncf %367 : vector<8x256xf32> to vector<8x256xbf16>
    %cst_219 = arith.constant dense<0.000000e+00> : vector<8x256xf32>
    %399 = tpu.matmul %397, %398, %cst_219 {dimension_numbers = #tpu.dot_dimension_numbers<[1], [0], [0], [1], [0, 0, 1, 1], [], []>} : vector<8x8xbf16>, vector<8x256xbf16>, vector<8x256xf32> -> vector<8x256xf32>
    %400 = arith.truncf %399 : vector<8x256xf32> to vector<8x256xbf16>
    %c2_220 = arith.constant 2 : index
    %c0_221 = arith.constant 0 : index
    %c0_222 = arith.constant 0 : index
    %401 = vector.load %arg28[%c2_220, %c0_221, %c0_222] : memref<3x256x256xbf16, #tpu.memory_space<vmem>>, vector<1x256x256xbf16>
    %402 = vector.shape_cast %401 : vector<1x256x256xbf16> to vector<256x256xbf16>
    %cst_223 = arith.constant dense<0.000000e+00> : vector<8x256xf32>
    %403 = tpu.matmul %400, %402, %cst_223 {dimension_numbers = #tpu.dot_dimension_numbers<[1], [0], [0], [1], [0, 0, 1, 1], [], []>} : vector<8x256xbf16>, vector<256x256xbf16>, vector<8x256xf32> -> vector<8x256xf32>
    %c2_224 = arith.constant 2 : index
    %c0_225 = arith.constant 0 : index
    %c0_226 = arith.constant 0 : index
    %404 = vector.load %arg29[%c2_224, %c0_225, %c0_226] : memref<3x1x256xf32, #tpu.memory_space<vmem>>, vector<1x1x256xf32>
    %405 = vector.shape_cast %404 : vector<1x1x256xf32> to vector<1x256xf32>
    %406 = vector.broadcast %405 : vector<1x256xf32> to vector<8x256xf32>
    %407 = arith.addf %403, %406 : vector<8x256xf32>
    %cst_227 = arith.constant 0.000000e+00 : f32
    %408 = vector.broadcast %cst_227 : f32 to vector<8x256xf32>
    %409 = arith.maximumf %407, %408 : vector<8x256xf32>
    %410 = arith.truncf %409 : vector<8x256xf32> to vector<8x256xbf16>
    %c2_228 = arith.constant 2 : index
    %c0_229 = arith.constant 0 : index
    %c0_230 = arith.constant 0 : index
    %411 = vector.load %arg30[%c2_228, %c0_229, %c0_230] : memref<3x256x256xbf16, #tpu.memory_space<vmem>>, vector<1x256x256xbf16>
    %412 = vector.shape_cast %411 : vector<1x256x256xbf16> to vector<256x256xbf16>
    %cst_231 = arith.constant dense<0.000000e+00> : vector<8x256xf32>
    %413 = tpu.matmul %410, %412, %cst_231 {dimension_numbers = #tpu.dot_dimension_numbers<[1], [0], [0], [1], [0, 0, 1, 1], [], []>} : vector<8x256xbf16>, vector<256x256xbf16>, vector<8x256xf32> -> vector<8x256xf32>
    %c2_232 = arith.constant 2 : index
    %c0_233 = arith.constant 0 : index
    %c0_234 = arith.constant 0 : index
    %414 = vector.load %arg31[%c2_232, %c0_233, %c0_234] : memref<3x1x256xf32, #tpu.memory_space<vmem>>, vector<1x1x256xf32>
    %415 = vector.shape_cast %414 : vector<1x1x256xf32> to vector<1x256xf32>
    %416 = vector.broadcast %415 : vector<1x256xf32> to vector<8x256xf32>
    %417 = arith.addf %413, %416 : vector<8x256xf32>
    %418 = arith.addf %368, %417 : vector<8x256xf32>
    %cst_235 = arith.constant 3.000000e+00 : f32
    %419 = vector.broadcast %cst_235 : f32 to vector<8x256xf32>
    %420 = arith.divf %418, %419 : vector<8x256xf32>
    %421 = tpu.concatenate %107, %101 in 0 : vector<8x256xf32>, vector<8x256xf32> -> vector<16x256xf32>
    %cst_236 = arith.constant 0.000000e+00 : f32
    %422 = vector.broadcast %cst_236 : f32 to vector<16x256xf32>
    %423 = arith.truncf %421 : vector<16x256xf32> to vector<16x256xbf16>
    %c0_237 = arith.constant 0 : index
    %c0_238 = arith.constant 0 : index
    %424 = vector.load %arg16[%c0_237, %c0_238] : memref<256x256xbf16, #tpu.memory_space<vmem>>, vector<256x256xbf16>
    %cst_239 = arith.constant dense<0.000000e+00> : vector<16x256xf32>
    %425 = tpu.matmul %423, %424, %cst_239 {dimension_numbers = #tpu.dot_dimension_numbers<[1], [0], [0], [1], [0, 0, 1, 1], [], []>} : vector<16x256xbf16>, vector<256x256xbf16>, vector<16x256xf32> -> vector<16x256xf32>
    %c0_240 = arith.constant 0 : index
    %c0_241 = arith.constant 0 : index
    %426 = vector.load %arg17[%c0_240, %c0_241] : memref<1x256xf32, #tpu.memory_space<vmem>>, vector<1x256xf32>
    %427 = vector.broadcast %426 : vector<1x256xf32> to vector<16x256xf32>
    %428 = arith.addf %425, %427 : vector<16x256xf32>
    %cst_242 = arith.constant 0.000000e+00 : f32
    %429 = vector.broadcast %cst_242 : f32 to vector<16x256xf32>
    %430 = arith.maximumf %428, %429 : vector<16x256xf32>
    %431 = arith.truncf %430 : vector<16x256xf32> to vector<16x256xbf16>
    %c0_243 = arith.constant 0 : index
    %c0_244 = arith.constant 0 : index
    %432 = vector.load %arg18[%c0_243, %c0_244] : memref<256x256xbf16, #tpu.memory_space<vmem>>, vector<256x256xbf16>
    %cst_245 = arith.constant dense<0.000000e+00> : vector<16x256xf32>
    %433 = tpu.matmul %431, %432, %cst_245 {dimension_numbers = #tpu.dot_dimension_numbers<[1], [0], [0], [1], [0, 0, 1, 1], [], []>} : vector<16x256xbf16>, vector<256x256xbf16>, vector<16x256xf32> -> vector<16x256xf32>
    %c0_246 = arith.constant 0 : index
    %c0_247 = arith.constant 0 : index
    %434 = vector.load %arg19[%c0_246, %c0_247] : memref<1x256xf32, #tpu.memory_space<vmem>>, vector<1x256xf32>
    %435 = vector.broadcast %434 : vector<1x256xf32> to vector<16x256xf32>
    %436 = arith.addf %433, %435 : vector<16x256xf32>
    %cst_248 = arith.constant 0.000000e+00 : f32
    %437 = vector.broadcast %cst_248 : f32 to vector<16x256xf32>
    %438 = arith.maximumf %436, %437 : vector<16x256xf32>
    %439 = vector.extract_strided_slice %438 {offsets = [0, 0], sizes = [8, 256], strides = [1, 1]} : vector<16x256xf32> to vector<8x256xf32>
    %440 = arith.truncf %439 : vector<8x256xf32> to vector<8x256xbf16>
    %441 = vector.extract_strided_slice %421 {offsets = [0, 0], sizes = [8, 256], strides = [1, 1]} : vector<16x256xf32> to vector<8x256xf32>
    %cst_249 = arith.constant dense<0.000000e+00> : vector<8x8xf32>
    %442 = tpu.matmul %440, %440, %cst_249 {dimension_numbers = #tpu.dot_dimension_numbers<[1], [1], [0], [0], [0, 0, 1, 0], [], []>} : vector<8x256xbf16>, vector<8x256xbf16>, vector<8x8xf32> -> vector<8x8xf32>
    %443 = vector.shape_cast %442 : vector<8x8xf32> to vector<1x8x8xf32>
    %cst_250 = arith.constant dense<0.000000e+00> : vector<1xf32>
    %444 = vector.multi_reduction <add>, %443, %cst_250 [1, 2] : vector<1x8x8xf32> to vector<1xf32>
    %445 = vector.shape_cast %444 : vector<1xf32> to vector<1x1x1xf32>
    %446 = vector.extract %445[0, 0, 0] : f32 from vector<1x1x1xf32>
    %cst_251 = arith.constant 6.400000e+01 : f32
    %447 = arith.divf %446, %cst_251 : f32
    %448 = vector.broadcast %447 : f32 to vector<8x8xf32>
    %449 = arith.cmpf ogt, %442, %448 : vector<8x8xf32>
    %450 = arith.extui %449 : vector<8x8xi1> to vector<8x8xi32>
    %451 = arith.sitofp %450 : vector<8x8xi32> to vector<8x8xf32>
    %452 = arith.addf %451, %114 : vector<8x8xf32>
    %453 = arith.truncf %452 : vector<8x8xf32> to vector<8x8xbf16>
    %454 = arith.truncf %441 : vector<8x256xf32> to vector<8x256xbf16>
    %cst_252 = arith.constant dense<0.000000e+00> : vector<8x256xf32>
    %455 = tpu.matmul %453, %454, %cst_252 {dimension_numbers = #tpu.dot_dimension_numbers<[1], [0], [0], [1], [0, 0, 1, 1], [], []>} : vector<8x8xbf16>, vector<8x256xbf16>, vector<8x256xf32> -> vector<8x256xf32>
    %456 = vector.extract_strided_slice %438 {offsets = [8, 0], sizes = [8, 256], strides = [1, 1]} : vector<16x256xf32> to vector<8x256xf32>
    %457 = arith.truncf %456 : vector<8x256xf32> to vector<8x256xbf16>
    %458 = vector.extract_strided_slice %421 {offsets = [8, 0], sizes = [8, 256], strides = [1, 1]} : vector<16x256xf32> to vector<8x256xf32>
    %cst_253 = arith.constant dense<0.000000e+00> : vector<8x8xf32>
    %459 = tpu.matmul %457, %457, %cst_253 {dimension_numbers = #tpu.dot_dimension_numbers<[1], [1], [0], [0], [0, 0, 1, 0], [], []>} : vector<8x256xbf16>, vector<8x256xbf16>, vector<8x8xf32> -> vector<8x8xf32>
    %460 = vector.shape_cast %459 : vector<8x8xf32> to vector<1x8x8xf32>
    %cst_254 = arith.constant dense<0.000000e+00> : vector<1xf32>
    %461 = vector.multi_reduction <add>, %460, %cst_254 [1, 2] : vector<1x8x8xf32> to vector<1xf32>
    %462 = vector.shape_cast %461 : vector<1xf32> to vector<1x1x1xf32>
    %463 = vector.extract %462[0, 0, 0] : f32 from vector<1x1x1xf32>
    %cst_255 = arith.constant 6.400000e+01 : f32
    %464 = arith.divf %463, %cst_255 : f32
    %465 = vector.broadcast %464 : f32 to vector<8x8xf32>
    %466 = arith.cmpf ogt, %459, %465 : vector<8x8xf32>
    %467 = arith.extui %466 : vector<8x8xi1> to vector<8x8xi32>
    %468 = arith.sitofp %467 : vector<8x8xi32> to vector<8x8xf32>
    %469 = arith.addf %468, %114 : vector<8x8xf32>
    %470 = arith.truncf %469 : vector<8x8xf32> to vector<8x8xbf16>
    %471 = arith.truncf %458 : vector<8x256xf32> to vector<8x256xbf16>
    %cst_256 = arith.constant dense<0.000000e+00> : vector<8x256xf32>
    %472 = tpu.matmul %470, %471, %cst_256 {dimension_numbers = #tpu.dot_dimension_numbers<[1], [0], [0], [1], [0, 0, 1, 1], [], []>} : vector<8x8xbf16>, vector<8x256xbf16>, vector<8x256xf32> -> vector<8x256xf32>
    %473 = tpu.concatenate %455, %472 in 0 : vector<8x256xf32>, vector<8x256xf32> -> vector<16x256xf32>
    %474 = arith.truncf %473 : vector<16x256xf32> to vector<16x256xbf16>
    %c0_257 = arith.constant 0 : index
    %c0_258 = arith.constant 0 : index
    %c0_259 = arith.constant 0 : index
    %475 = vector.load %arg20[%c0_257, %c0_258, %c0_259] : memref<3x256x256xbf16, #tpu.memory_space<vmem>>, vector<1x256x256xbf16>
    %476 = vector.shape_cast %475 : vector<1x256x256xbf16> to vector<256x256xbf16>
    %cst_260 = arith.constant dense<0.000000e+00> : vector<16x256xf32>
    %477 = tpu.matmul %474, %476, %cst_260 {dimension_numbers = #tpu.dot_dimension_numbers<[1], [0], [0], [1], [0, 0, 1, 1], [], []>} : vector<16x256xbf16>, vector<256x256xbf16>, vector<16x256xf32> -> vector<16x256xf32>
    %c0_261 = arith.constant 0 : index
    %c0_262 = arith.constant 0 : index
    %c0_263 = arith.constant 0 : index
    %478 = vector.load %arg21[%c0_261, %c0_262, %c0_263] : memref<3x1x256xf32, #tpu.memory_space<vmem>>, vector<1x1x256xf32>
    %479 = vector.shape_cast %478 : vector<1x1x256xf32> to vector<1x256xf32>
    %480 = vector.broadcast %479 : vector<1x256xf32> to vector<16x256xf32>
    %481 = arith.addf %477, %480 : vector<16x256xf32>
    %cst_264 = arith.constant 0.000000e+00 : f32
    %482 = vector.broadcast %cst_264 : f32 to vector<16x256xf32>
    %483 = arith.maximumf %481, %482 : vector<16x256xf32>
    %484 = arith.truncf %483 : vector<16x256xf32> to vector<16x256xbf16>
    %c0_265 = arith.constant 0 : index
    %c0_266 = arith.constant 0 : index
    %c0_267 = arith.constant 0 : index
    %485 = vector.load %arg22[%c0_265, %c0_266, %c0_267] : memref<3x256x256xbf16, #tpu.memory_space<vmem>>, vector<1x256x256xbf16>
    %486 = vector.shape_cast %485 : vector<1x256x256xbf16> to vector<256x256xbf16>
    %cst_268 = arith.constant dense<0.000000e+00> : vector<16x256xf32>
    %487 = tpu.matmul %484, %486, %cst_268 {dimension_numbers = #tpu.dot_dimension_numbers<[1], [0], [0], [1], [0, 0, 1, 1], [], []>} : vector<16x256xbf16>, vector<256x256xbf16>, vector<16x256xf32> -> vector<16x256xf32>
    %c0_269 = arith.constant 0 : index
    %c0_270 = arith.constant 0 : index
    %c0_271 = arith.constant 0 : index
    %488 = vector.load %arg23[%c0_269, %c0_270, %c0_271] : memref<3x1x256xf32, #tpu.memory_space<vmem>>, vector<1x1x256xf32>
    %489 = vector.shape_cast %488 : vector<1x1x256xf32> to vector<1x256xf32>
    %490 = vector.broadcast %489 : vector<1x256xf32> to vector<16x256xf32>
    %491 = arith.addf %487, %490 : vector<16x256xf32>
    %492 = arith.addf %422, %491 : vector<16x256xf32>
    %493 = arith.truncf %491 : vector<16x256xf32> to vector<16x256xbf16>
    %c0_272 = arith.constant 0 : index
    %c0_273 = arith.constant 0 : index
    %494 = vector.load %arg16[%c0_272, %c0_273] : memref<256x256xbf16, #tpu.memory_space<vmem>>, vector<256x256xbf16>
    %cst_274 = arith.constant dense<0.000000e+00> : vector<16x256xf32>
    %495 = tpu.matmul %493, %494, %cst_274 {dimension_numbers = #tpu.dot_dimension_numbers<[1], [0], [0], [1], [0, 0, 1, 1], [], []>} : vector<16x256xbf16>, vector<256x256xbf16>, vector<16x256xf32> -> vector<16x256xf32>
    %c0_275 = arith.constant 0 : index
    %c0_276 = arith.constant 0 : index
    %496 = vector.load %arg17[%c0_275, %c0_276] : memref<1x256xf32, #tpu.memory_space<vmem>>, vector<1x256xf32>
    %497 = vector.broadcast %496 : vector<1x256xf32> to vector<16x256xf32>
    %498 = arith.addf %495, %497 : vector<16x256xf32>
    %cst_277 = arith.constant 0.000000e+00 : f32
    %499 = vector.broadcast %cst_277 : f32 to vector<16x256xf32>
    %500 = arith.maximumf %498, %499 : vector<16x256xf32>
    %501 = arith.truncf %500 : vector<16x256xf32> to vector<16x256xbf16>
    %c0_278 = arith.constant 0 : index
    %c0_279 = arith.constant 0 : index
    %502 = vector.load %arg18[%c0_278, %c0_279] : memref<256x256xbf16, #tpu.memory_space<vmem>>, vector<256x256xbf16>
    %cst_280 = arith.constant dense<0.000000e+00> : vector<16x256xf32>
    %503 = tpu.matmul %501, %502, %cst_280 {dimension_numbers = #tpu.dot_dimension_numbers<[1], [0], [0], [1], [0, 0, 1, 1], [], []>} : vector<16x256xbf16>, vector<256x256xbf16>, vector<16x256xf32> -> vector<16x256xf32>
    %c0_281 = arith.constant 0 : index
    %c0_282 = arith.constant 0 : index
    %504 = vector.load %arg19[%c0_281, %c0_282] : memref<1x256xf32, #tpu.memory_space<vmem>>, vector<1x256xf32>
    %505 = vector.broadcast %504 : vector<1x256xf32> to vector<16x256xf32>
    %506 = arith.addf %503, %505 : vector<16x256xf32>
    %cst_283 = arith.constant 0.000000e+00 : f32
    %507 = vector.broadcast %cst_283 : f32 to vector<16x256xf32>
    %508 = arith.maximumf %506, %507 : vector<16x256xf32>
    %509 = vector.extract_strided_slice %508 {offsets = [0, 0], sizes = [8, 256], strides = [1, 1]} : vector<16x256xf32> to vector<8x256xf32>
    %510 = arith.truncf %509 : vector<8x256xf32> to vector<8x256xbf16>
    %511 = vector.extract_strided_slice %491 {offsets = [0, 0], sizes = [8, 256], strides = [1, 1]} : vector<16x256xf32> to vector<8x256xf32>
    %cst_284 = arith.constant dense<0.000000e+00> : vector<8x8xf32>
    %512 = tpu.matmul %510, %510, %cst_284 {dimension_numbers = #tpu.dot_dimension_numbers<[1], [1], [0], [0], [0, 0, 1, 0], [], []>} : vector<8x256xbf16>, vector<8x256xbf16>, vector<8x8xf32> -> vector<8x8xf32>
    %513 = vector.shape_cast %512 : vector<8x8xf32> to vector<1x8x8xf32>
    %cst_285 = arith.constant dense<0.000000e+00> : vector<1xf32>
    %514 = vector.multi_reduction <add>, %513, %cst_285 [1, 2] : vector<1x8x8xf32> to vector<1xf32>
    %515 = vector.shape_cast %514 : vector<1xf32> to vector<1x1x1xf32>
    %516 = vector.extract %515[0, 0, 0] : f32 from vector<1x1x1xf32>
    %cst_286 = arith.constant 6.400000e+01 : f32
    %517 = arith.divf %516, %cst_286 : f32
    %518 = vector.broadcast %517 : f32 to vector<8x8xf32>
    %519 = arith.cmpf ogt, %512, %518 : vector<8x8xf32>
    %520 = arith.extui %519 : vector<8x8xi1> to vector<8x8xi32>
    %521 = arith.sitofp %520 : vector<8x8xi32> to vector<8x8xf32>
    %522 = arith.addf %521, %114 : vector<8x8xf32>
    %523 = arith.truncf %522 : vector<8x8xf32> to vector<8x8xbf16>
    %524 = arith.truncf %511 : vector<8x256xf32> to vector<8x256xbf16>
    %cst_287 = arith.constant dense<0.000000e+00> : vector<8x256xf32>
    %525 = tpu.matmul %523, %524, %cst_287 {dimension_numbers = #tpu.dot_dimension_numbers<[1], [0], [0], [1], [0, 0, 1, 1], [], []>} : vector<8x8xbf16>, vector<8x256xbf16>, vector<8x256xf32> -> vector<8x256xf32>
    %526 = vector.extract_strided_slice %508 {offsets = [8, 0], sizes = [8, 256], strides = [1, 1]} : vector<16x256xf32> to vector<8x256xf32>
    %527 = arith.truncf %526 : vector<8x256xf32> to vector<8x256xbf16>
    %528 = vector.extract_strided_slice %491 {offsets = [8, 0], sizes = [8, 256], strides = [1, 1]} : vector<16x256xf32> to vector<8x256xf32>
    %cst_288 = arith.constant dense<0.000000e+00> : vector<8x8xf32>
    %529 = tpu.matmul %527, %527, %cst_288 {dimension_numbers = #tpu.dot_dimension_numbers<[1], [1], [0], [0], [0, 0, 1, 0], [], []>} : vector<8x256xbf16>, vector<8x256xbf16>, vector<8x8xf32> -> vector<8x8xf32>
    %530 = vector.shape_cast %529 : vector<8x8xf32> to vector<1x8x8xf32>
    %cst_289 = arith.constant dense<0.000000e+00> : vector<1xf32>
    %531 = vector.multi_reduction <add>, %530, %cst_289 [1, 2] : vector<1x8x8xf32> to vector<1xf32>
    %532 = vector.shape_cast %531 : vector<1xf32> to vector<1x1x1xf32>
    %533 = vector.extract %532[0, 0, 0] : f32 from vector<1x1x1xf32>
    %cst_290 = arith.constant 6.400000e+01 : f32
    %534 = arith.divf %533, %cst_290 : f32
    %535 = vector.broadcast %534 : f32 to vector<8x8xf32>
    %536 = arith.cmpf ogt, %529, %535 : vector<8x8xf32>
    %537 = arith.extui %536 : vector<8x8xi1> to vector<8x8xi32>
    %538 = arith.sitofp %537 : vector<8x8xi32> to vector<8x8xf32>
    %539 = arith.addf %538, %114 : vector<8x8xf32>
    %540 = arith.truncf %539 : vector<8x8xf32> to vector<8x8xbf16>
    %541 = arith.truncf %528 : vector<8x256xf32> to vector<8x256xbf16>
    %cst_291 = arith.constant dense<0.000000e+00> : vector<8x256xf32>
    %542 = tpu.matmul %540, %541, %cst_291 {dimension_numbers = #tpu.dot_dimension_numbers<[1], [0], [0], [1], [0, 0, 1, 1], [], []>} : vector<8x8xbf16>, vector<8x256xbf16>, vector<8x256xf32> -> vector<8x256xf32>
    %543 = tpu.concatenate %525, %542 in 0 : vector<8x256xf32>, vector<8x256xf32> -> vector<16x256xf32>
    %544 = arith.truncf %543 : vector<16x256xf32> to vector<16x256xbf16>
    %c1_292 = arith.constant 1 : index
    %c0_293 = arith.constant 0 : index
    %c0_294 = arith.constant 0 : index
    %545 = vector.load %arg20[%c1_292, %c0_293, %c0_294] : memref<3x256x256xbf16, #tpu.memory_space<vmem>>, vector<1x256x256xbf16>
    %546 = vector.shape_cast %545 : vector<1x256x256xbf16> to vector<256x256xbf16>
    %cst_295 = arith.constant dense<0.000000e+00> : vector<16x256xf32>
    %547 = tpu.matmul %544, %546, %cst_295 {dimension_numbers = #tpu.dot_dimension_numbers<[1], [0], [0], [1], [0, 0, 1, 1], [], []>} : vector<16x256xbf16>, vector<256x256xbf16>, vector<16x256xf32> -> vector<16x256xf32>
    %c1_296 = arith.constant 1 : index
    %c0_297 = arith.constant 0 : index
    %c0_298 = arith.constant 0 : index
    %548 = vector.load %arg21[%c1_296, %c0_297, %c0_298] : memref<3x1x256xf32, #tpu.memory_space<vmem>>, vector<1x1x256xf32>
    %549 = vector.shape_cast %548 : vector<1x1x256xf32> to vector<1x256xf32>
    %550 = vector.broadcast %549 : vector<1x256xf32> to vector<16x256xf32>
    %551 = arith.addf %547, %550 : vector<16x256xf32>
    %cst_299 = arith.constant 0.000000e+00 : f32
    %552 = vector.broadcast %cst_299 : f32 to vector<16x256xf32>
    %553 = arith.maximumf %551, %552 : vector<16x256xf32>
    %554 = arith.truncf %553 : vector<16x256xf32> to vector<16x256xbf16>
    %c1_300 = arith.constant 1 : index
    %c0_301 = arith.constant 0 : index
    %c0_302 = arith.constant 0 : index
    %555 = vector.load %arg22[%c1_300, %c0_301, %c0_302] : memref<3x256x256xbf16, #tpu.memory_space<vmem>>, vector<1x256x256xbf16>
    %556 = vector.shape_cast %555 : vector<1x256x256xbf16> to vector<256x256xbf16>
    %cst_303 = arith.constant dense<0.000000e+00> : vector<16x256xf32>
    %557 = tpu.matmul %554, %556, %cst_303 {dimension_numbers = #tpu.dot_dimension_numbers<[1], [0], [0], [1], [0, 0, 1, 1], [], []>} : vector<16x256xbf16>, vector<256x256xbf16>, vector<16x256xf32> -> vector<16x256xf32>
    %c1_304 = arith.constant 1 : index
    %c0_305 = arith.constant 0 : index
    %c0_306 = arith.constant 0 : index
    %558 = vector.load %arg23[%c1_304, %c0_305, %c0_306] : memref<3x1x256xf32, #tpu.memory_space<vmem>>, vector<1x1x256xf32>
    %559 = vector.shape_cast %558 : vector<1x1x256xf32> to vector<1x256xf32>
    %560 = vector.broadcast %559 : vector<1x256xf32> to vector<16x256xf32>
    %561 = arith.addf %557, %560 : vector<16x256xf32>
    %562 = arith.addf %492, %561 : vector<16x256xf32>
    %563 = arith.truncf %561 : vector<16x256xf32> to vector<16x256xbf16>
    %c0_307 = arith.constant 0 : index
    %c0_308 = arith.constant 0 : index
    %564 = vector.load %arg16[%c0_307, %c0_308] : memref<256x256xbf16, #tpu.memory_space<vmem>>, vector<256x256xbf16>
    %cst_309 = arith.constant dense<0.000000e+00> : vector<16x256xf32>
    %565 = tpu.matmul %563, %564, %cst_309 {dimension_numbers = #tpu.dot_dimension_numbers<[1], [0], [0], [1], [0, 0, 1, 1], [], []>} : vector<16x256xbf16>, vector<256x256xbf16>, vector<16x256xf32> -> vector<16x256xf32>
    %c0_310 = arith.constant 0 : index
    %c0_311 = arith.constant 0 : index
    %566 = vector.load %arg17[%c0_310, %c0_311] : memref<1x256xf32, #tpu.memory_space<vmem>>, vector<1x256xf32>
    %567 = vector.broadcast %566 : vector<1x256xf32> to vector<16x256xf32>
    %568 = arith.addf %565, %567 : vector<16x256xf32>
    %cst_312 = arith.constant 0.000000e+00 : f32
    %569 = vector.broadcast %cst_312 : f32 to vector<16x256xf32>
    %570 = arith.maximumf %568, %569 : vector<16x256xf32>
    %571 = arith.truncf %570 : vector<16x256xf32> to vector<16x256xbf16>
    %c0_313 = arith.constant 0 : index
    %c0_314 = arith.constant 0 : index
    %572 = vector.load %arg18[%c0_313, %c0_314] : memref<256x256xbf16, #tpu.memory_space<vmem>>, vector<256x256xbf16>
    %cst_315 = arith.constant dense<0.000000e+00> : vector<16x256xf32>
    %573 = tpu.matmul %571, %572, %cst_315 {dimension_numbers = #tpu.dot_dimension_numbers<[1], [0], [0], [1], [0, 0, 1, 1], [], []>} : vector<16x256xbf16>, vector<256x256xbf16>, vector<16x256xf32> -> vector<16x256xf32>
    %c0_316 = arith.constant 0 : index
    %c0_317 = arith.constant 0 : index
    %574 = vector.load %arg19[%c0_316, %c0_317] : memref<1x256xf32, #tpu.memory_space<vmem>>, vector<1x256xf32>
    %575 = vector.broadcast %574 : vector<1x256xf32> to vector<16x256xf32>
    %576 = arith.addf %573, %575 : vector<16x256xf32>
    %cst_318 = arith.constant 0.000000e+00 : f32
    %577 = vector.broadcast %cst_318 : f32 to vector<16x256xf32>
    %578 = arith.maximumf %576, %577 : vector<16x256xf32>
    %579 = vector.extract_strided_slice %578 {offsets = [0, 0], sizes = [8, 256], strides = [1, 1]} : vector<16x256xf32> to vector<8x256xf32>
    %580 = arith.truncf %579 : vector<8x256xf32> to vector<8x256xbf16>
    %581 = vector.extract_strided_slice %561 {offsets = [0, 0], sizes = [8, 256], strides = [1, 1]} : vector<16x256xf32> to vector<8x256xf32>
    %cst_319 = arith.constant dense<0.000000e+00> : vector<8x8xf32>
    %582 = tpu.matmul %580, %580, %cst_319 {dimension_numbers = #tpu.dot_dimension_numbers<[1], [1], [0], [0], [0, 0, 1, 0], [], []>} : vector<8x256xbf16>, vector<8x256xbf16>, vector<8x8xf32> -> vector<8x8xf32>
    %583 = vector.shape_cast %582 : vector<8x8xf32> to vector<1x8x8xf32>
    %cst_320 = arith.constant dense<0.000000e+00> : vector<1xf32>
    %584 = vector.multi_reduction <add>, %583, %cst_320 [1, 2] : vector<1x8x8xf32> to vector<1xf32>
    %585 = vector.shape_cast %584 : vector<1xf32> to vector<1x1x1xf32>
    %586 = vector.extract %585[0, 0, 0] : f32 from vector<1x1x1xf32>
    %cst_321 = arith.constant 6.400000e+01 : f32
    %587 = arith.divf %586, %cst_321 : f32
    %588 = vector.broadcast %587 : f32 to vector<8x8xf32>
    %589 = arith.cmpf ogt, %582, %588 : vector<8x8xf32>
    %590 = arith.extui %589 : vector<8x8xi1> to vector<8x8xi32>
    %591 = arith.sitofp %590 : vector<8x8xi32> to vector<8x8xf32>
    %592 = arith.addf %591, %114 : vector<8x8xf32>
    %593 = arith.truncf %592 : vector<8x8xf32> to vector<8x8xbf16>
    %594 = arith.truncf %581 : vector<8x256xf32> to vector<8x256xbf16>
    %cst_322 = arith.constant dense<0.000000e+00> : vector<8x256xf32>
    %595 = tpu.matmul %593, %594, %cst_322 {dimension_numbers = #tpu.dot_dimension_numbers<[1], [0], [0], [1], [0, 0, 1, 1], [], []>} : vector<8x8xbf16>, vector<8x256xbf16>, vector<8x256xf32> -> vector<8x256xf32>
    %596 = vector.extract_strided_slice %578 {offsets = [8, 0], sizes = [8, 256], strides = [1, 1]} : vector<16x256xf32> to vector<8x256xf32>
    %597 = arith.truncf %596 : vector<8x256xf32> to vector<8x256xbf16>
    %598 = vector.extract_strided_slice %561 {offsets = [8, 0], sizes = [8, 256], strides = [1, 1]} : vector<16x256xf32> to vector<8x256xf32>
    %cst_323 = arith.constant dense<0.000000e+00> : vector<8x8xf32>
    %599 = tpu.matmul %597, %597, %cst_323 {dimension_numbers = #tpu.dot_dimension_numbers<[1], [1], [0], [0], [0, 0, 1, 0], [], []>} : vector<8x256xbf16>, vector<8x256xbf16>, vector<8x8xf32> -> vector<8x8xf32>
    %600 = vector.shape_cast %599 : vector<8x8xf32> to vector<1x8x8xf32>
    %cst_324 = arith.constant dense<0.000000e+00> : vector<1xf32>
    %601 = vector.multi_reduction <add>, %600, %cst_324 [1, 2] : vector<1x8x8xf32> to vector<1xf32>
    %602 = vector.shape_cast %601 : vector<1xf32> to vector<1x1x1xf32>
    %603 = vector.extract %602[0, 0, 0] : f32 from vector<1x1x1xf32>
    %cst_325 = arith.constant 6.400000e+01 : f32
    %604 = arith.divf %603, %cst_325 : f32
    %605 = vector.broadcast %604 : f32 to vector<8x8xf32>
    %606 = arith.cmpf ogt, %599, %605 : vector<8x8xf32>
    %607 = arith.extui %606 : vector<8x8xi1> to vector<8x8xi32>
    %608 = arith.sitofp %607 : vector<8x8xi32> to vector<8x8xf32>
    %609 = arith.addf %608, %114 : vector<8x8xf32>
    %610 = arith.truncf %609 : vector<8x8xf32> to vector<8x8xbf16>
    %611 = arith.truncf %598 : vector<8x256xf32> to vector<8x256xbf16>
    %cst_326 = arith.constant dense<0.000000e+00> : vector<8x256xf32>
    %612 = tpu.matmul %610, %611, %cst_326 {dimension_numbers = #tpu.dot_dimension_numbers<[1], [0], [0], [1], [0, 0, 1, 1], [], []>} : vector<8x8xbf16>, vector<8x256xbf16>, vector<8x256xf32> -> vector<8x256xf32>
    %613 = tpu.concatenate %595, %612 in 0 : vector<8x256xf32>, vector<8x256xf32> -> vector<16x256xf32>
    %614 = arith.truncf %613 : vector<16x256xf32> to vector<16x256xbf16>
    %c2_327 = arith.constant 2 : index
    %c0_328 = arith.constant 0 : index
    %c0_329 = arith.constant 0 : index
    %615 = vector.load %arg20[%c2_327, %c0_328, %c0_329] : memref<3x256x256xbf16, #tpu.memory_space<vmem>>, vector<1x256x256xbf16>
    %616 = vector.shape_cast %615 : vector<1x256x256xbf16> to vector<256x256xbf16>
    %cst_330 = arith.constant dense<0.000000e+00> : vector<16x256xf32>
    %617 = tpu.matmul %614, %616, %cst_330 {dimension_numbers = #tpu.dot_dimension_numbers<[1], [0], [0], [1], [0, 0, 1, 1], [], []>} : vector<16x256xbf16>, vector<256x256xbf16>, vector<16x256xf32> -> vector<16x256xf32>
    %c2_331 = arith.constant 2 : index
    %c0_332 = arith.constant 0 : index
    %c0_333 = arith.constant 0 : index
    %618 = vector.load %arg21[%c2_331, %c0_332, %c0_333] : memref<3x1x256xf32, #tpu.memory_space<vmem>>, vector<1x1x256xf32>
    %619 = vector.shape_cast %618 : vector<1x1x256xf32> to vector<1x256xf32>
    %620 = vector.broadcast %619 : vector<1x256xf32> to vector<16x256xf32>
    %621 = arith.addf %617, %620 : vector<16x256xf32>
    %cst_334 = arith.constant 0.000000e+00 : f32
    %622 = vector.broadcast %cst_334 : f32 to vector<16x256xf32>
    %623 = arith.maximumf %621, %622 : vector<16x256xf32>
    %624 = arith.truncf %623 : vector<16x256xf32> to vector<16x256xbf16>
    %c2_335 = arith.constant 2 : index
    %c0_336 = arith.constant 0 : index
    %c0_337 = arith.constant 0 : index
    %625 = vector.load %arg22[%c2_335, %c0_336, %c0_337] : memref<3x256x256xbf16, #tpu.memory_space<vmem>>, vector<1x256x256xbf16>
    %626 = vector.shape_cast %625 : vector<1x256x256xbf16> to vector<256x256xbf16>
    %cst_338 = arith.constant dense<0.000000e+00> : vector<16x256xf32>
    %627 = tpu.matmul %624, %626, %cst_338 {dimension_numbers = #tpu.dot_dimension_numbers<[1], [0], [0], [1], [0, 0, 1, 1], [], []>} : vector<16x256xbf16>, vector<256x256xbf16>, vector<16x256xf32> -> vector<16x256xf32>
    %c2_339 = arith.constant 2 : index
    %c0_340 = arith.constant 0 : index
    %c0_341 = arith.constant 0 : index
    %628 = vector.load %arg23[%c2_339, %c0_340, %c0_341] : memref<3x1x256xf32, #tpu.memory_space<vmem>>, vector<1x1x256xf32>
    %629 = vector.shape_cast %628 : vector<1x1x256xf32> to vector<1x256xf32>
    %630 = vector.broadcast %629 : vector<1x256xf32> to vector<16x256xf32>
    %631 = arith.addf %627, %630 : vector<16x256xf32>
    %632 = arith.addf %562, %631 : vector<16x256xf32>
    %cst_342 = arith.constant 3.000000e+00 : f32
    %633 = vector.broadcast %cst_342 : f32 to vector<16x256xf32>
    %634 = arith.divf %632, %633 : vector<16x256xf32>
    %635 = vector.extract_strided_slice %634 {offsets = [0, 0], sizes = [8, 256], strides = [1, 1]} : vector<16x256xf32> to vector<8x256xf32>
    %636 = vector.extract_strided_slice %634 {offsets = [8, 0], sizes = [8, 256], strides = [1, 1]} : vector<16x256xf32> to vector<8x256xf32>
    %637 = arith.subf %267, %636 : vector<8x256xf32>
    %638 = arith.mulf %637, %637 : vector<8x256xf32>
    %639 = vector.shape_cast %638 : vector<8x256xf32> to vector<1x8x256xf32>
    %cst_343 = arith.constant dense<0.000000e+00> : vector<1xf32>
    %640 = vector.multi_reduction <add>, %639, %cst_343 [1, 2] : vector<1x8x256xf32> to vector<1xf32>
    %641 = vector.shape_cast %640 : vector<1xf32> to vector<1x1x1xf32>
    %642 = vector.extract %641[0, 0, 0] : f32 from vector<1x1x1xf32>
    %cst_344 = arith.constant 2.048000e+03 : f32
    %643 = arith.divf %642, %cst_344 : f32
    %c0_345 = arith.constant 0 : index
    %644 = memref.load %arg33[%c0_345] : memref<3xf32, #tpu.memory_space<smem>>
    memref.store %643, %arg33[%c0_345] : memref<3xf32, #tpu.memory_space<smem>>
    %645 = arith.subf %635, %636 : vector<8x256xf32>
    %646 = arith.mulf %645, %645 : vector<8x256xf32>
    %647 = vector.shape_cast %646 : vector<8x256xf32> to vector<1x8x256xf32>
    %cst_346 = arith.constant dense<0.000000e+00> : vector<1xf32>
    %648 = vector.multi_reduction <add>, %647, %cst_346 [1, 2] : vector<1x8x256xf32> to vector<1xf32>
    %649 = vector.shape_cast %648 : vector<1xf32> to vector<1x1x1xf32>
    %650 = vector.extract %649[0, 0, 0] : f32 from vector<1x1x1xf32>
    %cst_347 = arith.constant 2.048000e+03 : f32
    %651 = arith.divf %650, %cst_347 : f32
    %c1_348 = arith.constant 1 : index
    %652 = memref.load %arg33[%c1_348] : memref<3xf32, #tpu.memory_space<smem>>
    memref.store %651, %arg33[%c1_348] : memref<3xf32, #tpu.memory_space<smem>>
    %653 = arith.subf %420, %636 : vector<8x256xf32>
    %654 = arith.mulf %653, %653 : vector<8x256xf32>
    %655 = vector.shape_cast %654 : vector<8x256xf32> to vector<1x8x256xf32>
    %cst_349 = arith.constant dense<0.000000e+00> : vector<1xf32>
    %656 = vector.multi_reduction <add>, %655, %cst_349 [1, 2] : vector<1x8x256xf32> to vector<1xf32>
    %657 = vector.shape_cast %656 : vector<1xf32> to vector<1x1x1xf32>
    %658 = vector.extract %657[0, 0, 0] : f32 from vector<1x1x1xf32>
    %cst_350 = arith.constant 2.048000e+03 : f32
    %659 = arith.divf %658, %cst_350 : f32
    %c2_351 = arith.constant 2 : index
    %660 = memref.load %arg33[%c2_351] : memref<3xf32, #tpu.memory_space<smem>>
    memref.store %659, %arg33[%c2_351] : memref<3xf32, #tpu.memory_space<smem>>
    return
  }
}

</mosaic_0001>

<llo_original>
// kernel: graph_cross_sample_debias_forward.1
$region0: #{graph_cross_sample_debias_forward.1}
  #allocation0 [shape = 'u32[]', space=smem, size = 0x4, offset = 0x4, fixed_abs, tag = 'smem constant byte address 0x4 - core index']
  #allocation1 [shape = 'u32[144,128]{1,0:T(1,128)}', space=vmem, size = 0x12000, scoped, tag = 'internal scratch']
  #allocation2 [shape = 'f32[1,1]{1,0:T(1,128)S(1)}', space=vmem, size = 0x200, scoped, tag = 'scoped memory for graph_cross_sample_debias_forward.1']
  %s0 = inlined_call_operand.smem [shape: u32[34], index: -1, kind: input, shape index: {}]
  %s1 = sld [smem:[%s0]]
  %s2 = scalar_lea.smem %s0, 1
  %s3 = sld [smem:[%s2]]
  %s4 = scalar_lea.smem %s0, 2
  %s5 = sld [smem:[%s4]]
  %s6 = scalar_lea.smem %s0, 3
  %s7 = sld [smem:[%s6]]
  %s8 = scalar_lea.smem %s0, 4
  %s9 = sld [smem:[%s8]]
  %s10 = scalar_lea.smem %s0, 5
  %s11 = sld [smem:[%s10]]
  %s12 = scalar_lea.smem %s0, 6
  %s13 = sld [smem:[%s12]]
  %s14 = scalar_lea.smem %s0, 7
  %s15 = sld [smem:[%s14]]
  %s16 = scalar_lea.smem %s0, 8
  %s17 = sld [smem:[%s16]]
  %s18 = scalar_lea.smem %s0, 9
  %s19 = sld [smem:[%s18]]
  %s20 = scalar_lea.smem %s0, 10
  %s21 = sld [smem:[%s20]]
  %s22 = scalar_lea.smem %s0, 11
  %s23 = sld [smem:[%s22]]
  %s24 = scalar_lea.smem %s0, 12
  %s25 = sld [smem:[%s24]]
  %s26 = scalar_lea.smem %s0, 13
  %s27 = sld [smem:[%s26]]
  %s28 = scalar_lea.smem %s0, 14
  %s29 = sld [smem:[%s28]]
  %s30 = scalar_lea.smem %s0, 15
  %s31 = sld [smem:[%s30]]
  %s32 = scalar_lea.smem %s0, 16
  %s33 = sld [smem:[%s32]]
  %s34 = scalar_lea.smem %s0, 17
  %s35 = sld [smem:[%s34]]
  %s36 = scalar_lea.smem %s0, 18
  %s37 = sld [smem:[%s36]]
  %s38 = scalar_lea.smem %s0, 19
  %s39 = sld [smem:[%s38]]
  %s40 = scalar_lea.smem %s0, 20
  %s41 = sld [smem:[%s40]]
  %s42 = scalar_lea.smem %s0, 21
  %s43 = sld [smem:[%s42]]
  %s44 = scalar_lea.smem %s0, 22
  %s45 = sld [smem:[%s44]]
  %s46 = scalar_lea.smem %s0, 23
  %s47 = sld [smem:[%s46]]
  %s48 = scalar_lea.smem %s0, 24
  %s49 = sld [smem:[%s48]]
  %s50 = scalar_lea.smem %s0, 25
  %s51 = sld [smem:[%s50]]
  %s52 = scalar_lea.smem %s0, 26
  %s53 = sld [smem:[%s52]]
  %s54 = scalar_lea.smem %s0, 27
  %s55 = sld [smem:[%s54]]
  %s56 = scalar_lea.smem %s0, 28
  %s57 = sld [smem:[%s56]]
  %s58 = scalar_lea.smem %s0, 29
  %s59 = sld [smem:[%s58]]
  %s60 = scalar_lea.smem %s0, 30
  %s61 = sld [smem:[%s60]]
  %s62 = scalar_lea.smem %s0, 31
  %s63 = sld [smem:[%s62]]
  %s64 = scalar_lea.smem %s0, 32
  %s65 = sld [smem:[%s64]]
  %s66 = scalar_lea.smem %s0, 33
  %s67 = sld [smem:[%s66]]
  %68 = xla_tuple %s65, %s67
  %s69 = sld [smem:[#allocation0]]
  $region230: #{graph_cross_sample_debias_forward.1} parent=0
    _
  %s71 = ssub.s32 1, %s69
  %s72 = scalar_select 0, %s71, %s69
  %v73 = vstv %s15
  %74 = vst [vmem:[#allocation2] sm:$0x1] %v73
  $region1: #{graph_cross_sample_debias_forward.1} parent=0
    #allocation3 [shape = 'u8[40960]{0}', space=vmem, size = 0xa000, scoped, tag = 'input window, operand 1, single buffered']
    #allocation4 [shape = 's32[1]{0}', space=sflag, size = 0x4, scoped, tag = 'scoped memory for graph_cross_sample_debias_forward.1']
    #allocation5 [shape = 's32[1]{0}', space=sflag, size = 0x4, scoped, tag = 'scoped memory for graph_cross_sample_debias_forward.1']
    #allocation6 [shape = 'u8[262144]{0}', space=vmem, size = 0x40000, scoped, tag = 'input window, operand 4, single buffered']
    #allocation7 [shape = 's32[1]{0}', space=sflag, size = 0x4, scoped, tag = 'scoped memory for graph_cross_sample_debias_forward.1']
    #allocation8 [shape = 'u8[1024]{0}', space=vmem, size = 0x400, scoped, tag = 'input window, operand 5, single buffered']
    #allocation9 [shape = 'u8[1024]{0}', space=vmem, size = 0x400, scoped, tag = 'input window, operand 6, single buffered']
    #allocation10 [shape = 's32[1]{0}', space=sflag, size = 0x4, scoped, tag = 'scoped memory for graph_cross_sample_debias_forward.1']
    #allocation11 [shape = 'u8[131072]{0}', space=vmem, size = 0x20000, scoped, tag = 'input window, operand 8, single buffered']
    #allocation12 [shape = 'u8[131072]{0}', space=vmem, size = 0x20000, scoped, tag = 'input window, operand 10, single buffered']
    #allocation13 [shape = 's32[1]{0}', space=sflag, size = 0x4, scoped, tag = 'scoped memory for graph_cross_sample_debias_forward.1']
    #allocation14 [shape = 'u8[393216]{0}', space=vmem, size = 0x60000, scoped, tag = 'input window, operand 12, single buffered']
    #allocation15 [shape = 'u8[393216]{0}', space=vmem, size = 0x60000, scoped, tag = 'input window, operand 14, single buffered']
    #allocation16 [shape = 's32[1]{0}', space=sflag, size = 0x4, scoped, tag = 'scoped memory for graph_cross_sample_debias_forward.1']
    #allocation17 [shape = 'u8[131072]{0}', space=vmem, size = 0x20000, scoped, tag = 'input window, operand 16, single buffered']
    #allocation18 [shape = 'u8[1024]{0}', space=vmem, size = 0x400, scoped, tag = 'input window, operand 17, single buffered']
    #allocation19 [shape = 's32[1]{0}', space=sflag, size = 0x4, scoped, tag = 'scoped memory for graph_cross_sample_debias_forward.1']
    #allocation20 [shape = 'u8[131072]{0}', space=vmem, size = 0x20000, scoped, tag = 'input window, operand 18, single buffered']
    #allocation21 [shape = 'u8[1024]{0}', space=vmem, size = 0x400, scoped, tag = 'input window, operand 19, single buffered']
    #allocation22 [shape = 's32[1]{0}', space=sflag, size = 0x4, scoped, tag = 'scoped memory for graph_cross_sample_debias_forward.1']
    #allocation23 [shape = 'u8[393216]{0}', space=vmem, size = 0x60000, scoped, tag = 'input window, operand 20, single buffered']
    #allocation24 [shape = 'u8[393216]{0}', space=vmem, size = 0x60000, scoped, tag = 'input window, operand 22, single buffered']
    #allocation25 [shape = 's32[1]{0}', space=sflag, size = 0x4, scoped, tag = 'scoped memory for graph_cross_sample_debias_forward.1']
    #allocation26 [shape = 'u8[131072]{0}', space=vmem, size = 0x20000, scoped, tag = 'input window, operand 24, single buffered']
    #allocation27 [shape = 'u8[1024]{0}', space=vmem, size = 0x400, scoped, tag = 'input window, operand 25, single buffered']
    #allocation28 [shape = 's32[1]{0}', space=sflag, size = 0x4, scoped, tag = 'scoped memory for graph_cross_sample_debias_forward.1']
    #allocation29 [shape = 'u8[131072]{0}', space=vmem, size = 0x20000, scoped, tag = 'input window, operand 26, single buffered']
    #allocation30 [shape = 'u8[1024]{0}', space=vmem, size = 0x400, scoped, tag = 'input window, operand 27, single buffered']
    #allocation31 [shape = 's32[1]{0}', space=sflag, size = 0x4, scoped, tag = 'scoped memory for graph_cross_sample_debias_forward.1']
    #allocation32 [shape = 'u8[393216]{0}', space=vmem, size = 0x60000, scoped, tag = 'input window, operand 28, single buffered']
    #allocation33 [shape = 'u8[393216]{0}', space=vmem, size = 0x60000, scoped, tag = 'input window, operand 30, single buffered']
    #allocation34 [shape = 's32[1]{0}', space=sflag, size = 0x4, scoped, tag = 'scoped memory for graph_cross_sample_debias_forward.1']
    #allocation35 [shape = 'u8[3072]{0}', space=vmem, size = 0xc00, scoped, tag = 'input window, operand 31, single buffered']
    #allocation36 [shape = 'u8[512]{0}', space=smem, size = 0x200, scoped, tag = 'output window, operand 1, single buffered']
    %75 = vsyncpa [#allocation4], 0
    %76 = vsyncpa [#allocation7], 0
    %77 = vsyncpa [#allocation10], 0
    %78 = vsyncpa [#allocation13], 0
    %79 = vsyncpa [#allocation16], 0
    %80 = vsyncpa [#allocation19], 0
    %81 = vsyncpa [#allocation22], 0
    %82 = vsyncpa [#allocation25], 0
    %83 = vsyncpa [#allocation28], 0
    %84 = vsyncpa [#allocation31], 0
    %85 = vsyncpa [#allocation34], 0
    %86 = vsyncpa [#allocation5], 0
    // Predicated region
    $region2: #{graph_cross_sample_debias_forward.1} parent=1 // pred_check
      _
    $region3: #{graph_cross_sample_debias_forward.1} parent=1 // pred_check_branch
      %88 = sbr.rel (0) target = $region5
    $region4: #{graph_cross_sample_debias_forward.1} parent=1 // pred_region
      _
    $region5: #{graph_cross_sample_debias_forward.1} parent=1 // pred_fallthru
      _
    // Predicated region
    $region6: #{graph_cross_sample_debias_forward.1} parent=1 // pred_check
      _
    $region7: #{graph_cross_sample_debias_forward.1} parent=1 // pred_check_branch
      %90 = sbr.rel (0) target = $region9
    $region8: #{graph_cross_sample_debias_forward.1} parent=1 // pred_region
      %s92 = ssub.s32 1280, 1280
      %93 = vsyncadd [#allocation4], %s92
      %s94 = sshll.u32 [#allocation3], 4
      %s95 = int_to_ptr.vmem [resolvable:$true] %s94
      %100 = dma.hbm_to_vmem [thread:$0]  %s3, 1280, %s95, [#allocation4], 256, 256, 16
    $region9: #{graph_cross_sample_debias_forward.1} parent=1 // pred_fallthru
      _
    // Predicated region
    $region10: #{graph_cross_sample_debias_forward.1} parent=1 // pred_check
      _
    $region11: #{graph_cross_sample_debias_forward.1} parent=1 // pred_check_branch
      %102 = sbr.rel (0) target = $region13
    $region12: #{graph_cross_sample_debias_forward.1} parent=1 // pred_region
      _
    $region13: #{graph_cross_sample_debias_forward.1} parent=1 // pred_fallthru
      _
    // Predicated region
    $region14: #{graph_cross_sample_debias_forward.1} parent=1 // pred_check
      _
    $region15: #{graph_cross_sample_debias_forward.1} parent=1 // pred_check_branch
      %104 = sbr.rel (0) target = $region17
    $region16: #{graph_cross_sample_debias_forward.1} parent=1 // pred_region
      _
    $region17: #{graph_cross_sample_debias_forward.1} parent=1 // pred_fallthru
      _
    // Predicated region
    $region18: #{graph_cross_sample_debias_forward.1} parent=1 // pred_check
      _
    $region19: #{graph_cross_sample_debias_forward.1} parent=1 // pred_check_branch
      %106 = sbr.rel (0) target = $region21
    $region20: #{graph_cross_sample_debias_forward.1} parent=1 // pred_region
      %s108 = ssub.s32 8192, 8192
      %109 = vsyncadd [#allocation7], %s108
      %s110 = sshll.u32 [#allocation6], 4
      %s111 = int_to_ptr.vmem [resolvable:$true] %s110
      %116 = dma.hbm_to_vmem [thread:$0]  %s9, 8192, %s111, [#allocation7], 128, 128, 8
    $region21: #{graph_cross_sample_debias_forward.1} parent=1 // pred_fallthru
      _
    // Predicated region
    $region22: #{graph_cross_sample_debias_forward.1} parent=1 // pred_check
      _
    $region23: #{graph_cross_sample_debias_forward.1} parent=1 // pred_check_branch
      %118 = sbr.rel (0) target = $region25
    $region24: #{graph_cross_sample_debias_forward.1} parent=1 // pred_region
      %s120 = ssub.s32 32, 32
      %121 = vsyncadd [#allocation7], %s120
      %s123 = sshll.u32 [#allocation8], 4
      %s124 = int_to_ptr.vmem [resolvable:$true] %s123
      %126 = dma.hbm_to_vmem [thread:$0]  %s11, 32, %s124, [#allocation7]
    $region25: #{graph_cross_sample_debias_forward.1} parent=1 // pred_fallthru
      _
    // Predicated region
    $region26: #{graph_cross_sample_debias_forward.1} parent=1 // pred_check
      _
    $region27: #{graph_cross_sample_debias_forward.1} parent=1 // pred_check_branch
      %128 = sbr.rel (0) target = $region29
    $region28: #{graph_cross_sample_debias_forward.1} parent=1 // pred_region
      %s130 = ssub.s32 32, 32
      %131 = vsyncadd [#allocation10], %s130
      %s133 = sshll.u32 [#allocation9], 4
      %s134 = int_to_ptr.vmem [resolvable:$true] %s133
      %136 = dma.hbm_to_vmem [thread:$0]  %s13, 32, %s134, [#allocation10]
    $region29: #{graph_cross_sample_debias_forward.1} parent=1 // pred_fallthru
      _
    // Predicated region
    $region30: #{graph_cross_sample_debias_forward.1} parent=1 // pred_check
      _
    $region31: #{graph_cross_sample_debias_forward.1} parent=1 // pred_check_branch
      %138 = sbr.rel (0) target = $region33
    $region32: #{graph_cross_sample_debias_forward.1} parent=1 // pred_region
      _
    $region33: #{graph_cross_sample_debias_forward.1} parent=1 // pred_fallthru
      _
    // Predicated region
    $region34: #{graph_cross_sample_debias_forward.1} parent=1 // pred_check
      _
    $region35: #{graph_cross_sample_debias_forward.1} parent=1 // pred_check_branch
      %140 = sbr.rel (0) target = $region37
    $region36: #{graph_cross_sample_debias_forward.1} parent=1 // pred_region
      %s142 = ssub.s32 4096, 4096
      %143 = vsyncadd [#allocation10], %s142
      %s144 = sshll.u32 [#allocation11], 4
      %s145 = int_to_ptr.vmem [resolvable:$true] %s144
      %150 = dma.hbm_to_vmem [thread:$0]  %s17, 4096, %s145, [#allocation10], 128, 128, 8
    $region37: #{graph_cross_sample_debias_forward.1} parent=1 // pred_fallthru
      _
    // Predicated region
    $region38: #{graph_cross_sample_debias_forward.1} parent=1 // pred_check
      _
    $region39: #{graph_cross_sample_debias_forward.1} parent=1 // pred_check_branch
      %152 = sbr.rel (0) target = $region41
    $region40: #{graph_cross_sample_debias_forward.1} parent=1 // pred_region
      _
    $region41: #{graph_cross_sample_debias_forward.1} parent=1 // pred_fallthru
      _
    // Predicated region
    $region42: #{graph_cross_sample_debias_forward.1} parent=1 // pred_check
      _
    $region43: #{graph_cross_sample_debias_forward.1} parent=1 // pred_check_branch
      %154 = sbr.rel (0) target = $region45
    $region44: #{graph_cross_sample_debias_forward.1} parent=1 // pred_region
      %s156 = ssub.s32 4096, 4096
      %157 = vsyncadd [#allocation13], %s156
      %s158 = sshll.u32 [#allocation12], 4
      %s159 = int_to_ptr.vmem [resolvable:$true] %s158
      %164 = dma.hbm_to_vmem [thread:$0]  %s21, 4096, %s159, [#allocation13], 128, 128, 8
    $region45: #{graph_cross_sample_debias_forward.1} parent=1 // pred_fallthru
      _
    // Predicated region
    $region46: #{graph_cross_sample_debias_forward.1} parent=1 // pred_check
      _
    $region47: #{graph_cross_sample_debias_forward.1} parent=1 // pred_check_branch
      %166 = sbr.rel (0) target = $region49
    $region48: #{graph_cross_sample_debias_forward.1} parent=1 // pred_region
      _
    $region49: #{graph_cross_sample_debias_forward.1} parent=1 // pred_fallthru
      _
    // Predicated region
    $region50: #{graph_cross_sample_debias_forward.1} parent=1 // pred_check
      _
    $region51: #{graph_cross_sample_debias_forward.1} parent=1 // pred_check_branch
      %168 = sbr.rel (0) target = $region53
    $region52: #{graph_cross_sample_debias_forward.1} parent=1 // pred_region
      %s170 = ssub.s32 12288, 12288
      %171 = vsyncadd [#allocation13], %s170
      %s172 = sshll.u32 [#allocation14], 4
      %s173 = int_to_ptr.vmem [resolvable:$true] %s172
      %178 = dma.hbm_to_vmem [thread:$0]  %s25, 12288, %s173, [#allocation13], 128, 128, 8
    $region53: #{graph_cross_sample_debias_forward.1} parent=1 // pred_fallthru
      _
    // Predicated region
    $region54: #{graph_cross_sample_debias_forward.1} parent=1 // pred_check
      _
    $region55: #{graph_cross_sample_debias_forward.1} parent=1 // pred_check_branch
      %180 = sbr.rel (0) target = $region57
    $region56: #{graph_cross_sample_debias_forward.1} parent=1 // pred_region
      _
    $region57: #{graph_cross_sample_debias_forward.1} parent=1 // pred_fallthru
      _
    // Predicated region
    $region58: #{graph_cross_sample_debias_forward.1} parent=1 // pred_check
      _
    $region59: #{graph_cross_sample_debias_forward.1} parent=1 // pred_check_branch
      %182 = sbr.rel (0) target = $region61
    $region60: #{graph_cross_sample_debias_forward.1} parent=1 // pred_region
      %s184 = ssub.s32 12288, 12288
      %185 = vsyncadd [#allocation16], %s184
      %s186 = sshll.u32 [#allocation15], 4
      %s187 = int_to_ptr.vmem [resolvable:$true] %s186
      %192 = dma.hbm_to_vmem [thread:$0]  %s29, 12288, %s187, [#allocation16], 128, 128, 8
    $region61: #{graph_cross_sample_debias_forward.1} parent=1 // pred_fallthru
      _
    // Predicated region
    $region62: #{graph_cross_sample_debias_forward.1} parent=1 // pred_check
      _
    $region63: #{graph_cross_sample_debias_forward.1} parent=1 // pred_check_branch
      %194 = sbr.rel (0) target = $region65
    $region64: #{graph_cross_sample_debias_forward.1} parent=1 // pred_region
      _
    $region65: #{graph_cross_sample_debias_forward.1} parent=1 // pred_fallthru
      _
    // Predicated region
    $region66: #{graph_cross_sample_debias_forward.1} parent=1 // pred_check
      _
    $region67: #{graph_cross_sample_debias_forward.1} parent=1 // pred_check_branch
      %196 = sbr.rel (0) target = $region69
    $region68: #{graph_cross_sample_debias_forward.1} parent=1 // pred_region
      %s198 = ssub.s32 4096, 4096
      %199 = vsyncadd [#allocation16], %s198
      %s200 = sshll.u32 [#allocation17], 4
      %s201 = int_to_ptr.vmem [resolvable:$true] %s200
      %206 = dma.hbm_to_vmem [thread:$0]  %s33, 4096, %s201, [#allocation16], 128, 128, 8
    $region69: #{graph_cross_sample_debias_forward.1} parent=1 // pred_fallthru
      _
    // Predicated region
    $region70: #{graph_cross_sample_debias_forward.1} parent=1 // pred_check
      _
    $region71: #{graph_cross_sample_debias_forward.1} parent=1 // pred_check_branch
      %208 = sbr.rel (0) target = $region73
    $region72: #{graph_cross_sample_debias_forward.1} parent=1 // pred_region
      %s210 = ssub.s32 32, 32
      %211 = vsyncadd [#allocation19], %s210
      %s213 = sshll.u32 [#allocation18], 4
      %s214 = int_to_ptr.vmem [resolvable:$true] %s213
      %216 = dma.hbm_to_vmem [thread:$0]  %s35, 32, %s214, [#allocation19]
    $region73: #{graph_cross_sample_debias_forward.1} parent=1 // pred_fallthru
      _
    // Predicated region
    $region74: #{graph_cross_sample_debias_forward.1} parent=1 // pred_check
      _
    $region75: #{graph_cross_sample_debias_forward.1} parent=1 // pred_check_branch
      %218 = sbr.rel (0) target = $region77
    $region76: #{graph_cross_sample_debias_forward.1} parent=1 // pred_region
      %s220 = ssub.s32 4096, 4096
      %221 = vsyncadd [#allocation19], %s220
      %s222 = sshll.u32 [#allocation20], 4
      %s223 = int_to_ptr.vmem [resolvable:$true] %s222
      %228 = dma.hbm_to_vmem [thread:$0]  %s37, 4096, %s223, [#allocation19], 128, 128, 8
    $region77: #{graph_cross_sample_debias_forward.1} parent=1 // pred_fallthru
      _
    // Predicated region
    $region78: #{graph_cross_sample_debias_forward.1} parent=1 // pred_check
      _
    $region79: #{graph_cross_sample_debias_forward.1} parent=1 // pred_check_branch
      %230 = sbr.rel (0) target = $region81
    $region80: #{graph_cross_sample_debias_forward.1} parent=1 // pred_region
      %s232 = ssub.s32 32, 32
      %233 = vsyncadd [#allocation22], %s232
      %s235 = sshll.u32 [#allocation21], 4
      %s236 = int_to_ptr.vmem [resolvable:$true] %s235
      %238 = dma.hbm_to_vmem [thread:$0]  %s39, 32, %s236, [#allocation22]
    $region81: #{graph_cross_sample_debias_forward.1} parent=1 // pred_fallthru
      _
    // Predicated region
    $region82: #{graph_cross_sample_debias_forward.1} parent=1 // pred_check
      _
    $region83: #{graph_cross_sample_debias_forward.1} parent=1 // pred_check_branch
      %240 = sbr.rel (0) target = $region85
    $region84: #{graph_cross_sample_debias_forward.1} parent=1 // pred_region
      %s242 = ssub.s32 12288, 12288
      %243 = vsyncadd [#allocation22], %s242
      %s244 = sshll.u32 [#allocation23], 4
      %s245 = int_to_ptr.vmem [resolvable:$true] %s244
      %250 = dma.hbm_to_vmem [thread:$0]  %s41, 12288, %s245, [#allocation22], 128, 128, 8
    $region85: #{graph_cross_sample_debias_forward.1} parent=1 // pred_fallthru
      _
    // Predicated region
    $region86: #{graph_cross_sample_debias_forward.1} parent=1 // pred_check
      _
    $region87: #{graph_cross_sample_debias_forward.1} parent=1 // pred_check_branch
      %252 = sbr.rel (0) target = $region89
    $region88: #{graph_cross_sample_debias_forward.1} parent=1 // pred_region
      _
    $region89: #{graph_cross_sample_debias_forward.1} parent=1 // pred_fallthru
      _
    // Predicated region
    $region90: #{graph_cross_sample_debias_forward.1} parent=1 // pred_check
      _
    $region91: #{graph_cross_sample_debias_forward.1} parent=1 // pred_check_branch
      %254 = sbr.rel (0) target = $region93
    $region92: #{graph_cross_sample_debias_forward.1} parent=1 // pred_region
      %s256 = ssub.s32 12288, 12288
      %257 = vsyncadd [#allocation25], %s256
      %s258 = sshll.u32 [#allocation24], 4
      %s259 = int_to_ptr.vmem [resolvable:$true] %s258
      %264 = dma.hbm_to_vmem [thread:$0]  %s45, 12288, %s259, [#allocation25], 128, 128, 8
    $region93: #{graph_cross_sample_debias_forward.1} parent=1 // pred_fallthru
      _
    // Predicated region
    $region94: #{graph_cross_sample_debias_forward.1} parent=1 // pred_check
      _
    $region95: #{graph_cross_sample_debias_forward.1} parent=1 // pred_check_branch
      %266 = sbr.rel (0) target = $region97
    $region96: #{graph_cross_sample_debias_forward.1} parent=1 // pred_region
      _
    $region97: #{graph_cross_sample_debias_forward.1} parent=1 // pred_fallthru
      _
    // Predicated region
    $region98: #{graph_cross_sample_debias_forward.1} parent=1 // pred_check
      _
    $region99: #{graph_cross_sample_debias_forward.1} parent=1 // pred_check_branch
      %268 = sbr.rel (0) target = $region101
    $region100: #{graph_cross_sample_debias_forward.1} parent=1 // pred_region
      %s270 = ssub.s32 4096, 4096
      %271 = vsyncadd [#allocation25], %s270
      %s272 = sshll.u32 [#allocation26], 4
      %s273 = int_to_ptr.vmem [resolvable:$true] %s272
      %278 = dma.hbm_to_vmem [thread:$0]  %s49, 4096, %s273, [#allocation25], 128, 128, 8
    $region101: #{graph_cross_sample_debias_forward.1} parent=1 // pred_fallthru
      _
    // Predicated region
    $region102: #{graph_cross_sample_debias_forward.1} parent=1 // pred_check
      _
    $region103: #{graph_cross_sample_debias_forward.1} parent=1 // pred_check_branch
      %280 = sbr.rel (0) target = $region105
    $region104: #{graph_cross_sample_debias_forward.1} parent=1 // pred_region
      %s282 = ssub.s32 32, 32
      %283 = vsyncadd [#allocation28], %s282
      %s285 = sshll.u32 [#allocation27], 4
      %s286 = int_to_ptr.vmem [resolvable:$true] %s285
      %288 = dma.hbm_to_vmem [thread:$0]  %s51, 32, %s286, [#allocation28]
    $region105: #{graph_cross_sample_debias_forward.1} parent=1 // pred_fallthru
      _
    // Predicated region
    $region106: #{graph_cross_sample_debias_forward.1} parent=1 // pred_check
      _
    $region107: #{graph_cross_sample_debias_forward.1} parent=1 // pred_check_branch
      %290 = sbr.rel (0) target = $region109
    $region108: #{graph_cross_sample_debias_forward.1} parent=1 // pred_region
      %s292 = ssub.s32 4096, 4096
      %293 = vsyncadd [#allocation28], %s292
      %s294 = sshll.u32 [#allocation29], 4
      %s295 = int_to_ptr.vmem [resolvable:$true] %s294
      %300 = dma.hbm_to_vmem [thread:$0]  %s53, 4096, %s295, [#allocation28], 128, 128, 8
    $region109: #{graph_cross_sample_debias_forward.1} parent=1 // pred_fallthru
      _
    // Predicated region
    $region110: #{graph_cross_sample_debias_forward.1} parent=1 // pred_check
      _
    $region111: #{graph_cross_sample_debias_forward.1} parent=1 // pred_check_branch
      %302 = sbr.rel (0) target = $region113
    $region112: #{graph_cross_sample_debias_forward.1} parent=1 // pred_region
      %s304 = ssub.s32 32, 32
      %305 = vsyncadd [#allocation31], %s304
      %s307 = sshll.u32 [#allocation30], 4
      %s308 = int_to_ptr.vmem [resolvable:$true] %s307
      %310 = dma.hbm_to_vmem [thread:$0]  %s55, 32, %s308, [#allocation31]
    $region113: #{graph_cross_sample_debias_forward.1} parent=1 // pred_fallthru
      _
    // Predicated region
    $region114: #{graph_cross_sample_debias_forward.1} parent=1 // pred_check
      _
    $region115: #{graph_cross_sample_debias_forward.1} parent=1 // pred_check_branch
      %312 = sbr.rel (0) target = $region117
    $region116: #{graph_cross_sample_debias_forward.1} parent=1 // pred_region
      %s314 = ssub.s32 12288, 12288
      %315 = vsyncadd [#allocation31], %s314
      %s316 = sshll.u32 [#allocation32], 4
      %s317 = int_to_ptr.vmem [resolvable:$true] %s316
      %322 = dma.hbm_to_vmem [thread:$0]  %s57, 12288, %s317, [#allocation31], 128, 128, 8
    $region117: #{graph_cross_sample_debias_forward.1} parent=1 // pred_fallthru
      _
    // Predicated region
    $region118: #{graph_cross_sample_debias_forward.1} parent=1 // pred_check
      _
    $region119: #{graph_cross_sample_debias_forward.1} parent=1 // pred_check_branch
      %324 = sbr.rel (0) target = $region121
    $region120: #{graph_cross_sample_debias_forward.1} parent=1 // pred_region
      _
    $region121: #{graph_cross_sample_debias_forward.1} parent=1 // pred_fallthru
      _
    // Predicated region
    $region122: #{graph_cross_sample_debias_forward.1} parent=1 // pred_check
      _
    $region123: #{graph_cross_sample_debias_forward.1} parent=1 // pred_check_branch
      %326 = sbr.rel (0) target = $region125
    $region124: #{graph_cross_sample_debias_forward.1} parent=1 // pred_region
      %s328 = ssub.s32 12288, 12288
      %329 = vsyncadd [#allocation34], %s328
      %s330 = sshll.u32 [#allocation33], 4
      %s331 = int_to_ptr.vmem [resolvable:$true] %s330
      %336 = dma.hbm_to_vmem [thread:$0]  %s61, 12288, %s331, [#allocation34], 128, 128, 8
    $region125: #{graph_cross_sample_debias_forward.1} parent=1 // pred_fallthru
      _
    // Predicated region
    $region126: #{graph_cross_sample_debias_forward.1} parent=1 // pred_check
      _
    $region127: #{graph_cross_sample_debias_forward.1} parent=1 // pred_check_branch
      %338 = sbr.rel (0) target = $region129
    $region128: #{graph_cross_sample_debias_forward.1} parent=1 // pred_region
      %s340 = ssub.s32 96, 96
      %341 = vsyncadd [#allocation34], %s340
      %s342 = sshll.u32 [#allocation35], 4
      %s343 = int_to_ptr.vmem [resolvable:$true] %s342
      %348 = dma.hbm_to_vmem [thread:$0]  %s63, 96, %s343, [#allocation34], 32, 32, 2
    $region129: #{graph_cross_sample_debias_forward.1} parent=1 // pred_fallthru
      _
    // Predicated region
    $region130: #{graph_cross_sample_debias_forward.1} parent=1 // pred_check
      _
    $region131: #{graph_cross_sample_debias_forward.1} parent=1 // pred_check_branch
      %350 = sbr.rel (0) target = $region133
    $region132: #{graph_cross_sample_debias_forward.1} parent=1 // pred_region
      %351 = dma.done [#allocation4], 1280
    $region133: #{graph_cross_sample_debias_forward.1} parent=1 // pred_fallthru
      _
    // Predicated region
    $region134: #{graph_cross_sample_debias_forward.1} parent=1 // pred_check
      _
    $region135: #{graph_cross_sample_debias_forward.1} parent=1 // pred_check_branch
      %353 = sbr.rel (0) target = $region137
    $region136: #{graph_cross_sample_debias_forward.1} parent=1 // pred_region
      %354 = dma.done [#allocation7], 8192
    $region137: #{graph_cross_sample_debias_forward.1} parent=1 // pred_fallthru
      _
    // Predicated region
    $region138: #{graph_cross_sample_debias_forward.1} parent=1 // pred_check
      _
    $region139: #{graph_cross_sample_debias_forward.1} parent=1 // pred_check_branch
      %356 = sbr.rel (0) target = $region141
    $region140: #{graph_cross_sample_debias_forward.1} parent=1 // pred_region
      %357 = dma.done [#allocation7], 32
    $region141: #{graph_cross_sample_debias_forward.1} parent=1 // pred_fallthru
      _
    // Predicated region
    $region142: #{graph_cross_sample_debias_forward.1} parent=1 // pred_check
      _
    $region143: #{graph_cross_sample_debias_forward.1} parent=1 // pred_check_branch
      %359 = sbr.rel (0) target = $region145
    $region144: #{graph_cross_sample_debias_forward.1} parent=1 // pred_region
      %360 = dma.done [#allocation10], 32
    $region145: #{graph_cross_sample_debias_forward.1} parent=1 // pred_fallthru
      _
    // Predicated region
    $region146: #{graph_cross_sample_debias_forward.1} parent=1 // pred_check
      _
    $region147: #{graph_cross_sample_debias_forward.1} parent=1 // pred_check_branch
      %362 = sbr.rel (0) target = $region149
    $region148: #{graph_cross_sample_debias_forward.1} parent=1 // pred_region
      %363 = dma.done [#allocation10], 4096
    $region149: #{graph_cross_sample_debias_forward.1} parent=1 // pred_fallthru
      _
    // Predicated region
    $region150: #{graph_cross_sample_debias_forward.1} parent=1 // pred_check
      _
    $region151: #{graph_cross_sample_debias_forward.1} parent=1 // pred_check_branch
      %365 = sbr.rel (0) target = $region153
    $region152: #{graph_cross_sample_debias_forward.1} parent=1 // pred_region
      %366 = dma.done [#allocation13], 4096
    $region153: #{graph_cross_sample_debias_forward.1} parent=1 // pred_fallthru
      _
    // Predicated region
    $region154: #{graph_cross_sample_debias_forward.1} parent=1 // pred_check
      _
    $region155: #{graph_cross_sample_debias_forward.1} parent=1 // pred_check_branch
      %368 = sbr.rel (0) target = $region157
    $region156: #{graph_cross_sample_debias_forward.1} parent=1 // pred_region
      %369 = dma.done [#allocation13], 12288
    $region157: #{graph_cross_sample_debias_forward.1} parent=1 // pred_fallthru
      _
    // Predicated region
    $region158: #{graph_cross_sample_debias_forward.1} parent=1 // pred_check
      _
    $region159: #{graph_cross_sample_debias_forward.1} parent=1 // pred_check_branch
      %371 = sbr.rel (0) target = $region161
    $region160: #{graph_cross_sample_debias_forward.1} parent=1 // pred_region
      %372 = dma.done [#allocation16], 12288
    $region161: #{graph_cross_sample_debias_forward.1} parent=1 // pred_fallthru
      _
    // Predicated region
    $region162: #{graph_cross_sample_debias_forward.1} parent=1 // pred_check
      _
    $region163: #{graph_cross_sample_debias_forward.1} parent=1 // pred_check_branch
      %374 = sbr.rel (0) target = $region165
    $region164: #{graph_cross_sample_debias_forward.1} parent=1 // pred_region
      %375 = dma.done [#allocation16], 4096
    $region165: #{graph_cross_sample_debias_forward.1} parent=1 // pred_fallthru
      _
    // Predicated region
    $region166: #{graph_cross_sample_debias_forward.1} parent=1 // pred_check
      _
    $region167: #{graph_cross_sample_debias_forward.1} parent=1 // pred_check_branch
      %377 = sbr.rel (0) target = $region169
    $region168: #{graph_cross_sample_debias_forward.1} parent=1 // pred_region
      %378 = dma.done [#allocation19], 32
    $region169: #{graph_cross_sample_debias_forward.1} parent=1 // pred_fallthru
      _
    // Predicated region
    $region170: #{graph_cross_sample_debias_forward.1} parent=1 // pred_check
      _
    $region171: #{graph_cross_sample_debias_forward.1} parent=1 // pred_check_branch
      %380 = sbr.rel (0) target = $region173
    $region172: #{graph_cross_sample_debias_forward.1} parent=1 // pred_region
      %381 = dma.done [#allocation19], 4096
    $region173: #{graph_cross_sample_debias_forward.1} parent=1 // pred_fallthru
      _
    // Predicated region
    $region174: #{graph_cross_sample_debias_forward.1} parent=1 // pred_check
      _
    $region175: #{graph_cross_sample_debias_forward.1} parent=1 // pred_check_branch
      %383 = sbr.rel (0) target = $region177
    $region176: #{graph_cross_sample_debias_forward.1} parent=1 // pred_region
      %384 = dma.done [#allocation22], 32
    $region177: #{graph_cross_sample_debias_forward.1} parent=1 // pred_fallthru
      _
    // Predicated region
    $region178: #{graph_cross_sample_debias_forward.1} parent=1 // pred_check
      _
    $region179: #{graph_cross_sample_debias_forward.1} parent=1 // pred_check_branch
      %386 = sbr.rel (0) target = $region181
    $region180: #{graph_cross_sample_debias_forward.1} parent=1 // pred_region
      %387 = dma.done [#allocation22], 12288
    $region181: #{graph_cross_sample_debias_forward.1} parent=1 // pred_fallthru
      _
    // Predicated region
    $region182: #{graph_cross_sample_debias_forward.1} parent=1 // pred_check
      _
    $region183: #{graph_cross_sample_debias_forward.1} parent=1 // pred_check_branch
      %389 = sbr.rel (0) target = $region185
    $region184: #{graph_cross_sample_debias_forward.1} parent=1 // pred_region
      %390 = dma.done [#allocation25], 12288
    $region185: #{graph_cross_sample_debias_forward.1} parent=1 // pred_fallthru
      _
    // Predicated region
    $region186: #{graph_cross_sample_debias_forward.1} parent=1 // pred_check
      _
    $region187: #{graph_cross_sample_debias_forward.1} parent=1 // pred_check_branch
      %392 = sbr.rel (0) target = $region189
    $region188: #{graph_cross_sample_debias_forward.1} parent=1 // pred_region
      %393 = dma.done [#allocation25], 4096
    $region189: #{graph_cross_sample_debias_forward.1} parent=1 // pred_fallthru
      _
    // Predicated region
    $region190: #{graph_cross_sample_debias_forward.1} parent=1 // pred_check
      _
    $region191: #{graph_cross_sample_debias_forward.1} parent=1 // pred_check_branch
      %395 = sbr.rel (0) target = $region193
    $region192: #{graph_cross_sample_debias_forward.1} parent=1 // pred_region
      %396 = dma.done [#allocation28], 32
    $region193: #{graph_cross_sample_debias_forward.1} parent=1 // pred_fallthru
      _
    // Predicated region
    $region194: #{graph_cross_sample_debias_forward.1} parent=1 // pred_check
      _
    $region195: #{graph_cross_sample_debias_forward.1} parent=1 // pred_check_branch
      %398 = sbr.rel (0) target = $region197
    $region196: #{graph_cross_sample_debias_forward.1} parent=1 // pred_region
      %399 = dma.done [#allocation28], 4096
    $region197: #{graph_cross_sample_debias_forward.1} parent=1 // pred_fallthru
      _
    // Predicated region
    $region198: #{graph_cross_sample_debias_forward.1} parent=1 // pred_check
      _
    $region199: #{graph_cross_sample_debias_forward.1} parent=1 // pred_check_branch
      %401 = sbr.rel (0) target = $region201
    $region200: #{graph_cross_sample_debias_forward.1} parent=1 // pred_region
      %402 = dma.done [#allocation31], 32
    $region201: #{graph_cross_sample_debias_forward.1} parent=1 // pred_fallthru
      _
    // Predicated region
    $region202: #{graph_cross_sample_debias_forward.1} parent=1 // pred_check
      _
    $region203: #{graph_cross_sample_debias_forward.1} parent=1 // pred_check_branch
      %404 = sbr.rel (0) target = $region205
    $region204: #{graph_cross_sample_debias_forward.1} parent=1 // pred_region
      %405 = dma.done [#allocation31], 12288
    $region205: #{graph_cross_sample_debias_forward.1} parent=1 // pred_fallthru
      _
    // Predicated region
    $region206: #{graph_cross_sample_debias_forward.1} parent=1 // pred_check
      _
    $region207: #{graph_cross_sample_debias_forward.1} parent=1 // pred_check_branch
      %407 = sbr.rel (0) target = $region209
    $region208: #{graph_cross_sample_debias_forward.1} parent=1 // pred_region
      %408 = dma.done [#allocation34], 12288
    $region209: #{graph_cross_sample_debias_forward.1} parent=1 // pred_fallthru
      _
    // Predicated region
    $region210: #{graph_cross_sample_debias_forward.1} parent=1 // pred_check
      _
    $region211: #{graph_cross_sample_debias_forward.1} parent=1 // pred_check_branch
      %410 = sbr.rel (0) target = $region213
    $region212: #{graph_cross_sample_debias_forward.1} parent=1 // pred_region
      %411 = dma.done [#allocation34], 96
    $region213: #{graph_cross_sample_debias_forward.1} parent=1 // pred_fallthru
      _
    %v413 = vld [vmem:[%s1] sm:$0xff]
    %v414 = vld [vmem:[%s1 + $0x8] sm:$0xff]
    %v415 = vmul.f32 %v413, 0.999995
    %v416 = vmul.f32 %v414, 0.999995
    %v417 = vld [vmem:[#allocation3] sm:$0xff]
    %v418 = vld [vmem:[#allocation3 + $0x8] sm:$0xff]
    %v419 = vld [vmem:[#allocation3 + $0x10] sm:$0xff]
    %v420 = vld [vmem:[#allocation3 + $0x18] sm:$0xff]
    %v421 = vld [vmem:[#allocation3 + $0x20] sm:$0xff]
    %v422 = vld [vmem:[#allocation3 + $0x28] sm:$0xff]
    %v423 = vld [vmem:[#allocation3 + $0x30] sm:$0xff]
    %v424 = vld [vmem:[#allocation3 + $0x38] sm:$0xff]
    %v425 = vld [vmem:[#allocation3 + $0x40] sm:$0xff]
    %v426 = vld [vmem:[#allocation3 + $0x48] sm:$0xff]
    %v427 = vmul.f32 %v417, 0.999995
    %v428 = vmul.f32 %v418, 0.999995
    %v429 = vmul.f32 %v419, 0.999995
    %v430 = vmul.f32 %v420, 0.999995
    %v431 = vmul.f32 %v421, 0.999995
    %v432 = vmul.f32 %v422, 0.999995
    %v433 = vmul.f32 %v423, 0.999995
    %v434 = vmul.f32 %v424, 0.999995
    %v435 = vmul.f32 %v425, 0.999995
    %v436 = vmul.f32 %v426, 0.999995
    %v437 = vadd.f32 %v427, %v415
    %v438 = vadd.f32 %v428, %v416
    %v439 = vadd.f32 %v429, %v415
    %v440 = vadd.f32 %v430, %v416
    %v441 = vadd.f32 %v431, %v415
    %v442 = vadd.f32 %v432, %v416
    %v443 = vadd.f32 %v433, %v415
    %v444 = vadd.f32 %v434, %v416
    %v445 = vadd.f32 %v435, %v415
    %v446 = vadd.f32 %v436, %v416
    %v447 = vadd.f32 %v437, %v438
    %448 = vadd.xlane.f32.xlu0 %v447
    %v449 = vpop.xlane.xlu0 %448
    %v450 = vadd.f32 %v439, %v440
    %451 = vadd.xlane.f32.xlu0 %v450
    %v452 = vpop.xlane.xlu0 %451
    %v453 = vadd.f32 %v441, %v442
    %454 = vadd.xlane.f32.xlu0 %v453
    %v455 = vpop.xlane.xlu0 %454
    %v456 = vadd.f32 %v443, %v444
    %457 = vadd.xlane.f32.xlu0 %v456
    %v458 = vpop.xlane.xlu0 %457
    %v459 = vadd.f32 %v445, %v446
    %460 = vadd.xlane.f32.xlu0 %v459
    %v461 = vpop.xlane.xlu0 %460
    %v462 = vrcp.pop 256.0
    %v463 = vmul.f32 %v449, %v462
    %v464 = vmul.f32 %v452, %v462
    %v465 = vmul.f32 %v455, %v462
    %v466 = vmul.f32 %v458, %v462
    %v467 = vmul.f32 %v461, %v462
    %v468 = vsub.f32 %v437, %v463
    %v469 = vsub.f32 %v438, %v463
    %v470 = vsub.f32 %v439, %v464
    %v471 = vsub.f32 %v440, %v464
    %v472 = vsub.f32 %v441, %v465
    %v473 = vsub.f32 %v442, %v465
    %v474 = vsub.f32 %v443, %v466
    %v475 = vsub.f32 %v444, %v466
    %v476 = vsub.f32 %v445, %v467
    %v477 = vsub.f32 %v446, %v467
    %v478 = vmul.f32 %v468, %v468
    %v479 = vmul.f32 %v469, %v469
    %v480 = vmul.f32 %v470, %v470
    %v481 = vmul.f32 %v471, %v471
    %v482 = vmul.f32 %v472, %v472
    %v483 = vmul.f32 %v473, %v473
    %v484 = vmul.f32 %v474, %v474
    %v485 = vmul.f32 %v475, %v475
    %v486 = vmul.f32 %v476, %v476
    %v487 = vmul.f32 %v477, %v477
    %v488 = vadd.f32 %v478, %v479
    %489 = vadd.xlane.f32.xlu0 %v488
    %v490 = vpop.xlane.xlu0 %489
    %v491 = vadd.f32 %v480, %v481
    %492 = vadd.xlane.f32.xlu0 %v491
    %v493 = vpop.xlane.xlu0 %492
    %v494 = vadd.f32 %v482, %v483
    %495 = vadd.xlane.f32.xlu0 %v494
    %v496 = vpop.xlane.xlu0 %495
    %v497 = vadd.f32 %v484, %v485
    %498 = vadd.xlane.f32.xlu0 %v497
    %v499 = vpop.xlane.xlu0 %498
    %v500 = vadd.f32 %v486, %v487
    %501 = vadd.xlane.f32.xlu0 %v500
    %v502 = vpop.xlane.xlu0 %501
    %v503 = vrcp.pop 255.0
    %v504 = vmul.f32 %v490, %v503
    %v505 = vmul.f32 %v493, %v503
    %v506 = vmul.f32 %v496, %v503
    %v507 = vmul.f32 %v499, %v503
    %v508 = vmul.f32 %v502, %v503
    %v509 = vrsqrt.pop %v504
    %v510 = vmul.f32 %v504, %v509
    %vm511 = vcmp.eq.f32.partialorder %v504, inf
    %v512 = vsel %vm511, %v504, %v510
    %vm513 = vcmp.eq.f32.partialorder %v504, 0.0
    %v514 = vand.u32 %v504, 2147483648
    %v515 = vsel %vm513, %v514, %v512
    %v516 = vrsqrt.pop %v505
    %v517 = vmul.f32 %v505, %v516
    %vm518 = vcmp.eq.f32.partialorder %v505, inf
    %v519 = vsel %vm518, %v505, %v517
    %vm520 = vcmp.eq.f32.partialorder %v505, 0.0
    %v521 = vand.u32 %v505, 2147483648
    %v522 = vsel %vm520, %v521, %v519
    %v523 = vrsqrt.pop %v506
    %v524 = vmul.f32 %v506, %v523
    %vm525 = vcmp.eq.f32.partialorder %v506, inf
    %v526 = vsel %vm525, %v506, %v524
    %vm527 = vcmp.eq.f32.partialorder %v506, 0.0
    %v528 = vand.u32 %v506, 2147483648
    %v529 = vsel %vm527, %v528, %v526
    %v530 = vrsqrt.pop %v507
    %v531 = vmul.f32 %v507, %v530
    %vm532 = vcmp.eq.f32.partialorder %v507, inf
    %v533 = vsel %vm532, %v507, %v531
    %vm534 = vcmp.eq.f32.partialorder %v507, 0.0
    %v535 = vand.u32 %v507, 2147483648
    %v536 = vsel %vm534, %v535, %v533
    %v537 = vrsqrt.pop %v508
    %v538 = vmul.f32 %v508, %v537
    %vm539 = vcmp.eq.f32.partialorder %v508, inf
    %v540 = vsel %vm539, %v508, %v538
    %vm541 = vcmp.eq.f32.partialorder %v508, 0.0
    %v542 = vand.u32 %v508, 2147483648
    %v543 = vsel %vm541, %v542, %v540
    %v544 = vadd.f32 %v515, 1e-06
    %v545 = vadd.f32 %v522, 1e-06
    %v546 = vadd.f32 %v529, 1e-06
    %v547 = vadd.f32 %v536, 1e-06
    %v548 = vadd.f32 %v543, 1e-06
    %v549 = vrcp.pop %v544
    %v550 = vmul.f32 1.0, %v549
    %v551 = vrcp.pop %v545
    %v552 = vmul.f32 1.0, %v551
    %v553 = vrcp.pop %v546
    %v554 = vmul.f32 1.0, %v553
    %v555 = vrcp.pop %v547
    %v556 = vmul.f32 1.0, %v555
    %v557 = vrcp.pop %v548
    %v558 = vmul.f32 1.0, %v557
    %v559 = vmul.f32 %v468, %v550
    %v560 = vmul.f32 %v469, %v550
    %v561 = vmul.f32 %v470, %v552
    %v562 = vmul.f32 %v471, %v552
    %v563 = vmul.f32 %v472, %v554
    %v564 = vmul.f32 %v473, %v554
    %v565 = vmul.f32 %v474, %v556
    %v566 = vmul.f32 %v475, %v556
    %v567 = vmul.f32 %v476, %v558
    %v568 = vmul.f32 %v477, %v558
    %v569 = vld [vmem:[%s5] sm:$0xff]
    %v570 = vld [vmem:[%s5 + $0x8] sm:$0xff]
    %v571 = vld [vmem:[%s5 + $0x10] sm:$0xff]
    %v572 = vld [vmem:[%s5 + $0x18] sm:$0xff]
    %v573 = vld [vmem:[%s5 + $0x20] sm:$0xff]
    %v574 = vld [vmem:[%s5 + $0x28] sm:$0xff]
    %v575 = vld [vmem:[%s5 + $0x30] sm:$0xff]
    %v576 = vld [vmem:[%s5 + $0x38] sm:$0xff]
    %v577 = vld [vmem:[%s5 + $0x40] sm:$0xff]
    %v578 = vld [vmem:[%s5 + $0x48] sm:$0xff]
    %v579 = vpack.c.bf16 %v571, %v569
    %v580 = vpack.c.bf16 %v572, %v570
    %v581 = vpack.c.bf16 %v575, %v573
    %v582 = vpack.c.bf16 %v576, %v574
    %v583 = vpack.c.bf16 %v577, %v577
    %v584 = vpack.c.bf16 %v578, %v578
    %v585 = vld [vmem:[#allocation6] sm:$0xff]
    %v586 = vld [vmem:[#allocation6 + $0x8] sm:$0xff]
    %v587 = vld [vmem:[#allocation6 + $0x10] sm:$0xff]
    %v588 = vld [vmem:[#allocation6 + $0x18] sm:$0xff]
    %v589 = vld [vmem:[#allocation6 + $0x20] sm:$0xff]
    %v590 = vld [vmem:[#allocation6 + $0x28] sm:$0xff]
    %v591 = vld [vmem:[#allocation6 + $0x30] sm:$0xff]
    %v592 = vld [vmem:[#allocation6 + $0x38] sm:$0xff]
    %v593 = vld [vmem:[#allocation6 + $0x40] sm:$0xff]
    %v594 = vld [vmem:[#allocation6 + $0x48] sm:$0xff]
    %v595 = vld [vmem:[#allocation6 + $0x50] sm:$0xff]
    %v596 = vld [vmem:[#allocation6 + $0x58] sm:$0xff]
    %v597 = vld [vmem:[#allocation6 + $0x60] sm:$0xff]
    %v598 = vld [vmem:[#allocation6 + $0x68] sm:$0xff]
    %v599 = vld [vmem:[#allocation6 + $0x70] sm:$0xff]
    %v600 = vld [vmem:[#allocation6 + $0x78] sm:$0xff]
    %v601 = vld [vmem:[#allocation6 + $0x80] sm:$0xff]
    %v602 = vld [vmem:[#allocation6 + $0x88] sm:$0xff]
    %v603 = vld [vmem:[#allocation6 + $0x90] sm:$0xff]
    %v604 = vld [vmem:[#allocation6 + $0x98] sm:$0xff]
    %v605 = vld [vmem:[#allocation6 + $0xa0] sm:$0xff]
    %v606 = vld [vmem:[#allocation6 + $0xa8] sm:$0xff]
    %v607 = vld [vmem:[#allocation6 + $0xb0] sm:$0xff]
    %v608 = vld [vmem:[#allocation6 + $0xb8] sm:$0xff]
    %v609 = vld [vmem:[#allocation6 + $0xc0] sm:$0xff]
    %v610 = vld [vmem:[#allocation6 + $0xc8] sm:$0xff]
    %v611 = vld [vmem:[#allocation6 + $0xd0] sm:$0xff]
    %v612 = vld [vmem:[#allocation6 + $0xd8] sm:$0xff]
    %v613 = vld [vmem:[#allocation6 + $0xe0] sm:$0xff]
    %v614 = vld [vmem:[#allocation6 + $0xe8] sm:$0xff]
    %v615 = vld [vmem:[#allocation6 + $0xf0] sm:$0xff]
    %v616 = vld [vmem:[#allocation6 + $0xf8] sm:$0xff]
    %v617 = vpack.c.bf16 %v561, %v559
    %v618 = vpack.c.bf16 %v562, %v560
    %v619 = vpack.c.bf16 %v565, %v563
    %v620 = vpack.c.bf16 %v566, %v564
    %v621 = vpack.c.bf16 %v567, %v567
    %v622 = vpack.c.bf16 %v568, %v568
    %v623 = vld [vmem:[#allocation6 + $0x100] sm:$0xff]
    %v624 = vld [vmem:[#allocation6 + $0x108] sm:$0xff]
    %v625 = vld [vmem:[#allocation6 + $0x110] sm:$0xff]
    %v626 = vld [vmem:[#allocation6 + $0x118] sm:$0xff]
    %v627 = vld [vmem:[#allocation6 + $0x120] sm:$0xff]
    %v628 = vld [vmem:[#allocation6 + $0x128] sm:$0xff]
    %v629 = vld [vmem:[#allocation6 + $0x130] sm:$0xff]
    %v630 = vld [vmem:[#allocation6 + $0x138] sm:$0xff]
    %v631 = vld [vmem:[#allocation6 + $0x140] sm:$0xff]
    %v632 = vld [vmem:[#allocation6 + $0x148] sm:$0xff]
    %v633 = vld [vmem:[#allocation6 + $0x150] sm:$0xff]
    %v634 = vld [vmem:[#allocation6 + $0x158] sm:$0xff]
    %v635 = vld [vmem:[#allocation6 + $0x160] sm:$0xff]
    %v636 = vld [vmem:[#allocation6 + $0x168] sm:$0xff]
    %v637 = vld [vmem:[#allocation6 + $0x170] sm:$0xff]
    %v638 = vld [vmem:[#allocation6 + $0x178] sm:$0xff]
    %v639 = vld [vmem:[#allocation6 + $0x180] sm:$0xff]
    %v640 = vld [vmem:[#allocation6 + $0x188] sm:$0xff]
    %v641 = vld [vmem:[#allocation6 + $0x190] sm:$0xff]
    %v642 = vld [vmem:[#allocation6 + $0x198] sm:$0xff]
    %v643 = vld [vmem:[#allocation6 + $0x1a0] sm:$0xff]
    %v644 = vld [vmem:[#allocation6 + $0x1a8] sm:$0xff]
    %v645 = vld [vmem:[#allocation6 + $0x1b0] sm:$0xff]
    %v646 = vld [vmem:[#allocation6 + $0x1b8] sm:$0xff]
    %v647 = vld [vmem:[#allocation6 + $0x1c0] sm:$0xff]
    %v648 = vld [vmem:[#allocation6 + $0x1c8] sm:$0xff]
    %v649 = vld [vmem:[#allocation6 + $0x1d0] sm:$0xff]
    %v650 = vld [vmem:[#allocation6 + $0x1d8] sm:$0xff]
    %v651 = vld [vmem:[#allocation6 + $0x1e0] sm:$0xff]
    %v652 = vld [vmem:[#allocation6 + $0x1e8] sm:$0xff]
    %v653 = vld [vmem:[#allocation6 + $0x1f0] sm:$0xff]
    %v654 = vld [vmem:[#allocation6 + $0x1f8] sm:$0xff]
    %v687 = vunpack.c.l.b16 %v623
    %v688 = vunpack.c.h.b16 %v623
    %v689 = vunpack.c.l.b16 %v624
    %v690 = vunpack.c.h.b16 %v624
    %v691 = vunpack.c.l.b16 %v625
    %v692 = vunpack.c.h.b16 %v625
    %v693 = vunpack.c.l.b16 %v626
    %v694 = vunpack.c.h.b16 %v626
    %v695 = vunpack.c.l.b16 %v627
    %v696 = vunpack.c.h.b16 %v627
    %v697 = vunpack.c.l.b16 %v628
    %v698 = vunpack.c.h.b16 %v628
    %v699 = vunpack.c.l.b16 %v629
    %v700 = vunpack.c.h.b16 %v629
    %v701 = vunpack.c.l.b16 %v630
    %v702 = vunpack.c.h.b16 %v630
    %v703 = vunpack.c.l.b16 %v631
    %v704 = vunpack.c.h.b16 %v631
    %v705 = vunpack.c.l.b16 %v632
    %v706 = vunpack.c.h.b16 %v632
    %v707 = vunpack.c.l.b16 %v633
    %v708 = vunpack.c.h.b16 %v633
    %v709 = vunpack.c.l.b16 %v634
    %v710 = vunpack.c.h.b16 %v634
    %v711 = vunpack.c.l.b16 %v635
    %v712 = vunpack.c.h.b16 %v635
    %v713 = vunpack.c.l.b16 %v636
    %v714 = vunpack.c.h.b16 %v636
    %v715 = vunpack.c.l.b16 %v637
    %v716 = vunpack.c.h.b16 %v637
    %v717 = vunpack.c.l.b16 %v638
    %v718 = vunpack.c.h.b16 %v638
    %v719 = vunpack.c.l.b16 %v639
    %v720 = vunpack.c.h.b16 %v639
    %v721 = vunpack.c.l.b16 %v640
    %v722 = vunpack.c.h.b16 %v640
    %v723 = vunpack.c.l.b16 %v641
    %v724 = vunpack.c.h.b16 %v641
    %v725 = vunpack.c.l.b16 %v642
    %v726 = vunpack.c.h.b16 %v642
    %v727 = vunpack.c.l.b16 %v643
    %v728 = vunpack.c.h.b16 %v643
    %v729 = vunpack.c.l.b16 %v644
    %v730 = vunpack.c.h.b16 %v644
    %v731 = vunpack.c.l.b16 %v645
    %v732 = vunpack.c.h.b16 %v645
    %v733 = vunpack.c.l.b16 %v646
    %v734 = vunpack.c.h.b16 %v646
    %v735 = vunpack.c.l.b16 %v647
    %v736 = vunpack.c.h.b16 %v647
    %v737 = vunpack.c.l.b16 %v648
    %v738 = vunpack.c.h.b16 %v648
    %v739 = vunpack.c.l.b16 %v649
    %v740 = vunpack.c.h.b16 %v649
    %v741 = vunpack.c.l.b16 %v650
    %v742 = vunpack.c.h.b16 %v650
    %v743 = vunpack.c.l.b16 %v651
    %v744 = vunpack.c.h.b16 %v651
    %v745 = vunpack.c.l.b16 %v652
    %v746 = vunpack.c.h.b16 %v652
    %v747 = vunpack.c.l.b16 %v653
    %v748 = vunpack.c.h.b16 %v653
    %v749 = vunpack.c.l.b16 %v654
    %v750 = vunpack.c.h.b16 %v654
    %v751 = vpack.c.b16 %v689, %v687
    %v752 = vpack.c.b16 %v690, %v688
    %v753 = vpack.c.b16 %v693, %v691
    %v754 = vpack.c.b16 %v694, %v692
    %v755 = vpack.c.b16 %v697, %v695
    %v756 = vpack.c.b16 %v698, %v696
    %v757 = vpack.c.b16 %v701, %v699
    %v758 = vpack.c.b16 %v702, %v700
    %v759 = vpack.c.b16 %v705, %v703
    %v760 = vpack.c.b16 %v706, %v704
    %v761 = vpack.c.b16 %v709, %v707
    %v762 = vpack.c.b16 %v710, %v708
    %v763 = vpack.c.b16 %v713, %v711
    %v764 = vpack.c.b16 %v714, %v712
    %v765 = vpack.c.b16 %v717, %v715
    %v766 = vpack.c.b16 %v718, %v716
    %v767 = vpack.c.b16 %v721, %v719
    %v768 = vpack.c.b16 %v722, %v720
    %v769 = vpack.c.b16 %v725, %v723
    %v770 = vpack.c.b16 %v726, %v724
    %v771 = vpack.c.b16 %v729, %v727
    %v772 = vpack.c.b16 %v730, %v728
    %v773 = vpack.c.b16 %v733, %v731
    %v774 = vpack.c.b16 %v734, %v732
    %v775 = vpack.c.b16 %v737, %v735
    %v776 = vpack.c.b16 %v738, %v736
    %v777 = vpack.c.b16 %v741, %v739
    %v778 = vpack.c.b16 %v742, %v740
    %v779 = vpack.c.b16 %v745, %v743
    %v780 = vpack.c.b16 %v746, %v744
    %v781 = vpack.c.b16 %v749, %v747
    %v782 = vpack.c.b16 %v750, %v748
    %815 = vmatprep.subr.bf16.mxu0 %v752
    %816 = vmatpush1.bf16.msra.mxu0 %v751
    %817 = vmatprep.subr.bf16.mxu0 %v754
    %818 = vmatpush1.bf16.msra.mxu0 %v753
    %819 = vmatprep.subr.bf16.mxu0 %v756
    %820 = vmatpush1.bf16.msra.mxu0 %v755
    %821 = vmatprep.subr.bf16.mxu0 %v758
    %822 = vmatpush1.bf16.msra.mxu0 %v757
    %823 = vmatprep.subr.bf16.mxu0 %v760
    %824 = vmatpush1.bf16.msra.mxu0 %v759
    %825 = vmatprep.subr.bf16.mxu0 %v762
    %826 = vmatpush1.bf16.msra.mxu0 %v761
    %827 = vmatprep.subr.bf16.mxu0 %v764
    %828 = vmatpush1.bf16.msra.mxu0 %v763
    %829 = vmatprep.subr.bf16.mxu0 %v766
    %830 = vmatpush1.bf16.msra.mxu0 %v765
    %831 = vmatprep.subr.bf16.mxu0 %v768
    %832 = vmatpush1.bf16.msra.mxu0 %v767
    %833 = vmatprep.subr.bf16.mxu0 %v770
    %834 = vmatpush1.bf16.msra.mxu0 %v769
    %835 = vmatprep.subr.bf16.mxu0 %v772
    %836 = vmatpush1.bf16.msra.mxu0 %v771
    %837 = vmatprep.subr.bf16.mxu0 %v774
    %838 = vmatpush1.bf16.msra.mxu0 %v773
    %839 = vmatprep.subr.bf16.mxu0 %v776
    %840 = vmatpush1.bf16.msra.mxu0 %v775
    %841 = vmatprep.subr.bf16.mxu0 %v778
    %842 = vmatpush1.bf16.msra.mxu0 %v777
    %843 = vmatprep.subr.bf16.mxu0 %v780
    %844 = vmatpush1.bf16.msra.mxu0 %v779
    %845 = vmatprep.subr.bf16.mxu0 %v782
    %846 = vmatpush1.bf16.msra.mxu0 %v781
    %847 = vmatprep.mubr.bf16.mxu0 %v618
    %848 = vmatmul.mubr.bf16.gmra.mrb[0].mxu0 %v617
    %v849 = vpop.f32.mrb[0].mxu0
    %v850 = vadd.f32 0.0, %v849
    %v851 = vpop.f32.mrb[0].mxu0
    %v852 = vadd.f32 0.0, %v851
    %v853 = vpop.f32.mrb[0].mxu0
    %v854 = vadd.f32 0.0, %v853
    %v855 = vpop.f32.mrb[0].mxu0
    %v856 = vadd.f32 0.0, %v855
    %857 = vmatprep.mubr.bf16.mxu0 %v620
    %858 = vmatmul.mubr.bf16.gmra.mrb[0].mxu0 %v619
    %v859 = vpop.f32.mrb[0].mxu0
    %v860 = vadd.f32 0.0, %v859
    %v861 = vpop.f32.mrb[0].mxu0
    %v862 = vadd.f32 0.0, %v861
    %v863 = vpop.f32.mrb[0].mxu0
    %v864 = vadd.f32 0.0, %v863
    %v865 = vpop.f32.mrb[0].mxu0
    %v866 = vadd.f32 0.0, %v865
    %867 = vmatprep.mubr.bf16.mxu0 %v622
    %868 = vmatmul.mubr.bf16.gmra.mrb[0].mxu0 %v621
    %v869 = vpop.f32.mrb[0].mxu0
    %v870 = vadd.f32 0.0, %v869
    %v871 = vpop.f32.mrb[0].mxu0
    %v872 = vadd.f32 0.0, %v871
    %v873 = vpop.f32.mrb[0].mxu0
    %v874 = vpop.f32.mrb[0].mxu0
    %875 = vdwg.mxu0
    %v908 = vunpack.c.l.b16 %v585
    %v909 = vunpack.c.h.b16 %v585
    %v910 = vunpack.c.l.b16 %v586
    %v911 = vunpack.c.h.b16 %v586
    %v912 = vunpack.c.l.b16 %v587
    %v913 = vunpack.c.h.b16 %v587
    %v914 = vunpack.c.l.b16 %v588
    %v915 = vunpack.c.h.b16 %v588
    %v916 = vunpack.c.l.b16 %v589
    %v917 = vunpack.c.h.b16 %v589
    %v918 = vunpack.c.l.b16 %v590
    %v919 = vunpack.c.h.b16 %v590
    %v920 = vunpack.c.l.b16 %v591
    %v921 = vunpack.c.h.b16 %v591
    %v922 = vunpack.c.l.b16 %v592
    %v923 = vunpack.c.h.b16 %v592
    %v924 = vunpack.c.l.b16 %v593
    %v925 = vunpack.c.h.b16 %v593
    %v926 = vunpack.c.l.b16 %v594
    %v927 = vunpack.c.h.b16 %v594
    %v928 = vunpack.c.l.b16 %v595
    %v929 = vunpack.c.h.b16 %v595
    %v930 = vunpack.c.l.b16 %v596
    %v931 = vunpack.c.h.b16 %v596
    %v932 = vunpack.c.l.b16 %v597
    %v933 = vunpack.c.h.b16 %v597
    %v934 = vunpack.c.l.b16 %v598
    %v935 = vunpack.c.h.b16 %v598
    %v936 = vunpack.c.l.b16 %v599
    %v937 = vunpack.c.h.b16 %v599
    %v938 = vunpack.c.l.b16 %v600
    %v939 = vunpack.c.h.b16 %v600
    %v940 = vunpack.c.l.b16 %v601
    %v941 = vunpack.c.h.b16 %v601
    %v942 = vunpack.c.l.b16 %v602
    %v943 = vunpack.c.h.b16 %v602
    %v944 = vunpack.c.l.b16 %v603
    %v945 = vunpack.c.h.b16 %v603
    %v946 = vunpack.c.l.b16 %v604
    %v947 = vunpack.c.h.b16 %v604
    %v948 = vunpack.c.l.b16 %v605
    %v949 = vunpack.c.h.b16 %v605
    %v950 = vunpack.c.l.b16 %v606
    %v951 = vunpack.c.h.b16 %v606
    %v952 = vunpack.c.l.b16 %v607
    %v953 = vunpack.c.h.b16 %v607
    %v954 = vunpack.c.l.b16 %v608
    %v955 = vunpack.c.h.b16 %v608
    %v956 = vunpack.c.l.b16 %v609
    %v957 = vunpack.c.h.b16 %v609
    %v958 = vunpack.c.l.b16 %v610
    %v959 = vunpack.c.h.b16 %v610
    %v960 = vunpack.c.l.b16 %v611
    %v961 = vunpack.c.h.b16 %v611
    %v962 = vunpack.c.l.b16 %v612
    %v963 = vunpack.c.h.b16 %v612
    %v964 = vunpack.c.l.b16 %v613
    %v965 = vunpack.c.h.b16 %v613
    %v966 = vunpack.c.l.b16 %v614
    %v967 = vunpack.c.h.b16 %v614
    %v968 = vunpack.c.l.b16 %v615
    %v969 = vunpack.c.h.b16 %v615
    %v970 = vunpack.c.l.b16 %v616
    %v971 = vunpack.c.h.b16 %v616
    %v972 = vpack.c.b16 %v910, %v908
    %v973 = vpack.c.b16 %v911, %v909
    %v974 = vpack.c.b16 %v914, %v912
    %v975 = vpack.c.b16 %v915, %v913
    %v976 = vpack.c.b16 %v918, %v916
    %v977 = vpack.c.b16 %v919, %v917
    %v978 = vpack.c.b16 %v922, %v920
    %v979 = vpack.c.b16 %v923, %v921
    %v980 = vpack.c.b16 %v926, %v924
    %v981 = vpack.c.b16 %v927, %v925
    %v982 = vpack.c.b16 %v930, %v928
    %v983 = vpack.c.b16 %v931, %v929
    %v984 = vpack.c.b16 %v934, %v932
    %v985 = vpack.c.b16 %v935, %v933
    %v986 = vpack.c.b16 %v938, %v936
    %v987 = vpack.c.b16 %v939, %v937
    %v988 = vpack.c.b16 %v942, %v940
    %v989 = vpack.c.b16 %v943, %v941
    %v990 = vpack.c.b16 %v946, %v944
    %v991 = vpack.c.b16 %v947, %v945
    %v992 = vpack.c.b16 %v950, %v948
    %v993 = vpack.c.b16 %v951, %v949
    %v994 = vpack.c.b16 %v954, %v952
    %v995 = vpack.c.b16 %v955, %v953
    %v996 = vpack.c.b16 %v958, %v956
    %v997 = vpack.c.b16 %v959, %v957
    %v998 = vpack.c.b16 %v962, %v960
    %v999 = vpack.c.b16 %v963, %v961
    %v1000 = vpack.c.b16 %v966, %v964
    %v1001 = vpack.c.b16 %v967, %v965
    %v1002 = vpack.c.b16 %v970, %v968
    %v1003 = vpack.c.b16 %v971, %v969
    %1036 = vmatprep.subr.bf16.mxu0 %v973
    %1037 = vmatpush1.bf16.msra.mxu0 %v972
    %1038 = vmatprep.subr.bf16.mxu0 %v975
    %1039 = vmatpush1.bf16.msra.mxu0 %v974
    %1040 = vmatprep.subr.bf16.mxu0 %v977
    %1041 = vmatpush1.bf16.msra.mxu0 %v976
    %1042 = vmatprep.subr.bf16.mxu0 %v979
    %1043 = vmatpush1.bf16.msra.mxu0 %v978
    %1044 = vmatprep.subr.bf16.mxu0 %v981
    %1045 = vmatpush1.bf16.msra.mxu0 %v980
    %1046 = vmatprep.subr.bf16.mxu0 %v983
    %1047 = vmatpush1.bf16.msra.mxu0 %v982
    %1048 = vmatprep.subr.bf16.mxu0 %v985
    %1049 = vmatpush1.bf16.msra.mxu0 %v984
    %1050 = vmatprep.subr.bf16.mxu0 %v987
    %1051 = vmatpush1.bf16.msra.mxu0 %v986
    %1052 = vmatprep.subr.bf16.mxu0 %v989
    %1053 = vmatpush1.bf16.msra.mxu0 %v988
    %1054 = vmatprep.subr.bf16.mxu0 %v991
    %1055 = vmatpush1.bf16.msra.mxu0 %v990
    %1056 = vmatprep.subr.bf16.mxu0 %v993
    %1057 = vmatpush1.bf16.msra.mxu0 %v992
    %1058 = vmatprep.subr.bf16.mxu0 %v995
    %1059 = vmatpush1.bf16.msra.mxu0 %v994
    %1060 = vmatprep.subr.bf16.mxu0 %v997
    %1061 = vmatpush1.bf16.msra.mxu0 %v996
    %1062 = vmatprep.subr.bf16.mxu0 %v999
    %1063 = vmatpush1.bf16.msra.mxu0 %v998
    %1064 = vmatprep.subr.bf16.mxu0 %v1001
    %1065 = vmatpush1.bf16.msra.mxu0 %v1000
    %1066 = vmatprep.subr.bf16.mxu0 %v1003
    %1067 = vmatpush1.bf16.msra.mxu0 %v1002
    %1068 = vmatprep.mubr.bf16.mxu0 %v580
    %1069 = vmatmul.mubr.bf16.gmra.mrb[0].mxu0 %v579
    %v1070 = vpop.f32.mrb[0].mxu0
    %v1071 = vadd.f32 %v850, %v1070
    %v1072 = vpop.f32.mrb[0].mxu0
    %v1073 = vadd.f32 %v852, %v1072
    %v1074 = vpop.f32.mrb[0].mxu0
    %v1075 = vadd.f32 %v854, %v1074
    %v1076 = vpop.f32.mrb[0].mxu0
    %v1077 = vadd.f32 %v856, %v1076
    %1078 = vmatprep.mubr.bf16.mxu0 %v582
    %1079 = vmatmul.mubr.bf16.gmra.mrb[0].mxu0 %v581
    %v1080 = vpop.f32.mrb[0].mxu0
    %v1081 = vadd.f32 %v860, %v1080
    %v1082 = vpop.f32.mrb[0].mxu0
    %v1083 = vadd.f32 %v862, %v1082
    %v1084 = vpop.f32.mrb[0].mxu0
    %v1085 = vadd.f32 %v864, %v1084
    %v1086 = vpop.f32.mrb[0].mxu0
    %v1087 = vadd.f32 %v866, %v1086
    %1088 = vmatprep.mubr.bf16.mxu0 %v584
    %1089 = vmatmul.mubr.bf16.gmra.mrb[0].mxu0 %v583
    %v1090 = vpop.f32.mrb[0].mxu0
    %v1091 = vadd.f32 %v870, %v1090
    %v1092 = vpop.f32.mrb[0].mxu0
    %v1093 = vadd.f32 %v872, %v1092
    %v1094 = vpop.f32.mrb[0].mxu0
    %v1095 = vpop.f32.mrb[0].mxu0
    %1096 = vdwg.mxu0
    %v1097 = vld [vmem:[#allocation8] sm:$0x3]
    %v1099 = vlaneseq
    %v1100 = vshrl.u32 %v1099, 7
    %v1101 = vsub.s32 0, %v1100
    %v1102 = vrot.slane %v1097, %v1101
    %v1103 = vlaneseq
    %v1104 = vshrl.u32 %v1103, 7
    %v1105 = vsub.s32 1, %v1104
    %v1106 = vrot.slane %v1097, %v1105
    %v1109 = vadd.f32 %v1071, %v1102
    %v1110 = vadd.f32 %v1073, %v1106
    %v1111 = vadd.f32 %v1075, %v1102
    %v1112 = vadd.f32 %v1077, %v1106
    %v1113 = vadd.f32 %v1081, %v1102
    %v1114 = vadd.f32 %v1083, %v1106
    %v1115 = vadd.f32 %v1085, %v1102
    %v1116 = vadd.f32 %v1087, %v1106
    %v1117 = vadd.f32 %v1091, %v1102
    %v1118 = vadd.f32 %v1093, %v1106
    %v1119 = vmax.f32 %v1109, 0.0
    %v1120 = vmax.f32 %v1110, 0.0
    %v1121 = vmax.f32 %v1111, 0.0
    %v1122 = vmax.f32 %v1112, 0.0
    %v1123 = vmax.f32 %v1113, 0.0
    %v1124 = vmax.f32 %v1114, 0.0
    %v1125 = vmax.f32 %v1115, 0.0
    %v1126 = vmax.f32 %v1116, 0.0
    %v1127 = vmax.f32 %v1117, 0.0
    %v1128 = vmax.f32 %v1118, 0.0
    %v1129 = vld [vmem:[#allocation9] sm:$0x3]
    %v1131 = vlaneseq
    %v1132 = vshrl.u32 %v1131, 7
    %v1133 = vsub.s32 0, %v1132
    %v1134 = vrot.slane %v1129, %v1133
    %v1135 = vlaneseq
    %v1136 = vshrl.u32 %v1135, 7
    %v1137 = vsub.s32 1, %v1136
    %v1138 = vrot.slane %v1129, %v1137
    %v1141 = vmul.f32 %v1119, %v1134
    %v1142 = vmul.f32 %v1120, %v1138
    %v1143 = vmul.f32 %v1121, %v1134
    %v1144 = vmul.f32 %v1122, %v1138
    %v1145 = vmul.f32 %v1123, %v1134
    %v1146 = vmul.f32 %v1124, %v1138
    %v1147 = vmul.f32 %v1125, %v1134
    %v1148 = vmul.f32 %v1126, %v1138
    %v1149 = vmul.f32 %v1127, %v1134
    %v1150 = vmul.f32 %v1128, %v1138
    %v1151 = vadd.f32 %v1141, %v1142
    %1152 = vadd.xlane.f32.xlu0 %v1151
    %v1153 = vpop.xlane.xlu0 %1152
    %v1154 = vadd.f32 %v1143, %v1144
    %1155 = vadd.xlane.f32.xlu0 %v1154
    %v1156 = vpop.xlane.xlu0 %1155
    %v1157 = vadd.f32 %v1145, %v1146
    %1158 = vadd.xlane.f32.xlu0 %v1157
    %v1159 = vpop.xlane.xlu0 %1158
    %v1160 = vadd.f32 %v1147, %v1148
    %1161 = vadd.xlane.f32.xlu0 %v1160
    %v1162 = vpop.xlane.xlu0 %1161
    %v1163 = vadd.f32 %v1149, %v1150
    %1164 = vadd.xlane.f32.xlu0 %v1163
    %v1165 = vpop.xlane.xlu0 %1164
    %v1166 = vld [vmem:[#allocation2] sm:$0x1]
    %v1168 = vlaneseq
    %v1169 = vshrl.u32 %v1168, 7
    %v1170 = vsub.s32 0, %v1169
    %v1171 = vrot.slane %v1166, %v1170
    %v1173 = vadd.f32 %v1153, %v1171
    %v1174 = vadd.f32 %v1156, %v1171
    %v1175 = vadd.f32 %v1159, %v1171
    %v1176 = vadd.f32 %v1162, %v1171
    %v1177 = vadd.f32 %v1165, %v1171
    %vm1178 = vcmask 7168
    %1179 = vst.msk [vmem:[%s65] sm:$0xff] %vm1178, %v1173
    %1180 = vst.msk [vmem:[%s65 + $0x8] sm:$0xff] %vm1178, %v1174
    %1181 = vst.msk [vmem:[%s65 + $0x10] sm:$0xff] %vm1178, %v1175
    %1182 = vst.msk [vmem:[%s65 + $0x18] sm:$0xff] %vm1178, %v1176
    %1183 = vst.msk [vmem:[%s65 + $0x20] sm:$0xff] %vm1178, %v1177
    %v1184 = vld [vmem:[%s7] sm:$0xff]
    %vm1185 = vcmp.eq.s32.totalorder %v1184, 0
    %v1186 = vsel %vm1185, 1, 0
    %v1187 = vcvt.s32.f32 %v1186
    %v1188 = vld [vmem:[%s5] sm:$0xff]
    %v1189 = vld [vmem:[%s5 + $0x8] sm:$0xff]
    %1191 = vset.pattern.permute.xlu0 0
    %1192 = vperm.xlu0 %1191, %v1187
    %v1193 = vpop.permute.xlu0 %1192
    %v1195 = vmul.f32 %v1193, %v1188
    %v1196 = vmul.f32 %v1193, %v1189
    %v1197 = vadd.f32 %v1195, 0.0
    %v1198 = vadd.f32 %v1196, 0.0
    %vm1199 = vcmp.eq.s32.totalorder %v1184, 1
    %v1200 = vsel %vm1199, 1, 0
    %v1201 = vcvt.s32.f32 %v1200
    %s1202 = scalar_lea.vmem %s5, 16
    %v1203 = vld [vmem:[%s1202] sm:$0xff]
    %v1204 = vld [vmem:[%s1202 + $0x8] sm:$0xff]
    %1206 = vset.pattern.permute.xlu0 0
    %1207 = vperm.xlu0 %1206, %v1201
    %v1208 = vpop.permute.xlu0 %1207
    %v1210 = vmul.f32 %v1208, %v1203
    %v1211 = vmul.f32 %v1208, %v1204
    %v1212 = vadd.f32 %v1197, %v1210
    %v1213 = vadd.f32 %v1198, %v1211
    %vm1214 = vcmp.eq.s32.totalorder %v1184, 2
    %v1215 = vsel %vm1214, 1, 0
    %v1216 = vcvt.s32.f32 %v1215
    %s1217 = scalar_lea.vmem %s5, 32
    %v1218 = vld [vmem:[%s1217] sm:$0xff]
    %v1219 = vld [vmem:[%s1217 + $0x8] sm:$0xff]
    %1221 = vset.pattern.permute.xlu0 0
    %1222 = vperm.xlu0 %1221, %v1216
    %v1223 = vpop.permute.xlu0 %1222
    %v1225 = vmul.f32 %v1223, %v1218
    %v1226 = vmul.f32 %v1223, %v1219
    %v1227 = vadd.f32 %v1212, %v1225
    %v1228 = vadd.f32 %v1213, %v1226
    %vm1229 = vcmp.eq.s32.totalorder %v1184, 3
    %v1230 = vsel %vm1229, 1, 0
    %v1231 = vcvt.s32.f32 %v1230
    %s1232 = scalar_lea.vmem %s5, 48
    %v1233 = vld [vmem:[%s1232] sm:$0xff]
    %v1234 = vld [vmem:[%s1232 + $0x8] sm:$0xff]
    %1236 = vset.pattern.permute.xlu0 0
    %1237 = vperm.xlu0 %1236, %v1231
    %v1238 = vpop.permute.xlu0 %1237
    %v1240 = vmul.f32 %v1238, %v1233
    %v1241 = vmul.f32 %v1238, %v1234
    %v1242 = vadd.f32 %v1227, %v1240
    %v1243 = vadd.f32 %v1228, %v1241
    %vm1244 = vcmp.eq.s32.totalorder %v1184, 4
    %v1245 = vsel %vm1244, 1, 0
    %v1246 = vcvt.s32.f32 %v1245
    %s1247 = scalar_lea.vmem %s5, 64
    %v1248 = vld [vmem:[%s1247] sm:$0xff]
    %v1249 = vld [vmem:[%s1247 + $0x8] sm:$0xff]
    %1251 = vset.pattern.permute.xlu0 0
    %1252 = vperm.xlu0 %1251, %v1246
    %v1253 = vpop.permute.xlu0 %1252
    %v1255 = vmul.f32 %v1253, %v1248
    %v1256 = vmul.f32 %v1253, %v1249
    %v1257 = vadd.f32 %v1242, %v1255
    %v1258 = vadd.f32 %v1243, %v1256
    %v1259 = vmul.f32 %v1257, 0.999995
    %v1260 = vmul.f32 %v1258, 0.999995
    %v1261 = vmul.f32 %v567, 0.999995
    %v1262 = vmul.f32 %v568, 0.999995
    %v1263 = vlaneseq
    %v1264 = vshrl.u32 %v1263, 7
    %v1265 = vlaneseq
    %v1266 = vand.u32 %v1265, 127
    %vm1267 = vcmp.eq.s32.totalorder %v1264, %v1266
    %v1268 = vsel %vm1267, 1, 0
    %v1269 = vcvt.s32.f32 %v1268
    %v1270 = vpack.c.bf16 %v1261, %v1261
    %v1271 = vpack.c.bf16 %v1262, %v1262
    %v1272 = vld [vmem:[#allocation11] sm:$0xff]
    %v1273 = vld [vmem:[#allocation11 + $0x8] sm:$0xff]
    %v1274 = vld [vmem:[#allocation11 + $0x10] sm:$0xff]
    %v1275 = vld [vmem:[#allocation11 + $0x18] sm:$0xff]
    %v1276 = vld [vmem:[#allocation11 + $0x20] sm:$0xff]
    %v1277 = vld [vmem:[#allocation11 + $0x28] sm:$0xff]
    %v1278 = vld [vmem:[#allocation11 + $0x30] sm:$0xff]
    %v1279 = vld [vmem:[#allocation11 + $0x38] sm:$0xff]
    %v1280 = vld [vmem:[#allocation11 + $0x40] sm:$0xff]
    %v1281 = vld [vmem:[#allocation11 + $0x48] sm:$0xff]
    %v1282 = vld [vmem:[#allocation11 + $0x50] sm:$0xff]
    %v1283 = vld [vmem:[#allocation11 + $0x58] sm:$0xff]
    %v1284 = vld [vmem:[#allocation11 + $0x60] sm:$0xff]
    %v1285 = vld [vmem:[#allocation11 + $0x68] sm:$0xff]
    %v1286 = vld [vmem:[#allocation11 + $0x70] sm:$0xff]
    %v1287 = vld [vmem:[#allocation11 + $0x78] sm:$0xff]
    %v1288 = vld [vmem:[#allocation11 + $0x80] sm:$0xff]
    %v1289 = vld [vmem:[#allocation11 + $0x88] sm:$0xff]
    %v1290 = vld [vmem:[#allocation11 + $0x90] sm:$0xff]
    %v1291 = vld [vmem:[#allocation11 + $0x98] sm:$0xff]
    %v1292 = vld [vmem:[#allocation11 + $0xa0] sm:$0xff]
    %v1293 = vld [vmem:[#allocation11 + $0xa8] sm:$0xff]
    %v1294 = vld [vmem:[#allocation11 + $0xb0] sm:$0xff]
    %v1295 = vld [vmem:[#allocation11 + $0xb8] sm:$0xff]
    %v1296 = vld [vmem:[#allocation11 + $0xc0] sm:$0xff]
    %v1297 = vld [vmem:[#allocation11 + $0xc8] sm:$0xff]
    %v1298 = vld [vmem:[#allocation11 + $0xd0] sm:$0xff]
    %v1299 = vld [vmem:[#allocation11 + $0xd8] sm:$0xff]
    %v1300 = vld [vmem:[#allocation11 + $0xe0] sm:$0xff]
    %v1301 = vld [vmem:[#allocation11 + $0xe8] sm:$0xff]
    %v1302 = vld [vmem:[#allocation11 + $0xf0] sm:$0xff]
    %v1303 = vld [vmem:[#allocation11 + $0xf8] sm:$0xff]
    %v1304 = vld [vmem:[%s19] sm:$0x3]
    %v1306 = vlaneseq
    %v1307 = vshrl.u32 %v1306, 7
    %v1308 = vsub.s32 0, %v1307
    %v1309 = vrot.slane %v1304, %v1308
    %v1310 = vlaneseq
    %v1311 = vshrl.u32 %v1310, 7
    %v1312 = vsub.s32 1, %v1311
    %v1313 = vrot.slane %v1304, %v1312
    %v1348 = vunpack.c.l.b16 %v1272
    %v1349 = vunpack.c.h.b16 %v1272
    %v1350 = vunpack.c.l.b16 %v1273
    %v1351 = vunpack.c.h.b16 %v1273
    %v1352 = vunpack.c.l.b16 %v1274
    %v1353 = vunpack.c.h.b16 %v1274
    %v1354 = vunpack.c.l.b16 %v1275
    %v1355 = vunpack.c.h.b16 %v1275
    %v1356 = vunpack.c.l.b16 %v1276
    %v1357 = vunpack.c.h.b16 %v1276
    %v1358 = vunpack.c.l.b16 %v1277
    %v1359 = vunpack.c.h.b16 %v1277
    %v1360 = vunpack.c.l.b16 %v1278
    %v1361 = vunpack.c.h.b16 %v1278
    %v1362 = vunpack.c.l.b16 %v1279
    %v1363 = vunpack.c.h.b16 %v1279
    %v1364 = vunpack.c.l.b16 %v1280
    %v1365 = vunpack.c.h.b16 %v1280
    %v1366 = vunpack.c.l.b16 %v1281
    %v1367 = vunpack.c.h.b16 %v1281
    %v1368 = vunpack.c.l.b16 %v1282
    %v1369 = vunpack.c.h.b16 %v1282
    %v1370 = vunpack.c.l.b16 %v1283
    %v1371 = vunpack.c.h.b16 %v1283
    %v1372 = vunpack.c.l.b16 %v1284
    %v1373 = vunpack.c.h.b16 %v1284
    %v1374 = vunpack.c.l.b16 %v1285
    %v1375 = vunpack.c.h.b16 %v1285
    %v1376 = vunpack.c.l.b16 %v1286
    %v1377 = vunpack.c.h.b16 %v1286
    %v1378 = vunpack.c.l.b16 %v1287
    %v1379 = vunpack.c.h.b16 %v1287
    %v1380 = vunpack.c.l.b16 %v1288
    %v1381 = vunpack.c.h.b16 %v1288
    %v1382 = vunpack.c.l.b16 %v1289
    %v1383 = vunpack.c.h.b16 %v1289
    %v1384 = vunpack.c.l.b16 %v1290
    %v1385 = vunpack.c.h.b16 %v1290
    %v1386 = vunpack.c.l.b16 %v1291
    %v1387 = vunpack.c.h.b16 %v1291
    %v1388 = vunpack.c.l.b16 %v1292
    %v1389 = vunpack.c.h.b16 %v1292
    %v1390 = vunpack.c.l.b16 %v1293
    %v1391 = vunpack.c.h.b16 %v1293
    %v1392 = vunpack.c.l.b16 %v1294
    %v1393 = vunpack.c.h.b16 %v1294
    %v1394 = vunpack.c.l.b16 %v1295
    %v1395 = vunpack.c.h.b16 %v1295
    %v1396 = vunpack.c.l.b16 %v1296
    %v1397 = vunpack.c.h.b16 %v1296
    %v1398 = vunpack.c.l.b16 %v1297
    %v1399 = vunpack.c.h.b16 %v1297
    %v1400 = vunpack.c.l.b16 %v1298
    %v1401 = vunpack.c.h.b16 %v1298
    %v1402 = vunpack.c.l.b16 %v1299
    %v1403 = vunpack.c.h.b16 %v1299
    %v1404 = vunpack.c.l.b16 %v1300
    %v1405 = vunpack.c.h.b16 %v1300
    %v1406 = vunpack.c.l.b16 %v1301
    %v1407 = vunpack.c.h.b16 %v1301
    %v1408 = vunpack.c.l.b16 %v1302
    %v1409 = vunpack.c.h.b16 %v1302
    %v1410 = vunpack.c.l.b16 %v1303
    %v1411 = vunpack.c.h.b16 %v1303
    %v1412 = vpack.c.b16 %v1350, %v1348
    %v1413 = vpack.c.b16 %v1351, %v1349
    %v1414 = vpack.c.b16 %v1354, %v1352
    %v1415 = vpack.c.b16 %v1355, %v1353
    %v1416 = vpack.c.b16 %v1358, %v1356
    %v1417 = vpack.c.b16 %v1359, %v1357
    %v1418 = vpack.c.b16 %v1362, %v1360
    %v1419 = vpack.c.b16 %v1363, %v1361
    %v1420 = vpack.c.b16 %v1366, %v1364
    %v1421 = vpack.c.b16 %v1367, %v1365
    %v1422 = vpack.c.b16 %v1370, %v1368
    %v1423 = vpack.c.b16 %v1371, %v1369
    %v1424 = vpack.c.b16 %v1374, %v1372
    %v1425 = vpack.c.b16 %v1375, %v1373
    %v1426 = vpack.c.b16 %v1378, %v1376
    %v1427 = vpack.c.b16 %v1379, %v1377
    %v1428 = vpack.c.b16 %v1382, %v1380
    %v1429 = vpack.c.b16 %v1383, %v1381
    %v1430 = vpack.c.b16 %v1386, %v1384
    %v1431 = vpack.c.b16 %v1387, %v1385
    %v1432 = vpack.c.b16 %v1390, %v1388
    %v1433 = vpack.c.b16 %v1391, %v1389
    %v1434 = vpack.c.b16 %v1394, %v1392
    %v1435 = vpack.c.b16 %v1395, %v1393
    %v1436 = vpack.c.b16 %v1398, %v1396
    %v1437 = vpack.c.b16 %v1399, %v1397
    %v1438 = vpack.c.b16 %v1402, %v1400
    %v1439 = vpack.c.b16 %v1403, %v1401
    %v1440 = vpack.c.b16 %v1406, %v1404
    %v1441 = vpack.c.b16 %v1407, %v1405
    %v1442 = vpack.c.b16 %v1410, %v1408
    %v1443 = vpack.c.b16 %v1411, %v1409
    %1476 = vmatprep.subr.bf16.mxu0 %v1413
    %1477 = vmatpush1.bf16.msra.mxu0 %v1412
    %1478 = vmatprep.subr.bf16.mxu0 %v1415
    %1479 = vmatpush1.bf16.msra.mxu0 %v1414
    %1480 = vmatprep.subr.bf16.mxu0 %v1417
    %1481 = vmatpush1.bf16.msra.mxu0 %v1416
    %1482 = vmatprep.subr.bf16.mxu0 %v1419
    %1483 = vmatpush1.bf16.msra.mxu0 %v1418
    %1484 = vmatprep.subr.bf16.mxu0 %v1421
    %1485 = vmatpush1.bf16.msra.mxu0 %v1420
    %1486 = vmatprep.subr.bf16.mxu0 %v1423
    %1487 = vmatpush1.bf16.msra.mxu0 %v1422
    %1488 = vmatprep.subr.bf16.mxu0 %v1425
    %1489 = vmatpush1.bf16.msra.mxu0 %v1424
    %1490 = vmatprep.subr.bf16.mxu0 %v1427
    %1491 = vmatpush1.bf16.msra.mxu0 %v1426
    %1492 = vmatprep.subr.bf16.mxu0 %v1429
    %1493 = vmatpush1.bf16.msra.mxu0 %v1428
    %1494 = vmatprep.subr.bf16.mxu0 %v1431
    %1495 = vmatpush1.bf16.msra.mxu0 %v1430
    %1496 = vmatprep.subr.bf16.mxu0 %v1433
    %1497 = vmatpush1.bf16.msra.mxu0 %v1432
    %1498 = vmatprep.subr.bf16.mxu0 %v1435
    %1499 = vmatpush1.bf16.msra.mxu0 %v1434
    %1500 = vmatprep.subr.bf16.mxu0 %v1437
    %1501 = vmatpush1.bf16.msra.mxu0 %v1436
    %1502 = vmatprep.subr.bf16.mxu0 %v1439
    %1503 = vmatpush1.bf16.msra.mxu0 %v1438
    %1504 = vmatprep.subr.bf16.mxu0 %v1441
    %1505 = vmatpush1.bf16.msra.mxu0 %v1440
    %1506 = vmatprep.subr.bf16.mxu0 %v1443
    %1507 = vmatpush1.bf16.msra.mxu0 %v1442
    %1508 = vmatprep.mubr.bf16.mxu0 %v1271
    %1509 = vmatmul.mubr.bf16.gmra.mrb[0].mxu0 %v1270
    %v1510 = vpop.f32.mrb[0].mxu0
    %v1511 = vadd.f32 %v1309, %v1510
    %v1512 = vpop.f32.mrb[0].mxu0
    %v1513 = vadd.f32 %v1313, %v1512
    %v1514 = vpop.f32.mrb[0].mxu0
    %v1515 = vpop.f32.mrb[0].mxu0
    %1516 = vdwg.mxu0
    %v1517 = vmax.f32 %v1511, 0.0
    %v1518 = vmax.f32 %v1513, 0.0
    %v1519 = vpack.c.bf16 %v1517, %v1517
    %v1520 = vpack.c.bf16 %v1518, %v1518
    %v1521 = vld [vmem:[#allocation12] sm:$0xff]
    %v1522 = vld [vmem:[#allocation12 + $0x8] sm:$0xff]
    %v1523 = vld [vmem:[#allocation12 + $0x10] sm:$0xff]
    %v1524 = vld [vmem:[#allocation12 + $0x18] sm:$0xff]
    %v1525 = vld [vmem:[#allocation12 + $0x20] sm:$0xff]
    %v1526 = vld [vmem:[#allocation12 + $0x28] sm:$0xff]
    %v1527 = vld [vmem:[#allocation12 + $0x30] sm:$0xff]
    %v1528 = vld [vmem:[#allocation12 + $0x38] sm:$0xff]
    %v1529 = vld [vmem:[#allocation12 + $0x40] sm:$0xff]
    %v1530 = vld [vmem:[#allocation12 + $0x48] sm:$0xff]
    %v1531 = vld [vmem:[#allocation12 + $0x50] sm:$0xff]
    %v1532 = vld [vmem:[#allocation12 + $0x58] sm:$0xff]
    %v1533 = vld [vmem:[#allocation12 + $0x60] sm:$0xff]
    %v1534 = vld [vmem:[#allocation12 + $0x68] sm:$0xff]
    %v1535 = vld [vmem:[#allocation12 + $0x70] sm:$0xff]
    %v1536 = vld [vmem:[#allocation12 + $0x78] sm:$0xff]
    %v1537 = vld [vmem:[#allocation12 + $0x80] sm:$0xff]
    %v1538 = vld [vmem:[#allocation12 + $0x88] sm:$0xff]
    %v1539 = vld [vmem:[#allocation12 + $0x90] sm:$0xff]
    %v1540 = vld [vmem:[#allocation12 + $0x98] sm:$0xff]
    %v1541 = vld [vmem:[#allocation12 + $0xa0] sm:$0xff]
    %v1542 = vld [vmem:[#allocation12 + $0xa8] sm:$0xff]
    %v1543 = vld [vmem:[#allocation12 + $0xb0] sm:$0xff]
    %v1544 = vld [vmem:[#allocation12 + $0xb8] sm:$0xff]
    %v1545 = vld [vmem:[#allocation12 + $0xc0] sm:$0xff]
    %v1546 = vld [vmem:[#allocation12 + $0xc8] sm:$0xff]
    %v1547 = vld [vmem:[#allocation12 + $0xd0] sm:$0xff]
    %v1548 = vld [vmem:[#allocation12 + $0xd8] sm:$0xff]
    %v1549 = vld [vmem:[#allocation12 + $0xe0] sm:$0xff]
    %v1550 = vld [vmem:[#allocation12 + $0xe8] sm:$0xff]
    %v1551 = vld [vmem:[#allocation12 + $0xf0] sm:$0xff]
    %v1552 = vld [vmem:[#allocation12 + $0xf8] sm:$0xff]
    %v1553 = vld [vmem:[%s23] sm:$0x3]
    %v1555 = vlaneseq
    %v1556 = vshrl.u32 %v1555, 7
    %v1557 = vsub.s32 0, %v1556
    %v1558 = vrot.slane %v1553, %v1557
    %v1559 = vlaneseq
    %v1560 = vshrl.u32 %v1559, 7
    %v1561 = vsub.s32 1, %v1560
    %v1562 = vrot.slane %v1553, %v1561
    %v1597 = vunpack.c.l.b16 %v1521
    %v1598 = vunpack.c.h.b16 %v1521
    %v1599 = vunpack.c.l.b16 %v1522
    %v1600 = vunpack.c.h.b16 %v1522
    %v1601 = vunpack.c.l.b16 %v1523
    %v1602 = vunpack.c.h.b16 %v1523
    %v1603 = vunpack.c.l.b16 %v1524
    %v1604 = vunpack.c.h.b16 %v1524
    %v1605 = vunpack.c.l.b16 %v1525
    %v1606 = vunpack.c.h.b16 %v1525
    %v1607 = vunpack.c.l.b16 %v1526
    %v1608 = vunpack.c.h.b16 %v1526
    %v1609 = vunpack.c.l.b16 %v1527
    %v1610 = vunpack.c.h.b16 %v1527
    %v1611 = vunpack.c.l.b16 %v1528
    %v1612 = vunpack.c.h.b16 %v1528
    %v1613 = vunpack.c.l.b16 %v1529
    %v1614 = vunpack.c.h.b16 %v1529
    %v1615 = vunpack.c.l.b16 %v1530
    %v1616 = vunpack.c.h.b16 %v1530
    %v1617 = vunpack.c.l.b16 %v1531
    %v1618 = vunpack.c.h.b16 %v1531
    %v1619 = vunpack.c.l.b16 %v1532
    %v1620 = vunpack.c.h.b16 %v1532
    %v1621 = vunpack.c.l.b16 %v1533
    %v1622 = vunpack.c.h.b16 %v1533
    %v1623 = vunpack.c.l.b16 %v1534
    %v1624 = vunpack.c.h.b16 %v1534
    %v1625 = vunpack.c.l.b16 %v1535
    %v1626 = vunpack.c.h.b16 %v1535
    %v1627 = vunpack.c.l.b16 %v1536
    %v1628 = vunpack.c.h.b16 %v1536
    %v1629 = vunpack.c.l.b16 %v1537
    %v1630 = vunpack.c.h.b16 %v1537
    %v1631 = vunpack.c.l.b16 %v1538
    %v1632 = vunpack.c.h.b16 %v1538
    %v1633 = vunpack.c.l.b16 %v1539
    %v1634 = vunpack.c.h.b16 %v1539
    %v1635 = vunpack.c.l.b16 %v1540
    %v1636 = vunpack.c.h.b16 %v1540
    %v1637 = vunpack.c.l.b16 %v1541
    %v1638 = vunpack.c.h.b16 %v1541
    %v1639 = vunpack.c.l.b16 %v1542
    %v1640 = vunpack.c.h.b16 %v1542
    %v1641 = vunpack.c.l.b16 %v1543
    %v1642 = vunpack.c.h.b16 %v1543
    %v1643 = vunpack.c.l.b16 %v1544
    %v1644 = vunpack.c.h.b16 %v1544
    %v1645 = vunpack.c.l.b16 %v1545
    %v1646 = vunpack.c.h.b16 %v1545
    %v1647 = vunpack.c.l.b16 %v1546
    %v1648 = vunpack.c.h.b16 %v1546
    %v1649 = vunpack.c.l.b16 %v1547
    %v1650 = vunpack.c.h.b16 %v1547
    %v1651 = vunpack.c.l.b16 %v1548
    %v1652 = vunpack.c.h.b16 %v1548
    %v1653 = vunpack.c.l.b16 %v1549
    %v1654 = vunpack.c.h.b16 %v1549
    %v1655 = vunpack.c.l.b16 %v1550
    %v1656 = vunpack.c.h.b16 %v1550
    %v1657 = vunpack.c.l.b16 %v1551
    %v1658 = vunpack.c.h.b16 %v1551
    %v1659 = vunpack.c.l.b16 %v1552
    %v1660 = vunpack.c.h.b16 %v1552
    %v1661 = vpack.c.b16 %v1599, %v1597
    %v1662 = vpack.c.b16 %v1600, %v1598
    %v1663 = vpack.c.b16 %v1603, %v1601
    %v1664 = vpack.c.b16 %v1604, %v1602
    %v1665 = vpack.c.b16 %v1607, %v1605
    %v1666 = vpack.c.b16 %v1608, %v1606
    %v1667 = vpack.c.b16 %v1611, %v1609
    %v1668 = vpack.c.b16 %v1612, %v1610
    %v1669 = vpack.c.b16 %v1615, %v1613
    %v1670 = vpack.c.b16 %v1616, %v1614
    %v1671 = vpack.c.b16 %v1619, %v1617
    %v1672 = vpack.c.b16 %v1620, %v1618
    %v1673 = vpack.c.b16 %v1623, %v1621
    %v1674 = vpack.c.b16 %v1624, %v1622
    %v1675 = vpack.c.b16 %v1627, %v1625
    %v1676 = vpack.c.b16 %v1628, %v1626
    %v1677 = vpack.c.b16 %v1631, %v1629
    %v1678 = vpack.c.b16 %v1632, %v1630
    %v1679 = vpack.c.b16 %v1635, %v1633
    %v1680 = vpack.c.b16 %v1636, %v1634
    %v1681 = vpack.c.b16 %v1639, %v1637
    %v1682 = vpack.c.b16 %v1640, %v1638
    %v1683 = vpack.c.b16 %v1643, %v1641
    %v1684 = vpack.c.b16 %v1644, %v1642
    %v1685 = vpack.c.b16 %v1647, %v1645
    %v1686 = vpack.c.b16 %v1648, %v1646
    %v1687 = vpack.c.b16 %v1651, %v1649
    %v1688 = vpack.c.b16 %v1652, %v1650
    %v1689 = vpack.c.b16 %v1655, %v1653
    %v1690 = vpack.c.b16 %v1656, %v1654
    %v1691 = vpack.c.b16 %v1659, %v1657
    %v1692 = vpack.c.b16 %v1660, %v1658
    %1725 = vmatprep.subr.bf16.mxu0 %v1662
    %1726 = vmatpush1.bf16.msra.mxu0 %v1661
    %1727 = vmatprep.subr.bf16.mxu0 %v1664
    %1728 = vmatpush1.bf16.msra.mxu0 %v1663
    %1729 = vmatprep.subr.bf16.mxu0 %v1666
    %1730 = vmatpush1.bf16.msra.mxu0 %v1665
    %1731 = vmatprep.subr.bf16.mxu0 %v1668
    %1732 = vmatpush1.bf16.msra.mxu0 %v1667
    %1733 = vmatprep.subr.bf16.mxu0 %v1670
    %1734 = vmatpush1.bf16.msra.mxu0 %v1669
    %1735 = vmatprep.subr.bf16.mxu0 %v1672
    %1736 = vmatpush1.bf16.msra.mxu0 %v1671
    %1737 = vmatprep.subr.bf16.mxu0 %v1674
    %1738 = vmatpush1.bf16.msra.mxu0 %v1673
    %1739 = vmatprep.subr.bf16.mxu0 %v1676
    %1740 = vmatpush1.bf16.msra.mxu0 %v1675
    %1741 = vmatprep.subr.bf16.mxu0 %v1678
    %1742 = vmatpush1.bf16.msra.mxu0 %v1677
    %1743 = vmatprep.subr.bf16.mxu0 %v1680
    %1744 = vmatpush1.bf16.msra.mxu0 %v1679
    %1745 = vmatprep.subr.bf16.mxu0 %v1682
    %1746 = vmatpush1.bf16.msra.mxu0 %v1681
    %1747 = vmatprep.subr.bf16.mxu0 %v1684
    %1748 = vmatpush1.bf16.msra.mxu0 %v1683
    %1749 = vmatprep.subr.bf16.mxu0 %v1686
    %1750 = vmatpush1.bf16.msra.mxu0 %v1685
    %1751 = vmatprep.subr.bf16.mxu0 %v1688
    %1752 = vmatpush1.bf16.msra.mxu0 %v1687
    %1753 = vmatprep.subr.bf16.mxu0 %v1690
    %1754 = vmatpush1.bf16.msra.mxu0 %v1689
    %1755 = vmatprep.subr.bf16.mxu0 %v1692
    %1756 = vmatpush1.bf16.msra.mxu0 %v1691
    %1757 = vmatprep.mubr.bf16.mxu0 %v1520
    %1758 = vmatmul.mubr.bf16.gmra.mrb[0].mxu0 %v1519
    %v1759 = vpop.f32.mrb[0].mxu0
    %v1760 = vadd.f32 %v1558, %v1759
    %v1761 = vpop.f32.mrb[0].mxu0
    %v1762 = vadd.f32 %v1562, %v1761
    %v1763 = vpop.f32.mrb[0].mxu0
    %v1764 = vpop.f32.mrb[0].mxu0
    %1765 = vdwg.mxu0
    %v1766 = vmax.f32 %v1760, 0.0
    %v1767 = vmax.f32 %v1762, 0.0
    %v1768 = vpack.c.bf16 %v1766, %v1766
    %v1769 = vpack.c.bf16 %v1767, %v1767
    %1770 = vmatprep.subr.bf16.mxu0 %v1769
    %1771 = vmatpush1.bf16.xpose.msra.mxu0 %v1768
    %1772 = vmatprep.subr.bf16.mxu0 0
    %1773 = vmatpush1.bf16.xpose.msra.mxu0 0
    %1774 = vmatprep.subr.bf16.mxu0 0
    %1775 = vmatpush1.bf16.xpose.msra.mxu0 0
    %1776 = vmatprep.subr.bf16.mxu0 0
    %1777 = vmatpush1.bf16.xpose.msra.mxu0 0
    %1778 = vmatprep.subr.bf16.mxu0 0
    %1779 = vmatpush1.bf16.xpose.msra.mxu0 0
    %1780 = vmatprep.subr.bf16.mxu0 0
    %1781 = vmatpush1.bf16.xpose.msra.mxu0 0
    %1782 = vmatprep.subr.bf16.mxu0 0
    %1783 = vmatpush1.bf16.xpose.msra.mxu0 0
    %1784 = vmatprep.subr.bf16.mxu0 0
    %1785 = vmatpush1.bf16.xpose.msra.mxu0 0
    %1786 = vmatprep.subr.bf16.mxu0 0
    %1787 = vmatpush1.bf16.xpose.msra.mxu0 0
    %1788 = vmatprep.subr.bf16.mxu0 0
    %1789 = vmatpush1.bf16.xpose.msra.mxu0 0
    %1790 = vmatprep.subr.bf16.mxu0 0
    %1791 = vmatpush1.bf16.xpose.msra.mxu0 0
    %1792 = vmatprep.subr.bf16.mxu0 0
    %1793 = vmatpush1.bf16.xpose.msra.mxu0 0
    %1794 = vmatprep.subr.bf16.mxu0 0
    %1795 = vmatpush1.bf16.xpose.msra.mxu0 0
    %1796 = vmatprep.subr.bf16.mxu0 0
    %1797 = vmatpush1.bf16.xpose.msra.mxu0 0
    %1798 = vmatprep.subr.bf16.mxu0 0
    %1799 = vmatpush1.bf16.xpose.msra.mxu0 0
    %1800 = vmatprep.subr.bf16.mxu0 0
    %1801 = vmatpush1.bf16.xpose.msra.mxu0 0
    %1802 = vmatprep.mubr.bf16.mxu0 %v1769
    %1803 = vmatmul.mubr.bf16.gmra.mrb[0].mxu0 %v1768
    %v1804 = vpop.f32.mrb[0].mxu0
    %v1805 = vadd.f32 0.0, %v1804
    %v1806 = vpop.f32.mrb[0].mxu0
    %v1807 = vpop.f32.mrb[0].mxu0
    %v1808 = vpop.f32.mrb[0].mxu0
    %1809 = vdwg.mxu0
    %vm1810 = vcmask 64512
    %v1811 = vsel %vm1810, %v1805, 0.0
    %1812 = vadd.xlane.f32.xlu0 %v1811
    %v1813 = vpop.xlane.xlu0 %1812
    %v1814 = vrot.slane %v1813, 4
    %v1815 = vadd.f32 %v1813, %v1814
    %v1816 = vrot.slane %v1815, 2
    %v1817 = vadd.f32 %v1815, %v1816
    %v1818 = vrot.slane %v1817, 1
    %v1819 = vadd.f32 %v1817, %v1818
    %s1820 = vtos %v1819
    %v1821 = vrcp.pop 64.0
    %s1822 = vtos %v1821
    %s1823 = smul.f32 %s1820, %s1822
    %v1824 = vstv %s1823
    %vm1825 = vcmp.gt.f32.partialorder %v1805, %v1824
    %v1826 = vsel %vm1825, 1, 0
    %v1827 = vcvt.s32.f32 %v1826
    %v1828 = vadd.f32 %v1827, %v1269
    %v1829 = vpack.c.bf16 %v1828, %v1828
    %v1831 = vsel %vm1810, %v1829, 0
    %vm1833 = vcmask 1043456
    %v1835 = vsel %vm1833, %v1270, 0
    %v1838 = vsel %vm1833, %v1271, 0
    %1840 = vmatprep.subr.bf16.mxu0 %v1838
    %1841 = vmatpush1.bf16.msra.mxu0 %v1835
    %1842 = vmatprep.subr.bf16.mxu0 0
    %1843 = vmatpush1.bf16.msra.mxu0 0
    %1844 = vmatprep.subr.bf16.mxu0 0
    %1845 = vmatpush1.bf16.msra.mxu0 0
    %1846 = vmatprep.subr.bf16.mxu0 0
    %1847 = vmatpush1.bf16.msra.mxu0 0
    %1848 = vmatprep.subr.bf16.mxu0 0
    %1849 = vmatpush1.bf16.msra.mxu0 0
    %1850 = vmatprep.subr.bf16.mxu0 0
    %1851 = vmatpush1.bf16.msra.mxu0 0
    %1852 = vmatprep.subr.bf16.mxu0 0
    %1853 = vmatpush1.bf16.msra.mxu0 0
    %1854 = vmatprep.subr.bf16.mxu0 0
    %1855 = vmatpush1.bf16.msra.mxu0 0
    %1856 = vmatprep.subr.bf16.mxu0 0
    %1857 = vmatpush1.bf16.msra.mxu0 0
    %1858 = vmatprep.subr.bf16.mxu0 0
    %1859 = vmatpush1.bf16.msra.mxu0 0
    %1860 = vmatprep.subr.bf16.mxu0 0
    %1861 = vmatpush1.bf16.msra.mxu0 0
    %1862 = vmatprep.subr.bf16.mxu0 0
    %1863 = vmatpush1.bf16.msra.mxu0 0
    %1864 = vmatprep.subr.bf16.mxu0 0
    %1865 = vmatpush1.bf16.msra.mxu0 0
    %1866 = vmatprep.subr.bf16.mxu0 0
    %1867 = vmatpush1.bf16.msra.mxu0 0
    %1868 = vmatprep.subr.bf16.mxu0 0
    %1869 = vmatpush1.bf16.msra.mxu0 0
    %1870 = vmatprep.subr.bf16.mxu0 0
    %1871 = vmatpush1.bf16.msra.mxu0 0
    %1872 = vmatprep.mubr.bf16.mxu0 0
    %1873 = vmatmul.mubr.bf16.gmra.mrb[0].mxu0 %v1831
    %v1874 = vpop.f32.mrb[0].mxu0
    %v1875 = vadd.f32 0.0, %v1874
    %v1876 = vpop.f32.mrb[0].mxu0
    %v1877 = vadd.f32 0.0, %v1876
    %v1878 = vpop.f32.mrb[0].mxu0
    %v1879 = vpop.f32.mrb[0].mxu0
    %1880 = vdwg.mxu0
    %v1881 = vpack.c.bf16 %v1875, %v1875
    %v1882 = vpack.c.bf16 %v1877, %v1877
    %v1883 = vld [vmem:[#allocation14] sm:$0xff]
    %v1884 = vld [vmem:[#allocation14 + $0x8] sm:$0xff]
    %v1885 = vld [vmem:[#allocation14 + $0x10] sm:$0xff]
    %v1886 = vld [vmem:[#allocation14 + $0x18] sm:$0xff]
    %v1887 = vld [vmem:[#allocation14 + $0x20] sm:$0xff]
    %v1888 = vld [vmem:[#allocation14 + $0x28] sm:$0xff]
    %v1889 = vld [vmem:[#allocation14 + $0x30] sm:$0xff]
    %v1890 = vld [vmem:[#allocation14 + $0x38] sm:$0xff]
    %v1891 = vld [vmem:[#allocation14 + $0x40] sm:$0xff]
    %v1892 = vld [vmem:[#allocation14 + $0x48] sm:$0xff]
    %v1893 = vld [vmem:[#allocation14 + $0x50] sm:$0xff]
    %v1894 = vld [vmem:[#allocation14 + $0x58] sm:$0xff]
    %v1895 = vld [vmem:[#allocation14 + $0x60] sm:$0xff]
    %v1896 = vld [vmem:[#allocation14 + $0x68] sm:$0xff]
    %v1897 = vld [vmem:[#allocation14 + $0x70] sm:$0xff]
    %v1898 = vld [vmem:[#allocation14 + $0x78] sm:$0xff]
    %v1899 = vld [vmem:[#allocation14 + $0x80] sm:$0xff]
    %v1900 = vld [vmem:[#allocation14 + $0x88] sm:$0xff]
    %v1901 = vld [vmem:[#allocation14 + $0x90] sm:$0xff]
    %v1902 = vld [vmem:[#allocation14 + $0x98] sm:$0xff]
    %v1903 = vld [vmem:[#allocation14 + $0xa0] sm:$0xff]
    %v1904 = vld [vmem:[#allocation14 + $0xa8] sm:$0xff]
    %v1905 = vld [vmem:[#allocation14 + $0xb0] sm:$0xff]
    %v1906 = vld [vmem:[#allocation14 + $0xb8] sm:$0xff]
    %v1907 = vld [vmem:[#allocation14 + $0xc0] sm:$0xff]
    %v1908 = vld [vmem:[#allocation14 + $0xc8] sm:$0xff]
    %v1909 = vld [vmem:[#allocation14 + $0xd0] sm:$0xff]
    %v1910 = vld [vmem:[#allocation14 + $0xd8] sm:$0xff]
    %v1911 = vld [vmem:[#allocation14 + $0xe0] sm:$0xff]
    %v1912 = vld [vmem:[#allocation14 + $0xe8] sm:$0xff]
    %v1913 = vld [vmem:[#allocation14 + $0xf0] sm:$0xff]
    %v1914 = vld [vmem:[#allocation14 + $0xf8] sm:$0xff]
    %v1915 = vld [vmem:[%s27] sm:$0x3]
    %v1917 = vlaneseq
    %v1918 = vshrl.u32 %v1917, 7
    %v1919 = vsub.s32 0, %v1918
    %v1920 = vrot.slane %v1915, %v1919
    %v1921 = vlaneseq
    %v1922 = vshrl.u32 %v1921, 7
    %v1923 = vsub.s32 1, %v1922
    %v1924 = vrot.slane %v1915, %v1923
    %v1959 = vunpack.c.l.b16 %v1883
    %v1960 = vunpack.c.h.b16 %v1883
    %v1961 = vunpack.c.l.b16 %v1884
    %v1962 = vunpack.c.h.b16 %v1884
    %v1963 = vunpack.c.l.b16 %v1885
    %v1964 = vunpack.c.h.b16 %v1885
    %v1965 = vunpack.c.l.b16 %v1886
    %v1966 = vunpack.c.h.b16 %v1886
    %v1967 = vunpack.c.l.b16 %v1887
    %v1968 = vunpack.c.h.b16 %v1887
    %v1969 = vunpack.c.l.b16 %v1888
    %v1970 = vunpack.c.h.b16 %v1888
    %v1971 = vunpack.c.l.b16 %v1889
    %v1972 = vunpack.c.h.b16 %v1889
    %v1973 = vunpack.c.l.b16 %v1890
    %v1974 = vunpack.c.h.b16 %v1890
    %v1975 = vunpack.c.l.b16 %v1891
    %v1976 = vunpack.c.h.b16 %v1891
    %v1977 = vunpack.c.l.b16 %v1892
    %v1978 = vunpack.c.h.b16 %v1892
    %v1979 = vunpack.c.l.b16 %v1893
    %v1980 = vunpack.c.h.b16 %v1893
    %v1981 = vunpack.c.l.b16 %v1894
    %v1982 = vunpack.c.h.b16 %v1894
    %v1983 = vunpack.c.l.b16 %v1895
    %v1984 = vunpack.c.h.b16 %v1895
    %v1985 = vunpack.c.l.b16 %v1896
    %v1986 = vunpack.c.h.b16 %v1896
    %v1987 = vunpack.c.l.b16 %v1897
    %v1988 = vunpack.c.h.b16 %v1897
    %v1989 = vunpack.c.l.b16 %v1898
    %v1990 = vunpack.c.h.b16 %v1898
    %v1991 = vunpack.c.l.b16 %v1899
    %v1992 = vunpack.c.h.b16 %v1899
    %v1993 = vunpack.c.l.b16 %v1900
    %v1994 = vunpack.c.h.b16 %v1900
    %v1995 = vunpack.c.l.b16 %v1901
    %v1996 = vunpack.c.h.b16 %v1901
    %v1997 = vunpack.c.l.b16 %v1902
    %v1998 = vunpack.c.h.b16 %v1902
    %v1999 = vunpack.c.l.b16 %v1903
    %v2000 = vunpack.c.h.b16 %v1903
    %v2001 = vunpack.c.l.b16 %v1904
    %v2002 = vunpack.c.h.b16 %v1904
    %v2003 = vunpack.c.l.b16 %v1905
    %v2004 = vunpack.c.h.b16 %v1905
    %v2005 = vunpack.c.l.b16 %v1906
    %v2006 = vunpack.c.h.b16 %v1906
    %v2007 = vunpack.c.l.b16 %v1907
    %v2008 = vunpack.c.h.b16 %v1907
    %v2009 = vunpack.c.l.b16 %v1908
    %v2010 = vunpack.c.h.b16 %v1908
    %v2011 = vunpack.c.l.b16 %v1909
    %v2012 = vunpack.c.h.b16 %v1909
    %v2013 = vunpack.c.l.b16 %v1910
    %v2014 = vunpack.c.h.b16 %v1910
    %v2015 = vunpack.c.l.b16 %v1911
    %v2016 = vunpack.c.h.b16 %v1911
    %v2017 = vunpack.c.l.b16 %v1912
    %v2018 = vunpack.c.h.b16 %v1912
    %v2019 = vunpack.c.l.b16 %v1913
    %v2020 = vunpack.c.h.b16 %v1913
    %v2021 = vunpack.c.l.b16 %v1914
    %v2022 = vunpack.c.h.b16 %v1914
    %v2023 = vpack.c.b16 %v1961, %v1959
    %v2024 = vpack.c.b16 %v1962, %v1960
    %v2025 = vpack.c.b16 %v1965, %v1963
    %v2026 = vpack.c.b16 %v1966, %v1964
    %v2027 = vpack.c.b16 %v1969, %v1967
    %v2028 = vpack.c.b16 %v1970, %v1968
    %v2029 = vpack.c.b16 %v1973, %v1971
    %v2030 = vpack.c.b16 %v1974, %v1972
    %v2031 = vpack.c.b16 %v1977, %v1975
    %v2032 = vpack.c.b16 %v1978, %v1976
    %v2033 = vpack.c.b16 %v1981, %v1979
    %v2034 = vpack.c.b16 %v1982, %v1980
    %v2035 = vpack.c.b16 %v1985, %v1983
    %v2036 = vpack.c.b16 %v1986, %v1984
    %v2037 = vpack.c.b16 %v1989, %v1987
    %v2038 = vpack.c.b16 %v1990, %v1988
    %v2039 = vpack.c.b16 %v1993, %v1991
    %v2040 = vpack.c.b16 %v1994, %v1992
    %v2041 = vpack.c.b16 %v1997, %v1995
    %v2042 = vpack.c.b16 %v1998, %v1996
    %v2043 = vpack.c.b16 %v2001, %v1999
    %v2044 = vpack.c.b16 %v2002, %v2000
    %v2045 = vpack.c.b16 %v2005, %v2003
    %v2046 = vpack.c.b16 %v2006, %v2004
    %v2047 = vpack.c.b16 %v2009, %v2007
    %v2048 = vpack.c.b16 %v2010, %v2008
    %v2049 = vpack.c.b16 %v2013, %v2011
    %v2050 = vpack.c.b16 %v2014, %v2012
    %v2051 = vpack.c.b16 %v2017, %v2015
    %v2052 = vpack.c.b16 %v2018, %v2016
    %v2053 = vpack.c.b16 %v2021, %v2019
    %v2054 = vpack.c.b16 %v2022, %v2020
    %2087 = vmatprep.subr.bf16.mxu0 %v2024
    %2088 = vmatpush1.bf16.msra.mxu0 %v2023
    %2089 = vmatprep.subr.bf16.mxu0 %v2026
    %2090 = vmatpush1.bf16.msra.mxu0 %v2025
    %2091 = vmatprep.subr.bf16.mxu0 %v2028
    %2092 = vmatpush1.bf16.msra.mxu0 %v2027
    %2093 = vmatprep.subr.bf16.mxu0 %v2030
    %2094 = vmatpush1.bf16.msra.mxu0 %v2029
    %2095 = vmatprep.subr.bf16.mxu0 %v2032
    %2096 = vmatpush1.bf16.msra.mxu0 %v2031
    %2097 = vmatprep.subr.bf16.mxu0 %v2034
    %2098 = vmatpush1.bf16.msra.mxu0 %v2033
    %2099 = vmatprep.subr.bf16.mxu0 %v2036
    %2100 = vmatpush1.bf16.msra.mxu0 %v2035
    %2101 = vmatprep.subr.bf16.mxu0 %v2038
    %2102 = vmatpush1.bf16.msra.mxu0 %v2037
    %2103 = vmatprep.subr.bf16.mxu0 %v2040
    %2104 = vmatpush1.bf16.msra.mxu0 %v2039
    %2105 = vmatprep.subr.bf16.mxu0 %v2042
    %2106 = vmatpush1.bf16.msra.mxu0 %v2041
    %2107 = vmatprep.subr.bf16.mxu0 %v2044
    %2108 = vmatpush1.bf16.msra.mxu0 %v2043
    %2109 = vmatprep.subr.bf16.mxu0 %v2046
    %2110 = vmatpush1.bf16.msra.mxu0 %v2045
    %2111 = vmatprep.subr.bf16.mxu0 %v2048
    %2112 = vmatpush1.bf16.msra.mxu0 %v2047
    %2113 = vmatprep.subr.bf16.mxu0 %v2050
    %2114 = vmatpush1.bf16.msra.mxu0 %v2049
    %2115 = vmatprep.subr.bf16.mxu0 %v2052
    %2116 = vmatpush1.bf16.msra.mxu0 %v2051
    %2117 = vmatprep.subr.bf16.mxu0 %v2054
    %2118 = vmatpush1.bf16.msra.mxu0 %v2053
    %2119 = vmatprep.mubr.bf16.mxu0 %v1882
    %2120 = vmatmul.mubr.bf16.gmra.mrb[0].mxu0 %v1881
    %v2121 = vpop.f32.mrb[0].mxu0
    %v2122 = vadd.f32 %v1920, %v2121
    %v2123 = vpop.f32.mrb[0].mxu0
    %v2124 = vadd.f32 %v1924, %v2123
    %v2125 = vpop.f32.mrb[0].mxu0
    %v2126 = vpop.f32.mrb[0].mxu0
    %2127 = vdwg.mxu0
    %v2128 = vmax.f32 %v2122, 0.0
    %v2129 = vmax.f32 %v2124, 0.0
    %v2130 = vpack.c.bf16 %v2128, %v2128
    %v2131 = vpack.c.bf16 %v2129, %v2129
    %v2132 = vld [vmem:[#allocation15] sm:$0xff]
    %v2133 = vld [vmem:[#allocation15 + $0x8] sm:$0xff]
    %v2134 = vld [vmem:[#allocation15 + $0x10] sm:$0xff]
    %v2135 = vld [vmem:[#allocation15 + $0x18] sm:$0xff]
    %v2136 = vld [vmem:[#allocation15 + $0x20] sm:$0xff]
    %v2137 = vld [vmem:[#allocation15 + $0x28] sm:$0xff]
    %v2138 = vld [vmem:[#allocation15 + $0x30] sm:$0xff]
    %v2139 = vld [vmem:[#allocation15 + $0x38] sm:$0xff]
    %v2140 = vld [vmem:[#allocation15 + $0x40] sm:$0xff]
    %v2141 = vld [vmem:[#allocation15 + $0x48] sm:$0xff]
    %v2142 = vld [vmem:[#allocation15 + $0x50] sm:$0xff]
    %v2143 = vld [vmem:[#allocation15 + $0x58] sm:$0xff]
    %v2144 = vld [vmem:[#allocation15 + $0x60] sm:$0xff]
    %v2145 = vld [vmem:[#allocation15 + $0x68] sm:$0xff]
    %v2146 = vld [vmem:[#allocation15 + $0x70] sm:$0xff]
    %v2147 = vld [vmem:[#allocation15 + $0x78] sm:$0xff]
    %v2148 = vld [vmem:[#allocation15 + $0x80] sm:$0xff]
    %v2149 = vld [vmem:[#allocation15 + $0x88] sm:$0xff]
    %v2150 = vld [vmem:[#allocation15 + $0x90] sm:$0xff]
    %v2151 = vld [vmem:[#allocation15 + $0x98] sm:$0xff]
    %v2152 = vld [vmem:[#allocation15 + $0xa0] sm:$0xff]
    %v2153 = vld [vmem:[#allocation15 + $0xa8] sm:$0xff]
    %v2154 = vld [vmem:[#allocation15 + $0xb0] sm:$0xff]
    %v2155 = vld [vmem:[#allocation15 + $0xb8] sm:$0xff]
    %v2156 = vld [vmem:[#allocation15 + $0xc0] sm:$0xff]
    %v2157 = vld [vmem:[#allocation15 + $0xc8] sm:$0xff]
    %v2158 = vld [vmem:[#allocation15 + $0xd0] sm:$0xff]
    %v2159 = vld [vmem:[#allocation15 + $0xd8] sm:$0xff]
    %v2160 = vld [vmem:[#allocation15 + $0xe0] sm:$0xff]
    %v2161 = vld [vmem:[#allocation15 + $0xe8] sm:$0xff]
    %v2162 = vld [vmem:[#allocation15 + $0xf0] sm:$0xff]
    %v2163 = vld [vmem:[#allocation15 + $0xf8] sm:$0xff]
    %v2164 = vld [vmem:[%s31] sm:$0x3]
    %v2166 = vlaneseq
    %v2167 = vshrl.u32 %v2166, 7
    %v2168 = vsub.s32 0, %v2167
    %v2169 = vrot.slane %v2164, %v2168
    %v2170 = vlaneseq
    %v2171 = vshrl.u32 %v2170, 7
    %v2172 = vsub.s32 1, %v2171
    %v2173 = vrot.slane %v2164, %v2172
    %v2208 = vunpack.c.l.b16 %v2132
    %v2209 = vunpack.c.h.b16 %v2132
    %v2210 = vunpack.c.l.b16 %v2133
    %v2211 = vunpack.c.h.b16 %v2133
    %v2212 = vunpack.c.l.b16 %v2134
    %v2213 = vunpack.c.h.b16 %v2134
    %v2214 = vunpack.c.l.b16 %v2135
    %v2215 = vunpack.c.h.b16 %v2135
    %v2216 = vunpack.c.l.b16 %v2136
    %v2217 = vunpack.c.h.b16 %v2136
    %v2218 = vunpack.c.l.b16 %v2137
    %v2219 = vunpack.c.h.b16 %v2137
    %v2220 = vunpack.c.l.b16 %v2138
    %v2221 = vunpack.c.h.b16 %v2138
    %v2222 = vunpack.c.l.b16 %v2139
    %v2223 = vunpack.c.h.b16 %v2139
    %v2224 = vunpack.c.l.b16 %v2140
    %v2225 = vunpack.c.h.b16 %v2140
    %v2226 = vunpack.c.l.b16 %v2141
    %v2227 = vunpack.c.h.b16 %v2141
    %v2228 = vunpack.c.l.b16 %v2142
    %v2229 = vunpack.c.h.b16 %v2142
    %v2230 = vunpack.c.l.b16 %v2143
    %v2231 = vunpack.c.h.b16 %v2143
    %v2232 = vunpack.c.l.b16 %v2144
    %v2233 = vunpack.c.h.b16 %v2144
    %v2234 = vunpack.c.l.b16 %v2145
    %v2235 = vunpack.c.h.b16 %v2145
    %v2236 = vunpack.c.l.b16 %v2146
    %v2237 = vunpack.c.h.b16 %v2146
    %v2238 = vunpack.c.l.b16 %v2147
    %v2239 = vunpack.c.h.b16 %v2147
    %v2240 = vunpack.c.l.b16 %v2148
    %v2241 = vunpack.c.h.b16 %v2148
    %v2242 = vunpack.c.l.b16 %v2149
    %v2243 = vunpack.c.h.b16 %v2149
    %v2244 = vunpack.c.l.b16 %v2150
    %v2245 = vunpack.c.h.b16 %v2150
    %v2246 = vunpack.c.l.b16 %v2151
    %v2247 = vunpack.c.h.b16 %v2151
    %v2248 = vunpack.c.l.b16 %v2152
    %v2249 = vunpack.c.h.b16 %v2152
    %v2250 = vunpack.c.l.b16 %v2153
    %v2251 = vunpack.c.h.b16 %v2153
    %v2252 = vunpack.c.l.b16 %v2154
    %v2253 = vunpack.c.h.b16 %v2154
    %v2254 = vunpack.c.l.b16 %v2155
    %v2255 = vunpack.c.h.b16 %v2155
    %v2256 = vunpack.c.l.b16 %v2156
    %v2257 = vunpack.c.h.b16 %v2156
    %v2258 = vunpack.c.l.b16 %v2157
    %v2259 = vunpack.c.h.b16 %v2157
    %v2260 = vunpack.c.l.b16 %v2158
    %v2261 = vunpack.c.h.b16 %v2158
    %v2262 = vunpack.c.l.b16 %v2159
    %v2263 = vunpack.c.h.b16 %v2159
    %v2264 = vunpack.c.l.b16 %v2160
    %v2265 = vunpack.c.h.b16 %v2160
    %v2266 = vunpack.c.l.b16 %v2161
    %v2267 = vunpack.c.h.b16 %v2161
    %v2268 = vunpack.c.l.b16 %v2162
    %v2269 = vunpack.c.h.b16 %v2162
    %v2270 = vunpack.c.l.b16 %v2163
    %v2271 = vunpack.c.h.b16 %v2163
    %v2272 = vpack.c.b16 %v2210, %v2208
    %v2273 = vpack.c.b16 %v2211, %v2209
    %v2274 = vpack.c.b16 %v2214, %v2212
    %v2275 = vpack.c.b16 %v2215, %v2213
    %v2276 = vpack.c.b16 %v2218, %v2216
    %v2277 = vpack.c.b16 %v2219, %v2217
    %v2278 = vpack.c.b16 %v2222, %v2220
    %v2279 = vpack.c.b16 %v2223, %v2221
    %v2280 = vpack.c.b16 %v2226, %v2224
    %v2281 = vpack.c.b16 %v2227, %v2225
    %v2282 = vpack.c.b16 %v2230, %v2228
    %v2283 = vpack.c.b16 %v2231, %v2229
    %v2284 = vpack.c.b16 %v2234, %v2232
    %v2285 = vpack.c.b16 %v2235, %v2233
    %v2286 = vpack.c.b16 %v2238, %v2236
    %v2287 = vpack.c.b16 %v2239, %v2237
    %v2288 = vpack.c.b16 %v2242, %v2240
    %v2289 = vpack.c.b16 %v2243, %v2241
    %v2290 = vpack.c.b16 %v2246, %v2244
    %v2291 = vpack.c.b16 %v2247, %v2245
    %v2292 = vpack.c.b16 %v2250, %v2248
    %v2293 = vpack.c.b16 %v2251, %v2249
    %v2294 = vpack.c.b16 %v2254, %v2252
    %v2295 = vpack.c.b16 %v2255, %v2253
    %v2296 = vpack.c.b16 %v2258, %v2256
    %v2297 = vpack.c.b16 %v2259, %v2257
    %v2298 = vpack.c.b16 %v2262, %v2260
    %v2299 = vpack.c.b16 %v2263, %v2261
    %v2300 = vpack.c.b16 %v2266, %v2264
    %v2301 = vpack.c.b16 %v2267, %v2265
    %v2302 = vpack.c.b16 %v2270, %v2268
    %v2303 = vpack.c.b16 %v2271, %v2269
    %2336 = vmatprep.subr.bf16.mxu0 %v2273
    %2337 = vmatpush1.bf16.msra.mxu0 %v2272
    %2338 = vmatprep.subr.bf16.mxu0 %v2275
    %2339 = vmatpush1.bf16.msra.mxu0 %v2274
    %2340 = vmatprep.subr.bf16.mxu0 %v2277
    %2341 = vmatpush1.bf16.msra.mxu0 %v2276
    %2342 = vmatprep.subr.bf16.mxu0 %v2279
    %2343 = vmatpush1.bf16.msra.mxu0 %v2278
    %2344 = vmatprep.subr.bf16.mxu0 %v2281
    %2345 = vmatpush1.bf16.msra.mxu0 %v2280
    %2346 = vmatprep.subr.bf16.mxu0 %v2283
    %2347 = vmatpush1.bf16.msra.mxu0 %v2282
    %2348 = vmatprep.subr.bf16.mxu0 %v2285
    %2349 = vmatpush1.bf16.msra.mxu0 %v2284
    %2350 = vmatprep.subr.bf16.mxu0 %v2287
    %2351 = vmatpush1.bf16.msra.mxu0 %v2286
    %2352 = vmatprep.subr.bf16.mxu0 %v2289
    %2353 = vmatpush1.bf16.msra.mxu0 %v2288
    %2354 = vmatprep.subr.bf16.mxu0 %v2291
    %2355 = vmatpush1.bf16.msra.mxu0 %v2290
    %2356 = vmatprep.subr.bf16.mxu0 %v2293
    %2357 = vmatpush1.bf16.msra.mxu0 %v2292
    %2358 = vmatprep.subr.bf16.mxu0 %v2295
    %2359 = vmatpush1.bf16.msra.mxu0 %v2294
    %2360 = vmatprep.subr.bf16.mxu0 %v2297
    %2361 = vmatpush1.bf16.msra.mxu0 %v2296
    %2362 = vmatprep.subr.bf16.mxu0 %v2299
    %2363 = vmatpush1.bf16.msra.mxu0 %v2298
    %2364 = vmatprep.subr.bf16.mxu0 %v2301
    %2365 = vmatpush1.bf16.msra.mxu0 %v2300
    %2366 = vmatprep.subr.bf16.mxu0 %v2303
    %2367 = vmatpush1.bf16.msra.mxu0 %v2302
    %2368 = vmatprep.mubr.bf16.mxu0 %v2131
    %2369 = vmatmul.mubr.bf16.gmra.mrb[0].mxu0 %v2130
    %v2370 = vpop.f32.mrb[0].mxu0
    %v2371 = vadd.f32 %v2169, %v2370
    %v2372 = vpop.f32.mrb[0].mxu0
    %v2373 = vadd.f32 %v2173, %v2372
    %v2374 = vpop.f32.mrb[0].mxu0
    %v2375 = vpop.f32.mrb[0].mxu0
    %2376 = vdwg.mxu0
    %v2377 = vadd.f32 %v2371, 0.0
    %v2378 = vadd.f32 %v2373, 0.0
    %v2379 = vpack.c.bf16 %v2371, %v2371
    %v2380 = vpack.c.bf16 %v2373, %v2373
    %2381 = vmatprep.subr.bf16.mxu0 %v1413
    %2382 = vmatpush1.bf16.msra.mxu0 %v1412
    %2383 = vmatprep.subr.bf16.mxu0 %v1415
    %2384 = vmatpush1.bf16.msra.mxu0 %v1414
    %2385 = vmatprep.subr.bf16.mxu0 %v1417
    %2386 = vmatpush1.bf16.msra.mxu0 %v1416
    %2387 = vmatprep.subr.bf16.mxu0 %v1419
    %2388 = vmatpush1.bf16.msra.mxu0 %v1418
    %2389 = vmatprep.subr.bf16.mxu0 %v1421
    %2390 = vmatpush1.bf16.msra.mxu0 %v1420
    %2391 = vmatprep.subr.bf16.mxu0 %v1423
    %2392 = vmatpush1.bf16.msra.mxu0 %v1422
    %2393 = vmatprep.subr.bf16.mxu0 %v1425
    %2394 = vmatpush1.bf16.msra.mxu0 %v1424
    %2395 = vmatprep.subr.bf16.mxu0 %v1427
    %2396 = vmatpush1.bf16.msra.mxu0 %v1426
    %2397 = vmatprep.subr.bf16.mxu0 %v1429
    %2398 = vmatpush1.bf16.msra.mxu0 %v1428
    %2399 = vmatprep.subr.bf16.mxu0 %v1431
    %2400 = vmatpush1.bf16.msra.mxu0 %v1430
    %2401 = vmatprep.subr.bf16.mxu0 %v1433
    %2402 = vmatpush1.bf16.msra.mxu0 %v1432
    %2403 = vmatprep.subr.bf16.mxu0 %v1435
    %2404 = vmatpush1.bf16.msra.mxu0 %v1434
    %2405 = vmatprep.subr.bf16.mxu0 %v1437
    %2406 = vmatpush1.bf16.msra.mxu0 %v1436
    %2407 = vmatprep.subr.bf16.mxu0 %v1439
    %2408 = vmatpush1.bf16.msra.mxu0 %v1438
    %2409 = vmatprep.subr.bf16.mxu0 %v1441
    %2410 = vmatpush1.bf16.msra.mxu0 %v1440
    %2411 = vmatprep.subr.bf16.mxu0 %v1443
    %2412 = vmatpush1.bf16.msra.mxu0 %v1442
    %2413 = vmatprep.mubr.bf16.mxu0 %v2380
    %2414 = vmatmul.mubr.bf16.gmra.mrb[0].mxu0 %v2379
    %v2415 = vpop.f32.mrb[0].mxu0
    %v2416 = vadd.f32 %v1309, %v2415
    %v2417 = vpop.f32.mrb[0].mxu0
    %v2418 = vadd.f32 %v1313, %v2417
    %v2419 = vpop.f32.mrb[0].mxu0
    %v2420 = vpop.f32.mrb[0].mxu0
    %2421 = vdwg.mxu0
    %v2422 = vmax.f32 %v2416, 0.0
    %v2423 = vmax.f32 %v2418, 0.0
    %v2424 = vpack.c.bf16 %v2422, %v2422
    %v2425 = vpack.c.bf16 %v2423, %v2423
    %2426 = vmatprep.subr.bf16.mxu0 %v1662
    %2427 = vmatpush1.bf16.msra.mxu0 %v1661
    %2428 = vmatprep.subr.bf16.mxu0 %v1664
    %2429 = vmatpush1.bf16.msra.mxu0 %v1663
    %2430 = vmatprep.subr.bf16.mxu0 %v1666
    %2431 = vmatpush1.bf16.msra.mxu0 %v1665
    %2432 = vmatprep.subr.bf16.mxu0 %v1668
    %2433 = vmatpush1.bf16.msra.mxu0 %v1667
    %2434 = vmatprep.subr.bf16.mxu0 %v1670
    %2435 = vmatpush1.bf16.msra.mxu0 %v1669
    %2436 = vmatprep.subr.bf16.mxu0 %v1672
    %2437 = vmatpush1.bf16.msra.mxu0 %v1671
    %2438 = vmatprep.subr.bf16.mxu0 %v1674
    %2439 = vmatpush1.bf16.msra.mxu0 %v1673
    %2440 = vmatprep.subr.bf16.mxu0 %v1676
    %2441 = vmatpush1.bf16.msra.mxu0 %v1675
    %2442 = vmatprep.subr.bf16.mxu0 %v1678
    %2443 = vmatpush1.bf16.msra.mxu0 %v1677
    %2444 = vmatprep.subr.bf16.mxu0 %v1680
    %2445 = vmatpush1.bf16.msra.mxu0 %v1679
    %2446 = vmatprep.subr.bf16.mxu0 %v1682
    %2447 = vmatpush1.bf16.msra.mxu0 %v1681
    %2448 = vmatprep.subr.bf16.mxu0 %v1684
    %2449 = vmatpush1.bf16.msra.mxu0 %v1683
    %2450 = vmatprep.subr.bf16.mxu0 %v1686
    %2451 = vmatpush1.bf16.msra.mxu0 %v1685
    %2452 = vmatprep.subr.bf16.mxu0 %v1688
    %2453 = vmatpush1.bf16.msra.mxu0 %v1687
    %2454 = vmatprep.subr.bf16.mxu0 %v1690
    %2455 = vmatpush1.bf16.msra.mxu0 %v1689
    %2456 = vmatprep.subr.bf16.mxu0 %v1692
    %2457 = vmatpush1.bf16.msra.mxu0 %v1691
    %2458 = vmatprep.mubr.bf16.mxu0 %v2425
    %2459 = vmatmul.mubr.bf16.gmra.mrb[0].mxu0 %v2424
    %v2460 = vpop.f32.mrb[0].mxu0
    %v2461 = vadd.f32 %v1558, %v2460
    %v2462 = vpop.f32.mrb[0].mxu0
    %v2463 = vadd.f32 %v1562, %v2462
    %v2464 = vpop.f32.mrb[0].mxu0
    %v2465 = vpop.f32.mrb[0].mxu0
    %2466 = vdwg.mxu0
    %v2467 = vmax.f32 %v2461, 0.0
    %v2468 = vmax.f32 %v2463, 0.0
    %v2469 = vpack.c.bf16 %v2467, %v2467
    %v2470 = vpack.c.bf16 %v2468, %v2468
    %2471 = vmatprep.subr.bf16.mxu0 %v2470
    %2472 = vmatpush1.bf16.xpose.msra.mxu0 %v2469
    %2473 = vmatprep.subr.bf16.mxu0 0
    %2474 = vmatpush1.bf16.xpose.msra.mxu0 0
    %2475 = vmatprep.subr.bf16.mxu0 0
    %2476 = vmatpush1.bf16.xpose.msra.mxu0 0
    %2477 = vmatprep.subr.bf16.mxu0 0
    %2478 = vmatpush1.bf16.xpose.msra.mxu0 0
    %2479 = vmatprep.subr.bf16.mxu0 0
    %2480 = vmatpush1.bf16.xpose.msra.mxu0 0
    %2481 = vmatprep.subr.bf16.mxu0 0
    %2482 = vmatpush1.bf16.xpose.msra.mxu0 0
    %2483 = vmatprep.subr.bf16.mxu0 0
    %2484 = vmatpush1.bf16.xpose.msra.mxu0 0
    %2485 = vmatprep.subr.bf16.mxu0 0
    %2486 = vmatpush1.bf16.xpose.msra.mxu0 0
    %2487 = vmatprep.subr.bf16.mxu0 0
    %2488 = vmatpush1.bf16.xpose.msra.mxu0 0
    %2489 = vmatprep.subr.bf16.mxu0 0
    %2490 = vmatpush1.bf16.xpose.msra.mxu0 0
    %2491 = vmatprep.subr.bf16.mxu0 0
    %2492 = vmatpush1.bf16.xpose.msra.mxu0 0
    %2493 = vmatprep.subr.bf16.mxu0 0
    %2494 = vmatpush1.bf16.xpose.msra.mxu0 0
    %2495 = vmatprep.subr.bf16.mxu0 0
    %2496 = vmatpush1.bf16.xpose.msra.mxu0 0
    %2497 = vmatprep.subr.bf16.mxu0 0
    %2498 = vmatpush1.bf16.xpose.msra.mxu0 0
    %2499 = vmatprep.subr.bf16.mxu0 0
    %2500 = vmatpush1.bf16.xpose.msra.mxu0 0
    %2501 = vmatprep.subr.bf16.mxu0 0
    %2502 = vmatpush1.bf16.xpose.msra.mxu0 0
    %2503 = vmatprep.mubr.bf16.mxu0 %v2470
    %2504 = vmatmul.mubr.bf16.gmra.mrb[0].mxu0 %v2469
    %v2505 = vpop.f32.mrb[0].mxu0
    %v2506 = vadd.f32 0.0, %v2505
    %v2507 = vpop.f32.mrb[0].mxu0
    %v2508 = vpop.f32.mrb[0].mxu0
    %v2509 = vpop.f32.mrb[0].mxu0
    %2510 = vdwg.mxu0
    %v2511 = vsel %vm1810, %v2506, 0.0
    %2512 = vadd.xlane.f32.xlu0 %v2511
    %v2513 = vpop.xlane.xlu0 %2512
    %v2514 = vrot.slane %v2513, 4
    %v2515 = vadd.f32 %v2513, %v2514
    %v2516 = vrot.slane %v2515, 2
    %v2517 = vadd.f32 %v2515, %v2516
    %v2518 = vrot.slane %v2517, 1
    %v2519 = vadd.f32 %v2517, %v2518
    %s2520 = vtos %v2519
    %v2521 = vrcp.pop 64.0
    %s2522 = vtos %v2521
    %s2523 = smul.f32 %s2520, %s2522
    %v2524 = vstv %s2523
    %vm2525 = vcmp.gt.f32.partialorder %v2506, %v2524
    %v2526 = vsel %vm2525, 1, 0
    %v2527 = vcvt.s32.f32 %v2526
    %v2528 = vadd.f32 %v2527, %v1269
    %v2529 = vpack.c.bf16 %v2528, %v2528
    %v2531 = vsel %vm1810, %v2529, 0
    %v2534 = vsel %vm1833, %v2379, 0
    %v2537 = vsel %vm1833, %v2380, 0
    %2539 = vmatprep.subr.bf16.mxu0 %v2537
    %2540 = vmatpush1.bf16.msra.mxu0 %v2534
    %2541 = vmatprep.subr.bf16.mxu0 0
    %2542 = vmatpush1.bf16.msra.mxu0 0
    %2543 = vmatprep.subr.bf16.mxu0 0
    %2544 = vmatpush1.bf16.msra.mxu0 0
    %2545 = vmatprep.subr.bf16.mxu0 0
    %2546 = vmatpush1.bf16.msra.mxu0 0
    %2547 = vmatprep.subr.bf16.mxu0 0
    %2548 = vmatpush1.bf16.msra.mxu0 0
    %2549 = vmatprep.subr.bf16.mxu0 0
    %2550 = vmatpush1.bf16.msra.mxu0 0
    %2551 = vmatprep.subr.bf16.mxu0 0
    %2552 = vmatpush1.bf16.msra.mxu0 0
    %2553 = vmatprep.subr.bf16.mxu0 0
    %2554 = vmatpush1.bf16.msra.mxu0 0
    %2555 = vmatprep.subr.bf16.mxu0 0
    %2556 = vmatpush1.bf16.msra.mxu0 0
    %2557 = vmatprep.subr.bf16.mxu0 0
    %2558 = vmatpush1.bf16.msra.mxu0 0
    %2559 = vmatprep.subr.bf16.mxu0 0
    %2560 = vmatpush1.bf16.msra.mxu0 0
    %2561 = vmatprep.subr.bf16.mxu0 0
    %2562 = vmatpush1.bf16.msra.mxu0 0
    %2563 = vmatprep.subr.bf16.mxu0 0
    %2564 = vmatpush1.bf16.msra.mxu0 0
    %2565 = vmatprep.subr.bf16.mxu0 0
    %2566 = vmatpush1.bf16.msra.mxu0 0
    %2567 = vmatprep.subr.bf16.mxu0 0
    %2568 = vmatpush1.bf16.msra.mxu0 0
    %2569 = vmatprep.subr.bf16.mxu0 0
    %2570 = vmatpush1.bf16.msra.mxu0 0
    %2571 = vmatprep.mubr.bf16.mxu0 0
    %2572 = vmatmul.mubr.bf16.gmra.mrb[0].mxu0 %v2531
    %v2573 = vpop.f32.mrb[0].mxu0
    %v2574 = vadd.f32 0.0, %v2573
    %v2575 = vpop.f32.mrb[0].mxu0
    %v2576 = vadd.f32 0.0, %v2575
    %v2577 = vpop.f32.mrb[0].mxu0
    %v2578 = vpop.f32.mrb[0].mxu0
    %2579 = vdwg.mxu0
    %v2580 = vpack.c.bf16 %v2574, %v2574
    %v2581 = vpack.c.bf16 %v2576, %v2576
    %s2582 = scalar_lea.vmem [#allocation14], 256
    %v2583 = vld [vmem:[%s2582] sm:$0xff]
    %v2584 = vld [vmem:[%s2582 + $0x8] sm:$0xff]
    %v2585 = vld [vmem:[%s2582 + $0x10] sm:$0xff]
    %v2586 = vld [vmem:[%s2582 + $0x18] sm:$0xff]
    %v2587 = vld [vmem:[%s2582 + $0x20] sm:$0xff]
    %v2588 = vld [vmem:[%s2582 + $0x28] sm:$0xff]
    %v2589 = vld [vmem:[%s2582 + $0x30] sm:$0xff]
    %v2590 = vld [vmem:[%s2582 + $0x38] sm:$0xff]
    %v2591 = vld [vmem:[%s2582 + $0x40] sm:$0xff]
    %v2592 = vld [vmem:[%s2582 + $0x48] sm:$0xff]
    %v2593 = vld [vmem:[%s2582 + $0x50] sm:$0xff]
    %v2594 = vld [vmem:[%s2582 + $0x58] sm:$0xff]
    %v2595 = vld [vmem:[%s2582 + $0x60] sm:$0xff]
    %v2596 = vld [vmem:[%s2582 + $0x68] sm:$0xff]
    %v2597 = vld [vmem:[%s2582 + $0x70] sm:$0xff]
    %v2598 = vld [vmem:[%s2582 + $0x78] sm:$0xff]
    %v2599 = vld [vmem:[%s2582 + $0x80] sm:$0xff]
    %v2600 = vld [vmem:[%s2582 + $0x88] sm:$0xff]
    %v2601 = vld [vmem:[%s2582 + $0x90] sm:$0xff]
    %v2602 = vld [vmem:[%s2582 + $0x98] sm:$0xff]
    %v2603 = vld [vmem:[%s2582 + $0xa0] sm:$0xff]
    %v2604 = vld [vmem:[%s2582 + $0xa8] sm:$0xff]
    %v2605 = vld [vmem:[%s2582 + $0xb0] sm:$0xff]
    %v2606 = vld [vmem:[%s2582 + $0xb8] sm:$0xff]
    %v2607 = vld [vmem:[%s2582 + $0xc0] sm:$0xff]
    %v2608 = vld [vmem:[%s2582 + $0xc8] sm:$0xff]
    %v2609 = vld [vmem:[%s2582 + $0xd0] sm:$0xff]
    %v2610 = vld [vmem:[%s2582 + $0xd8] sm:$0xff]
    %v2611 = vld [vmem:[%s2582 + $0xe0] sm:$0xff]
    %v2612 = vld [vmem:[%s2582 + $0xe8] sm:$0xff]
    %v2613 = vld [vmem:[%s2582 + $0xf0] sm:$0xff]
    %v2614 = vld [vmem:[%s2582 + $0xf8] sm:$0xff]
    %s2615 = scalar_lea.vmem %s27, 2
    %v2616 = vld [vmem:[%s2615] sm:$0x3]
    %v2618 = vlaneseq
    %v2619 = vshrl.u32 %v2618, 7
    %v2620 = vsub.s32 0, %v2619
    %v2621 = vrot.slane %v2616, %v2620
    %v2622 = vlaneseq
    %v2623 = vshrl.u32 %v2622, 7
    %v2624 = vsub.s32 1, %v2623
    %v2625 = vrot.slane %v2616, %v2624
    %v2660 = vunpack.c.l.b16 %v2583
    %v2661 = vunpack.c.h.b16 %v2583
    %v2662 = vunpack.c.l.b16 %v2584
    %v2663 = vunpack.c.h.b16 %v2584
    %v2664 = vunpack.c.l.b16 %v2585
    %v2665 = vunpack.c.h.b16 %v2585
    %v2666 = vunpack.c.l.b16 %v2586
    %v2667 = vunpack.c.h.b16 %v2586
    %v2668 = vunpack.c.l.b16 %v2587
    %v2669 = vunpack.c.h.b16 %v2587
    %v2670 = vunpack.c.l.b16 %v2588
    %v2671 = vunpack.c.h.b16 %v2588
    %v2672 = vunpack.c.l.b16 %v2589
    %v2673 = vunpack.c.h.b16 %v2589
    %v2674 = vunpack.c.l.b16 %v2590
    %v2675 = vunpack.c.h.b16 %v2590
    %v2676 = vunpack.c.l.b16 %v2591
    %v2677 = vunpack.c.h.b16 %v2591
    %v2678 = vunpack.c.l.b16 %v2592
    %v2679 = vunpack.c.h.b16 %v2592
    %v2680 = vunpack.c.l.b16 %v2593
    %v2681 = vunpack.c.h.b16 %v2593
    %v2682 = vunpack.c.l.b16 %v2594
    %v2683 = vunpack.c.h.b16 %v2594
    %v2684 = vunpack.c.l.b16 %v2595
    %v2685 = vunpack.c.h.b16 %v2595
    %v2686 = vunpack.c.l.b16 %v2596
    %v2687 = vunpack.c.h.b16 %v2596
    %v2688 = vunpack.c.l.b16 %v2597
    %v2689 = vunpack.c.h.b16 %v2597
    %v2690 = vunpack.c.l.b16 %v2598
    %v2691 = vunpack.c.h.b16 %v2598
    %v2692 = vunpack.c.l.b16 %v2599
    %v2693 = vunpack.c.h.b16 %v2599
    %v2694 = vunpack.c.l.b16 %v2600
    %v2695 = vunpack.c.h.b16 %v2600
    %v2696 = vunpack.c.l.b16 %v2601
    %v2697 = vunpack.c.h.b16 %v2601
    %v2698 = vunpack.c.l.b16 %v2602
    %v2699 = vunpack.c.h.b16 %v2602
    %v2700 = vunpack.c.l.b16 %v2603
    %v2701 = vunpack.c.h.b16 %v2603
    %v2702 = vunpack.c.l.b16 %v2604
    %v2703 = vunpack.c.h.b16 %v2604
    %v2704 = vunpack.c.l.b16 %v2605
    %v2705 = vunpack.c.h.b16 %v2605
    %v2706 = vunpack.c.l.b16 %v2606
    %v2707 = vunpack.c.h.b16 %v2606
    %v2708 = vunpack.c.l.b16 %v2607
    %v2709 = vunpack.c.h.b16 %v2607
    %v2710 = vunpack.c.l.b16 %v2608
    %v2711 = vunpack.c.h.b16 %v2608
    %v2712 = vunpack.c.l.b16 %v2609
    %v2713 = vunpack.c.h.b16 %v2609
    %v2714 = vunpack.c.l.b16 %v2610
    %v2715 = vunpack.c.h.b16 %v2610
    %v2716 = vunpack.c.l.b16 %v2611
    %v2717 = vunpack.c.h.b16 %v2611
    %v2718 = vunpack.c.l.b16 %v2612
    %v2719 = vunpack.c.h.b16 %v2612
    %v2720 = vunpack.c.l.b16 %v2613
    %v2721 = vunpack.c.h.b16 %v2613
    %v2722 = vunpack.c.l.b16 %v2614
    %v2723 = vunpack.c.h.b16 %v2614
    %v2724 = vpack.c.b16 %v2662, %v2660
    %v2725 = vpack.c.b16 %v2663, %v2661
    %v2726 = vpack.c.b16 %v2666, %v2664
    %v2727 = vpack.c.b16 %v2667, %v2665
    %v2728 = vpack.c.b16 %v2670, %v2668
    %v2729 = vpack.c.b16 %v2671, %v2669
    %v2730 = vpack.c.b16 %v2674, %v2672
    %v2731 = vpack.c.b16 %v2675, %v2673
    %v2732 = vpack.c.b16 %v2678, %v2676
    %v2733 = vpack.c.b16 %v2679, %v2677
    %v2734 = vpack.c.b16 %v2682, %v2680
    %v2735 = vpack.c.b16 %v2683, %v2681
    %v2736 = vpack.c.b16 %v2686, %v2684
    %v2737 = vpack.c.b16 %v2687, %v2685
    %v2738 = vpack.c.b16 %v2690, %v2688
    %v2739 = vpack.c.b16 %v2691, %v2689
    %v2740 = vpack.c.b16 %v2694, %v2692
    %v2741 = vpack.c.b16 %v2695, %v2693
    %v2742 = vpack.c.b16 %v2698, %v2696
    %v2743 = vpack.c.b16 %v2699, %v2697
    %v2744 = vpack.c.b16 %v2702, %v2700
    %v2745 = vpack.c.b16 %v2703, %v2701
    %v2746 = vpack.c.b16 %v2706, %v2704
    %v2747 = vpack.c.b16 %v2707, %v2705
    %v2748 = vpack.c.b16 %v2710, %v2708
    %v2749 = vpack.c.b16 %v2711, %v2709
    %v2750 = vpack.c.b16 %v2714, %v2712
    %v2751 = vpack.c.b16 %v2715, %v2713
    %v2752 = vpack.c.b16 %v2718, %v2716
    %v2753 = vpack.c.b16 %v2719, %v2717
    %v2754 = vpack.c.b16 %v2722, %v2720
    %v2755 = vpack.c.b16 %v2723, %v2721
    %2788 = vmatprep.subr.bf16.mxu0 %v2725
    %2789 = vmatpush1.bf16.msra.mxu0 %v2724
    %2790 = vmatprep.subr.bf16.mxu0 %v2727
    %2791 = vmatpush1.bf16.msra.mxu0 %v2726
    %2792 = vmatprep.subr.bf16.mxu0 %v2729
    %2793 = vmatpush1.bf16.msra.mxu0 %v2728
    %2794 = vmatprep.subr.bf16.mxu0 %v2731
    %2795 = vmatpush1.bf16.msra.mxu0 %v2730
    %2796 = vmatprep.subr.bf16.mxu0 %v2733
    %2797 = vmatpush1.bf16.msra.mxu0 %v2732
    %2798 = vmatprep.subr.bf16.mxu0 %v2735
    %2799 = vmatpush1.bf16.msra.mxu0 %v2734
    %2800 = vmatprep.subr.bf16.mxu0 %v2737
    %2801 = vmatpush1.bf16.msra.mxu0 %v2736
    %2802 = vmatprep.subr.bf16.mxu0 %v2739
    %2803 = vmatpush1.bf16.msra.mxu0 %v2738
    %2804 = vmatprep.subr.bf16.mxu0 %v2741
    %2805 = vmatpush1.bf16.msra.mxu0 %v2740
    %2806 = vmatprep.subr.bf16.mxu0 %v2743
    %2807 = vmatpush1.bf16.msra.mxu0 %v2742
    %2808 = vmatprep.subr.bf16.mxu0 %v2745
    %2809 = vmatpush1.bf16.msra.mxu0 %v2744
    %2810 = vmatprep.subr.bf16.mxu0 %v2747
    %2811 = vmatpush1.bf16.msra.mxu0 %v2746
    %2812 = vmatprep.subr.bf16.mxu0 %v2749
    %2813 = vmatpush1.bf16.msra.mxu0 %v2748
    %2814 = vmatprep.subr.bf16.mxu0 %v2751
    %2815 = vmatpush1.bf16.msra.mxu0 %v2750
    %2816 = vmatprep.subr.bf16.mxu0 %v2753
    %2817 = vmatpush1.bf16.msra.mxu0 %v2752
    %2818 = vmatprep.subr.bf16.mxu0 %v2755
    %2819 = vmatpush1.bf16.msra.mxu0 %v2754
    %2820 = vmatprep.mubr.bf16.mxu0 %v2581
    %2821 = vmatmul.mubr.bf16.gmra.mrb[0].mxu0 %v2580
    %v2822 = vpop.f32.mrb[0].mxu0
    %v2823 = vadd.f32 %v2621, %v2822
    %v2824 = vpop.f32.mrb[0].mxu0
    %v2825 = vadd.f32 %v2625, %v2824
    %v2826 = vpop.f32.mrb[0].mxu0
    %v2827 = vpop.f32.mrb[0].mxu0
    %2828 = vdwg.mxu0
    %v2829 = vmax.f32 %v2823, 0.0
    %v2830 = vmax.f32 %v2825, 0.0
    %v2831 = vpack.c.bf16 %v2829, %v2829
    %v2832 = vpack.c.bf16 %v2830, %v2830
    %s2833 = scalar_lea.vmem [#allocation15], 256
    %v2834 = vld [vmem:[%s2833] sm:$0xff]
    %v2835 = vld [vmem:[%s2833 + $0x8] sm:$0xff]
    %v2836 = vld [vmem:[%s2833 + $0x10] sm:$0xff]
    %v2837 = vld [vmem:[%s2833 + $0x18] sm:$0xff]
    %v2838 = vld [vmem:[%s2833 + $0x20] sm:$0xff]
    %v2839 = vld [vmem:[%s2833 + $0x28] sm:$0xff]
    %v2840 = vld [vmem:[%s2833 + $0x30] sm:$0xff]
    %v2841 = vld [vmem:[%s2833 + $0x38] sm:$0xff]
    %v2842 = vld [vmem:[%s2833 + $0x40] sm:$0xff]
    %v2843 = vld [vmem:[%s2833 + $0x48] sm:$0xff]
    %v2844 = vld [vmem:[%s2833 + $0x50] sm:$0xff]
    %v2845 = vld [vmem:[%s2833 + $0x58] sm:$0xff]
    %v2846 = vld [vmem:[%s2833 + $0x60] sm:$0xff]
    %v2847 = vld [vmem:[%s2833 + $0x68] sm:$0xff]
    %v2848 = vld [vmem:[%s2833 + $0x70] sm:$0xff]
    %v2849 = vld [vmem:[%s2833 + $0x78] sm:$0xff]
    %v2850 = vld [vmem:[%s2833 + $0x80] sm:$0xff]
    %v2851 = vld [vmem:[%s2833 + $0x88] sm:$0xff]
    %v2852 = vld [vmem:[%s2833 + $0x90] sm:$0xff]
    %v2853 = vld [vmem:[%s2833 + $0x98] sm:$0xff]
    %v2854 = vld [vmem:[%s2833 + $0xa0] sm:$0xff]
    %v2855 = vld [vmem:[%s2833 + $0xa8] sm:$0xff]
    %v2856 = vld [vmem:[%s2833 + $0xb0] sm:$0xff]
    %v2857 = vld [vmem:[%s2833 + $0xb8] sm:$0xff]
    %v2858 = vld [vmem:[%s2833 + $0xc0] sm:$0xff]
    %v2859 = vld [vmem:[%s2833 + $0xc8] sm:$0xff]
    %v2860 = vld [vmem:[%s2833 + $0xd0] sm:$0xff]
    %v2861 = vld [vmem:[%s2833 + $0xd8] sm:$0xff]
    %v2862 = vld [vmem:[%s2833 + $0xe0] sm:$0xff]
    %v2863 = vld [vmem:[%s2833 + $0xe8] sm:$0xff]
    %v2864 = vld [vmem:[%s2833 + $0xf0] sm:$0xff]
    %v2865 = vld [vmem:[%s2833 + $0xf8] sm:$0xff]
    %s2866 = scalar_lea.vmem %s31, 2
    %v2867 = vld [vmem:[%s2866] sm:$0x3]
    %v2869 = vlaneseq
    %v2870 = vshrl.u32 %v2869, 7
    %v2871 = vsub.s32 0, %v2870
    %v2872 = vrot.slane %v2867, %v2871
    %v2873 = vlaneseq
    %v2874 = vshrl.u32 %v2873, 7
    %v2875 = vsub.s32 1, %v2874
    %v2876 = vrot.slane %v2867, %v2875
    %v2911 = vunpack.c.l.b16 %v2834
    %v2912 = vunpack.c.h.b16 %v2834
    %v2913 = vunpack.c.l.b16 %v2835
    %v2914 = vunpack.c.h.b16 %v2835
    %v2915 = vunpack.c.l.b16 %v2836
    %v2916 = vunpack.c.h.b16 %v2836
    %v2917 = vunpack.c.l.b16 %v2837
    %v2918 = vunpack.c.h.b16 %v2837
    %v2919 = vunpack.c.l.b16 %v2838
    %v2920 = vunpack.c.h.b16 %v2838
    %v2921 = vunpack.c.l.b16 %v2839
    %v2922 = vunpack.c.h.b16 %v2839
    %v2923 = vunpack.c.l.b16 %v2840
    %v2924 = vunpack.c.h.b16 %v2840
    %v2925 = vunpack.c.l.b16 %v2841
    %v2926 = vunpack.c.h.b16 %v2841
    %v2927 = vunpack.c.l.b16 %v2842
    %v2928 = vunpack.c.h.b16 %v2842
    %v2929 = vunpack.c.l.b16 %v2843
    %v2930 = vunpack.c.h.b16 %v2843
    %v2931 = vunpack.c.l.b16 %v2844
    %v2932 = vunpack.c.h.b16 %v2844
    %v2933 = vunpack.c.l.b16 %v2845
    %v2934 = vunpack.c.h.b16 %v2845
    %v2935 = vunpack.c.l.b16 %v2846
    %v2936 = vunpack.c.h.b16 %v2846
    %v2937 = vunpack.c.l.b16 %v2847
    %v2938 = vunpack.c.h.b16 %v2847
    %v2939 = vunpack.c.l.b16 %v2848
    %v2940 = vunpack.c.h.b16 %v2848
    %v2941 = vunpack.c.l.b16 %v2849
    %v2942 = vunpack.c.h.b16 %v2849
    %v2943 = vunpack.c.l.b16 %v2850
    %v2944 = vunpack.c.h.b16 %v2850
    %v2945 = vunpack.c.l.b16 %v2851
    %v2946 = vunpack.c.h.b16 %v2851
    %v2947 = vunpack.c.l.b16 %v2852
    %v2948 = vunpack.c.h.b16 %v2852
    %v2949 = vunpack.c.l.b16 %v2853
    %v2950 = vunpack.c.h.b16 %v2853
    %v2951 = vunpack.c.l.b16 %v2854
    %v2952 = vunpack.c.h.b16 %v2854
    %v2953 = vunpack.c.l.b16 %v2855
    %v2954 = vunpack.c.h.b16 %v2855
    %v2955 = vunpack.c.l.b16 %v2856
    %v2956 = vunpack.c.h.b16 %v2856
    %v2957 = vunpack.c.l.b16 %v2857
    %v2958 = vunpack.c.h.b16 %v2857
    %v2959 = vunpack.c.l.b16 %v2858
    %v2960 = vunpack.c.h.b16 %v2858
    %v2961 = vunpack.c.l.b16 %v2859
    %v2962 = vunpack.c.h.b16 %v2859
    %v2963 = vunpack.c.l.b16 %v2860
    %v2964 = vunpack.c.h.b16 %v2860
    %v2965 = vunpack.c.l.b16 %v2861
    %v2966 = vunpack.c.h.b16 %v2861
    %v2967 = vunpack.c.l.b16 %v2862
    %v2968 = vunpack.c.h.b16 %v2862
    %v2969 = vunpack.c.l.b16 %v2863
    %v2970 = vunpack.c.h.b16 %v2863
    %v2971 = vunpack.c.l.b16 %v2864
    %v2972 = vunpack.c.h.b16 %v2864
    %v2973 = vunpack.c.l.b16 %v2865
    %v2974 = vunpack.c.h.b16 %v2865
    %v2975 = vpack.c.b16 %v2913, %v2911
    %v2976 = vpack.c.b16 %v2914, %v2912
    %v2977 = vpack.c.b16 %v2917, %v2915
    %v2978 = vpack.c.b16 %v2918, %v2916
    %v2979 = vpack.c.b16 %v2921, %v2919
    %v2980 = vpack.c.b16 %v2922, %v2920
    %v2981 = vpack.c.b16 %v2925, %v2923
    %v2982 = vpack.c.b16 %v2926, %v2924
    %v2983 = vpack.c.b16 %v2929, %v2927
    %v2984 = vpack.c.b16 %v2930, %v2928
    %v2985 = vpack.c.b16 %v2933, %v2931
    %v2986 = vpack.c.b16 %v2934, %v2932
    %v2987 = vpack.c.b16 %v2937, %v2935
    %v2988 = vpack.c.b16 %v2938, %v2936
    %v2989 = vpack.c.b16 %v2941, %v2939
    %v2990 = vpack.c.b16 %v2942, %v2940
    %v2991 = vpack.c.b16 %v2945, %v2943
    %v2992 = vpack.c.b16 %v2946, %v2944
    %v2993 = vpack.c.b16 %v2949, %v2947
    %v2994 = vpack.c.b16 %v2950, %v2948
    %v2995 = vpack.c.b16 %v2953, %v2951
    %v2996 = vpack.c.b16 %v2954, %v2952
    %v2997 = vpack.c.b16 %v2957, %v2955
    %v2998 = vpack.c.b16 %v2958, %v2956
    %v2999 = vpack.c.b16 %v2961, %v2959
    %v3000 = vpack.c.b16 %v2962, %v2960
    %v3001 = vpack.c.b16 %v2965, %v2963
    %v3002 = vpack.c.b16 %v2966, %v2964
    %v3003 = vpack.c.b16 %v2969, %v2967
    %v3004 = vpack.c.b16 %v2970, %v2968
    %v3005 = vpack.c.b16 %v2973, %v2971
    %v3006 = vpack.c.b16 %v2974, %v2972
    %3039 = vmatprep.subr.bf16.mxu0 %v2976
    %3040 = vmatpush1.bf16.msra.mxu0 %v2975
    %3041 = vmatprep.subr.bf16.mxu0 %v2978
    %3042 = vmatpush1.bf16.msra.mxu0 %v2977
    %3043 = vmatprep.subr.bf16.mxu0 %v2980
    %3044 = vmatpush1.bf16.msra.mxu0 %v2979
    %3045 = vmatprep.subr.bf16.mxu0 %v2982
    %3046 = vmatpush1.bf16.msra.mxu0 %v2981
    %3047 = vmatprep.subr.bf16.mxu0 %v2984
    %3048 = vmatpush1.bf16.msra.mxu0 %v2983
    %3049 = vmatprep.subr.bf16.mxu0 %v2986
    %3050 = vmatpush1.bf16.msra.mxu0 %v2985
    %3051 = vmatprep.subr.bf16.mxu0 %v2988
    %3052 = vmatpush1.bf16.msra.mxu0 %v2987
    %3053 = vmatprep.subr.bf16.mxu0 %v2990
    %3054 = vmatpush1.bf16.msra.mxu0 %v2989
    %3055 = vmatprep.subr.bf16.mxu0 %v2992
    %3056 = vmatpush1.bf16.msra.mxu0 %v2991
    %3057 = vmatprep.subr.bf16.mxu0 %v2994
    %3058 = vmatpush1.bf16.msra.mxu0 %v2993
    %3059 = vmatprep.subr.bf16.mxu0 %v2996
    %3060 = vmatpush1.bf16.msra.mxu0 %v2995
    %3061 = vmatprep.subr.bf16.mxu0 %v2998
    %3062 = vmatpush1.bf16.msra.mxu0 %v2997
    %3063 = vmatprep.subr.bf16.mxu0 %v3000
    %3064 = vmatpush1.bf16.msra.mxu0 %v2999
    %3065 = vmatprep.subr.bf16.mxu0 %v3002
    %3066 = vmatpush1.bf16.msra.mxu0 %v3001
    %3067 = vmatprep.subr.bf16.mxu0 %v3004
    %3068 = vmatpush1.bf16.msra.mxu0 %v3003
    %3069 = vmatprep.subr.bf16.mxu0 %v3006
    %3070 = vmatpush1.bf16.msra.mxu0 %v3005
    %3071 = vmatprep.mubr.bf16.mxu0 %v2832
    %3072 = vmatmul.mubr.bf16.gmra.mrb[0].mxu0 %v2831
    %v3073 = vpop.f32.mrb[0].mxu0
    %v3074 = vadd.f32 %v2872, %v3073
    %v3075 = vpop.f32.mrb[0].mxu0
    %v3076 = vadd.f32 %v2876, %v3075
    %v3077 = vpop.f32.mrb[0].mxu0
    %v3078 = vpop.f32.mrb[0].mxu0
    %3079 = vdwg.mxu0
    %v3080 = vadd.f32 %v2377, %v3074
    %v3081 = vadd.f32 %v2378, %v3076
    %v3082 = vpack.c.bf16 %v3074, %v3074
    %v3083 = vpack.c.bf16 %v3076, %v3076
    %3084 = vmatprep.subr.bf16.mxu0 %v1413
    %3085 = vmatpush1.bf16.msra.mxu0 %v1412
    %3086 = vmatprep.subr.bf16.mxu0 %v1415
    %3087 = vmatpush1.bf16.msra.mxu0 %v1414
    %3088 = vmatprep.subr.bf16.mxu0 %v1417
    %3089 = vmatpush1.bf16.msra.mxu0 %v1416
    %3090 = vmatprep.subr.bf16.mxu0 %v1419
    %3091 = vmatpush1.bf16.msra.mxu0 %v1418
    %3092 = vmatprep.subr.bf16.mxu0 %v1421
    %3093 = vmatpush1.bf16.msra.mxu0 %v1420
    %3094 = vmatprep.subr.bf16.mxu0 %v1423
    %3095 = vmatpush1.bf16.msra.mxu0 %v1422
    %3096 = vmatprep.subr.bf16.mxu0 %v1425
    %3097 = vmatpush1.bf16.msra.mxu0 %v1424
    %3098 = vmatprep.subr.bf16.mxu0 %v1427
    %3099 = vmatpush1.bf16.msra.mxu0 %v1426
    %3100 = vmatprep.subr.bf16.mxu0 %v1429
    %3101 = vmatpush1.bf16.msra.mxu0 %v1428
    %3102 = vmatprep.subr.bf16.mxu0 %v1431
    %3103 = vmatpush1.bf16.msra.mxu0 %v1430
    %3104 = vmatprep.subr.bf16.mxu0 %v1433
    %3105 = vmatpush1.bf16.msra.mxu0 %v1432
    %3106 = vmatprep.subr.bf16.mxu0 %v1435
    %3107 = vmatpush1.bf16.msra.mxu0 %v1434
    %3108 = vmatprep.subr.bf16.mxu0 %v1437
    %3109 = vmatpush1.bf16.msra.mxu0 %v1436
    %3110 = vmatprep.subr.bf16.mxu0 %v1439
    %3111 = vmatpush1.bf16.msra.mxu0 %v1438
    %3112 = vmatprep.subr.bf16.mxu0 %v1441
    %3113 = vmatpush1.bf16.msra.mxu0 %v1440
    %3114 = vmatprep.subr.bf16.mxu0 %v1443
    %3115 = vmatpush1.bf16.msra.mxu0 %v1442
    %3116 = vmatprep.mubr.bf16.mxu0 %v3083
    %3117 = vmatmul.mubr.bf16.gmra.mrb[0].mxu0 %v3082
    %v3118 = vpop.f32.mrb[0].mxu0
    %v3119 = vadd.f32 %v1309, %v3118
    %v3120 = vpop.f32.mrb[0].mxu0
    %v3121 = vadd.f32 %v1313, %v3120
    %v3122 = vpop.f32.mrb[0].mxu0
    %v3123 = vpop.f32.mrb[0].mxu0
    %3124 = vdwg.mxu0
    %v3125 = vmax.f32 %v3119, 0.0
    %v3126 = vmax.f32 %v3121, 0.0
    %v3127 = vpack.c.bf16 %v3125, %v3125
    %v3128 = vpack.c.bf16 %v3126, %v3126
    %3129 = vmatprep.subr.bf16.mxu0 %v1662
    %3130 = vmatpush1.bf16.msra.mxu0 %v1661
    %3131 = vmatprep.subr.bf16.mxu0 %v1664
    %3132 = vmatpush1.bf16.msra.mxu0 %v1663
    %3133 = vmatprep.subr.bf16.mxu0 %v1666
    %3134 = vmatpush1.bf16.msra.mxu0 %v1665
    %3135 = vmatprep.subr.bf16.mxu0 %v1668
    %3136 = vmatpush1.bf16.msra.mxu0 %v1667
    %3137 = vmatprep.subr.bf16.mxu0 %v1670
    %3138 = vmatpush1.bf16.msra.mxu0 %v1669
    %3139 = vmatprep.subr.bf16.mxu0 %v1672
    %3140 = vmatpush1.bf16.msra.mxu0 %v1671
    %3141 = vmatprep.subr.bf16.mxu0 %v1674
    %3142 = vmatpush1.bf16.msra.mxu0 %v1673
    %3143 = vmatprep.subr.bf16.mxu0 %v1676
    %3144 = vmatpush1.bf16.msra.mxu0 %v1675
    %3145 = vmatprep.subr.bf16.mxu0 %v1678
    %3146 = vmatpush1.bf16.msra.mxu0 %v1677
    %3147 = vmatprep.subr.bf16.mxu0 %v1680
    %3148 = vmatpush1.bf16.msra.mxu0 %v1679
    %3149 = vmatprep.subr.bf16.mxu0 %v1682
    %3150 = vmatpush1.bf16.msra.mxu0 %v1681
    %3151 = vmatprep.subr.bf16.mxu0 %v1684
    %3152 = vmatpush1.bf16.msra.mxu0 %v1683
    %3153 = vmatprep.subr.bf16.mxu0 %v1686
    %3154 = vmatpush1.bf16.msra.mxu0 %v1685
    %3155 = vmatprep.subr.bf16.mxu0 %v1688
    %3156 = vmatpush1.bf16.msra.mxu0 %v1687
    %3157 = vmatprep.subr.bf16.mxu0 %v1690
    %3158 = vmatpush1.bf16.msra.mxu0 %v1689
    %3159 = vmatprep.subr.bf16.mxu0 %v1692
    %3160 = vmatpush1.bf16.msra.mxu0 %v1691
    %3161 = vmatprep.mubr.bf16.mxu0 %v3128
    %3162 = vmatmul.mubr.bf16.gmra.mrb[0].mxu0 %v3127
    %v3163 = vpop.f32.mrb[0].mxu0
    %v3164 = vadd.f32 %v1558, %v3163
    %v3165 = vpop.f32.mrb[0].mxu0
    %v3166 = vadd.f32 %v1562, %v3165
    %v3167 = vpop.f32.mrb[0].mxu0
    %v3168 = vpop.f32.mrb[0].mxu0
    %3169 = vdwg.mxu0
    %v3170 = vmax.f32 %v3164, 0.0
    %v3171 = vmax.f32 %v3166, 0.0
    %v3172 = vpack.c.bf16 %v3170, %v3170
    %v3173 = vpack.c.bf16 %v3171, %v3171
    %3174 = vmatprep.subr.bf16.mxu0 %v3173
    %3175 = vmatpush1.bf16.xpose.msra.mxu0 %v3172
    %3176 = vmatprep.subr.bf16.mxu0 0
    %3177 = vmatpush1.bf16.xpose.msra.mxu0 0
    %3178 = vmatprep.subr.bf16.mxu0 0
    %3179 = vmatpush1.bf16.xpose.msra.mxu0 0
    %3180 = vmatprep.subr.bf16.mxu0 0
    %3181 = vmatpush1.bf16.xpose.msra.mxu0 0
    %3182 = vmatprep.subr.bf16.mxu0 0
    %3183 = vmatpush1.bf16.xpose.msra.mxu0 0
    %3184 = vmatprep.subr.bf16.mxu0 0
    %3185 = vmatpush1.bf16.xpose.msra.mxu0 0
    %3186 = vmatprep.subr.bf16.mxu0 0
    %3187 = vmatpush1.bf16.xpose.msra.mxu0 0
    %3188 = vmatprep.subr.bf16.mxu0 0
    %3189 = vmatpush1.bf16.xpose.msra.mxu0 0
    %3190 = vmatprep.subr.bf16.mxu0 0
    %3191 = vmatpush1.bf16.xpose.msra.mxu0 0
    %3192 = vmatprep.subr.bf16.mxu0 0
    %3193 = vmatpush1.bf16.xpose.msra.mxu0 0
    %3194 = vmatprep.subr.bf16.mxu0 0
    %3195 = vmatpush1.bf16.xpose.msra.mxu0 0
    %3196 = vmatprep.subr.bf16.mxu0 0
    %3197 = vmatpush1.bf16.xpose.msra.mxu0 0
    %3198 = vmatprep.subr.bf16.mxu0 0
    %3199 = vmatpush1.bf16.xpose.msra.mxu0 0
    %3200 = vmatprep.subr.bf16.mxu0 0
    %3201 = vmatpush1.bf16.xpose.msra.mxu0 0
    %3202 = vmatprep.subr.bf16.mxu0 0
    %3203 = vmatpush1.bf16.xpose.msra.mxu0 0
    %3204 = vmatprep.subr.bf16.mxu0 0
    %3205 = vmatpush1.bf16.xpose.msra.mxu0 0
    %3206 = vmatprep.mubr.bf16.mxu0 %v3173
    %3207 = vmatmul.mubr.bf16.gmra.mrb[0].mxu0 %v3172
    %v3208 = vpop.f32.mrb[0].mxu0
    %v3209 = vadd.f32 0.0, %v3208
    %v3210 = vpop.f32.mrb[0].mxu0
    %v3211 = vpop.f32.mrb[0].mxu0
    %v3212 = vpop.f32.mrb[0].mxu0
    %3213 = vdwg.mxu0
    %v3214 = vsel %vm1810, %v3209, 0.0
    %3215 = vadd.xlane.f32.xlu0 %v3214
    %v3216 = vpop.xlane.xlu0 %3215
    %v3217 = vrot.slane %v3216, 4
    %v3218 = vadd.f32 %v3216, %v3217
    %v3219 = vrot.slane %v3218, 2
    %v3220 = vadd.f32 %v3218, %v3219
    %v3221 = vrot.slane %v3220, 1
    %v3222 = vadd.f32 %v3220, %v3221
    %s3223 = vtos %v3222
    %v3224 = vrcp.pop 64.0
    %s3225 = vtos %v3224
    %s3226 = smul.f32 %s3223, %s3225
    %v3227 = vstv %s3226
    %vm3228 = vcmp.gt.f32.partialorder %v3209, %v3227
    %v3229 = vsel %vm3228, 1, 0
    %v3230 = vcvt.s32.f32 %v3229
    %v3231 = vadd.f32 %v3230, %v1269
    %v3232 = vpack.c.bf16 %v3231, %v3231
    %v3234 = vsel %vm1810, %v3232, 0
    %v3237 = vsel %vm1833, %v3082, 0
    %v3240 = vsel %vm1833, %v3083, 0
    %3242 = vmatprep.subr.bf16.mxu0 %v3240
    %3243 = vmatpush1.bf16.msra.mxu0 %v3237
    %3244 = vmatprep.subr.bf16.mxu0 0
    %3245 = vmatpush1.bf16.msra.mxu0 0
    %3246 = vmatprep.subr.bf16.mxu0 0
    %3247 = vmatpush1.bf16.msra.mxu0 0
    %3248 = vmatprep.subr.bf16.mxu0 0
    %3249 = vmatpush1.bf16.msra.mxu0 0
    %3250 = vmatprep.subr.bf16.mxu0 0
    %3251 = vmatpush1.bf16.msra.mxu0 0
    %3252 = vmatprep.subr.bf16.mxu0 0
    %3253 = vmatpush1.bf16.msra.mxu0 0
    %3254 = vmatprep.subr.bf16.mxu0 0
    %3255 = vmatpush1.bf16.msra.mxu0 0
    %3256 = vmatprep.subr.bf16.mxu0 0
    %3257 = vmatpush1.bf16.msra.mxu0 0
    %3258 = vmatprep.subr.bf16.mxu0 0
    %3259 = vmatpush1.bf16.msra.mxu0 0
    %3260 = vmatprep.subr.bf16.mxu0 0
    %3261 = vmatpush1.bf16.msra.mxu0 0
    %3262 = vmatprep.subr.bf16.mxu0 0
    %3263 = vmatpush1.bf16.msra.mxu0 0
    %3264 = vmatprep.subr.bf16.mxu0 0
    %3265 = vmatpush1.bf16.msra.mxu0 0
    %3266 = vmatprep.subr.bf16.mxu0 0
    %3267 = vmatpush1.bf16.msra.mxu0 0
    %3268 = vmatprep.subr.bf16.mxu0 0
    %3269 = vmatpush1.bf16.msra.mxu0 0
    %3270 = vmatprep.subr.bf16.mxu0 0
    %3271 = vmatpush1.bf16.msra.mxu0 0
    %3272 = vmatprep.subr.bf16.mxu0 0
    %3273 = vmatpush1.bf16.msra.mxu0 0
    %3274 = vmatprep.mubr.bf16.mxu0 0
    %3275 = vmatmul.mubr.bf16.gmra.mrb[0].mxu0 %v3234
    %v3276 = vpop.f32.mrb[0].mxu0
    %v3277 = vadd.f32 0.0, %v3276
    %v3278 = vpop.f32.mrb[0].mxu0
    %v3279 = vadd.f32 0.0, %v3278
    %v3280 = vpop.f32.mrb[0].mxu0
    %v3281 = vpop.f32.mrb[0].mxu0
    %3282 = vdwg.mxu0
    %v3283 = vpack.c.bf16 %v3277, %v3277
    %v3284 = vpack.c.bf16 %v3279, %v3279
    %s3285 = scalar_lea.vmem [#allocation14], 512
    %v3286 = vld [vmem:[%s3285] sm:$0xff]
    %v3287 = vld [vmem:[%s3285 + $0x8] sm:$0xff]
    %v3288 = vld [vmem:[%s3285 + $0x10] sm:$0xff]
    %v3289 = vld [vmem:[%s3285 + $0x18] sm:$0xff]
    %v3290 = vld [vmem:[%s3285 + $0x20] sm:$0xff]
    %v3291 = vld [vmem:[%s3285 + $0x28] sm:$0xff]
    %v3292 = vld [vmem:[%s3285 + $0x30] sm:$0xff]
    %v3293 = vld [vmem:[%s3285 + $0x38] sm:$0xff]
    %v3294 = vld [vmem:[%s3285 + $0x40] sm:$0xff]
    %v3295 = vld [vmem:[%s3285 + $0x48] sm:$0xff]
    %v3296 = vld [vmem:[%s3285 + $0x50] sm:$0xff]
    %v3297 = vld [vmem:[%s3285 + $0x58] sm:$0xff]
    %v3298 = vld [vmem:[%s3285 + $0x60] sm:$0xff]
    %v3299 = vld [vmem:[%s3285 + $0x68] sm:$0xff]
    %v3300 = vld [vmem:[%s3285 + $0x70] sm:$0xff]
    %v3301 = vld [vmem:[%s3285 + $0x78] sm:$0xff]
    %v3302 = vld [vmem:[%s3285 + $0x80] sm:$0xff]
    %v3303 = vld [vmem:[%s3285 + $0x88] sm:$0xff]
    %v3304 = vld [vmem:[%s3285 + $0x90] sm:$0xff]
    %v3305 = vld [vmem:[%s3285 + $0x98] sm:$0xff]
    %v3306 = vld [vmem:[%s3285 + $0xa0] sm:$0xff]
    %v3307 = vld [vmem:[%s3285 + $0xa8] sm:$0xff]
    %v3308 = vld [vmem:[%s3285 + $0xb0] sm:$0xff]
    %v3309 = vld [vmem:[%s3285 + $0xb8] sm:$0xff]
    %v3310 = vld [vmem:[%s3285 + $0xc0] sm:$0xff]
    %v3311 = vld [vmem:[%s3285 + $0xc8] sm:$0xff]
    %v3312 = vld [vmem:[%s3285 + $0xd0] sm:$0xff]
    %v3313 = vld [vmem:[%s3285 + $0xd8] sm:$0xff]
    %v3314 = vld [vmem:[%s3285 + $0xe0] sm:$0xff]
    %v3315 = vld [vmem:[%s3285 + $0xe8] sm:$0xff]
    %v3316 = vld [vmem:[%s3285 + $0xf0] sm:$0xff]
    %v3317 = vld [vmem:[%s3285 + $0xf8] sm:$0xff]
    %s3318 = scalar_lea.vmem %s27, 4
    %v3319 = vld [vmem:[%s3318] sm:$0x3]
    %v3321 = vlaneseq
    %v3322 = vshrl.u32 %v3321, 7
    %v3323 = vsub.s32 0, %v3322
    %v3324 = vrot.slane %v3319, %v3323
    %v3325 = vlaneseq
    %v3326 = vshrl.u32 %v3325, 7
    %v3327 = vsub.s32 1, %v3326
    %v3328 = vrot.slane %v3319, %v3327
    %v3363 = vunpack.c.l.b16 %v3286
    %v3364 = vunpack.c.h.b16 %v3286
    %v3365 = vunpack.c.l.b16 %v3287
    %v3366 = vunpack.c.h.b16 %v3287
    %v3367 = vunpack.c.l.b16 %v3288
    %v3368 = vunpack.c.h.b16 %v3288
    %v3369 = vunpack.c.l.b16 %v3289
    %v3370 = vunpack.c.h.b16 %v3289
    %v3371 = vunpack.c.l.b16 %v3290
    %v3372 = vunpack.c.h.b16 %v3290
    %v3373 = vunpack.c.l.b16 %v3291
    %v3374 = vunpack.c.h.b16 %v3291
    %v3375 = vunpack.c.l.b16 %v3292
    %v3376 = vunpack.c.h.b16 %v3292
    %v3377 = vunpack.c.l.b16 %v3293
    %v3378 = vunpack.c.h.b16 %v3293
    %v3379 = vunpack.c.l.b16 %v3294
    %v3380 = vunpack.c.h.b16 %v3294
    %v3381 = vunpack.c.l.b16 %v3295
    %v3382 = vunpack.c.h.b16 %v3295
    %v3383 = vunpack.c.l.b16 %v3296
    %v3384 = vunpack.c.h.b16 %v3296
    %v3385 = vunpack.c.l.b16 %v3297
    %v3386 = vunpack.c.h.b16 %v3297
    %v3387 = vunpack.c.l.b16 %v3298
    %v3388 = vunpack.c.h.b16 %v3298
    %v3389 = vunpack.c.l.b16 %v3299
    %v3390 = vunpack.c.h.b16 %v3299
    %v3391 = vunpack.c.l.b16 %v3300
    %v3392 = vunpack.c.h.b16 %v3300
    %v3393 = vunpack.c.l.b16 %v3301
    %v3394 = vunpack.c.h.b16 %v3301
    %v3395 = vunpack.c.l.b16 %v3302
    %v3396 = vunpack.c.h.b16 %v3302
    %v3397 = vunpack.c.l.b16 %v3303
    %v3398 = vunpack.c.h.b16 %v3303
    %v3399 = vunpack.c.l.b16 %v3304
    %v3400 = vunpack.c.h.b16 %v3304
    %v3401 = vunpack.c.l.b16 %v3305
    %v3402 = vunpack.c.h.b16 %v3305
    %v3403 = vunpack.c.l.b16 %v3306
    %v3404 = vunpack.c.h.b16 %v3306
    %v3405 = vunpack.c.l.b16 %v3307
    %v3406 = vunpack.c.h.b16 %v3307
    %v3407 = vunpack.c.l.b16 %v3308
    %v3408 = vunpack.c.h.b16 %v3308
    %v3409 = vunpack.c.l.b16 %v3309
    %v3410 = vunpack.c.h.b16 %v3309
    %v3411 = vunpack.c.l.b16 %v3310
    %v3412 = vunpack.c.h.b16 %v3310
    %v3413 = vunpack.c.l.b16 %v3311
    %v3414 = vunpack.c.h.b16 %v3311
    %v3415 = vunpack.c.l.b16 %v3312
    %v3416 = vunpack.c.h.b16 %v3312
    %v3417 = vunpack.c.l.b16 %v3313
    %v3418 = vunpack.c.h.b16 %v3313
    %v3419 = vunpack.c.l.b16 %v3314
    %v3420 = vunpack.c.h.b16 %v3314
    %v3421 = vunpack.c.l.b16 %v3315
    %v3422 = vunpack.c.h.b16 %v3315
    %v3423 = vunpack.c.l.b16 %v3316
    %v3424 = vunpack.c.h.b16 %v3316
    %v3425 = vunpack.c.l.b16 %v3317
    %v3426 = vunpack.c.h.b16 %v3317
    %v3427 = vpack.c.b16 %v3365, %v3363
    %v3428 = vpack.c.b16 %v3366, %v3364
    %v3429 = vpack.c.b16 %v3369, %v3367
    %v3430 = vpack.c.b16 %v3370, %v3368
    %v3431 = vpack.c.b16 %v3373, %v3371
    %v3432 = vpack.c.b16 %v3374, %v3372
    %v3433 = vpack.c.b16 %v3377, %v3375
    %v3434 = vpack.c.b16 %v3378, %v3376
    %v3435 = vpack.c.b16 %v3381, %v3379
    %v3436 = vpack.c.b16 %v3382, %v3380
    %v3437 = vpack.c.b16 %v3385, %v3383
    %v3438 = vpack.c.b16 %v3386, %v3384
    %v3439 = vpack.c.b16 %v3389, %v3387
    %v3440 = vpack.c.b16 %v3390, %v3388
    %v3441 = vpack.c.b16 %v3393, %v3391
    %v3442 = vpack.c.b16 %v3394, %v3392
    %v3443 = vpack.c.b16 %v3397, %v3395
    %v3444 = vpack.c.b16 %v3398, %v3396
    %v3445 = vpack.c.b16 %v3401, %v3399
    %v3446 = vpack.c.b16 %v3402, %v3400
    %v3447 = vpack.c.b16 %v3405, %v3403
    %v3448 = vpack.c.b16 %v3406, %v3404
    %v3449 = vpack.c.b16 %v3409, %v3407
    %v3450 = vpack.c.b16 %v3410, %v3408
    %v3451 = vpack.c.b16 %v3413, %v3411
    %v3452 = vpack.c.b16 %v3414, %v3412
    %v3453 = vpack.c.b16 %v3417, %v3415
    %v3454 = vpack.c.b16 %v3418, %v3416
    %v3455 = vpack.c.b16 %v3421, %v3419
    %v3456 = vpack.c.b16 %v3422, %v3420
    %v3457 = vpack.c.b16 %v3425, %v3423
    %v3458 = vpack.c.b16 %v3426, %v3424
    %3491 = vmatprep.subr.bf16.mxu0 %v3428
    %3492 = vmatpush1.bf16.msra.mxu0 %v3427
    %3493 = vmatprep.subr.bf16.mxu0 %v3430
    %3494 = vmatpush1.bf16.msra.mxu0 %v3429
    %3495 = vmatprep.subr.bf16.mxu0 %v3432
    %3496 = vmatpush1.bf16.msra.mxu0 %v3431
    %3497 = vmatprep.subr.bf16.mxu0 %v3434
    %3498 = vmatpush1.bf16.msra.mxu0 %v3433
    %3499 = vmatprep.subr.bf16.mxu0 %v3436
    %3500 = vmatpush1.bf16.msra.mxu0 %v3435
    %3501 = vmatprep.subr.bf16.mxu0 %v3438
    %3502 = vmatpush1.bf16.msra.mxu0 %v3437
    %3503 = vmatprep.subr.bf16.mxu0 %v3440
    %3504 = vmatpush1.bf16.msra.mxu0 %v3439
    %3505 = vmatprep.subr.bf16.mxu0 %v3442
    %3506 = vmatpush1.bf16.msra.mxu0 %v3441
    %3507 = vmatprep.subr.bf16.mxu0 %v3444
    %3508 = vmatpush1.bf16.msra.mxu0 %v3443
    %3509 = vmatprep.subr.bf16.mxu0 %v3446
    %3510 = vmatpush1.bf16.msra.mxu0 %v3445
    %3511 = vmatprep.subr.bf16.mxu0 %v3448
    %3512 = vmatpush1.bf16.msra.mxu0 %v3447
    %3513 = vmatprep.subr.bf16.mxu0 %v3450
    %3514 = vmatpush1.bf16.msra.mxu0 %v3449
    %3515 = vmatprep.subr.bf16.mxu0 %v3452
    %3516 = vmatpush1.bf16.msra.mxu0 %v3451
    %3517 = vmatprep.subr.bf16.mxu0 %v3454
    %3518 = vmatpush1.bf16.msra.mxu0 %v3453
    %3519 = vmatprep.subr.bf16.mxu0 %v3456
    %3520 = vmatpush1.bf16.msra.mxu0 %v3455
    %3521 = vmatprep.subr.bf16.mxu0 %v3458
    %3522 = vmatpush1.bf16.msra.mxu0 %v3457
    %3523 = vmatprep.mubr.bf16.mxu0 %v3284
    %3524 = vmatmul.mubr.bf16.gmra.mrb[0].mxu0 %v3283
    %v3525 = vpop.f32.mrb[0].mxu0
    %v3526 = vadd.f32 %v3324, %v3525
    %v3527 = vpop.f32.mrb[0].mxu0
    %v3528 = vadd.f32 %v3328, %v3527
    %v3529 = vpop.f32.mrb[0].mxu0
    %v3530 = vpop.f32.mrb[0].mxu0
    %3531 = vdwg.mxu0
    %v3532 = vmax.f32 %v3526, 0.0
    %v3533 = vmax.f32 %v3528, 0.0
    %v3534 = vpack.c.bf16 %v3532, %v3532
    %v3535 = vpack.c.bf16 %v3533, %v3533
    %s3536 = scalar_lea.vmem [#allocation15], 512
    %v3537 = vld [vmem:[%s3536] sm:$0xff]
    %v3538 = vld [vmem:[%s3536 + $0x8] sm:$0xff]
    %v3539 = vld [vmem:[%s3536 + $0x10] sm:$0xff]
    %v3540 = vld [vmem:[%s3536 + $0x18] sm:$0xff]
    %v3541 = vld [vmem:[%s3536 + $0x20] sm:$0xff]
    %v3542 = vld [vmem:[%s3536 + $0x28] sm:$0xff]
    %v3543 = vld [vmem:[%s3536 + $0x30] sm:$0xff]
    %v3544 = vld [vmem:[%s3536 + $0x38] sm:$0xff]
    %v3545 = vld [vmem:[%s3536 + $0x40] sm:$0xff]
    %v3546 = vld [vmem:[%s3536 + $0x48] sm:$0xff]
    %v3547 = vld [vmem:[%s3536 + $0x50] sm:$0xff]
    %v3548 = vld [vmem:[%s3536 + $0x58] sm:$0xff]
    %v3549 = vld [vmem:[%s3536 + $0x60] sm:$0xff]
    %v3550 = vld [vmem:[%s3536 + $0x68] sm:$0xff]
    %v3551 = vld [vmem:[%s3536 + $0x70] sm:$0xff]
    %v3552 = vld [vmem:[%s3536 + $0x78] sm:$0xff]
    %v3553 = vld [vmem:[%s3536 + $0x80] sm:$0xff]
    %v3554 = vld [vmem:[%s3536 + $0x88] sm:$0xff]
    %v3555 = vld [vmem:[%s3536 + $0x90] sm:$0xff]
    %v3556 = vld [vmem:[%s3536 + $0x98] sm:$0xff]
    %v3557 = vld [vmem:[%s3536 + $0xa0] sm:$0xff]
    %v3558 = vld [vmem:[%s3536 + $0xa8] sm:$0xff]
    %v3559 = vld [vmem:[%s3536 + $0xb0] sm:$0xff]
    %v3560 = vld [vmem:[%s3536 + $0xb8] sm:$0xff]
    %v3561 = vld [vmem:[%s3536 + $0xc0] sm:$0xff]
    %v3562 = vld [vmem:[%s3536 + $0xc8] sm:$0xff]
    %v3563 = vld [vmem:[%s3536 + $0xd0] sm:$0xff]
    %v3564 = vld [vmem:[%s3536 + $0xd8] sm:$0xff]
    %v3565 = vld [vmem:[%s3536 + $0xe0] sm:$0xff]
    %v3566 = vld [vmem:[%s3536 + $0xe8] sm:$0xff]
    %v3567 = vld [vmem:[%s3536 + $0xf0] sm:$0xff]
    %v3568 = vld [vmem:[%s3536 + $0xf8] sm:$0xff]
    %s3569 = scalar_lea.vmem %s31, 4
    %v3570 = vld [vmem:[%s3569] sm:$0x3]
    %v3572 = vlaneseq
    %v3573 = vshrl.u32 %v3572, 7
    %v3574 = vsub.s32 0, %v3573
    %v3575 = vrot.slane %v3570, %v3574
    %v3576 = vlaneseq
    %v3577 = vshrl.u32 %v3576, 7
    %v3578 = vsub.s32 1, %v3577
    %v3579 = vrot.slane %v3570, %v3578
    %v3614 = vunpack.c.l.b16 %v3537
    %v3615 = vunpack.c.h.b16 %v3537
    %v3616 = vunpack.c.l.b16 %v3538
    %v3617 = vunpack.c.h.b16 %v3538
    %v3618 = vunpack.c.l.b16 %v3539
    %v3619 = vunpack.c.h.b16 %v3539
    %v3620 = vunpack.c.l.b16 %v3540
    %v3621 = vunpack.c.h.b16 %v3540
    %v3622 = vunpack.c.l.b16 %v3541
    %v3623 = vunpack.c.h.b16 %v3541
    %v3624 = vunpack.c.l.b16 %v3542
    %v3625 = vunpack.c.h.b16 %v3542
    %v3626 = vunpack.c.l.b16 %v3543
    %v3627 = vunpack.c.h.b16 %v3543
    %v3628 = vunpack.c.l.b16 %v3544
    %v3629 = vunpack.c.h.b16 %v3544
    %v3630 = vunpack.c.l.b16 %v3545
    %v3631 = vunpack.c.h.b16 %v3545
    %v3632 = vunpack.c.l.b16 %v3546
    %v3633 = vunpack.c.h.b16 %v3546
    %v3634 = vunpack.c.l.b16 %v3547
    %v3635 = vunpack.c.h.b16 %v3547
    %v3636 = vunpack.c.l.b16 %v3548
    %v3637 = vunpack.c.h.b16 %v3548
    %v3638 = vunpack.c.l.b16 %v3549
    %v3639 = vunpack.c.h.b16 %v3549
    %v3640 = vunpack.c.l.b16 %v3550
    %v3641 = vunpack.c.h.b16 %v3550
    %v3642 = vunpack.c.l.b16 %v3551
    %v3643 = vunpack.c.h.b16 %v3551
    %v3644 = vunpack.c.l.b16 %v3552
    %v3645 = vunpack.c.h.b16 %v3552
    %v3646 = vunpack.c.l.b16 %v3553
    %v3647 = vunpack.c.h.b16 %v3553
    %v3648 = vunpack.c.l.b16 %v3554
    %v3649 = vunpack.c.h.b16 %v3554
    %v3650 = vunpack.c.l.b16 %v3555
    %v3651 = vunpack.c.h.b16 %v3555
    %v3652 = vunpack.c.l.b16 %v3556
    %v3653 = vunpack.c.h.b16 %v3556
    %v3654 = vunpack.c.l.b16 %v3557
    %v3655 = vunpack.c.h.b16 %v3557
    %v3656 = vunpack.c.l.b16 %v3558
    %v3657 = vunpack.c.h.b16 %v3558
    %v3658 = vunpack.c.l.b16 %v3559
    %v3659 = vunpack.c.h.b16 %v3559
    %v3660 = vunpack.c.l.b16 %v3560
    %v3661 = vunpack.c.h.b16 %v3560
    %v3662 = vunpack.c.l.b16 %v3561
    %v3663 = vunpack.c.h.b16 %v3561
    %v3664 = vunpack.c.l.b16 %v3562
    %v3665 = vunpack.c.h.b16 %v3562
    %v3666 = vunpack.c.l.b16 %v3563
    %v3667 = vunpack.c.h.b16 %v3563
    %v3668 = vunpack.c.l.b16 %v3564
    %v3669 = vunpack.c.h.b16 %v3564
    %v3670 = vunpack.c.l.b16 %v3565
    %v3671 = vunpack.c.h.b16 %v3565
    %v3672 = vunpack.c.l.b16 %v3566
    %v3673 = vunpack.c.h.b16 %v3566
    %v3674 = vunpack.c.l.b16 %v3567
    %v3675 = vunpack.c.h.b16 %v3567
    %v3676 = vunpack.c.l.b16 %v3568
    %v3677 = vunpack.c.h.b16 %v3568
    %v3678 = vpack.c.b16 %v3616, %v3614
    %v3679 = vpack.c.b16 %v3617, %v3615
    %v3680 = vpack.c.b16 %v3620, %v3618
    %v3681 = vpack.c.b16 %v3621, %v3619
    %v3682 = vpack.c.b16 %v3624, %v3622
    %v3683 = vpack.c.b16 %v3625, %v3623
    %v3684 = vpack.c.b16 %v3628, %v3626
    %v3685 = vpack.c.b16 %v3629, %v3627
    %v3686 = vpack.c.b16 %v3632, %v3630
    %v3687 = vpack.c.b16 %v3633, %v3631
    %v3688 = vpack.c.b16 %v3636, %v3634
    %v3689 = vpack.c.b16 %v3637, %v3635
    %v3690 = vpack.c.b16 %v3640, %v3638
    %v3691 = vpack.c.b16 %v3641, %v3639
    %v3692 = vpack.c.b16 %v3644, %v3642
    %v3693 = vpack.c.b16 %v3645, %v3643
    %v3694 = vpack.c.b16 %v3648, %v3646
    %v3695 = vpack.c.b16 %v3649, %v3647
    %v3696 = vpack.c.b16 %v3652, %v3650
    %v3697 = vpack.c.b16 %v3653, %v3651
    %v3698 = vpack.c.b16 %v3656, %v3654
    %v3699 = vpack.c.b16 %v3657, %v3655
    %v3700 = vpack.c.b16 %v3660, %v3658
    %v3701 = vpack.c.b16 %v3661, %v3659
    %v3702 = vpack.c.b16 %v3664, %v3662
    %v3703 = vpack.c.b16 %v3665, %v3663
    %v3704 = vpack.c.b16 %v3668, %v3666
    %v3705 = vpack.c.b16 %v3669, %v3667
    %v3706 = vpack.c.b16 %v3672, %v3670
    %v3707 = vpack.c.b16 %v3673, %v3671
    %v3708 = vpack.c.b16 %v3676, %v3674
    %v3709 = vpack.c.b16 %v3677, %v3675
    %3742 = vmatprep.subr.bf16.mxu0 %v3679
    %3743 = vmatpush1.bf16.msra.mxu0 %v3678
    %3744 = vmatprep.subr.bf16.mxu0 %v3681
    %3745 = vmatpush1.bf16.msra.mxu0 %v3680
    %3746 = vmatprep.subr.bf16.mxu0 %v3683
    %3747 = vmatpush1.bf16.msra.mxu0 %v3682
    %3748 = vmatprep.subr.bf16.mxu0 %v3685
    %3749 = vmatpush1.bf16.msra.mxu0 %v3684
    %3750 = vmatprep.subr.bf16.mxu0 %v3687
    %3751 = vmatpush1.bf16.msra.mxu0 %v3686
    %3752 = vmatprep.subr.bf16.mxu0 %v3689
    %3753 = vmatpush1.bf16.msra.mxu0 %v3688
    %3754 = vmatprep.subr.bf16.mxu0 %v3691
    %3755 = vmatpush1.bf16.msra.mxu0 %v3690
    %3756 = vmatprep.subr.bf16.mxu0 %v3693
    %3757 = vmatpush1.bf16.msra.mxu0 %v3692
    %3758 = vmatprep.subr.bf16.mxu0 %v3695
    %3759 = vmatpush1.bf16.msra.mxu0 %v3694
    %3760 = vmatprep.subr.bf16.mxu0 %v3697
    %3761 = vmatpush1.bf16.msra.mxu0 %v3696
    %3762 = vmatprep.subr.bf16.mxu0 %v3699
    %3763 = vmatpush1.bf16.msra.mxu0 %v3698
    %3764 = vmatprep.subr.bf16.mxu0 %v3701
    %3765 = vmatpush1.bf16.msra.mxu0 %v3700
    %3766 = vmatprep.subr.bf16.mxu0 %v3703
    %3767 = vmatpush1.bf16.msra.mxu0 %v3702
    %3768 = vmatprep.subr.bf16.mxu0 %v3705
    %3769 = vmatpush1.bf16.msra.mxu0 %v3704
    %3770 = vmatprep.subr.bf16.mxu0 %v3707
    %3771 = vmatpush1.bf16.msra.mxu0 %v3706
    %3772 = vmatprep.subr.bf16.mxu0 %v3709
    %3773 = vmatpush1.bf16.msra.mxu0 %v3708
    %3774 = vmatprep.mubr.bf16.mxu0 %v3535
    %3775 = vmatmul.mubr.bf16.gmra.mrb[0].mxu0 %v3534
    %v3776 = vpop.f32.mrb[0].mxu0
    %v3777 = vadd.f32 %v3575, %v3776
    %v3778 = vpop.f32.mrb[0].mxu0
    %v3779 = vadd.f32 %v3579, %v3778
    %v3780 = vpop.f32.mrb[0].mxu0
    %v3781 = vpop.f32.mrb[0].mxu0
    %3782 = vdwg.mxu0
    %v3783 = vadd.f32 %v3080, %v3777
    %v3784 = vadd.f32 %v3081, %v3779
    %v3785 = vrcp.pop 3.0
    %v3786 = vmul.f32 %v3783, %v3785
    %v3787 = vmul.f32 %v3784, %v3785
    %v3788 = vpack.c.bf16 %v415, %v415
    %v3789 = vpack.c.bf16 %v416, %v416
    %v3790 = vld [vmem:[#allocation26] sm:$0xff]
    %v3791 = vld [vmem:[#allocation26 + $0x8] sm:$0xff]
    %v3792 = vld [vmem:[#allocation26 + $0x10] sm:$0xff]
    %v3793 = vld [vmem:[#allocation26 + $0x18] sm:$0xff]
    %v3794 = vld [vmem:[#allocation26 + $0x20] sm:$0xff]
    %v3795 = vld [vmem:[#allocation26 + $0x28] sm:$0xff]
    %v3796 = vld [vmem:[#allocation26 + $0x30] sm:$0xff]
    %v3797 = vld [vmem:[#allocation26 + $0x38] sm:$0xff]
    %v3798 = vld [vmem:[#allocation26 + $0x40] sm:$0xff]
    %v3799 = vld [vmem:[#allocation26 + $0x48] sm:$0xff]
    %v3800 = vld [vmem:[#allocation26 + $0x50] sm:$0xff]
    %v3801 = vld [vmem:[#allocation26 + $0x58] sm:$0xff]
    %v3802 = vld [vmem:[#allocation26 + $0x60] sm:$0xff]
    %v3803 = vld [vmem:[#allocation26 + $0x68] sm:$0xff]
    %v3804 = vld [vmem:[#allocation26 + $0x70] sm:$0xff]
    %v3805 = vld [vmem:[#allocation26 + $0x78] sm:$0xff]
    %v3806 = vld [vmem:[#allocation26 + $0x80] sm:$0xff]
    %v3807 = vld [vmem:[#allocation26 + $0x88] sm:$0xff]
    %v3808 = vld [vmem:[#allocation26 + $0x90] sm:$0xff]
    %v3809 = vld [vmem:[#allocation26 + $0x98] sm:$0xff]
    %v3810 = vld [vmem:[#allocation26 + $0xa0] sm:$0xff]
    %v3811 = vld [vmem:[#allocation26 + $0xa8] sm:$0xff]
    %v3812 = vld [vmem:[#allocation26 + $0xb0] sm:$0xff]
    %v3813 = vld [vmem:[#allocation26 + $0xb8] sm:$0xff]
    %v3814 = vld [vmem:[#allocation26 + $0xc0] sm:$0xff]
    %v3815 = vld [vmem:[#allocation26 + $0xc8] sm:$0xff]
    %v3816 = vld [vmem:[#allocation26 + $0xd0] sm:$0xff]
    %v3817 = vld [vmem:[#allocation26 + $0xd8] sm:$0xff]
    %v3818 = vld [vmem:[#allocation26 + $0xe0] sm:$0xff]
    %v3819 = vld [vmem:[#allocation26 + $0xe8] sm:$0xff]
    %v3820 = vld [vmem:[#allocation26 + $0xf0] sm:$0xff]
    %v3821 = vld [vmem:[#allocation26 + $0xf8] sm:$0xff]
    %v3822 = vld [vmem:[#allocation27] sm:$0x3]
    %v3824 = vlaneseq
    %v3825 = vshrl.u32 %v3824, 7
    %v3826 = vsub.s32 0, %v3825
    %v3827 = vrot.slane %v3822, %v3826
    %v3828 = vlaneseq
    %v3829 = vshrl.u32 %v3828, 7
    %v3830 = vsub.s32 1, %v3829
    %v3831 = vrot.slane %v3822, %v3830
    %v3866 = vunpack.c.l.b16 %v3790
    %v3867 = vunpack.c.h.b16 %v3790
    %v3868 = vunpack.c.l.b16 %v3791
    %v3869 = vunpack.c.h.b16 %v3791
    %v3870 = vunpack.c.l.b16 %v3792
    %v3871 = vunpack.c.h.b16 %v3792
    %v3872 = vunpack.c.l.b16 %v3793
    %v3873 = vunpack.c.h.b16 %v3793
    %v3874 = vunpack.c.l.b16 %v3794
    %v3875 = vunpack.c.h.b16 %v3794
    %v3876 = vunpack.c.l.b16 %v3795
    %v3877 = vunpack.c.h.b16 %v3795
    %v3878 = vunpack.c.l.b16 %v3796
    %v3879 = vunpack.c.h.b16 %v3796
    %v3880 = vunpack.c.l.b16 %v3797
    %v3881 = vunpack.c.h.b16 %v3797
    %v3882 = vunpack.c.l.b16 %v3798
    %v3883 = vunpack.c.h.b16 %v3798
    %v3884 = vunpack.c.l.b16 %v3799
    %v3885 = vunpack.c.h.b16 %v3799
    %v3886 = vunpack.c.l.b16 %v3800
    %v3887 = vunpack.c.h.b16 %v3800
    %v3888 = vunpack.c.l.b16 %v3801
    %v3889 = vunpack.c.h.b16 %v3801
    %v3890 = vunpack.c.l.b16 %v3802
    %v3891 = vunpack.c.h.b16 %v3802
    %v3892 = vunpack.c.l.b16 %v3803
    %v3893 = vunpack.c.h.b16 %v3803
    %v3894 = vunpack.c.l.b16 %v3804
    %v3895 = vunpack.c.h.b16 %v3804
    %v3896 = vunpack.c.l.b16 %v3805
    %v3897 = vunpack.c.h.b16 %v3805
    %v3898 = vunpack.c.l.b16 %v3806
    %v3899 = vunpack.c.h.b16 %v3806
    %v3900 = vunpack.c.l.b16 %v3807
    %v3901 = vunpack.c.h.b16 %v3807
    %v3902 = vunpack.c.l.b16 %v3808
    %v3903 = vunpack.c.h.b16 %v3808
    %v3904 = vunpack.c.l.b16 %v3809
    %v3905 = vunpack.c.h.b16 %v3809
    %v3906 = vunpack.c.l.b16 %v3810
    %v3907 = vunpack.c.h.b16 %v3810
    %v3908 = vunpack.c.l.b16 %v3811
    %v3909 = vunpack.c.h.b16 %v3811
    %v3910 = vunpack.c.l.b16 %v3812
    %v3911 = vunpack.c.h.b16 %v3812
    %v3912 = vunpack.c.l.b16 %v3813
    %v3913 = vunpack.c.h.b16 %v3813
    %v3914 = vunpack.c.l.b16 %v3814
    %v3915 = vunpack.c.h.b16 %v3814
    %v3916 = vunpack.c.l.b16 %v3815
    %v3917 = vunpack.c.h.b16 %v3815
    %v3918 = vunpack.c.l.b16 %v3816
    %v3919 = vunpack.c.h.b16 %v3816
    %v3920 = vunpack.c.l.b16 %v3817
    %v3921 = vunpack.c.h.b16 %v3817
    %v3922 = vunpack.c.l.b16 %v3818
    %v3923 = vunpack.c.h.b16 %v3818
    %v3924 = vunpack.c.l.b16 %v3819
    %v3925 = vunpack.c.h.b16 %v3819
    %v3926 = vunpack.c.l.b16 %v3820
    %v3927 = vunpack.c.h.b16 %v3820
    %v3928 = vunpack.c.l.b16 %v3821
    %v3929 = vunpack.c.h.b16 %v3821
    %v3930 = vpack.c.b16 %v3868, %v3866
    %v3931 = vpack.c.b16 %v3869, %v3867
    %v3932 = vpack.c.b16 %v3872, %v3870
    %v3933 = vpack.c.b16 %v3873, %v3871
    %v3934 = vpack.c.b16 %v3876, %v3874
    %v3935 = vpack.c.b16 %v3877, %v3875
    %v3936 = vpack.c.b16 %v3880, %v3878
    %v3937 = vpack.c.b16 %v3881, %v3879
    %v3938 = vpack.c.b16 %v3884, %v3882
    %v3939 = vpack.c.b16 %v3885, %v3883
    %v3940 = vpack.c.b16 %v3888, %v3886
    %v3941 = vpack.c.b16 %v3889, %v3887
    %v3942 = vpack.c.b16 %v3892, %v3890
    %v3943 = vpack.c.b16 %v3893, %v3891
    %v3944 = vpack.c.b16 %v3896, %v3894
    %v3945 = vpack.c.b16 %v3897, %v3895
    %v3946 = vpack.c.b16 %v3900, %v3898
    %v3947 = vpack.c.b16 %v3901, %v3899
    %v3948 = vpack.c.b16 %v3904, %v3902
    %v3949 = vpack.c.b16 %v3905, %v3903
    %v3950 = vpack.c.b16 %v3908, %v3906
    %v3951 = vpack.c.b16 %v3909, %v3907
    %v3952 = vpack.c.b16 %v3912, %v3910
    %v3953 = vpack.c.b16 %v3913, %v3911
    %v3954 = vpack.c.b16 %v3916, %v3914
    %v3955 = vpack.c.b16 %v3917, %v3915
    %v3956 = vpack.c.b16 %v3920, %v3918
    %v3957 = vpack.c.b16 %v3921, %v3919
    %v3958 = vpack.c.b16 %v3924, %v3922
    %v3959 = vpack.c.b16 %v3925, %v3923
    %v3960 = vpack.c.b16 %v3928, %v3926
    %v3961 = vpack.c.b16 %v3929, %v3927
    %3994 = vmatprep.subr.bf16.mxu0 %v3931
    %3995 = vmatpush1.bf16.msra.mxu0 %v3930
    %3996 = vmatprep.subr.bf16.mxu0 %v3933
    %3997 = vmatpush1.bf16.msra.mxu0 %v3932
    %3998 = vmatprep.subr.bf16.mxu0 %v3935
    %3999 = vmatpush1.bf16.msra.mxu0 %v3934
    %4000 = vmatprep.subr.bf16.mxu0 %v3937
    %4001 = vmatpush1.bf16.msra.mxu0 %v3936
    %4002 = vmatprep.subr.bf16.mxu0 %v3939
    %4003 = vmatpush1.bf16.msra.mxu0 %v3938
    %4004 = vmatprep.subr.bf16.mxu0 %v3941
    %4005 = vmatpush1.bf16.msra.mxu0 %v3940
    %4006 = vmatprep.subr.bf16.mxu0 %v3943
    %4007 = vmatpush1.bf16.msra.mxu0 %v3942
    %4008 = vmatprep.subr.bf16.mxu0 %v3945
    %4009 = vmatpush1.bf16.msra.mxu0 %v3944
    %4010 = vmatprep.subr.bf16.mxu0 %v3947
    %4011 = vmatpush1.bf16.msra.mxu0 %v3946
    %4012 = vmatprep.subr.bf16.mxu0 %v3949
    %4013 = vmatpush1.bf16.msra.mxu0 %v3948
    %4014 = vmatprep.subr.bf16.mxu0 %v3951
    %4015 = vmatpush1.bf16.msra.mxu0 %v3950
    %4016 = vmatprep.subr.bf16.mxu0 %v3953
    %4017 = vmatpush1.bf16.msra.mxu0 %v3952
    %4018 = vmatprep.subr.bf16.mxu0 %v3955
    %4019 = vmatpush1.bf16.msra.mxu0 %v3954
    %4020 = vmatprep.subr.bf16.mxu0 %v3957
    %4021 = vmatpush1.bf16.msra.mxu0 %v3956
    %4022 = vmatprep.subr.bf16.mxu0 %v3959
    %4023 = vmatpush1.bf16.msra.mxu0 %v3958
    %4024 = vmatprep.subr.bf16.mxu0 %v3961
    %4025 = vmatpush1.bf16.msra.mxu0 %v3960
    %4026 = vmatprep.mubr.bf16.mxu0 %v3789
    %4027 = vmatmul.mubr.bf16.gmra.mrb[0].mxu0 %v3788
    %v4028 = vpop.f32.mrb[0].mxu0
    %v4029 = vadd.f32 %v3827, %v4028
    %v4030 = vpop.f32.mrb[0].mxu0
    %v4031 = vadd.f32 %v3831, %v4030
    %v4032 = vpop.f32.mrb[0].mxu0
    %v4033 = vpop.f32.mrb[0].mxu0
    %4034 = vdwg.mxu0
    %v4035 = vmax.f32 %v4029, 0.0
    %v4036 = vmax.f32 %v4031, 0.0
    %v4037 = vpack.c.bf16 %v4035, %v4035
    %v4038 = vpack.c.bf16 %v4036, %v4036
    %v4039 = vld [vmem:[#allocation29] sm:$0xff]
    %v4040 = vld [vmem:[#allocation29 + $0x8] sm:$0xff]
    %v4041 = vld [vmem:[#allocation29 + $0x10] sm:$0xff]
    %v4042 = vld [vmem:[#allocation29 + $0x18] sm:$0xff]
    %v4043 = vld [vmem:[#allocation29 + $0x20] sm:$0xff]
    %v4044 = vld [vmem:[#allocation29 + $0x28] sm:$0xff]
    %v4045 = vld [vmem:[#allocation29 + $0x30] sm:$0xff]
    %v4046 = vld [vmem:[#allocation29 + $0x38] sm:$0xff]
    %v4047 = vld [vmem:[#allocation29 + $0x40] sm:$0xff]
    %v4048 = vld [vmem:[#allocation29 + $0x48] sm:$0xff]
    %v4049 = vld [vmem:[#allocation29 + $0x50] sm:$0xff]
    %v4050 = vld [vmem:[#allocation29 + $0x58] sm:$0xff]
    %v4051 = vld [vmem:[#allocation29 + $0x60] sm:$0xff]
    %v4052 = vld [vmem:[#allocation29 + $0x68] sm:$0xff]
    %v4053 = vld [vmem:[#allocation29 + $0x70] sm:$0xff]
    %v4054 = vld [vmem:[#allocation29 + $0x78] sm:$0xff]
    %v4055 = vld [vmem:[#allocation29 + $0x80] sm:$0xff]
    %v4056 = vld [vmem:[#allocation29 + $0x88] sm:$0xff]
    %v4057 = vld [vmem:[#allocation29 + $0x90] sm:$0xff]
    %v4058 = vld [vmem:[#allocation29 + $0x98] sm:$0xff]
    %v4059 = vld [vmem:[#allocation29 + $0xa0] sm:$0xff]
    %v4060 = vld [vmem:[#allocation29 + $0xa8] sm:$0xff]
    %v4061 = vld [vmem:[#allocation29 + $0xb0] sm:$0xff]
    %v4062 = vld [vmem:[#allocation29 + $0xb8] sm:$0xff]
    %v4063 = vld [vmem:[#allocation29 + $0xc0] sm:$0xff]
    %v4064 = vld [vmem:[#allocation29 + $0xc8] sm:$0xff]
    %v4065 = vld [vmem:[#allocation29 + $0xd0] sm:$0xff]
    %v4066 = vld [vmem:[#allocation29 + $0xd8] sm:$0xff]
    %v4067 = vld [vmem:[#allocation29 + $0xe0] sm:$0xff]
    %v4068 = vld [vmem:[#allocation29 + $0xe8] sm:$0xff]
    %v4069 = vld [vmem:[#allocation29 + $0xf0] sm:$0xff]
    %v4070 = vld [vmem:[#allocation29 + $0xf8] sm:$0xff]
    %v4071 = vld [vmem:[#allocation30] sm:$0x3]
    %v4073 = vlaneseq
    %v4074 = vshrl.u32 %v4073, 7
    %v4075 = vsub.s32 0, %v4074
    %v4076 = vrot.slane %v4071, %v4075
    %v4077 = vlaneseq
    %v4078 = vshrl.u32 %v4077, 7
    %v4079 = vsub.s32 1, %v4078
    %v4080 = vrot.slane %v4071, %v4079
    %v4115 = vunpack.c.l.b16 %v4039
    %v4116 = vunpack.c.h.b16 %v4039
    %v4117 = vunpack.c.l.b16 %v4040
    %v4118 = vunpack.c.h.b16 %v4040
    %v4119 = vunpack.c.l.b16 %v4041
    %v4120 = vunpack.c.h.b16 %v4041
    %v4121 = vunpack.c.l.b16 %v4042
    %v4122 = vunpack.c.h.b16 %v4042
    %v4123 = vunpack.c.l.b16 %v4043
    %v4124 = vunpack.c.h.b16 %v4043
    %v4125 = vunpack.c.l.b16 %v4044
    %v4126 = vunpack.c.h.b16 %v4044
    %v4127 = vunpack.c.l.b16 %v4045
    %v4128 = vunpack.c.h.b16 %v4045
    %v4129 = vunpack.c.l.b16 %v4046
    %v4130 = vunpack.c.h.b16 %v4046
    %v4131 = vunpack.c.l.b16 %v4047
    %v4132 = vunpack.c.h.b16 %v4047
    %v4133 = vunpack.c.l.b16 %v4048
    %v4134 = vunpack.c.h.b16 %v4048
    %v4135 = vunpack.c.l.b16 %v4049
    %v4136 = vunpack.c.h.b16 %v4049
    %v4137 = vunpack.c.l.b16 %v4050
    %v4138 = vunpack.c.h.b16 %v4050
    %v4139 = vunpack.c.l.b16 %v4051
    %v4140 = vunpack.c.h.b16 %v4051
    %v4141 = vunpack.c.l.b16 %v4052
    %v4142 = vunpack.c.h.b16 %v4052
    %v4143 = vunpack.c.l.b16 %v4053
    %v4144 = vunpack.c.h.b16 %v4053
    %v4145 = vunpack.c.l.b16 %v4054
    %v4146 = vunpack.c.h.b16 %v4054
    %v4147 = vunpack.c.l.b16 %v4055
    %v4148 = vunpack.c.h.b16 %v4055
    %v4149 = vunpack.c.l.b16 %v4056
    %v4150 = vunpack.c.h.b16 %v4056
    %v4151 = vunpack.c.l.b16 %v4057
    %v4152 = vunpack.c.h.b16 %v4057
    %v4153 = vunpack.c.l.b16 %v4058
    %v4154 = vunpack.c.h.b16 %v4058
    %v4155 = vunpack.c.l.b16 %v4059
    %v4156 = vunpack.c.h.b16 %v4059
    %v4157 = vunpack.c.l.b16 %v4060
    %v4158 = vunpack.c.h.b16 %v4060
    %v4159 = vunpack.c.l.b16 %v4061
    %v4160 = vunpack.c.h.b16 %v4061
    %v4161 = vunpack.c.l.b16 %v4062
    %v4162 = vunpack.c.h.b16 %v4062
    %v4163 = vunpack.c.l.b16 %v4063
    %v4164 = vunpack.c.h.b16 %v4063
    %v4165 = vunpack.c.l.b16 %v4064
    %v4166 = vunpack.c.h.b16 %v4064
    %v4167 = vunpack.c.l.b16 %v4065
    %v4168 = vunpack.c.h.b16 %v4065
    %v4169 = vunpack.c.l.b16 %v4066
    %v4170 = vunpack.c.h.b16 %v4066
    %v4171 = vunpack.c.l.b16 %v4067
    %v4172 = vunpack.c.h.b16 %v4067
    %v4173 = vunpack.c.l.b16 %v4068
    %v4174 = vunpack.c.h.b16 %v4068
    %v4175 = vunpack.c.l.b16 %v4069
    %v4176 = vunpack.c.h.b16 %v4069
    %v4177 = vunpack.c.l.b16 %v4070
    %v4178 = vunpack.c.h.b16 %v4070
    %v4179 = vpack.c.b16 %v4117, %v4115
    %v4180 = vpack.c.b16 %v4118, %v4116
    %v4181 = vpack.c.b16 %v4121, %v4119
    %v4182 = vpack.c.b16 %v4122, %v4120
    %v4183 = vpack.c.b16 %v4125, %v4123
    %v4184 = vpack.c.b16 %v4126, %v4124
    %v4185 = vpack.c.b16 %v4129, %v4127
    %v4186 = vpack.c.b16 %v4130, %v4128
    %v4187 = vpack.c.b16 %v4133, %v4131
    %v4188 = vpack.c.b16 %v4134, %v4132
    %v4189 = vpack.c.b16 %v4137, %v4135
    %v4190 = vpack.c.b16 %v4138, %v4136
    %v4191 = vpack.c.b16 %v4141, %v4139
    %v4192 = vpack.c.b16 %v4142, %v4140
    %v4193 = vpack.c.b16 %v4145, %v4143
    %v4194 = vpack.c.b16 %v4146, %v4144
    %v4195 = vpack.c.b16 %v4149, %v4147
    %v4196 = vpack.c.b16 %v4150, %v4148
    %v4197 = vpack.c.b16 %v4153, %v4151
    %v4198 = vpack.c.b16 %v4154, %v4152
    %v4199 = vpack.c.b16 %v4157, %v4155
    %v4200 = vpack.c.b16 %v4158, %v4156
    %v4201 = vpack.c.b16 %v4161, %v4159
    %v4202 = vpack.c.b16 %v4162, %v4160
    %v4203 = vpack.c.b16 %v4165, %v4163
    %v4204 = vpack.c.b16 %v4166, %v4164
    %v4205 = vpack.c.b16 %v4169, %v4167
    %v4206 = vpack.c.b16 %v4170, %v4168
    %v4207 = vpack.c.b16 %v4173, %v4171
    %v4208 = vpack.c.b16 %v4174, %v4172
    %v4209 = vpack.c.b16 %v4177, %v4175
    %v4210 = vpack.c.b16 %v4178, %v4176
    %4243 = vmatprep.subr.bf16.mxu0 %v4180
    %4244 = vmatpush1.bf16.msra.mxu0 %v4179
    %4245 = vmatprep.subr.bf16.mxu0 %v4182
    %4246 = vmatpush1.bf16.msra.mxu0 %v4181
    %4247 = vmatprep.subr.bf16.mxu0 %v4184
    %4248 = vmatpush1.bf16.msra.mxu0 %v4183
    %4249 = vmatprep.subr.bf16.mxu0 %v4186
    %4250 = vmatpush1.bf16.msra.mxu0 %v4185
    %4251 = vmatprep.subr.bf16.mxu0 %v4188
    %4252 = vmatpush1.bf16.msra.mxu0 %v4187
    %4253 = vmatprep.subr.bf16.mxu0 %v4190
    %4254 = vmatpush1.bf16.msra.mxu0 %v4189
    %4255 = vmatprep.subr.bf16.mxu0 %v4192
    %4256 = vmatpush1.bf16.msra.mxu0 %v4191
    %4257 = vmatprep.subr.bf16.mxu0 %v4194
    %4258 = vmatpush1.bf16.msra.mxu0 %v4193
    %4259 = vmatprep.subr.bf16.mxu0 %v4196
    %4260 = vmatpush1.bf16.msra.mxu0 %v4195
    %4261 = vmatprep.subr.bf16.mxu0 %v4198
    %4262 = vmatpush1.bf16.msra.mxu0 %v4197
    %4263 = vmatprep.subr.bf16.mxu0 %v4200
    %4264 = vmatpush1.bf16.msra.mxu0 %v4199
    %4265 = vmatprep.subr.bf16.mxu0 %v4202
    %4266 = vmatpush1.bf16.msra.mxu0 %v4201
    %4267 = vmatprep.subr.bf16.mxu0 %v4204
    %4268 = vmatpush1.bf16.msra.mxu0 %v4203
    %4269 = vmatprep.subr.bf16.mxu0 %v4206
    %4270 = vmatpush1.bf16.msra.mxu0 %v4205
    %4271 = vmatprep.subr.bf16.mxu0 %v4208
    %4272 = vmatpush1.bf16.msra.mxu0 %v4207
    %4273 = vmatprep.subr.bf16.mxu0 %v4210
    %4274 = vmatpush1.bf16.msra.mxu0 %v4209
    %4275 = vmatprep.mubr.bf16.mxu0 %v4038
    %4276 = vmatmul.mubr.bf16.gmra.mrb[0].mxu0 %v4037
    %v4277 = vpop.f32.mrb[0].mxu0
    %v4278 = vadd.f32 %v4076, %v4277
    %v4279 = vpop.f32.mrb[0].mxu0
    %v4280 = vadd.f32 %v4080, %v4279
    %v4281 = vpop.f32.mrb[0].mxu0
    %v4282 = vpop.f32.mrb[0].mxu0
    %4283 = vdwg.mxu0
    %v4284 = vmax.f32 %v4278, 0.0
    %v4285 = vmax.f32 %v4280, 0.0
    %v4286 = vpack.c.bf16 %v4284, %v4284
    %v4287 = vpack.c.bf16 %v4285, %v4285
    %4288 = vmatprep.subr.bf16.mxu0 %v4287
    %4289 = vmatpush1.bf16.xpose.msra.mxu0 %v4286
    %4290 = vmatprep.subr.bf16.mxu0 0
    %4291 = vmatpush1.bf16.xpose.msra.mxu0 0
    %4292 = vmatprep.subr.bf16.mxu0 0
    %4293 = vmatpush1.bf16.xpose.msra.mxu0 0
    %4294 = vmatprep.subr.bf16.mxu0 0
    %4295 = vmatpush1.bf16.xpose.msra.mxu0 0
    %4296 = vmatprep.subr.bf16.mxu0 0
    %4297 = vmatpush1.bf16.xpose.msra.mxu0 0
    %4298 = vmatprep.subr.bf16.mxu0 0
    %4299 = vmatpush1.bf16.xpose.msra.mxu0 0
    %4300 = vmatprep.subr.bf16.mxu0 0
    %4301 = vmatpush1.bf16.xpose.msra.mxu0 0
    %4302 = vmatprep.subr.bf16.mxu0 0
    %4303 = vmatpush1.bf16.xpose.msra.mxu0 0
    %4304 = vmatprep.subr.bf16.mxu0 0
    %4305 = vmatpush1.bf16.xpose.msra.mxu0 0
    %4306 = vmatprep.subr.bf16.mxu0 0
    %4307 = vmatpush1.bf16.xpose.msra.mxu0 0
    %4308 = vmatprep.subr.bf16.mxu0 0
    %4309 = vmatpush1.bf16.xpose.msra.mxu0 0
    %4310 = vmatprep.subr.bf16.mxu0 0
    %4311 = vmatpush1.bf16.xpose.msra.mxu0 0
    %4312 = vmatprep.subr.bf16.mxu0 0
    %4313 = vmatpush1.bf16.xpose.msra.mxu0 0
    %4314 = vmatprep.subr.bf16.mxu0 0
    %4315 = vmatpush1.bf16.xpose.msra.mxu0 0
    %4316 = vmatprep.subr.bf16.mxu0 0
    %4317 = vmatpush1.bf16.xpose.msra.mxu0 0
    %4318 = vmatprep.subr.bf16.mxu0 0
    %4319 = vmatpush1.bf16.xpose.msra.mxu0 0
    %4320 = vmatprep.mubr.bf16.mxu0 %v4287
    %4321 = vmatmul.mubr.bf16.gmra.mrb[0].mxu0 %v4286
    %v4322 = vpop.f32.mrb[0].mxu0
    %v4323 = vadd.f32 0.0, %v4322
    %v4324 = vpop.f32.mrb[0].mxu0
    %v4325 = vpop.f32.mrb[0].mxu0
    %v4326 = vpop.f32.mrb[0].mxu0
    %4327 = vdwg.mxu0
    %v4328 = vsel %vm1810, %v4323, 0.0
    %4329 = vadd.xlane.f32.xlu0 %v4328
    %v4330 = vpop.xlane.xlu0 %4329
    %v4331 = vrot.slane %v4330, 4
    %v4332 = vadd.f32 %v4330, %v4331
    %v4333 = vrot.slane %v4332, 2
    %v4334 = vadd.f32 %v4332, %v4333
    %v4335 = vrot.slane %v4334, 1
    %v4336 = vadd.f32 %v4334, %v4335
    %s4337 = vtos %v4336
    %v4338 = vrcp.pop 64.0
    %s4339 = vtos %v4338
    %s4340 = smul.f32 %s4337, %s4339
    %v4341 = vstv %s4340
    %vm4342 = vcmp.gt.f32.partialorder %v4323, %v4341
    %v4343 = vsel %vm4342, 1, 0
    %v4344 = vcvt.s32.f32 %v4343
    %v4345 = vadd.f32 %v4344, %v1269
    %v4346 = vpack.c.bf16 %v4345, %v4345
    %v4348 = vsel %vm1810, %v4346, 0
    %v4351 = vsel %vm1833, %v3788, 0
    %v4354 = vsel %vm1833, %v3789, 0
    %4356 = vmatprep.subr.bf16.mxu0 %v4354
    %4357 = vmatpush1.bf16.msra.mxu0 %v4351
    %4358 = vmatprep.subr.bf16.mxu0 0
    %4359 = vmatpush1.bf16.msra.mxu0 0
    %4360 = vmatprep.subr.bf16.mxu0 0
    %4361 = vmatpush1.bf16.msra.mxu0 0
    %4362 = vmatprep.subr.bf16.mxu0 0
    %4363 = vmatpush1.bf16.msra.mxu0 0
    %4364 = vmatprep.subr.bf16.mxu0 0
    %4365 = vmatpush1.bf16.msra.mxu0 0
    %4366 = vmatprep.subr.bf16.mxu0 0
    %4367 = vmatpush1.bf16.msra.mxu0 0
    %4368 = vmatprep.subr.bf16.mxu0 0
    %4369 = vmatpush1.bf16.msra.mxu0 0
    %4370 = vmatprep.subr.bf16.mxu0 0
    %4371 = vmatpush1.bf16.msra.mxu0 0
    %4372 = vmatprep.subr.bf16.mxu0 0
    %4373 = vmatpush1.bf16.msra.mxu0 0
    %4374 = vmatprep.subr.bf16.mxu0 0
    %4375 = vmatpush1.bf16.msra.mxu0 0
    %4376 = vmatprep.subr.bf16.mxu0 0
    %4377 = vmatpush1.bf16.msra.mxu0 0
    %4378 = vmatprep.subr.bf16.mxu0 0
    %4379 = vmatpush1.bf16.msra.mxu0 0
    %4380 = vmatprep.subr.bf16.mxu0 0
    %4381 = vmatpush1.bf16.msra.mxu0 0
    %4382 = vmatprep.subr.bf16.mxu0 0
    %4383 = vmatpush1.bf16.msra.mxu0 0
    %4384 = vmatprep.subr.bf16.mxu0 0
    %4385 = vmatpush1.bf16.msra.mxu0 0
    %4386 = vmatprep.subr.bf16.mxu0 0
    %4387 = vmatpush1.bf16.msra.mxu0 0
    %4388 = vmatprep.mubr.bf16.mxu0 0
    %4389 = vmatmul.mubr.bf16.gmra.mrb[0].mxu0 %v4348
    %v4390 = vpop.f32.mrb[0].mxu0
    %v4391 = vadd.f32 0.0, %v4390
    %v4392 = vpop.f32.mrb[0].mxu0
    %v4393 = vadd.f32 0.0, %v4392
    %v4394 = vpop.f32.mrb[0].mxu0
    %v4395 = vpop.f32.mrb[0].mxu0
    %4396 = vdwg.mxu0
    %v4397 = vpack.c.bf16 %v4391, %v4391
    %v4398 = vpack.c.bf16 %v4393, %v4393
    %v4399 = vld [vmem:[#allocation32] sm:$0xff]
    %v4400 = vld [vmem:[#allocation32 + $0x8] sm:$0xff]
    %v4401 = vld [vmem:[#allocation32 + $0x10] sm:$0xff]
    %v4402 = vld [vmem:[#allocation32 + $0x18] sm:$0xff]
    %v4403 = vld [vmem:[#allocation32 + $0x20] sm:$0xff]
    %v4404 = vld [vmem:[#allocation32 + $0x28] sm:$0xff]
    %v4405 = vld [vmem:[#allocation32 + $0x30] sm:$0xff]
    %v4406 = vld [vmem:[#allocation32 + $0x38] sm:$0xff]
    %v4407 = vld [vmem:[#allocation32 + $0x40] sm:$0xff]
    %v4408 = vld [vmem:[#allocation32 + $0x48] sm:$0xff]
    %v4409 = vld [vmem:[#allocation32 + $0x50] sm:$0xff]
    %v4410 = vld [vmem:[#allocation32 + $0x58] sm:$0xff]
    %v4411 = vld [vmem:[#allocation32 + $0x60] sm:$0xff]
    %v4412 = vld [vmem:[#allocation32 + $0x68] sm:$0xff]
    %v4413 = vld [vmem:[#allocation32 + $0x70] sm:$0xff]
    %v4414 = vld [vmem:[#allocation32 + $0x78] sm:$0xff]
    %v4415 = vld [vmem:[#allocation32 + $0x80] sm:$0xff]
    %v4416 = vld [vmem:[#allocation32 + $0x88] sm:$0xff]
    %v4417 = vld [vmem:[#allocation32 + $0x90] sm:$0xff]
    %v4418 = vld [vmem:[#allocation32 + $0x98] sm:$0xff]
    %v4419 = vld [vmem:[#allocation32 + $0xa0] sm:$0xff]
    %v4420 = vld [vmem:[#allocation32 + $0xa8] sm:$0xff]
    %v4421 = vld [vmem:[#allocation32 + $0xb0] sm:$0xff]
    %v4422 = vld [vmem:[#allocation32 + $0xb8] sm:$0xff]
    %v4423 = vld [vmem:[#allocation32 + $0xc0] sm:$0xff]
    %v4424 = vld [vmem:[#allocation32 + $0xc8] sm:$0xff]
    %v4425 = vld [vmem:[#allocation32 + $0xd0] sm:$0xff]
    %v4426 = vld [vmem:[#allocation32 + $0xd8] sm:$0xff]
    %v4427 = vld [vmem:[#allocation32 + $0xe0] sm:$0xff]
    %v4428 = vld [vmem:[#allocation32 + $0xe8] sm:$0xff]
    %v4429 = vld [vmem:[#allocation32 + $0xf0] sm:$0xff]
    %v4430 = vld [vmem:[#allocation32 + $0xf8] sm:$0xff]
    %v4431 = vld [vmem:[%s59] sm:$0x3]
    %v4433 = vlaneseq
    %v4434 = vshrl.u32 %v4433, 7
    %v4435 = vsub.s32 0, %v4434
    %v4436 = vrot.slane %v4431, %v4435
    %v4437 = vlaneseq
    %v4438 = vshrl.u32 %v4437, 7
    %v4439 = vsub.s32 1, %v4438
    %v4440 = vrot.slane %v4431, %v4439
    %v4475 = vunpack.c.l.b16 %v4399
    %v4476 = vunpack.c.h.b16 %v4399
    %v4477 = vunpack.c.l.b16 %v4400
    %v4478 = vunpack.c.h.b16 %v4400
    %v4479 = vunpack.c.l.b16 %v4401
    %v4480 = vunpack.c.h.b16 %v4401
    %v4481 = vunpack.c.l.b16 %v4402
    %v4482 = vunpack.c.h.b16 %v4402
    %v4483 = vunpack.c.l.b16 %v4403
    %v4484 = vunpack.c.h.b16 %v4403
    %v4485 = vunpack.c.l.b16 %v4404
    %v4486 = vunpack.c.h.b16 %v4404
    %v4487 = vunpack.c.l.b16 %v4405
    %v4488 = vunpack.c.h.b16 %v4405
    %v4489 = vunpack.c.l.b16 %v4406
    %v4490 = vunpack.c.h.b16 %v4406
    %v4491 = vunpack.c.l.b16 %v4407
    %v4492 = vunpack.c.h.b16 %v4407
    %v4493 = vunpack.c.l.b16 %v4408
    %v4494 = vunpack.c.h.b16 %v4408
    %v4495 = vunpack.c.l.b16 %v4409
    %v4496 = vunpack.c.h.b16 %v4409
    %v4497 = vunpack.c.l.b16 %v4410
    %v4498 = vunpack.c.h.b16 %v4410
    %v4499 = vunpack.c.l.b16 %v4411
    %v4500 = vunpack.c.h.b16 %v4411
    %v4501 = vunpack.c.l.b16 %v4412
    %v4502 = vunpack.c.h.b16 %v4412
    %v4503 = vunpack.c.l.b16 %v4413
    %v4504 = vunpack.c.h.b16 %v4413
    %v4505 = vunpack.c.l.b16 %v4414
    %v4506 = vunpack.c.h.b16 %v4414
    %v4507 = vunpack.c.l.b16 %v4415
    %v4508 = vunpack.c.h.b16 %v4415
    %v4509 = vunpack.c.l.b16 %v4416
    %v4510 = vunpack.c.h.b16 %v4416
    %v4511 = vunpack.c.l.b16 %v4417
    %v4512 = vunpack.c.h.b16 %v4417
    %v4513 = vunpack.c.l.b16 %v4418
    %v4514 = vunpack.c.h.b16 %v4418
    %v4515 = vunpack.c.l.b16 %v4419
    %v4516 = vunpack.c.h.b16 %v4419
    %v4517 = vunpack.c.l.b16 %v4420
    %v4518 = vunpack.c.h.b16 %v4420
    %v4519 = vunpack.c.l.b16 %v4421
    %v4520 = vunpack.c.h.b16 %v4421
    %v4521 = vunpack.c.l.b16 %v4422
    %v4522 = vunpack.c.h.b16 %v4422
    %v4523 = vunpack.c.l.b16 %v4423
    %v4524 = vunpack.c.h.b16 %v4423
    %v4525 = vunpack.c.l.b16 %v4424
    %v4526 = vunpack.c.h.b16 %v4424
    %v4527 = vunpack.c.l.b16 %v4425
    %v4528 = vunpack.c.h.b16 %v4425
    %v4529 = vunpack.c.l.b16 %v4426
    %v4530 = vunpack.c.h.b16 %v4426
    %v4531 = vunpack.c.l.b16 %v4427
    %v4532 = vunpack.c.h.b16 %v4427
    %v4533 = vunpack.c.l.b16 %v4428
    %v4534 = vunpack.c.h.b16 %v4428
    %v4535 = vunpack.c.l.b16 %v4429
    %v4536 = vunpack.c.h.b16 %v4429
    %v4537 = vunpack.c.l.b16 %v4430
    %v4538 = vunpack.c.h.b16 %v4430
    %v4539 = vpack.c.b16 %v4477, %v4475
    %v4540 = vpack.c.b16 %v4478, %v4476
    %v4541 = vpack.c.b16 %v4481, %v4479
    %v4542 = vpack.c.b16 %v4482, %v4480
    %v4543 = vpack.c.b16 %v4485, %v4483
    %v4544 = vpack.c.b16 %v4486, %v4484
    %v4545 = vpack.c.b16 %v4489, %v4487
    %v4546 = vpack.c.b16 %v4490, %v4488
    %v4547 = vpack.c.b16 %v4493, %v4491
    %v4548 = vpack.c.b16 %v4494, %v4492
    %v4549 = vpack.c.b16 %v4497, %v4495
    %v4550 = vpack.c.b16 %v4498, %v4496
    %v4551 = vpack.c.b16 %v4501, %v4499
    %v4552 = vpack.c.b16 %v4502, %v4500
    %v4553 = vpack.c.b16 %v4505, %v4503
    %v4554 = vpack.c.b16 %v4506, %v4504
    %v4555 = vpack.c.b16 %v4509, %v4507
    %v4556 = vpack.c.b16 %v4510, %v4508
    %v4557 = vpack.c.b16 %v4513, %v4511
    %v4558 = vpack.c.b16 %v4514, %v4512
    %v4559 = vpack.c.b16 %v4517, %v4515
    %v4560 = vpack.c.b16 %v4518, %v4516
    %v4561 = vpack.c.b16 %v4521, %v4519
    %v4562 = vpack.c.b16 %v4522, %v4520
    %v4563 = vpack.c.b16 %v4525, %v4523
    %v4564 = vpack.c.b16 %v4526, %v4524
    %v4565 = vpack.c.b16 %v4529, %v4527
    %v4566 = vpack.c.b16 %v4530, %v4528
    %v4567 = vpack.c.b16 %v4533, %v4531
    %v4568 = vpack.c.b16 %v4534, %v4532
    %v4569 = vpack.c.b16 %v4537, %v4535
    %v4570 = vpack.c.b16 %v4538, %v4536
    %4603 = vmatprep.subr.bf16.mxu0 %v4540
    %4604 = vmatpush1.bf16.msra.mxu0 %v4539
    %4605 = vmatprep.subr.bf16.mxu0 %v4542
    %4606 = vmatpush1.bf16.msra.mxu0 %v4541
    %4607 = vmatprep.subr.bf16.mxu0 %v4544
    %4608 = vmatpush1.bf16.msra.mxu0 %v4543
    %4609 = vmatprep.subr.bf16.mxu0 %v4546
    %4610 = vmatpush1.bf16.msra.mxu0 %v4545
    %4611 = vmatprep.subr.bf16.mxu0 %v4548
    %4612 = vmatpush1.bf16.msra.mxu0 %v4547
    %4613 = vmatprep.subr.bf16.mxu0 %v4550
    %4614 = vmatpush1.bf16.msra.mxu0 %v4549
    %4615 = vmatprep.subr.bf16.mxu0 %v4552
    %4616 = vmatpush1.bf16.msra.mxu0 %v4551
    %4617 = vmatprep.subr.bf16.mxu0 %v4554
    %4618 = vmatpush1.bf16.msra.mxu0 %v4553
    %4619 = vmatprep.subr.bf16.mxu0 %v4556
    %4620 = vmatpush1.bf16.msra.mxu0 %v4555
    %4621 = vmatprep.subr.bf16.mxu0 %v4558
    %4622 = vmatpush1.bf16.msra.mxu0 %v4557
    %4623 = vmatprep.subr.bf16.mxu0 %v4560
    %4624 = vmatpush1.bf16.msra.mxu0 %v4559
    %4625 = vmatprep.subr.bf16.mxu0 %v4562
    %4626 = vmatpush1.bf16.msra.mxu0 %v4561
    %4627 = vmatprep.subr.bf16.mxu0 %v4564
    %4628 = vmatpush1.bf16.msra.mxu0 %v4563
    %4629 = vmatprep.subr.bf16.mxu0 %v4566
    %4630 = vmatpush1.bf16.msra.mxu0 %v4565
    %4631 = vmatprep.subr.bf16.mxu0 %v4568
    %4632 = vmatpush1.bf16.msra.mxu0 %v4567
    %4633 = vmatprep.subr.bf16.mxu0 %v4570
    %4634 = vmatpush1.bf16.msra.mxu0 %v4569
    %4635 = vmatprep.mubr.bf16.mxu0 %v4398
    %4636 = vmatmul.mubr.bf16.gmra.mrb[0].mxu0 %v4397
    %v4637 = vpop.f32.mrb[0].mxu0
    %v4638 = vadd.f32 %v4436, %v4637
    %v4639 = vpop.f32.mrb[0].mxu0
    %v4640 = vadd.f32 %v4440, %v4639
    %v4641 = vpop.f32.mrb[0].mxu0
    %v4642 = vpop.f32.mrb[0].mxu0
    %4643 = vdwg.mxu0
    %v4644 = vmax.f32 %v4638, 0.0
    %v4645 = vmax.f32 %v4640, 0.0
    %v4646 = vpack.c.bf16 %v4644, %v4644
    %v4647 = vpack.c.bf16 %v4645, %v4645
    %v4648 = vld [vmem:[#allocation33] sm:$0xff]
    %v4649 = vld [vmem:[#allocation33 + $0x8] sm:$0xff]
    %v4650 = vld [vmem:[#allocation33 + $0x10] sm:$0xff]
    %v4651 = vld [vmem:[#allocation33 + $0x18] sm:$0xff]
    %v4652 = vld [vmem:[#allocation33 + $0x20] sm:$0xff]
    %v4653 = vld [vmem:[#allocation33 + $0x28] sm:$0xff]
    %v4654 = vld [vmem:[#allocation33 + $0x30] sm:$0xff]
    %v4655 = vld [vmem:[#allocation33 + $0x38] sm:$0xff]
    %v4656 = vld [vmem:[#allocation33 + $0x40] sm:$0xff]
    %v4657 = vld [vmem:[#allocation33 + $0x48] sm:$0xff]
    %v4658 = vld [vmem:[#allocation33 + $0x50] sm:$0xff]
    %v4659 = vld [vmem:[#allocation33 + $0x58] sm:$0xff]
    %v4660 = vld [vmem:[#allocation33 + $0x60] sm:$0xff]
    %v4661 = vld [vmem:[#allocation33 + $0x68] sm:$0xff]
    %v4662 = vld [vmem:[#allocation33 + $0x70] sm:$0xff]
    %v4663 = vld [vmem:[#allocation33 + $0x78] sm:$0xff]
    %v4664 = vld [vmem:[#allocation33 + $0x80] sm:$0xff]
    %v4665 = vld [vmem:[#allocation33 + $0x88] sm:$0xff]
    %v4666 = vld [vmem:[#allocation33 + $0x90] sm:$0xff]
    %v4667 = vld [vmem:[#allocation33 + $0x98] sm:$0xff]
    %v4668 = vld [vmem:[#allocation33 + $0xa0] sm:$0xff]
    %v4669 = vld [vmem:[#allocation33 + $0xa8] sm:$0xff]
    %v4670 = vld [vmem:[#allocation33 + $0xb0] sm:$0xff]
    %v4671 = vld [vmem:[#allocation33 + $0xb8] sm:$0xff]
    %v4672 = vld [vmem:[#allocation33 + $0xc0] sm:$0xff]
    %v4673 = vld [vmem:[#allocation33 + $0xc8] sm:$0xff]
    %v4674 = vld [vmem:[#allocation33 + $0xd0] sm:$0xff]
    %v4675 = vld [vmem:[#allocation33 + $0xd8] sm:$0xff]
    %v4676 = vld [vmem:[#allocation33 + $0xe0] sm:$0xff]
    %v4677 = vld [vmem:[#allocation33 + $0xe8] sm:$0xff]
    %v4678 = vld [vmem:[#allocation33 + $0xf0] sm:$0xff]
    %v4679 = vld [vmem:[#allocation33 + $0xf8] sm:$0xff]
    %v4680 = vld [vmem:[#allocation35] sm:$0x3]
    %v4682 = vlaneseq
    %v4683 = vshrl.u32 %v4682, 7
    %v4684 = vsub.s32 0, %v4683
    %v4685 = vrot.slane %v4680, %v4684
    %v4686 = vlaneseq
    %v4687 = vshrl.u32 %v4686, 7
    %v4688 = vsub.s32 1, %v4687
    %v4689 = vrot.slane %v4680, %v4688
    %v4724 = vunpack.c.l.b16 %v4648
    %v4725 = vunpack.c.h.b16 %v4648
    %v4726 = vunpack.c.l.b16 %v4649
    %v4727 = vunpack.c.h.b16 %v4649
    %v4728 = vunpack.c.l.b16 %v4650
    %v4729 = vunpack.c.h.b16 %v4650
    %v4730 = vunpack.c.l.b16 %v4651
    %v4731 = vunpack.c.h.b16 %v4651
    %v4732 = vunpack.c.l.b16 %v4652
    %v4733 = vunpack.c.h.b16 %v4652
    %v4734 = vunpack.c.l.b16 %v4653
    %v4735 = vunpack.c.h.b16 %v4653
    %v4736 = vunpack.c.l.b16 %v4654
    %v4737 = vunpack.c.h.b16 %v4654
    %v4738 = vunpack.c.l.b16 %v4655
    %v4739 = vunpack.c.h.b16 %v4655
    %v4740 = vunpack.c.l.b16 %v4656
    %v4741 = vunpack.c.h.b16 %v4656
    %v4742 = vunpack.c.l.b16 %v4657
    %v4743 = vunpack.c.h.b16 %v4657
    %v4744 = vunpack.c.l.b16 %v4658
    %v4745 = vunpack.c.h.b16 %v4658
    %v4746 = vunpack.c.l.b16 %v4659
    %v4747 = vunpack.c.h.b16 %v4659
    %v4748 = vunpack.c.l.b16 %v4660
    %v4749 = vunpack.c.h.b16 %v4660
    %v4750 = vunpack.c.l.b16 %v4661
    %v4751 = vunpack.c.h.b16 %v4661
    %v4752 = vunpack.c.l.b16 %v4662
    %v4753 = vunpack.c.h.b16 %v4662
    %v4754 = vunpack.c.l.b16 %v4663
    %v4755 = vunpack.c.h.b16 %v4663
    %v4756 = vunpack.c.l.b16 %v4664
    %v4757 = vunpack.c.h.b16 %v4664
    %v4758 = vunpack.c.l.b16 %v4665
    %v4759 = vunpack.c.h.b16 %v4665
    %v4760 = vunpack.c.l.b16 %v4666
    %v4761 = vunpack.c.h.b16 %v4666
    %v4762 = vunpack.c.l.b16 %v4667
    %v4763 = vunpack.c.h.b16 %v4667
    %v4764 = vunpack.c.l.b16 %v4668
    %v4765 = vunpack.c.h.b16 %v4668
    %v4766 = vunpack.c.l.b16 %v4669
    %v4767 = vunpack.c.h.b16 %v4669
    %v4768 = vunpack.c.l.b16 %v4670
    %v4769 = vunpack.c.h.b16 %v4670
    %v4770 = vunpack.c.l.b16 %v4671
    %v4771 = vunpack.c.h.b16 %v4671
    %v4772 = vunpack.c.l.b16 %v4672
    %v4773 = vunpack.c.h.b16 %v4672
    %v4774 = vunpack.c.l.b16 %v4673
    %v4775 = vunpack.c.h.b16 %v4673
    %v4776 = vunpack.c.l.b16 %v4674
    %v4777 = vunpack.c.h.b16 %v4674
    %v4778 = vunpack.c.l.b16 %v4675
    %v4779 = vunpack.c.h.b16 %v4675
    %v4780 = vunpack.c.l.b16 %v4676
    %v4781 = vunpack.c.h.b16 %v4676
    %v4782 = vunpack.c.l.b16 %v4677
    %v4783 = vunpack.c.h.b16 %v4677
    %v4784 = vunpack.c.l.b16 %v4678
    %v4785 = vunpack.c.h.b16 %v4678
    %v4786 = vunpack.c.l.b16 %v4679
    %v4787 = vunpack.c.h.b16 %v4679
    %v4788 = vpack.c.b16 %v4726, %v4724
    %v4789 = vpack.c.b16 %v4727, %v4725
    %v4790 = vpack.c.b16 %v4730, %v4728
    %v4791 = vpack.c.b16 %v4731, %v4729
    %v4792 = vpack.c.b16 %v4734, %v4732
    %v4793 = vpack.c.b16 %v4735, %v4733
    %v4794 = vpack.c.b16 %v4738, %v4736
    %v4795 = vpack.c.b16 %v4739, %v4737
    %v4796 = vpack.c.b16 %v4742, %v4740
    %v4797 = vpack.c.b16 %v4743, %v4741
    %v4798 = vpack.c.b16 %v4746, %v4744
    %v4799 = vpack.c.b16 %v4747, %v4745
    %v4800 = vpack.c.b16 %v4750, %v4748
    %v4801 = vpack.c.b16 %v4751, %v4749
    %v4802 = vpack.c.b16 %v4754, %v4752
    %v4803 = vpack.c.b16 %v4755, %v4753
    %v4804 = vpack.c.b16 %v4758, %v4756
    %v4805 = vpack.c.b16 %v4759, %v4757
    %v4806 = vpack.c.b16 %v4762, %v4760
    %v4807 = vpack.c.b16 %v4763, %v4761
    %v4808 = vpack.c.b16 %v4766, %v4764
    %v4809 = vpack.c.b16 %v4767, %v4765
    %v4810 = vpack.c.b16 %v4770, %v4768
    %v4811 = vpack.c.b16 %v4771, %v4769
    %v4812 = vpack.c.b16 %v4774, %v4772
    %v4813 = vpack.c.b16 %v4775, %v4773
    %v4814 = vpack.c.b16 %v4778, %v4776
    %v4815 = vpack.c.b16 %v4779, %v4777
    %v4816 = vpack.c.b16 %v4782, %v4780
    %v4817 = vpack.c.b16 %v4783, %v4781
    %v4818 = vpack.c.b16 %v4786, %v4784
    %v4819 = vpack.c.b16 %v4787, %v4785
    %4852 = vmatprep.subr.bf16.mxu0 %v4789
    %4853 = vmatpush1.bf16.msra.mxu0 %v4788
    %4854 = vmatprep.subr.bf16.mxu0 %v4791
    %4855 = vmatpush1.bf16.msra.mxu0 %v4790
    %4856 = vmatprep.subr.bf16.mxu0 %v4793
    %4857 = vmatpush1.bf16.msra.mxu0 %v4792
    %4858 = vmatprep.subr.bf16.mxu0 %v4795
    %4859 = vmatpush1.bf16.msra.mxu0 %v4794
    %4860 = vmatprep.subr.bf16.mxu0 %v4797
    %4861 = vmatpush1.bf16.msra.mxu0 %v4796
    %4862 = vmatprep.subr.bf16.mxu0 %v4799
    %4863 = vmatpush1.bf16.msra.mxu0 %v4798
    %4864 = vmatprep.subr.bf16.mxu0 %v4801
    %4865 = vmatpush1.bf16.msra.mxu0 %v4800
    %4866 = vmatprep.subr.bf16.mxu0 %v4803
    %4867 = vmatpush1.bf16.msra.mxu0 %v4802
    %4868 = vmatprep.subr.bf16.mxu0 %v4805
    %4869 = vmatpush1.bf16.msra.mxu0 %v4804
    %4870 = vmatprep.subr.bf16.mxu0 %v4807
    %4871 = vmatpush1.bf16.msra.mxu0 %v4806
    %4872 = vmatprep.subr.bf16.mxu0 %v4809
    %4873 = vmatpush1.bf16.msra.mxu0 %v4808
    %4874 = vmatprep.subr.bf16.mxu0 %v4811
    %4875 = vmatpush1.bf16.msra.mxu0 %v4810
    %4876 = vmatprep.subr.bf16.mxu0 %v4813
    %4877 = vmatpush1.bf16.msra.mxu0 %v4812
    %4878 = vmatprep.subr.bf16.mxu0 %v4815
    %4879 = vmatpush1.bf16.msra.mxu0 %v4814
    %4880 = vmatprep.subr.bf16.mxu0 %v4817
    %4881 = vmatpush1.bf16.msra.mxu0 %v4816
    %4882 = vmatprep.subr.bf16.mxu0 %v4819
    %4883 = vmatpush1.bf16.msra.mxu0 %v4818
    %4884 = vmatprep.mubr.bf16.mxu0 %v4647
    %4885 = vmatmul.mubr.bf16.gmra.mrb[0].mxu0 %v4646
    %v4886 = vpop.f32.mrb[0].mxu0
    %v4887 = vadd.f32 %v4685, %v4886
    %v4888 = vpop.f32.mrb[0].mxu0
    %v4889 = vadd.f32 %v4689, %v4888
    %v4890 = vpop.f32.mrb[0].mxu0
    %v4891 = vpop.f32.mrb[0].mxu0
    %4892 = vdwg.mxu0
    %v4893 = vadd.f32 %v4887, 0.0
    %v4894 = vadd.f32 %v4889, 0.0
    %v4895 = vpack.c.bf16 %v4887, %v4887
    %v4896 = vpack.c.bf16 %v4889, %v4889
    %4897 = vmatprep.subr.bf16.mxu0 %v3931
    %4898 = vmatpush1.bf16.msra.mxu0 %v3930
    %4899 = vmatprep.subr.bf16.mxu0 %v3933
    %4900 = vmatpush1.bf16.msra.mxu0 %v3932
    %4901 = vmatprep.subr.bf16.mxu0 %v3935
    %4902 = vmatpush1.bf16.msra.mxu0 %v3934
    %4903 = vmatprep.subr.bf16.mxu0 %v3937
    %4904 = vmatpush1.bf16.msra.mxu0 %v3936
    %4905 = vmatprep.subr.bf16.mxu0 %v3939
    %4906 = vmatpush1.bf16.msra.mxu0 %v3938
    %4907 = vmatprep.subr.bf16.mxu0 %v3941
    %4908 = vmatpush1.bf16.msra.mxu0 %v3940
    %4909 = vmatprep.subr.bf16.mxu0 %v3943
    %4910 = vmatpush1.bf16.msra.mxu0 %v3942
    %4911 = vmatprep.subr.bf16.mxu0 %v3945
    %4912 = vmatpush1.bf16.msra.mxu0 %v3944
    %4913 = vmatprep.subr.bf16.mxu0 %v3947
    %4914 = vmatpush1.bf16.msra.mxu0 %v3946
    %4915 = vmatprep.subr.bf16.mxu0 %v3949
    %4916 = vmatpush1.bf16.msra.mxu0 %v3948
    %4917 = vmatprep.subr.bf16.mxu0 %v3951
    %4918 = vmatpush1.bf16.msra.mxu0 %v3950
    %4919 = vmatprep.subr.bf16.mxu0 %v3953
    %4920 = vmatpush1.bf16.msra.mxu0 %v3952
    %4921 = vmatprep.subr.bf16.mxu0 %v3955
    %4922 = vmatpush1.bf16.msra.mxu0 %v3954
    %4923 = vmatprep.subr.bf16.mxu0 %v3957
    %4924 = vmatpush1.bf16.msra.mxu0 %v3956
    %4925 = vmatprep.subr.bf16.mxu0 %v3959
    %4926 = vmatpush1.bf16.msra.mxu0 %v3958
    %4927 = vmatprep.subr.bf16.mxu0 %v3961
    %4928 = vmatpush1.bf16.msra.mxu0 %v3960
    %4929 = vmatprep.mubr.bf16.mxu0 %v4896
    %4930 = vmatmul.mubr.bf16.gmra.mrb[0].mxu0 %v4895
    %v4931 = vpop.f32.mrb[0].mxu0
    %v4932 = vadd.f32 %v3827, %v4931
    %v4933 = vpop.f32.mrb[0].mxu0
    %v4934 = vadd.f32 %v3831, %v4933
    %v4935 = vpop.f32.mrb[0].mxu0
    %v4936 = vpop.f32.mrb[0].mxu0
    %4937 = vdwg.mxu0
    %v4938 = vmax.f32 %v4932, 0.0
    %v4939 = vmax.f32 %v4934, 0.0
    %v4940 = vpack.c.bf16 %v4938, %v4938
    %v4941 = vpack.c.bf16 %v4939, %v4939
    %4942 = vmatprep.subr.bf16.mxu0 %v4180
    %4943 = vmatpush1.bf16.msra.mxu0 %v4179
    %4944 = vmatprep.subr.bf16.mxu0 %v4182
    %4945 = vmatpush1.bf16.msra.mxu0 %v4181
    %4946 = vmatprep.subr.bf16.mxu0 %v4184
    %4947 = vmatpush1.bf16.msra.mxu0 %v4183
    %4948 = vmatprep.subr.bf16.mxu0 %v4186
    %4949 = vmatpush1.bf16.msra.mxu0 %v4185
    %4950 = vmatprep.subr.bf16.mxu0 %v4188
    %4951 = vmatpush1.bf16.msra.mxu0 %v4187
    %4952 = vmatprep.subr.bf16.mxu0 %v4190
    %4953 = vmatpush1.bf16.msra.mxu0 %v4189
    %4954 = vmatprep.subr.bf16.mxu0 %v4192
    %4955 = vmatpush1.bf16.msra.mxu0 %v4191
    %4956 = vmatprep.subr.bf16.mxu0 %v4194
    %4957 = vmatpush1.bf16.msra.mxu0 %v4193
    %4958 = vmatprep.subr.bf16.mxu0 %v4196
    %4959 = vmatpush1.bf16.msra.mxu0 %v4195
    %4960 = vmatprep.subr.bf16.mxu0 %v4198
    %4961 = vmatpush1.bf16.msra.mxu0 %v4197
    %4962 = vmatprep.subr.bf16.mxu0 %v4200
    %4963 = vmatpush1.bf16.msra.mxu0 %v4199
    %4964 = vmatprep.subr.bf16.mxu0 %v4202
    %4965 = vmatpush1.bf16.msra.mxu0 %v4201
    %4966 = vmatprep.subr.bf16.mxu0 %v4204
    %4967 = vmatpush1.bf16.msra.mxu0 %v4203
    %4968 = vmatprep.subr.bf16.mxu0 %v4206
    %4969 = vmatpush1.bf16.msra.mxu0 %v4205
    %4970 = vmatprep.subr.bf16.mxu0 %v4208
    %4971 = vmatpush1.bf16.msra.mxu0 %v4207
    %4972 = vmatprep.subr.bf16.mxu0 %v4210
    %4973 = vmatpush1.bf16.msra.mxu0 %v4209
    %4974 = vmatprep.mubr.bf16.mxu0 %v4941
    %4975 = vmatmul.mubr.bf16.gmra.mrb[0].mxu0 %v4940
    %v4976 = vpop.f32.mrb[0].mxu0
    %v4977 = vadd.f32 %v4076, %v4976
    %v4978 = vpop.f32.mrb[0].mxu0
    %v4979 = vadd.f32 %v4080, %v4978
    %v4980 = vpop.f32.mrb[0].mxu0
    %v4981 = vpop.f32.mrb[0].mxu0
    %4982 = vdwg.mxu0
    %v4983 = vmax.f32 %v4977, 0.0
    %v4984 = vmax.f32 %v4979, 0.0
    %v4985 = vpack.c.bf16 %v4983, %v4983
    %v4986 = vpack.c.bf16 %v4984, %v4984
    %4987 = vmatprep.subr.bf16.mxu0 %v4986
    %4988 = vmatpush1.bf16.xpose.msra.mxu0 %v4985
    %4989 = vmatprep.subr.bf16.mxu0 0
    %4990 = vmatpush1.bf16.xpose.msra.mxu0 0
    %4991 = vmatprep.subr.bf16.mxu0 0
    %4992 = vmatpush1.bf16.xpose.msra.mxu0 0
    %4993 = vmatprep.subr.bf16.mxu0 0
    %4994 = vmatpush1.bf16.xpose.msra.mxu0 0
    %4995 = vmatprep.subr.bf16.mxu0 0
    %4996 = vmatpush1.bf16.xpose.msra.mxu0 0
    %4997 = vmatprep.subr.bf16.mxu0 0
    %4998 = vmatpush1.bf16.xpose.msra.mxu0 0
    %4999 = vmatprep.subr.bf16.mxu0 0
    %5000 = vmatpush1.bf16.xpose.msra.mxu0 0
    %5001 = vmatprep.subr.bf16.mxu0 0
    %5002 = vmatpush1.bf16.xpose.msra.mxu0 0
    %5003 = vmatprep.subr.bf16.mxu0 0
    %5004 = vmatpush1.bf16.xpose.msra.mxu0 0
    %5005 = vmatprep.subr.bf16.mxu0 0
    %5006 = vmatpush1.bf16.xpose.msra.mxu0 0
    %5007 = vmatprep.subr.bf16.mxu0 0
    %5008 = vmatpush1.bf16.xpose.msra.mxu0 0
    %5009 = vmatprep.subr.bf16.mxu0 0
    %5010 = vmatpush1.bf16.xpose.msra.mxu0 0
    %5011 = vmatprep.subr.bf16.mxu0 0
    %5012 = vmatpush1.bf16.xpose.msra.mxu0 0
    %5013 = vmatprep.subr.bf16.mxu0 0
    %5014 = vmatpush1.bf16.xpose.msra.mxu0 0
    %5015 = vmatprep.subr.bf16.mxu0 0
    %5016 = vmatpush1.bf16.xpose.msra.mxu0 0
    %5017 = vmatprep.subr.bf16.mxu0 0
    %5018 = vmatpush1.bf16.xpose.msra.mxu0 0
    %5019 = vmatprep.mubr.bf16.mxu0 %v4986
    %5020 = vmatmul.mubr.bf16.gmra.mrb[0].mxu0 %v4985
    %v5021 = vpop.f32.mrb[0].mxu0
    %v5022 = vadd.f32 0.0, %v5021
    %v5023 = vpop.f32.mrb[0].mxu0
    %v5024 = vpop.f32.mrb[0].mxu0
    %v5025 = vpop.f32.mrb[0].mxu0
    %5026 = vdwg.mxu0
    %v5027 = vsel %vm1810, %v5022, 0.0
    %5028 = vadd.xlane.f32.xlu0 %v5027
    %v5029 = vpop.xlane.xlu0 %5028
    %v5030 = vrot.slane %v5029, 4
    %v5031 = vadd.f32 %v5029, %v5030
    %v5032 = vrot.slane %v5031, 2
    %v5033 = vadd.f32 %v5031, %v5032
    %v5034 = vrot.slane %v5033, 1
    %v5035 = vadd.f32 %v5033, %v5034
    %s5036 = vtos %v5035
    %v5037 = vrcp.pop 64.0
    %s5038 = vtos %v5037
    %s5039 = smul.f32 %s5036, %s5038
    %v5040 = vstv %s5039
    %vm5041 = vcmp.gt.f32.partialorder %v5022, %v5040
    %v5042 = vsel %vm5041, 1, 0
    %v5043 = vcvt.s32.f32 %v5042
    %v5044 = vadd.f32 %v5043, %v1269
    %v5045 = vpack.c.bf16 %v5044, %v5044
    %v5047 = vsel %vm1810, %v5045, 0
    %v5050 = vsel %vm1833, %v4895, 0
    %v5053 = vsel %vm1833, %v4896, 0
    %5055 = vmatprep.subr.bf16.mxu0 %v5053
    %5056 = vmatpush1.bf16.msra.mxu0 %v5050
    %5057 = vmatprep.subr.bf16.mxu0 0
    %5058 = vmatpush1.bf16.msra.mxu0 0
    %5059 = vmatprep.subr.bf16.mxu0 0
    %5060 = vmatpush1.bf16.msra.mxu0 0
    %5061 = vmatprep.subr.bf16.mxu0 0
    %5062 = vmatpush1.bf16.msra.mxu0 0
    %5063 = vmatprep.subr.bf16.mxu0 0
    %5064 = vmatpush1.bf16.msra.mxu0 0
    %5065 = vmatprep.subr.bf16.mxu0 0
    %5066 = vmatpush1.bf16.msra.mxu0 0
    %5067 = vmatprep.subr.bf16.mxu0 0
    %5068 = vmatpush1.bf16.msra.mxu0 0
    %5069 = vmatprep.subr.bf16.mxu0 0
    %5070 = vmatpush1.bf16.msra.mxu0 0
    %5071 = vmatprep.subr.bf16.mxu0 0
    %5072 = vmatpush1.bf16.msra.mxu0 0
    %5073 = vmatprep.subr.bf16.mxu0 0
    %5074 = vmatpush1.bf16.msra.mxu0 0
    %5075 = vmatprep.subr.bf16.mxu0 0
    %5076 = vmatpush1.bf16.msra.mxu0 0
    %5077 = vmatprep.subr.bf16.mxu0 0
    %5078 = vmatpush1.bf16.msra.mxu0 0
    %5079 = vmatprep.subr.bf16.mxu0 0
    %5080 = vmatpush1.bf16.msra.mxu0 0
    %5081 = vmatprep.subr.bf16.mxu0 0
    %5082 = vmatpush1.bf16.msra.mxu0 0
    %5083 = vmatprep.subr.bf16.mxu0 0
    %5084 = vmatpush1.bf16.msra.mxu0 0
    %5085 = vmatprep.subr.bf16.mxu0 0
    %5086 = vmatpush1.bf16.msra.mxu0 0
    %5087 = vmatprep.mubr.bf16.mxu0 0
    %5088 = vmatmul.mubr.bf16.gmra.mrb[0].mxu0 %v5047
    %v5089 = vpop.f32.mrb[0].mxu0
    %v5090 = vadd.f32 0.0, %v5089
    %v5091 = vpop.f32.mrb[0].mxu0
    %v5092 = vadd.f32 0.0, %v5091
    %v5093 = vpop.f32.mrb[0].mxu0
    %v5094 = vpop.f32.mrb[0].mxu0
    %5095 = vdwg.mxu0
    %v5096 = vpack.c.bf16 %v5090, %v5090
    %v5097 = vpack.c.bf16 %v5092, %v5092
    %s5098 = scalar_lea.vmem [#allocation32], 256
    %v5099 = vld [vmem:[%s5098] sm:$0xff]
    %v5100 = vld [vmem:[%s5098 + $0x8] sm:$0xff]
    %v5101 = vld [vmem:[%s5098 + $0x10] sm:$0xff]
    %v5102 = vld [vmem:[%s5098 + $0x18] sm:$0xff]
    %v5103 = vld [vmem:[%s5098 + $0x20] sm:$0xff]
    %v5104 = vld [vmem:[%s5098 + $0x28] sm:$0xff]
    %v5105 = vld [vmem:[%s5098 + $0x30] sm:$0xff]
    %v5106 = vld [vmem:[%s5098 + $0x38] sm:$0xff]
    %v5107 = vld [vmem:[%s5098 + $0x40] sm:$0xff]
    %v5108 = vld [vmem:[%s5098 + $0x48] sm:$0xff]
    %v5109 = vld [vmem:[%s5098 + $0x50] sm:$0xff]
    %v5110 = vld [vmem:[%s5098 + $0x58] sm:$0xff]
    %v5111 = vld [vmem:[%s5098 + $0x60] sm:$0xff]
    %v5112 = vld [vmem:[%s5098 + $0x68] sm:$0xff]
    %v5113 = vld [vmem:[%s5098 + $0x70] sm:$0xff]
    %v5114 = vld [vmem:[%s5098 + $0x78] sm:$0xff]
    %v5115 = vld [vmem:[%s5098 + $0x80] sm:$0xff]
    %v5116 = vld [vmem:[%s5098 + $0x88] sm:$0xff]
    %v5117 = vld [vmem:[%s5098 + $0x90] sm:$0xff]
    %v5118 = vld [vmem:[%s5098 + $0x98] sm:$0xff]
    %v5119 = vld [vmem:[%s5098 + $0xa0] sm:$0xff]
    %v5120 = vld [vmem:[%s5098 + $0xa8] sm:$0xff]
    %v5121 = vld [vmem:[%s5098 + $0xb0] sm:$0xff]
    %v5122 = vld [vmem:[%s5098 + $0xb8] sm:$0xff]
    %v5123 = vld [vmem:[%s5098 + $0xc0] sm:$0xff]
    %v5124 = vld [vmem:[%s5098 + $0xc8] sm:$0xff]
    %v5125 = vld [vmem:[%s5098 + $0xd0] sm:$0xff]
    %v5126 = vld [vmem:[%s5098 + $0xd8] sm:$0xff]
    %v5127 = vld [vmem:[%s5098 + $0xe0] sm:$0xff]
    %v5128 = vld [vmem:[%s5098 + $0xe8] sm:$0xff]
    %v5129 = vld [vmem:[%s5098 + $0xf0] sm:$0xff]
    %v5130 = vld [vmem:[%s5098 + $0xf8] sm:$0xff]
    %s5131 = scalar_lea.vmem %s59, 2
    %v5132 = vld [vmem:[%s5131] sm:$0x3]
    %v5134 = vlaneseq
    %v5135 = vshrl.u32 %v5134, 7
    %v5136 = vsub.s32 0, %v5135
    %v5137 = vrot.slane %v5132, %v5136
    %v5138 = vlaneseq
    %v5139 = vshrl.u32 %v5138, 7
    %v5140 = vsub.s32 1, %v5139
    %v5141 = vrot.slane %v5132, %v5140
    %v5176 = vunpack.c.l.b16 %v5099
    %v5177 = vunpack.c.h.b16 %v5099
    %v5178 = vunpack.c.l.b16 %v5100
    %v5179 = vunpack.c.h.b16 %v5100
    %v5180 = vunpack.c.l.b16 %v5101
    %v5181 = vunpack.c.h.b16 %v5101
    %v5182 = vunpack.c.l.b16 %v5102
    %v5183 = vunpack.c.h.b16 %v5102
    %v5184 = vunpack.c.l.b16 %v5103
    %v5185 = vunpack.c.h.b16 %v5103
    %v5186 = vunpack.c.l.b16 %v5104
    %v5187 = vunpack.c.h.b16 %v5104
    %v5188 = vunpack.c.l.b16 %v5105
    %v5189 = vunpack.c.h.b16 %v5105
    %v5190 = vunpack.c.l.b16 %v5106
    %v5191 = vunpack.c.h.b16 %v5106
    %v5192 = vunpack.c.l.b16 %v5107
    %v5193 = vunpack.c.h.b16 %v5107
    %v5194 = vunpack.c.l.b16 %v5108
    %v5195 = vunpack.c.h.b16 %v5108
    %v5196 = vunpack.c.l.b16 %v5109
    %v5197 = vunpack.c.h.b16 %v5109
    %v5198 = vunpack.c.l.b16 %v5110
    %v5199 = vunpack.c.h.b16 %v5110
    %v5200 = vunpack.c.l.b16 %v5111
    %v5201 = vunpack.c.h.b16 %v5111
    %v5202 = vunpack.c.l.b16 %v5112
    %v5203 = vunpack.c.h.b16 %v5112
    %v5204 = vunpack.c.l.b16 %v5113
    %v5205 = vunpack.c.h.b16 %v5113
    %v5206 = vunpack.c.l.b16 %v5114
    %v5207 = vunpack.c.h.b16 %v5114
    %v5208 = vunpack.c.l.b16 %v5115
    %v5209 = vunpack.c.h.b16 %v5115
    %v5210 = vunpack.c.l.b16 %v5116
    %v5211 = vunpack.c.h.b16 %v5116
    %v5212 = vunpack.c.l.b16 %v5117
    %v5213 = vunpack.c.h.b16 %v5117
    %v5214 = vunpack.c.l.b16 %v5118
    %v5215 = vunpack.c.h.b16 %v5118
    %v5216 = vunpack.c.l.b16 %v5119
    %v5217 = vunpack.c.h.b16 %v5119
    %v5218 = vunpack.c.l.b16 %v5120
    %v5219 = vunpack.c.h.b16 %v5120
    %v5220 = vunpack.c.l.b16 %v5121
    %v5221 = vunpack.c.h.b16 %v5121
    %v5222 = vunpack.c.l.b16 %v5122
    %v5223 = vunpack.c.h.b16 %v5122
    %v5224 = vunpack.c.l.b16 %v5123
    %v5225 = vunpack.c.h.b16 %v5123
    %v5226 = vunpack.c.l.b16 %v5124
    %v5227 = vunpack.c.h.b16 %v5124
    %v5228 = vunpack.c.l.b16 %v5125
    %v5229 = vunpack.c.h.b16 %v5125
    %v5230 = vunpack.c.l.b16 %v5126
    %v5231 = vunpack.c.h.b16 %v5126
    %v5232 = vunpack.c.l.b16 %v5127
    %v5233 = vunpack.c.h.b16 %v5127
    %v5234 = vunpack.c.l.b16 %v5128
    %v5235 = vunpack.c.h.b16 %v5128
    %v5236 = vunpack.c.l.b16 %v5129
    %v5237 = vunpack.c.h.b16 %v5129
    %v5238 = vunpack.c.l.b16 %v5130
    %v5239 = vunpack.c.h.b16 %v5130
    %v5240 = vpack.c.b16 %v5178, %v5176
    %v5241 = vpack.c.b16 %v5179, %v5177
    %v5242 = vpack.c.b16 %v5182, %v5180
    %v5243 = vpack.c.b16 %v5183, %v5181
    %v5244 = vpack.c.b16 %v5186, %v5184
    %v5245 = vpack.c.b16 %v5187, %v5185
    %v5246 = vpack.c.b16 %v5190, %v5188
    %v5247 = vpack.c.b16 %v5191, %v5189
    %v5248 = vpack.c.b16 %v5194, %v5192
    %v5249 = vpack.c.b16 %v5195, %v5193
    %v5250 = vpack.c.b16 %v5198, %v5196
    %v5251 = vpack.c.b16 %v5199, %v5197
    %v5252 = vpack.c.b16 %v5202, %v5200
    %v5253 = vpack.c.b16 %v5203, %v5201
    %v5254 = vpack.c.b16 %v5206, %v5204
    %v5255 = vpack.c.b16 %v5207, %v5205
    %v5256 = vpack.c.b16 %v5210, %v5208
    %v5257 = vpack.c.b16 %v5211, %v5209
    %v5258 = vpack.c.b16 %v5214, %v5212
    %v5259 = vpack.c.b16 %v5215, %v5213
    %v5260 = vpack.c.b16 %v5218, %v5216
    %v5261 = vpack.c.b16 %v5219, %v5217
    %v5262 = vpack.c.b16 %v5222, %v5220
    %v5263 = vpack.c.b16 %v5223, %v5221
    %v5264 = vpack.c.b16 %v5226, %v5224
    %v5265 = vpack.c.b16 %v5227, %v5225
    %v5266 = vpack.c.b16 %v5230, %v5228
    %v5267 = vpack.c.b16 %v5231, %v5229
    %v5268 = vpack.c.b16 %v5234, %v5232
    %v5269 = vpack.c.b16 %v5235, %v5233
    %v5270 = vpack.c.b16 %v5238, %v5236
    %v5271 = vpack.c.b16 %v5239, %v5237
    %5304 = vmatprep.subr.bf16.mxu0 %v5241
    %5305 = vmatpush1.bf16.msra.mxu0 %v5240
    %5306 = vmatprep.subr.bf16.mxu0 %v5243
    %5307 = vmatpush1.bf16.msra.mxu0 %v5242
    %5308 = vmatprep.subr.bf16.mxu0 %v5245
    %5309 = vmatpush1.bf16.msra.mxu0 %v5244
    %5310 = vmatprep.subr.bf16.mxu0 %v5247
    %5311 = vmatpush1.bf16.msra.mxu0 %v5246
    %5312 = vmatprep.subr.bf16.mxu0 %v5249
    %5313 = vmatpush1.bf16.msra.mxu0 %v5248
    %5314 = vmatprep.subr.bf16.mxu0 %v5251
    %5315 = vmatpush1.bf16.msra.mxu0 %v5250
    %5316 = vmatprep.subr.bf16.mxu0 %v5253
    %5317 = vmatpush1.bf16.msra.mxu0 %v5252
    %5318 = vmatprep.subr.bf16.mxu0 %v5255
    %5319 = vmatpush1.bf16.msra.mxu0 %v5254
    %5320 = vmatprep.subr.bf16.mxu0 %v5257
    %5321 = vmatpush1.bf16.msra.mxu0 %v5256
    %5322 = vmatprep.subr.bf16.mxu0 %v5259
    %5323 = vmatpush1.bf16.msra.mxu0 %v5258
    %5324 = vmatprep.subr.bf16.mxu0 %v5261
    %5325 = vmatpush1.bf16.msra.mxu0 %v5260
    %5326 = vmatprep.subr.bf16.mxu0 %v5263
    %5327 = vmatpush1.bf16.msra.mxu0 %v5262
    %5328 = vmatprep.subr.bf16.mxu0 %v5265
    %5329 = vmatpush1.bf16.msra.mxu0 %v5264
    %5330 = vmatprep.subr.bf16.mxu0 %v5267
    %5331 = vmatpush1.bf16.msra.mxu0 %v5266
    %5332 = vmatprep.subr.bf16.mxu0 %v5269
    %5333 = vmatpush1.bf16.msra.mxu0 %v5268
    %5334 = vmatprep.subr.bf16.mxu0 %v5271
    %5335 = vmatpush1.bf16.msra.mxu0 %v5270
    %5336 = vmatprep.mubr.bf16.mxu0 %v5097
    %5337 = vmatmul.mubr.bf16.gmra.mrb[0].mxu0 %v5096
    %v5338 = vpop.f32.mrb[0].mxu0
    %v5339 = vadd.f32 %v5137, %v5338
    %v5340 = vpop.f32.mrb[0].mxu0
    %v5341 = vadd.f32 %v5141, %v5340
    %v5342 = vpop.f32.mrb[0].mxu0
    %v5343 = vpop.f32.mrb[0].mxu0
    %5344 = vdwg.mxu0
    %v5345 = vmax.f32 %v5339, 0.0
    %v5346 = vmax.f32 %v5341, 0.0
    %v5347 = vpack.c.bf16 %v5345, %v5345
    %v5348 = vpack.c.bf16 %v5346, %v5346
    %s5349 = scalar_lea.vmem [#allocation33], 256
    %v5350 = vld [vmem:[%s5349] sm:$0xff]
    %v5351 = vld [vmem:[%s5349 + $0x8] sm:$0xff]
    %v5352 = vld [vmem:[%s5349 + $0x10] sm:$0xff]
    %v5353 = vld [vmem:[%s5349 + $0x18] sm:$0xff]
    %v5354 = vld [vmem:[%s5349 + $0x20] sm:$0xff]
    %v5355 = vld [vmem:[%s5349 + $0x28] sm:$0xff]
    %v5356 = vld [vmem:[%s5349 + $0x30] sm:$0xff]
    %v5357 = vld [vmem:[%s5349 + $0x38] sm:$0xff]
    %v5358 = vld [vmem:[%s5349 + $0x40] sm:$0xff]
    %v5359 = vld [vmem:[%s5349 + $0x48] sm:$0xff]
    %v5360 = vld [vmem:[%s5349 + $0x50] sm:$0xff]
    %v5361 = vld [vmem:[%s5349 + $0x58] sm:$0xff]
    %v5362 = vld [vmem:[%s5349 + $0x60] sm:$0xff]
    %v5363 = vld [vmem:[%s5349 + $0x68] sm:$0xff]
    %v5364 = vld [vmem:[%s5349 + $0x70] sm:$0xff]
    %v5365 = vld [vmem:[%s5349 + $0x78] sm:$0xff]
    %v5366 = vld [vmem:[%s5349 + $0x80] sm:$0xff]
    %v5367 = vld [vmem:[%s5349 + $0x88] sm:$0xff]
    %v5368 = vld [vmem:[%s5349 + $0x90] sm:$0xff]
    %v5369 = vld [vmem:[%s5349 + $0x98] sm:$0xff]
    %v5370 = vld [vmem:[%s5349 + $0xa0] sm:$0xff]
    %v5371 = vld [vmem:[%s5349 + $0xa8] sm:$0xff]
    %v5372 = vld [vmem:[%s5349 + $0xb0] sm:$0xff]
    %v5373 = vld [vmem:[%s5349 + $0xb8] sm:$0xff]
    %v5374 = vld [vmem:[%s5349 + $0xc0] sm:$0xff]
    %v5375 = vld [vmem:[%s5349 + $0xc8] sm:$0xff]
    %v5376 = vld [vmem:[%s5349 + $0xd0] sm:$0xff]
    %v5377 = vld [vmem:[%s5349 + $0xd8] sm:$0xff]
    %v5378 = vld [vmem:[%s5349 + $0xe0] sm:$0xff]
    %v5379 = vld [vmem:[%s5349 + $0xe8] sm:$0xff]
    %v5380 = vld [vmem:[%s5349 + $0xf0] sm:$0xff]
    %v5381 = vld [vmem:[%s5349 + $0xf8] sm:$0xff]
    %s5382 = scalar_lea.vmem [#allocation35], 2
    %v5383 = vld [vmem:[%s5382] sm:$0x3]
    %v5385 = vlaneseq
    %v5386 = vshrl.u32 %v5385, 7
    %v5387 = vsub.s32 0, %v5386
    %v5388 = vrot.slane %v5383, %v5387
    %v5389 = vlaneseq
    %v5390 = vshrl.u32 %v5389, 7
    %v5391 = vsub.s32 1, %v5390
    %v5392 = vrot.slane %v5383, %v5391
    %v5427 = vunpack.c.l.b16 %v5350
    %v5428 = vunpack.c.h.b16 %v5350
    %v5429 = vunpack.c.l.b16 %v5351
    %v5430 = vunpack.c.h.b16 %v5351
    %v5431 = vunpack.c.l.b16 %v5352
    %v5432 = vunpack.c.h.b16 %v5352
    %v5433 = vunpack.c.l.b16 %v5353
    %v5434 = vunpack.c.h.b16 %v5353
    %v5435 = vunpack.c.l.b16 %v5354
    %v5436 = vunpack.c.h.b16 %v5354
    %v5437 = vunpack.c.l.b16 %v5355
    %v5438 = vunpack.c.h.b16 %v5355
    %v5439 = vunpack.c.l.b16 %v5356
    %v5440 = vunpack.c.h.b16 %v5356
    %v5441 = vunpack.c.l.b16 %v5357
    %v5442 = vunpack.c.h.b16 %v5357
    %v5443 = vunpack.c.l.b16 %v5358
    %v5444 = vunpack.c.h.b16 %v5358
    %v5445 = vunpack.c.l.b16 %v5359
    %v5446 = vunpack.c.h.b16 %v5359
    %v5447 = vunpack.c.l.b16 %v5360
    %v5448 = vunpack.c.h.b16 %v5360
    %v5449 = vunpack.c.l.b16 %v5361
    %v5450 = vunpack.c.h.b16 %v5361
    %v5451 = vunpack.c.l.b16 %v5362
    %v5452 = vunpack.c.h.b16 %v5362
    %v5453 = vunpack.c.l.b16 %v5363
    %v5454 = vunpack.c.h.b16 %v5363
    %v5455 = vunpack.c.l.b16 %v5364
    %v5456 = vunpack.c.h.b16 %v5364
    %v5457 = vunpack.c.l.b16 %v5365
    %v5458 = vunpack.c.h.b16 %v5365
    %v5459 = vunpack.c.l.b16 %v5366
    %v5460 = vunpack.c.h.b16 %v5366
    %v5461 = vunpack.c.l.b16 %v5367
    %v5462 = vunpack.c.h.b16 %v5367
    %v5463 = vunpack.c.l.b16 %v5368
    %v5464 = vunpack.c.h.b16 %v5368
    %v5465 = vunpack.c.l.b16 %v5369
    %v5466 = vunpack.c.h.b16 %v5369
    %v5467 = vunpack.c.l.b16 %v5370
    %v5468 = vunpack.c.h.b16 %v5370
    %v5469 = vunpack.c.l.b16 %v5371
    %v5470 = vunpack.c.h.b16 %v5371
    %v5471 = vunpack.c.l.b16 %v5372
    %v5472 = vunpack.c.h.b16 %v5372
    %v5473 = vunpack.c.l.b16 %v5373
    %v5474 = vunpack.c.h.b16 %v5373
    %v5475 = vunpack.c.l.b16 %v5374
    %v5476 = vunpack.c.h.b16 %v5374
    %v5477 = vunpack.c.l.b16 %v5375
    %v5478 = vunpack.c.h.b16 %v5375
    %v5479 = vunpack.c.l.b16 %v5376
    %v5480 = vunpack.c.h.b16 %v5376
    %v5481 = vunpack.c.l.b16 %v5377
    %v5482 = vunpack.c.h.b16 %v5377
    %v5483 = vunpack.c.l.b16 %v5378
    %v5484 = vunpack.c.h.b16 %v5378
    %v5485 = vunpack.c.l.b16 %v5379
    %v5486 = vunpack.c.h.b16 %v5379
    %v5487 = vunpack.c.l.b16 %v5380
    %v5488 = vunpack.c.h.b16 %v5380
    %v5489 = vunpack.c.l.b16 %v5381
    %v5490 = vunpack.c.h.b16 %v5381
    %v5491 = vpack.c.b16 %v5429, %v5427
    %v5492 = vpack.c.b16 %v5430, %v5428
    %v5493 = vpack.c.b16 %v5433, %v5431
    %v5494 = vpack.c.b16 %v5434, %v5432
    %v5495 = vpack.c.b16 %v5437, %v5435
    %v5496 = vpack.c.b16 %v5438, %v5436
    %v5497 = vpack.c.b16 %v5441, %v5439
    %v5498 = vpack.c.b16 %v5442, %v5440
    %v5499 = vpack.c.b16 %v5445, %v5443
    %v5500 = vpack.c.b16 %v5446, %v5444
    %v5501 = vpack.c.b16 %v5449, %v5447
    %v5502 = vpack.c.b16 %v5450, %v5448
    %v5503 = vpack.c.b16 %v5453, %v5451
    %v5504 = vpack.c.b16 %v5454, %v5452
    %v5505 = vpack.c.b16 %v5457, %v5455
    %v5506 = vpack.c.b16 %v5458, %v5456
    %v5507 = vpack.c.b16 %v5461, %v5459
    %v5508 = vpack.c.b16 %v5462, %v5460
    %v5509 = vpack.c.b16 %v5465, %v5463
    %v5510 = vpack.c.b16 %v5466, %v5464
    %v5511 = vpack.c.b16 %v5469, %v5467
    %v5512 = vpack.c.b16 %v5470, %v5468
    %v5513 = vpack.c.b16 %v5473, %v5471
    %v5514 = vpack.c.b16 %v5474, %v5472
    %v5515 = vpack.c.b16 %v5477, %v5475
    %v5516 = vpack.c.b16 %v5478, %v5476
    %v5517 = vpack.c.b16 %v5481, %v5479
    %v5518 = vpack.c.b16 %v5482, %v5480
    %v5519 = vpack.c.b16 %v5485, %v5483
    %v5520 = vpack.c.b16 %v5486, %v5484
    %v5521 = vpack.c.b16 %v5489, %v5487
    %v5522 = vpack.c.b16 %v5490, %v5488
    %5555 = vmatprep.subr.bf16.mxu0 %v5492
    %5556 = vmatpush1.bf16.msra.mxu0 %v5491
    %5557 = vmatprep.subr.bf16.mxu0 %v5494
    %5558 = vmatpush1.bf16.msra.mxu0 %v5493
    %5559 = vmatprep.subr.bf16.mxu0 %v5496
    %5560 = vmatpush1.bf16.msra.mxu0 %v5495
    %5561 = vmatprep.subr.bf16.mxu0 %v5498
    %5562 = vmatpush1.bf16.msra.mxu0 %v5497
    %5563 = vmatprep.subr.bf16.mxu0 %v5500
    %5564 = vmatpush1.bf16.msra.mxu0 %v5499
    %5565 = vmatprep.subr.bf16.mxu0 %v5502
    %5566 = vmatpush1.bf16.msra.mxu0 %v5501
    %5567 = vmatprep.subr.bf16.mxu0 %v5504
    %5568 = vmatpush1.bf16.msra.mxu0 %v5503
    %5569 = vmatprep.subr.bf16.mxu0 %v5506
    %5570 = vmatpush1.bf16.msra.mxu0 %v5505
    %5571 = vmatprep.subr.bf16.mxu0 %v5508
    %5572 = vmatpush1.bf16.msra.mxu0 %v5507
    %5573 = vmatprep.subr.bf16.mxu0 %v5510
    %5574 = vmatpush1.bf16.msra.mxu0 %v5509
    %5575 = vmatprep.subr.bf16.mxu0 %v5512
    %5576 = vmatpush1.bf16.msra.mxu0 %v5511
    %5577 = vmatprep.subr.bf16.mxu0 %v5514
    %5578 = vmatpush1.bf16.msra.mxu0 %v5513
    %5579 = vmatprep.subr.bf16.mxu0 %v5516
    %5580 = vmatpush1.bf16.msra.mxu0 %v5515
    %5581 = vmatprep.subr.bf16.mxu0 %v5518
    %5582 = vmatpush1.bf16.msra.mxu0 %v5517
    %5583 = vmatprep.subr.bf16.mxu0 %v5520
    %5584 = vmatpush1.bf16.msra.mxu0 %v5519
    %5585 = vmatprep.subr.bf16.mxu0 %v5522
    %5586 = vmatpush1.bf16.msra.mxu0 %v5521
    %5587 = vmatprep.mubr.bf16.mxu0 %v5348
    %5588 = vmatmul.mubr.bf16.gmra.mrb[0].mxu0 %v5347
    %v5589 = vpop.f32.mrb[0].mxu0
    %v5590 = vadd.f32 %v5388, %v5589
    %v5591 = vpop.f32.mrb[0].mxu0
    %v5592 = vadd.f32 %v5392, %v5591
    %v5593 = vpop.f32.mrb[0].mxu0
    %v5594 = vpop.f32.mrb[0].mxu0
    %5595 = vdwg.mxu0
    %v5596 = vadd.f32 %v4893, %v5590
    %v5597 = vadd.f32 %v4894, %v5592
    %v5598 = vpack.c.bf16 %v5590, %v5590
    %v5599 = vpack.c.bf16 %v5592, %v5592
    %5600 = vmatprep.subr.bf16.mxu0 %v3931
    %5601 = vmatpush1.bf16.msra.mxu0 %v3930
    %5602 = vmatprep.subr.bf16.mxu0 %v3933
    %5603 = vmatpush1.bf16.msra.mxu0 %v3932
    %5604 = vmatprep.subr.bf16.mxu0 %v3935
    %5605 = vmatpush1.bf16.msra.mxu0 %v3934
    %5606 = vmatprep.subr.bf16.mxu0 %v3937
    %5607 = vmatpush1.bf16.msra.mxu0 %v3936
    %5608 = vmatprep.subr.bf16.mxu0 %v3939
    %5609 = vmatpush1.bf16.msra.mxu0 %v3938
    %5610 = vmatprep.subr.bf16.mxu0 %v3941
    %5611 = vmatpush1.bf16.msra.mxu0 %v3940
    %5612 = vmatprep.subr.bf16.mxu0 %v3943
    %5613 = vmatpush1.bf16.msra.mxu0 %v3942
    %5614 = vmatprep.subr.bf16.mxu0 %v3945
    %5615 = vmatpush1.bf16.msra.mxu0 %v3944
    %5616 = vmatprep.subr.bf16.mxu0 %v3947
    %5617 = vmatpush1.bf16.msra.mxu0 %v3946
    %5618 = vmatprep.subr.bf16.mxu0 %v3949
    %5619 = vmatpush1.bf16.msra.mxu0 %v3948
    %5620 = vmatprep.subr.bf16.mxu0 %v3951
    %5621 = vmatpush1.bf16.msra.mxu0 %v3950
    %5622 = vmatprep.subr.bf16.mxu0 %v3953
    %5623 = vmatpush1.bf16.msra.mxu0 %v3952
    %5624 = vmatprep.subr.bf16.mxu0 %v3955
    %5625 = vmatpush1.bf16.msra.mxu0 %v3954
    %5626 = vmatprep.subr.bf16.mxu0 %v3957
    %5627 = vmatpush1.bf16.msra.mxu0 %v3956
    %5628 = vmatprep.subr.bf16.mxu0 %v3959
    %5629 = vmatpush1.bf16.msra.mxu0 %v3958
    %5630 = vmatprep.subr.bf16.mxu0 %v3961
    %5631 = vmatpush1.bf16.msra.mxu0 %v3960
    %5632 = vmatprep.mubr.bf16.mxu0 %v5599
    %5633 = vmatmul.mubr.bf16.gmra.mrb[0].mxu0 %v5598
    %v5634 = vpop.f32.mrb[0].mxu0
    %v5635 = vadd.f32 %v3827, %v5634
    %v5636 = vpop.f32.mrb[0].mxu0
    %v5637 = vadd.f32 %v3831, %v5636
    %v5638 = vpop.f32.mrb[0].mxu0
    %v5639 = vpop.f32.mrb[0].mxu0
    %5640 = vdwg.mxu0
    %v5641 = vmax.f32 %v5635, 0.0
    %v5642 = vmax.f32 %v5637, 0.0
    %v5643 = vpack.c.bf16 %v5641, %v5641
    %v5644 = vpack.c.bf16 %v5642, %v5642
    %5645 = vmatprep.subr.bf16.mxu0 %v4180
    %5646 = vmatpush1.bf16.msra.mxu0 %v4179
    %5647 = vmatprep.subr.bf16.mxu0 %v4182
    %5648 = vmatpush1.bf16.msra.mxu0 %v4181
    %5649 = vmatprep.subr.bf16.mxu0 %v4184
    %5650 = vmatpush1.bf16.msra.mxu0 %v4183
    %5651 = vmatprep.subr.bf16.mxu0 %v4186
    %5652 = vmatpush1.bf16.msra.mxu0 %v4185
    %5653 = vmatprep.subr.bf16.mxu0 %v4188
    %5654 = vmatpush1.bf16.msra.mxu0 %v4187
    %5655 = vmatprep.subr.bf16.mxu0 %v4190
    %5656 = vmatpush1.bf16.msra.mxu0 %v4189
    %5657 = vmatprep.subr.bf16.mxu0 %v4192
    %5658 = vmatpush1.bf16.msra.mxu0 %v4191
    %5659 = vmatprep.subr.bf16.mxu0 %v4194
    %5660 = vmatpush1.bf16.msra.mxu0 %v4193
    %5661 = vmatprep.subr.bf16.mxu0 %v4196
    %5662 = vmatpush1.bf16.msra.mxu0 %v4195
    %5663 = vmatprep.subr.bf16.mxu0 %v4198
    %5664 = vmatpush1.bf16.msra.mxu0 %v4197
    %5665 = vmatprep.subr.bf16.mxu0 %v4200
    %5666 = vmatpush1.bf16.msra.mxu0 %v4199
    %5667 = vmatprep.subr.bf16.mxu0 %v4202
    %5668 = vmatpush1.bf16.msra.mxu0 %v4201
    %5669 = vmatprep.subr.bf16.mxu0 %v4204
    %5670 = vmatpush1.bf16.msra.mxu0 %v4203
    %5671 = vmatprep.subr.bf16.mxu0 %v4206
    %5672 = vmatpush1.bf16.msra.mxu0 %v4205
    %5673 = vmatprep.subr.bf16.mxu0 %v4208
    %5674 = vmatpush1.bf16.msra.mxu0 %v4207
    %5675 = vmatprep.subr.bf16.mxu0 %v4210
    %5676 = vmatpush1.bf16.msra.mxu0 %v4209
    %5677 = vmatprep.mubr.bf16.mxu0 %v5644
    %5678 = vmatmul.mubr.bf16.gmra.mrb[0].mxu0 %v5643
    %v5679 = vpop.f32.mrb[0].mxu0
    %v5680 = vadd.f32 %v4076, %v5679
    %v5681 = vpop.f32.mrb[0].mxu0
    %v5682 = vadd.f32 %v4080, %v5681
    %v5683 = vpop.f32.mrb[0].mxu0
    %v5684 = vpop.f32.mrb[0].mxu0
    %5685 = vdwg.mxu0
    %v5686 = vmax.f32 %v5680, 0.0
    %v5687 = vmax.f32 %v5682, 0.0
    %v5688 = vpack.c.bf16 %v5686, %v5686
    %v5689 = vpack.c.bf16 %v5687, %v5687
    %5690 = vmatprep.subr.bf16.mxu0 %v5689
    %5691 = vmatpush1.bf16.xpose.msra.mxu0 %v5688
    %5692 = vmatprep.subr.bf16.mxu0 0
    %5693 = vmatpush1.bf16.xpose.msra.mxu0 0
    %5694 = vmatprep.subr.bf16.mxu0 0
    %5695 = vmatpush1.bf16.xpose.msra.mxu0 0
    %5696 = vmatprep.subr.bf16.mxu0 0
    %5697 = vmatpush1.bf16.xpose.msra.mxu0 0
    %5698 = vmatprep.subr.bf16.mxu0 0
    %5699 = vmatpush1.bf16.xpose.msra.mxu0 0
    %5700 = vmatprep.subr.bf16.mxu0 0
    %5701 = vmatpush1.bf16.xpose.msra.mxu0 0
    %5702 = vmatprep.subr.bf16.mxu0 0
    %5703 = vmatpush1.bf16.xpose.msra.mxu0 0
    %5704 = vmatprep.subr.bf16.mxu0 0
    %5705 = vmatpush1.bf16.xpose.msra.mxu0 0
    %5706 = vmatprep.subr.bf16.mxu0 0
    %5707 = vmatpush1.bf16.xpose.msra.mxu0 0
    %5708 = vmatprep.subr.bf16.mxu0 0
    %5709 = vmatpush1.bf16.xpose.msra.mxu0 0
    %5710 = vmatprep.subr.bf16.mxu0 0
    %5711 = vmatpush1.bf16.xpose.msra.mxu0 0
    %5712 = vmatprep.subr.bf16.mxu0 0
    %5713 = vmatpush1.bf16.xpose.msra.mxu0 0
    %5714 = vmatprep.subr.bf16.mxu0 0
    %5715 = vmatpush1.bf16.xpose.msra.mxu0 0
    %5716 = vmatprep.subr.bf16.mxu0 0
    %5717 = vmatpush1.bf16.xpose.msra.mxu0 0
    %5718 = vmatprep.subr.bf16.mxu0 0
    %5719 = vmatpush1.bf16.xpose.msra.mxu0 0
    %5720 = vmatprep.subr.bf16.mxu0 0
    %5721 = vmatpush1.bf16.xpose.msra.mxu0 0
    %5722 = vmatprep.mubr.bf16.mxu0 %v5689
    %5723 = vmatmul.mubr.bf16.gmra.mrb[0].mxu0 %v5688
    %v5724 = vpop.f32.mrb[0].mxu0
    %v5725 = vadd.f32 0.0, %v5724
    %v5726 = vpop.f32.mrb[0].mxu0
    %v5727 = vpop.f32.mrb[0].mxu0
    %v5728 = vpop.f32.mrb[0].mxu0
    %5729 = vdwg.mxu0
    %v5730 = vsel %vm1810, %v5725, 0.0
    %5731 = vadd.xlane.f32.xlu0 %v5730
    %v5732 = vpop.xlane.xlu0 %5731
    %v5733 = vrot.slane %v5732, 4
    %v5734 = vadd.f32 %v5732, %v5733
    %v5735 = vrot.slane %v5734, 2
    %v5736 = vadd.f32 %v5734, %v5735
    %v5737 = vrot.slane %v5736, 1
    %v5738 = vadd.f32 %v5736, %v5737
    %s5739 = vtos %v5738
    %v5740 = vrcp.pop 64.0
    %s5741 = vtos %v5740
    %s5742 = smul.f32 %s5739, %s5741
    %v5743 = vstv %s5742
    %vm5744 = vcmp.gt.f32.partialorder %v5725, %v5743
    %v5745 = vsel %vm5744, 1, 0
    %v5746 = vcvt.s32.f32 %v5745
    %v5747 = vadd.f32 %v5746, %v1269
    %v5748 = vpack.c.bf16 %v5747, %v5747
    %v5750 = vsel %vm1810, %v5748, 0
    %v5753 = vsel %vm1833, %v5598, 0
    %v5756 = vsel %vm1833, %v5599, 0
    %5758 = vmatprep.subr.bf16.mxu0 %v5756
    %5759 = vmatpush1.bf16.msra.mxu0 %v5753
    %5760 = vmatprep.subr.bf16.mxu0 0
    %5761 = vmatpush1.bf16.msra.mxu0 0
    %5762 = vmatprep.subr.bf16.mxu0 0
    %5763 = vmatpush1.bf16.msra.mxu0 0
    %5764 = vmatprep.subr.bf16.mxu0 0
    %5765 = vmatpush1.bf16.msra.mxu0 0
    %5766 = vmatprep.subr.bf16.mxu0 0
    %5767 = vmatpush1.bf16.msra.mxu0 0
    %5768 = vmatprep.subr.bf16.mxu0 0
    %5769 = vmatpush1.bf16.msra.mxu0 0
    %5770 = vmatprep.subr.bf16.mxu0 0
    %5771 = vmatpush1.bf16.msra.mxu0 0
    %5772 = vmatprep.subr.bf16.mxu0 0
    %5773 = vmatpush1.bf16.msra.mxu0 0
    %5774 = vmatprep.subr.bf16.mxu0 0
    %5775 = vmatpush1.bf16.msra.mxu0 0
    %5776 = vmatprep.subr.bf16.mxu0 0
    %5777 = vmatpush1.bf16.msra.mxu0 0
    %5778 = vmatprep.subr.bf16.mxu0 0
    %5779 = vmatpush1.bf16.msra.mxu0 0
    %5780 = vmatprep.subr.bf16.mxu0 0
    %5781 = vmatpush1.bf16.msra.mxu0 0
    %5782 = vmatprep.subr.bf16.mxu0 0
    %5783 = vmatpush1.bf16.msra.mxu0 0
    %5784 = vmatprep.subr.bf16.mxu0 0
    %5785 = vmatpush1.bf16.msra.mxu0 0
    %5786 = vmatprep.subr.bf16.mxu0 0
    %5787 = vmatpush1.bf16.msra.mxu0 0
    %5788 = vmatprep.subr.bf16.mxu0 0
    %5789 = vmatpush1.bf16.msra.mxu0 0
    %5790 = vmatprep.mubr.bf16.mxu0 0
    %5791 = vmatmul.mubr.bf16.gmra.mrb[0].mxu0 %v5750
    %v5792 = vpop.f32.mrb[0].mxu0
    %v5793 = vadd.f32 0.0, %v5792
    %v5794 = vpop.f32.mrb[0].mxu0
    %v5795 = vadd.f32 0.0, %v5794
    %v5796 = vpop.f32.mrb[0].mxu0
    %v5797 = vpop.f32.mrb[0].mxu0
    %5798 = vdwg.mxu0
    %v5799 = vpack.c.bf16 %v5793, %v5793
    %v5800 = vpack.c.bf16 %v5795, %v5795
    %s5801 = scalar_lea.vmem [#allocation32], 512
    %v5802 = vld [vmem:[%s5801] sm:$0xff]
    %v5803 = vld [vmem:[%s5801 + $0x8] sm:$0xff]
    %v5804 = vld [vmem:[%s5801 + $0x10] sm:$0xff]
    %v5805 = vld [vmem:[%s5801 + $0x18] sm:$0xff]
    %v5806 = vld [vmem:[%s5801 + $0x20] sm:$0xff]
    %v5807 = vld [vmem:[%s5801 + $0x28] sm:$0xff]
    %v5808 = vld [vmem:[%s5801 + $0x30] sm:$0xff]
    %v5809 = vld [vmem:[%s5801 + $0x38] sm:$0xff]
    %v5810 = vld [vmem:[%s5801 + $0x40] sm:$0xff]
    %v5811 = vld [vmem:[%s5801 + $0x48] sm:$0xff]
    %v5812 = vld [vmem:[%s5801 + $0x50] sm:$0xff]
    %v5813 = vld [vmem:[%s5801 + $0x58] sm:$0xff]
    %v5814 = vld [vmem:[%s5801 + $0x60] sm:$0xff]
    %v5815 = vld [vmem:[%s5801 + $0x68] sm:$0xff]
    %v5816 = vld [vmem:[%s5801 + $0x70] sm:$0xff]
    %v5817 = vld [vmem:[%s5801 + $0x78] sm:$0xff]
    %v5818 = vld [vmem:[%s5801 + $0x80] sm:$0xff]
    %v5819 = vld [vmem:[%s5801 + $0x88] sm:$0xff]
    %v5820 = vld [vmem:[%s5801 + $0x90] sm:$0xff]
    %v5821 = vld [vmem:[%s5801 + $0x98] sm:$0xff]
    %v5822 = vld [vmem:[%s5801 + $0xa0] sm:$0xff]
    %v5823 = vld [vmem:[%s5801 + $0xa8] sm:$0xff]
    %v5824 = vld [vmem:[%s5801 + $0xb0] sm:$0xff]
    %v5825 = vld [vmem:[%s5801 + $0xb8] sm:$0xff]
    %v5826 = vld [vmem:[%s5801 + $0xc0] sm:$0xff]
    %v5827 = vld [vmem:[%s5801 + $0xc8] sm:$0xff]
    %v5828 = vld [vmem:[%s5801 + $0xd0] sm:$0xff]
    %v5829 = vld [vmem:[%s5801 + $0xd8] sm:$0xff]
    %v5830 = vld [vmem:[%s5801 + $0xe0] sm:$0xff]
    %v5831 = vld [vmem:[%s5801 + $0xe8] sm:$0xff]
    %v5832 = vld [vmem:[%s5801 + $0xf0] sm:$0xff]
    %v5833 = vld [vmem:[%s5801 + $0xf8] sm:$0xff]
    %s5834 = scalar_lea.vmem %s59, 4
    %v5835 = vld [vmem:[%s5834] sm:$0x3]
    %v5837 = vlaneseq
    %v5838 = vshrl.u32 %v5837, 7
    %v5839 = vsub.s32 0, %v5838
    %v5840 = vrot.slane %v5835, %v5839
    %v5841 = vlaneseq
    %v5842 = vshrl.u32 %v5841, 7
    %v5843 = vsub.s32 1, %v5842
    %v5844 = vrot.slane %v5835, %v5843
    %v5879 = vunpack.c.l.b16 %v5802
    %v5880 = vunpack.c.h.b16 %v5802
    %v5881 = vunpack.c.l.b16 %v5803
    %v5882 = vunpack.c.h.b16 %v5803
    %v5883 = vunpack.c.l.b16 %v5804
    %v5884 = vunpack.c.h.b16 %v5804
    %v5885 = vunpack.c.l.b16 %v5805
    %v5886 = vunpack.c.h.b16 %v5805
    %v5887 = vunpack.c.l.b16 %v5806
    %v5888 = vunpack.c.h.b16 %v5806
    %v5889 = vunpack.c.l.b16 %v5807
    %v5890 = vunpack.c.h.b16 %v5807
    %v5891 = vunpack.c.l.b16 %v5808
    %v5892 = vunpack.c.h.b16 %v5808
    %v5893 = vunpack.c.l.b16 %v5809
    %v5894 = vunpack.c.h.b16 %v5809
    %v5895 = vunpack.c.l.b16 %v5810
    %v5896 = vunpack.c.h.b16 %v5810
    %v5897 = vunpack.c.l.b16 %v5811
    %v5898 = vunpack.c.h.b16 %v5811
    %v5899 = vunpack.c.l.b16 %v5812
    %v5900 = vunpack.c.h.b16 %v5812
    %v5901 = vunpack.c.l.b16 %v5813
    %v5902 = vunpack.c.h.b16 %v5813
    %v5903 = vunpack.c.l.b16 %v5814
    %v5904 = vunpack.c.h.b16 %v5814
    %v5905 = vunpack.c.l.b16 %v5815
    %v5906 = vunpack.c.h.b16 %v5815
    %v5907 = vunpack.c.l.b16 %v5816
    %v5908 = vunpack.c.h.b16 %v5816
    %v5909 = vunpack.c.l.b16 %v5817
    %v5910 = vunpack.c.h.b16 %v5817
    %v5911 = vunpack.c.l.b16 %v5818
    %v5912 = vunpack.c.h.b16 %v5818
    %v5913 = vunpack.c.l.b16 %v5819
    %v5914 = vunpack.c.h.b16 %v5819
    %v5915 = vunpack.c.l.b16 %v5820
    %v5916 = vunpack.c.h.b16 %v5820
    %v5917 = vunpack.c.l.b16 %v5821
    %v5918 = vunpack.c.h.b16 %v5821
    %v5919 = vunpack.c.l.b16 %v5822
    %v5920 = vunpack.c.h.b16 %v5822
    %v5921 = vunpack.c.l.b16 %v5823
    %v5922 = vunpack.c.h.b16 %v5823
    %v5923 = vunpack.c.l.b16 %v5824
    %v5924 = vunpack.c.h.b16 %v5824
    %v5925 = vunpack.c.l.b16 %v5825
    %v5926 = vunpack.c.h.b16 %v5825
    %v5927 = vunpack.c.l.b16 %v5826
    %v5928 = vunpack.c.h.b16 %v5826
    %v5929 = vunpack.c.l.b16 %v5827
    %v5930 = vunpack.c.h.b16 %v5827
    %v5931 = vunpack.c.l.b16 %v5828
    %v5932 = vunpack.c.h.b16 %v5828
    %v5933 = vunpack.c.l.b16 %v5829
    %v5934 = vunpack.c.h.b16 %v5829
    %v5935 = vunpack.c.l.b16 %v5830
    %v5936 = vunpack.c.h.b16 %v5830
    %v5937 = vunpack.c.l.b16 %v5831
    %v5938 = vunpack.c.h.b16 %v5831
    %v5939 = vunpack.c.l.b16 %v5832
    %v5940 = vunpack.c.h.b16 %v5832
    %v5941 = vunpack.c.l.b16 %v5833
    %v5942 = vunpack.c.h.b16 %v5833
    %v5943 = vpack.c.b16 %v5881, %v5879
    %v5944 = vpack.c.b16 %v5882, %v5880
    %v5945 = vpack.c.b16 %v5885, %v5883
    %v5946 = vpack.c.b16 %v5886, %v5884
    %v5947 = vpack.c.b16 %v5889, %v5887
    %v5948 = vpack.c.b16 %v5890, %v5888
    %v5949 = vpack.c.b16 %v5893, %v5891
    %v5950 = vpack.c.b16 %v5894, %v5892
    %v5951 = vpack.c.b16 %v5897, %v5895
    %v5952 = vpack.c.b16 %v5898, %v5896
    %v5953 = vpack.c.b16 %v5901, %v5899
    %v5954 = vpack.c.b16 %v5902, %v5900
    %v5955 = vpack.c.b16 %v5905, %v5903
    %v5956 = vpack.c.b16 %v5906, %v5904
    %v5957 = vpack.c.b16 %v5909, %v5907
    %v5958 = vpack.c.b16 %v5910, %v5908
    %v5959 = vpack.c.b16 %v5913, %v5911
    %v5960 = vpack.c.b16 %v5914, %v5912
    %v5961 = vpack.c.b16 %v5917, %v5915
    %v5962 = vpack.c.b16 %v5918, %v5916
    %v5963 = vpack.c.b16 %v5921, %v5919
    %v5964 = vpack.c.b16 %v5922, %v5920
    %v5965 = vpack.c.b16 %v5925, %v5923
    %v5966 = vpack.c.b16 %v5926, %v5924
    %v5967 = vpack.c.b16 %v5929, %v5927
    %v5968 = vpack.c.b16 %v5930, %v5928
    %v5969 = vpack.c.b16 %v5933, %v5931
    %v5970 = vpack.c.b16 %v5934, %v5932
    %v5971 = vpack.c.b16 %v5937, %v5935
    %v5972 = vpack.c.b16 %v5938, %v5936
    %v5973 = vpack.c.b16 %v5941, %v5939
    %v5974 = vpack.c.b16 %v5942, %v5940
    %6007 = vmatprep.subr.bf16.mxu0 %v5944
    %6008 = vmatpush1.bf16.msra.mxu0 %v5943
    %6009 = vmatprep.subr.bf16.mxu0 %v5946
    %6010 = vmatpush1.bf16.msra.mxu0 %v5945
    %6011 = vmatprep.subr.bf16.mxu0 %v5948
    %6012 = vmatpush1.bf16.msra.mxu0 %v5947
    %6013 = vmatprep.subr.bf16.mxu0 %v5950
    %6014 = vmatpush1.bf16.msra.mxu0 %v5949
    %6015 = vmatprep.subr.bf16.mxu0 %v5952
    %6016 = vmatpush1.bf16.msra.mxu0 %v5951
    %6017 = vmatprep.subr.bf16.mxu0 %v5954
    %6018 = vmatpush1.bf16.msra.mxu0 %v5953
    %6019 = vmatprep.subr.bf16.mxu0 %v5956
    %6020 = vmatpush1.bf16.msra.mxu0 %v5955
    %6021 = vmatprep.subr.bf16.mxu0 %v5958
    %6022 = vmatpush1.bf16.msra.mxu0 %v5957
    %6023 = vmatprep.subr.bf16.mxu0 %v5960
    %6024 = vmatpush1.bf16.msra.mxu0 %v5959
    %6025 = vmatprep.subr.bf16.mxu0 %v5962
    %6026 = vmatpush1.bf16.msra.mxu0 %v5961
    %6027 = vmatprep.subr.bf16.mxu0 %v5964
    %6028 = vmatpush1.bf16.msra.mxu0 %v5963
    %6029 = vmatprep.subr.bf16.mxu0 %v5966
    %6030 = vmatpush1.bf16.msra.mxu0 %v5965
    %6031 = vmatprep.subr.bf16.mxu0 %v5968
    %6032 = vmatpush1.bf16.msra.mxu0 %v5967
    %6033 = vmatprep.subr.bf16.mxu0 %v5970
    %6034 = vmatpush1.bf16.msra.mxu0 %v5969
    %6035 = vmatprep.subr.bf16.mxu0 %v5972
    %6036 = vmatpush1.bf16.msra.mxu0 %v5971
    %6037 = vmatprep.subr.bf16.mxu0 %v5974
    %6038 = vmatpush1.bf16.msra.mxu0 %v5973
    %6039 = vmatprep.mubr.bf16.mxu0 %v5800
    %6040 = vmatmul.mubr.bf16.gmra.mrb[0].mxu0 %v5799
    %v6041 = vpop.f32.mrb[0].mxu0
    %v6042 = vadd.f32 %v5840, %v6041
    %v6043 = vpop.f32.mrb[0].mxu0
    %v6044 = vadd.f32 %v5844, %v6043
    %v6045 = vpop.f32.mrb[0].mxu0
    %v6046 = vpop.f32.mrb[0].mxu0
    %6047 = vdwg.mxu0
    %v6048 = vmax.f32 %v6042, 0.0
    %v6049 = vmax.f32 %v6044, 0.0
    %v6050 = vpack.c.bf16 %v6048, %v6048
    %v6051 = vpack.c.bf16 %v6049, %v6049
    %s6052 = scalar_lea.vmem [#allocation33], 512
    %v6053 = vld [vmem:[%s6052] sm:$0xff]
    %v6054 = vld [vmem:[%s6052 + $0x8] sm:$0xff]
    %v6055 = vld [vmem:[%s6052 + $0x10] sm:$0xff]
    %v6056 = vld [vmem:[%s6052 + $0x18] sm:$0xff]
    %v6057 = vld [vmem:[%s6052 + $0x20] sm:$0xff]
    %v6058 = vld [vmem:[%s6052 + $0x28] sm:$0xff]
    %v6059 = vld [vmem:[%s6052 + $0x30] sm:$0xff]
    %v6060 = vld [vmem:[%s6052 + $0x38] sm:$0xff]
    %v6061 = vld [vmem:[%s6052 + $0x40] sm:$0xff]
    %v6062 = vld [vmem:[%s6052 + $0x48] sm:$0xff]
    %v6063 = vld [vmem:[%s6052 + $0x50] sm:$0xff]
    %v6064 = vld [vmem:[%s6052 + $0x58] sm:$0xff]
    %v6065 = vld [vmem:[%s6052 + $0x60] sm:$0xff]
    %v6066 = vld [vmem:[%s6052 + $0x68] sm:$0xff]
    %v6067 = vld [vmem:[%s6052 + $0x70] sm:$0xff]
    %v6068 = vld [vmem:[%s6052 + $0x78] sm:$0xff]
    %v6069 = vld [vmem:[%s6052 + $0x80] sm:$0xff]
    %v6070 = vld [vmem:[%s6052 + $0x88] sm:$0xff]
    %v6071 = vld [vmem:[%s6052 + $0x90] sm:$0xff]
    %v6072 = vld [vmem:[%s6052 + $0x98] sm:$0xff]
    %v6073 = vld [vmem:[%s6052 + $0xa0] sm:$0xff]
    %v6074 = vld [vmem:[%s6052 + $0xa8] sm:$0xff]
    %v6075 = vld [vmem:[%s6052 + $0xb0] sm:$0xff]
    %v6076 = vld [vmem:[%s6052 + $0xb8] sm:$0xff]
    %v6077 = vld [vmem:[%s6052 + $0xc0] sm:$0xff]
    %v6078 = vld [vmem:[%s6052 + $0xc8] sm:$0xff]
    %v6079 = vld [vmem:[%s6052 + $0xd0] sm:$0xff]
    %v6080 = vld [vmem:[%s6052 + $0xd8] sm:$0xff]
    %v6081 = vld [vmem:[%s6052 + $0xe0] sm:$0xff]
    %v6082 = vld [vmem:[%s6052 + $0xe8] sm:$0xff]
    %v6083 = vld [vmem:[%s6052 + $0xf0] sm:$0xff]
    %v6084 = vld [vmem:[%s6052 + $0xf8] sm:$0xff]
    %s6085 = scalar_lea.vmem [#allocation35], 4
    %v6086 = vld [vmem:[%s6085] sm:$0x3]
    %v6088 = vlaneseq
    %v6089 = vshrl.u32 %v6088, 7
    %v6090 = vsub.s32 0, %v6089
    %v6091 = vrot.slane %v6086, %v6090
    %v6092 = vlaneseq
    %v6093 = vshrl.u32 %v6092, 7
    %v6094 = vsub.s32 1, %v6093
    %v6095 = vrot.slane %v6086, %v6094
    %v6130 = vunpack.c.l.b16 %v6053
    %v6131 = vunpack.c.h.b16 %v6053
    %v6132 = vunpack.c.l.b16 %v6054
    %v6133 = vunpack.c.h.b16 %v6054
    %v6134 = vunpack.c.l.b16 %v6055
    %v6135 = vunpack.c.h.b16 %v6055
    %v6136 = vunpack.c.l.b16 %v6056
    %v6137 = vunpack.c.h.b16 %v6056
    %v6138 = vunpack.c.l.b16 %v6057
    %v6139 = vunpack.c.h.b16 %v6057
    %v6140 = vunpack.c.l.b16 %v6058
    %v6141 = vunpack.c.h.b16 %v6058
    %v6142 = vunpack.c.l.b16 %v6059
    %v6143 = vunpack.c.h.b16 %v6059
    %v6144 = vunpack.c.l.b16 %v6060
    %v6145 = vunpack.c.h.b16 %v6060
    %v6146 = vunpack.c.l.b16 %v6061
    %v6147 = vunpack.c.h.b16 %v6061
    %v6148 = vunpack.c.l.b16 %v6062
    %v6149 = vunpack.c.h.b16 %v6062
    %v6150 = vunpack.c.l.b16 %v6063
    %v6151 = vunpack.c.h.b16 %v6063
    %v6152 = vunpack.c.l.b16 %v6064
    %v6153 = vunpack.c.h.b16 %v6064
    %v6154 = vunpack.c.l.b16 %v6065
    %v6155 = vunpack.c.h.b16 %v6065
    %v6156 = vunpack.c.l.b16 %v6066
    %v6157 = vunpack.c.h.b16 %v6066
    %v6158 = vunpack.c.l.b16 %v6067
    %v6159 = vunpack.c.h.b16 %v6067
    %v6160 = vunpack.c.l.b16 %v6068
    %v6161 = vunpack.c.h.b16 %v6068
    %v6162 = vunpack.c.l.b16 %v6069
    %v6163 = vunpack.c.h.b16 %v6069
    %v6164 = vunpack.c.l.b16 %v6070
    %v6165 = vunpack.c.h.b16 %v6070
    %v6166 = vunpack.c.l.b16 %v6071
    %v6167 = vunpack.c.h.b16 %v6071
    %v6168 = vunpack.c.l.b16 %v6072
    %v6169 = vunpack.c.h.b16 %v6072
    %v6170 = vunpack.c.l.b16 %v6073
    %v6171 = vunpack.c.h.b16 %v6073
    %v6172 = vunpack.c.l.b16 %v6074
    %v6173 = vunpack.c.h.b16 %v6074
    %v6174 = vunpack.c.l.b16 %v6075
    %v6175 = vunpack.c.h.b16 %v6075
    %v6176 = vunpack.c.l.b16 %v6076
    %v6177 = vunpack.c.h.b16 %v6076
    %v6178 = vunpack.c.l.b16 %v6077
    %v6179 = vunpack.c.h.b16 %v6077
    %v6180 = vunpack.c.l.b16 %v6078
    %v6181 = vunpack.c.h.b16 %v6078
    %v6182 = vunpack.c.l.b16 %v6079
    %v6183 = vunpack.c.h.b16 %v6079
    %v6184 = vunpack.c.l.b16 %v6080
    %v6185 = vunpack.c.h.b16 %v6080
    %v6186 = vunpack.c.l.b16 %v6081
    %v6187 = vunpack.c.h.b16 %v6081
    %v6188 = vunpack.c.l.b16 %v6082
    %v6189 = vunpack.c.h.b16 %v6082
    %v6190 = vunpack.c.l.b16 %v6083
    %v6191 = vunpack.c.h.b16 %v6083
    %v6192 = vunpack.c.l.b16 %v6084
    %v6193 = vunpack.c.h.b16 %v6084
    %v6194 = vpack.c.b16 %v6132, %v6130
    %v6195 = vpack.c.b16 %v6133, %v6131
    %v6196 = vpack.c.b16 %v6136, %v6134
    %v6197 = vpack.c.b16 %v6137, %v6135
    %v6198 = vpack.c.b16 %v6140, %v6138
    %v6199 = vpack.c.b16 %v6141, %v6139
    %v6200 = vpack.c.b16 %v6144, %v6142
    %v6201 = vpack.c.b16 %v6145, %v6143
    %v6202 = vpack.c.b16 %v6148, %v6146
    %v6203 = vpack.c.b16 %v6149, %v6147
    %v6204 = vpack.c.b16 %v6152, %v6150
    %v6205 = vpack.c.b16 %v6153, %v6151
    %v6206 = vpack.c.b16 %v6156, %v6154
    %v6207 = vpack.c.b16 %v6157, %v6155
    %v6208 = vpack.c.b16 %v6160, %v6158
    %v6209 = vpack.c.b16 %v6161, %v6159
    %v6210 = vpack.c.b16 %v6164, %v6162
    %v6211 = vpack.c.b16 %v6165, %v6163
    %v6212 = vpack.c.b16 %v6168, %v6166
    %v6213 = vpack.c.b16 %v6169, %v6167
    %v6214 = vpack.c.b16 %v6172, %v6170
    %v6215 = vpack.c.b16 %v6173, %v6171
    %v6216 = vpack.c.b16 %v6176, %v6174
    %v6217 = vpack.c.b16 %v6177, %v6175
    %v6218 = vpack.c.b16 %v6180, %v6178
    %v6219 = vpack.c.b16 %v6181, %v6179
    %v6220 = vpack.c.b16 %v6184, %v6182
    %v6221 = vpack.c.b16 %v6185, %v6183
    %v6222 = vpack.c.b16 %v6188, %v6186
    %v6223 = vpack.c.b16 %v6189, %v6187
    %v6224 = vpack.c.b16 %v6192, %v6190
    %v6225 = vpack.c.b16 %v6193, %v6191
    %6258 = vmatprep.subr.bf16.mxu0 %v6195
    %6259 = vmatpush1.bf16.msra.mxu0 %v6194
    %6260 = vmatprep.subr.bf16.mxu0 %v6197
    %6261 = vmatpush1.bf16.msra.mxu0 %v6196
    %6262 = vmatprep.subr.bf16.mxu0 %v6199
    %6263 = vmatpush1.bf16.msra.mxu0 %v6198
    %6264 = vmatprep.subr.bf16.mxu0 %v6201
    %6265 = vmatpush1.bf16.msra.mxu0 %v6200
    %6266 = vmatprep.subr.bf16.mxu0 %v6203
    %6267 = vmatpush1.bf16.msra.mxu0 %v6202
    %6268 = vmatprep.subr.bf16.mxu0 %v6205
    %6269 = vmatpush1.bf16.msra.mxu0 %v6204
    %6270 = vmatprep.subr.bf16.mxu0 %v6207
    %6271 = vmatpush1.bf16.msra.mxu0 %v6206
    %6272 = vmatprep.subr.bf16.mxu0 %v6209
    %6273 = vmatpush1.bf16.msra.mxu0 %v6208
    %6274 = vmatprep.subr.bf16.mxu0 %v6211
    %6275 = vmatpush1.bf16.msra.mxu0 %v6210
    %6276 = vmatprep.subr.bf16.mxu0 %v6213
    %6277 = vmatpush1.bf16.msra.mxu0 %v6212
    %6278 = vmatprep.subr.bf16.mxu0 %v6215
    %6279 = vmatpush1.bf16.msra.mxu0 %v6214
    %6280 = vmatprep.subr.bf16.mxu0 %v6217
    %6281 = vmatpush1.bf16.msra.mxu0 %v6216
    %6282 = vmatprep.subr.bf16.mxu0 %v6219
    %6283 = vmatpush1.bf16.msra.mxu0 %v6218
    %6284 = vmatprep.subr.bf16.mxu0 %v6221
    %6285 = vmatpush1.bf16.msra.mxu0 %v6220
    %6286 = vmatprep.subr.bf16.mxu0 %v6223
    %6287 = vmatpush1.bf16.msra.mxu0 %v6222
    %6288 = vmatprep.subr.bf16.mxu0 %v6225
    %6289 = vmatpush1.bf16.msra.mxu0 %v6224
    %6290 = vmatprep.mubr.bf16.mxu0 %v6051
    %6291 = vmatmul.mubr.bf16.gmra.mrb[0].mxu0 %v6050
    %v6292 = vpop.f32.mrb[0].mxu0
    %v6293 = vadd.f32 %v6091, %v6292
    %v6294 = vpop.f32.mrb[0].mxu0
    %v6295 = vadd.f32 %v6095, %v6294
    %v6296 = vpop.f32.mrb[0].mxu0
    %v6297 = vpop.f32.mrb[0].mxu0
    %6298 = vdwg.mxu0
    %v6299 = vadd.f32 %v5596, %v6293
    %v6300 = vadd.f32 %v5597, %v6295
    %v6301 = vmul.f32 %v6299, %v3785
    %v6302 = vmul.f32 %v6300, %v3785
    %v6303 = vpack.c.bf16 %v1259, %v435
    %v6304 = vpack.c.bf16 %v1260, %v436
    %v6305 = vld [vmem:[#allocation17] sm:$0xff]
    %v6306 = vld [vmem:[#allocation17 + $0x8] sm:$0xff]
    %v6307 = vld [vmem:[#allocation17 + $0x10] sm:$0xff]
    %v6308 = vld [vmem:[#allocation17 + $0x18] sm:$0xff]
    %v6309 = vld [vmem:[#allocation17 + $0x20] sm:$0xff]
    %v6310 = vld [vmem:[#allocation17 + $0x28] sm:$0xff]
    %v6311 = vld [vmem:[#allocation17 + $0x30] sm:$0xff]
    %v6312 = vld [vmem:[#allocation17 + $0x38] sm:$0xff]
    %v6313 = vld [vmem:[#allocation17 + $0x40] sm:$0xff]
    %v6314 = vld [vmem:[#allocation17 + $0x48] sm:$0xff]
    %v6315 = vld [vmem:[#allocation17 + $0x50] sm:$0xff]
    %v6316 = vld [vmem:[#allocation17 + $0x58] sm:$0xff]
    %v6317 = vld [vmem:[#allocation17 + $0x60] sm:$0xff]
    %v6318 = vld [vmem:[#allocation17 + $0x68] sm:$0xff]
    %v6319 = vld [vmem:[#allocation17 + $0x70] sm:$0xff]
    %v6320 = vld [vmem:[#allocation17 + $0x78] sm:$0xff]
    %v6321 = vld [vmem:[#allocation17 + $0x80] sm:$0xff]
    %v6322 = vld [vmem:[#allocation17 + $0x88] sm:$0xff]
    %v6323 = vld [vmem:[#allocation17 + $0x90] sm:$0xff]
    %v6324 = vld [vmem:[#allocation17 + $0x98] sm:$0xff]
    %v6325 = vld [vmem:[#allocation17 + $0xa0] sm:$0xff]
    %v6326 = vld [vmem:[#allocation17 + $0xa8] sm:$0xff]
    %v6327 = vld [vmem:[#allocation17 + $0xb0] sm:$0xff]
    %v6328 = vld [vmem:[#allocation17 + $0xb8] sm:$0xff]
    %v6329 = vld [vmem:[#allocation17 + $0xc0] sm:$0xff]
    %v6330 = vld [vmem:[#allocation17 + $0xc8] sm:$0xff]
    %v6331 = vld [vmem:[#allocation17 + $0xd0] sm:$0xff]
    %v6332 = vld [vmem:[#allocation17 + $0xd8] sm:$0xff]
    %v6333 = vld [vmem:[#allocation17 + $0xe0] sm:$0xff]
    %v6334 = vld [vmem:[#allocation17 + $0xe8] sm:$0xff]
    %v6335 = vld [vmem:[#allocation17 + $0xf0] sm:$0xff]
    %v6336 = vld [vmem:[#allocation17 + $0xf8] sm:$0xff]
    %v6337 = vld [vmem:[#allocation18] sm:$0x3]
    %v6339 = vlaneseq
    %v6340 = vshrl.u32 %v6339, 7
    %v6341 = vsub.s32 0, %v6340
    %v6342 = vrot.slane %v6337, %v6341
    %v6343 = vlaneseq
    %v6344 = vshrl.u32 %v6343, 7
    %v6345 = vsub.s32 1, %v6344
    %v6346 = vrot.slane %v6337, %v6345
    %v6381 = vunpack.c.l.b16 %v6305
    %v6382 = vunpack.c.h.b16 %v6305
    %v6383 = vunpack.c.l.b16 %v6306
    %v6384 = vunpack.c.h.b16 %v6306
    %v6385 = vunpack.c.l.b16 %v6307
    %v6386 = vunpack.c.h.b16 %v6307
    %v6387 = vunpack.c.l.b16 %v6308
    %v6388 = vunpack.c.h.b16 %v6308
    %v6389 = vunpack.c.l.b16 %v6309
    %v6390 = vunpack.c.h.b16 %v6309
    %v6391 = vunpack.c.l.b16 %v6310
    %v6392 = vunpack.c.h.b16 %v6310
    %v6393 = vunpack.c.l.b16 %v6311
    %v6394 = vunpack.c.h.b16 %v6311
    %v6395 = vunpack.c.l.b16 %v6312
    %v6396 = vunpack.c.h.b16 %v6312
    %v6397 = vunpack.c.l.b16 %v6313
    %v6398 = vunpack.c.h.b16 %v6313
    %v6399 = vunpack.c.l.b16 %v6314
    %v6400 = vunpack.c.h.b16 %v6314
    %v6401 = vunpack.c.l.b16 %v6315
    %v6402 = vunpack.c.h.b16 %v6315
    %v6403 = vunpack.c.l.b16 %v6316
    %v6404 = vunpack.c.h.b16 %v6316
    %v6405 = vunpack.c.l.b16 %v6317
    %v6406 = vunpack.c.h.b16 %v6317
    %v6407 = vunpack.c.l.b16 %v6318
    %v6408 = vunpack.c.h.b16 %v6318
    %v6409 = vunpack.c.l.b16 %v6319
    %v6410 = vunpack.c.h.b16 %v6319
    %v6411 = vunpack.c.l.b16 %v6320
    %v6412 = vunpack.c.h.b16 %v6320
    %v6413 = vunpack.c.l.b16 %v6321
    %v6414 = vunpack.c.h.b16 %v6321
    %v6415 = vunpack.c.l.b16 %v6322
    %v6416 = vunpack.c.h.b16 %v6322
    %v6417 = vunpack.c.l.b16 %v6323
    %v6418 = vunpack.c.h.b16 %v6323
    %v6419 = vunpack.c.l.b16 %v6324
    %v6420 = vunpack.c.h.b16 %v6324
    %v6421 = vunpack.c.l.b16 %v6325
    %v6422 = vunpack.c.h.b16 %v6325
    %v6423 = vunpack.c.l.b16 %v6326
    %v6424 = vunpack.c.h.b16 %v6326
    %v6425 = vunpack.c.l.b16 %v6327
    %v6426 = vunpack.c.h.b16 %v6327
    %v6427 = vunpack.c.l.b16 %v6328
    %v6428 = vunpack.c.h.b16 %v6328
    %v6429 = vunpack.c.l.b16 %v6329
    %v6430 = vunpack.c.h.b16 %v6329
    %v6431 = vunpack.c.l.b16 %v6330
    %v6432 = vunpack.c.h.b16 %v6330
    %v6433 = vunpack.c.l.b16 %v6331
    %v6434 = vunpack.c.h.b16 %v6331
    %v6435 = vunpack.c.l.b16 %v6332
    %v6436 = vunpack.c.h.b16 %v6332
    %v6437 = vunpack.c.l.b16 %v6333
    %v6438 = vunpack.c.h.b16 %v6333
    %v6439 = vunpack.c.l.b16 %v6334
    %v6440 = vunpack.c.h.b16 %v6334
    %v6441 = vunpack.c.l.b16 %v6335
    %v6442 = vunpack.c.h.b16 %v6335
    %v6443 = vunpack.c.l.b16 %v6336
    %v6444 = vunpack.c.h.b16 %v6336
    %v6445 = vpack.c.b16 %v6383, %v6381
    %v6446 = vpack.c.b16 %v6384, %v6382
    %v6447 = vpack.c.b16 %v6387, %v6385
    %v6448 = vpack.c.b16 %v6388, %v6386
    %v6449 = vpack.c.b16 %v6391, %v6389
    %v6450 = vpack.c.b16 %v6392, %v6390
    %v6451 = vpack.c.b16 %v6395, %v6393
    %v6452 = vpack.c.b16 %v6396, %v6394
    %v6453 = vpack.c.b16 %v6399, %v6397
    %v6454 = vpack.c.b16 %v6400, %v6398
    %v6455 = vpack.c.b16 %v6403, %v6401
    %v6456 = vpack.c.b16 %v6404, %v6402
    %v6457 = vpack.c.b16 %v6407, %v6405
    %v6458 = vpack.c.b16 %v6408, %v6406
    %v6459 = vpack.c.b16 %v6411, %v6409
    %v6460 = vpack.c.b16 %v6412, %v6410
    %v6461 = vpack.c.b16 %v6415, %v6413
    %v6462 = vpack.c.b16 %v6416, %v6414
    %v6463 = vpack.c.b16 %v6419, %v6417
    %v6464 = vpack.c.b16 %v6420, %v6418
    %v6465 = vpack.c.b16 %v6423, %v6421
    %v6466 = vpack.c.b16 %v6424, %v6422
    %v6467 = vpack.c.b16 %v6427, %v6425
    %v6468 = vpack.c.b16 %v6428, %v6426
    %v6469 = vpack.c.b16 %v6431, %v6429
    %v6470 = vpack.c.b16 %v6432, %v6430
    %v6471 = vpack.c.b16 %v6435, %v6433
    %v6472 = vpack.c.b16 %v6436, %v6434
    %v6473 = vpack.c.b16 %v6439, %v6437
    %v6474 = vpack.c.b16 %v6440, %v6438
    %v6475 = vpack.c.b16 %v6443, %v6441
    %v6476 = vpack.c.b16 %v6444, %v6442
    %6509 = vmatprep.subr.bf16.mxu0 %v6446
    %6510 = vmatpush1.bf16.msra.mxu0 %v6445
    %6511 = vmatprep.subr.bf16.mxu0 %v6448
    %6512 = vmatpush1.bf16.msra.mxu0 %v6447
    %6513 = vmatprep.subr.bf16.mxu0 %v6450
    %6514 = vmatpush1.bf16.msra.mxu0 %v6449
    %6515 = vmatprep.subr.bf16.mxu0 %v6452
    %6516 = vmatpush1.bf16.msra.mxu0 %v6451
    %6517 = vmatprep.subr.bf16.mxu0 %v6454
    %6518 = vmatpush1.bf16.msra.mxu0 %v6453
    %6519 = vmatprep.subr.bf16.mxu0 %v6456
    %6520 = vmatpush1.bf16.msra.mxu0 %v6455
    %6521 = vmatprep.subr.bf16.mxu0 %v6458
    %6522 = vmatpush1.bf16.msra.mxu0 %v6457
    %6523 = vmatprep.subr.bf16.mxu0 %v6460
    %6524 = vmatpush1.bf16.msra.mxu0 %v6459
    %6525 = vmatprep.subr.bf16.mxu0 %v6462
    %6526 = vmatpush1.bf16.msra.mxu0 %v6461
    %6527 = vmatprep.subr.bf16.mxu0 %v6464
    %6528 = vmatpush1.bf16.msra.mxu0 %v6463
    %6529 = vmatprep.subr.bf16.mxu0 %v6466
    %6530 = vmatpush1.bf16.msra.mxu0 %v6465
    %6531 = vmatprep.subr.bf16.mxu0 %v6468
    %6532 = vmatpush1.bf16.msra.mxu0 %v6467
    %6533 = vmatprep.subr.bf16.mxu0 %v6470
    %6534 = vmatpush1.bf16.msra.mxu0 %v6469
    %6535 = vmatprep.subr.bf16.mxu0 %v6472
    %6536 = vmatpush1.bf16.msra.mxu0 %v6471
    %6537 = vmatprep.subr.bf16.mxu0 %v6474
    %6538 = vmatpush1.bf16.msra.mxu0 %v6473
    %6539 = vmatprep.subr.bf16.mxu0 %v6476
    %6540 = vmatpush1.bf16.msra.mxu0 %v6475
    %6541 = vmatprep.mubr.bf16.mxu0 %v6304
    %6542 = vmatmul.mubr.bf16.gmra.mrb[0].mxu0 %v6303
    %v6543 = vpop.f32.mrb[0].mxu0
    %v6544 = vadd.f32 %v6342, %v6543
    %v6545 = vpop.f32.mrb[0].mxu0
    %v6546 = vadd.f32 %v6346, %v6545
    %v6547 = vpop.f32.mrb[0].mxu0
    %v6548 = vadd.f32 %v6342, %v6547
    %v6549 = vpop.f32.mrb[0].mxu0
    %v6550 = vadd.f32 %v6346, %v6549
    %6551 = vdwg.mxu0
    %v6552 = vmax.f32 %v6544, 0.0
    %v6553 = vmax.f32 %v6546, 0.0
    %v6554 = vmax.f32 %v6548, 0.0
    %v6555 = vmax.f32 %v6550, 0.0
    %v6556 = vpack.c.bf16 %v6554, %v6552
    %v6557 = vpack.c.bf16 %v6555, %v6553
    %v6558 = vld [vmem:[#allocation20] sm:$0xff]
    %v6559 = vld [vmem:[#allocation20 + $0x8] sm:$0xff]
    %v6560 = vld [vmem:[#allocation20 + $0x10] sm:$0xff]
    %v6561 = vld [vmem:[#allocation20 + $0x18] sm:$0xff]
    %v6562 = vld [vmem:[#allocation20 + $0x20] sm:$0xff]
    %v6563 = vld [vmem:[#allocation20 + $0x28] sm:$0xff]
    %v6564 = vld [vmem:[#allocation20 + $0x30] sm:$0xff]
    %v6565 = vld [vmem:[#allocation20 + $0x38] sm:$0xff]
    %v6566 = vld [vmem:[#allocation20 + $0x40] sm:$0xff]
    %v6567 = vld [vmem:[#allocation20 + $0x48] sm:$0xff]
    %v6568 = vld [vmem:[#allocation20 + $0x50] sm:$0xff]
    %v6569 = vld [vmem:[#allocation20 + $0x58] sm:$0xff]
    %v6570 = vld [vmem:[#allocation20 + $0x60] sm:$0xff]
    %v6571 = vld [vmem:[#allocation20 + $0x68] sm:$0xff]
    %v6572 = vld [vmem:[#allocation20 + $0x70] sm:$0xff]
    %v6573 = vld [vmem:[#allocation20 + $0x78] sm:$0xff]
    %v6574 = vld [vmem:[#allocation20 + $0x80] sm:$0xff]
    %v6575 = vld [vmem:[#allocation20 + $0x88] sm:$0xff]
    %v6576 = vld [vmem:[#allocation20 + $0x90] sm:$0xff]
    %v6577 = vld [vmem:[#allocation20 + $0x98] sm:$0xff]
    %v6578 = vld [vmem:[#allocation20 + $0xa0] sm:$0xff]
    %v6579 = vld [vmem:[#allocation20 + $0xa8] sm:$0xff]
    %v6580 = vld [vmem:[#allocation20 + $0xb0] sm:$0xff]
    %v6581 = vld [vmem:[#allocation20 + $0xb8] sm:$0xff]
    %v6582 = vld [vmem:[#allocation20 + $0xc0] sm:$0xff]
    %v6583 = vld [vmem:[#allocation20 + $0xc8] sm:$0xff]
    %v6584 = vld [vmem:[#allocation20 + $0xd0] sm:$0xff]
    %v6585 = vld [vmem:[#allocation20 + $0xd8] sm:$0xff]
    %v6586 = vld [vmem:[#allocation20 + $0xe0] sm:$0xff]
    %v6587 = vld [vmem:[#allocation20 + $0xe8] sm:$0xff]
    %v6588 = vld [vmem:[#allocation20 + $0xf0] sm:$0xff]
    %v6589 = vld [vmem:[#allocation20 + $0xf8] sm:$0xff]
    %v6590 = vld [vmem:[#allocation21] sm:$0x3]
    %v6592 = vlaneseq
    %v6593 = vshrl.u32 %v6592, 7
    %v6594 = vsub.s32 0, %v6593
    %v6595 = vrot.slane %v6590, %v6594
    %v6596 = vlaneseq
    %v6597 = vshrl.u32 %v6596, 7
    %v6598 = vsub.s32 1, %v6597
    %v6599 = vrot.slane %v6590, %v6598
    %v6634 = vunpack.c.l.b16 %v6558
    %v6635 = vunpack.c.h.b16 %v6558
    %v6636 = vunpack.c.l.b16 %v6559
    %v6637 = vunpack.c.h.b16 %v6559
    %v6638 = vunpack.c.l.b16 %v6560
    %v6639 = vunpack.c.h.b16 %v6560
    %v6640 = vunpack.c.l.b16 %v6561
    %v6641 = vunpack.c.h.b16 %v6561
    %v6642 = vunpack.c.l.b16 %v6562
    %v6643 = vunpack.c.h.b16 %v6562
    %v6644 = vunpack.c.l.b16 %v6563
    %v6645 = vunpack.c.h.b16 %v6563
    %v6646 = vunpack.c.l.b16 %v6564
    %v6647 = vunpack.c.h.b16 %v6564
    %v6648 = vunpack.c.l.b16 %v6565
    %v6649 = vunpack.c.h.b16 %v6565
    %v6650 = vunpack.c.l.b16 %v6566
    %v6651 = vunpack.c.h.b16 %v6566
    %v6652 = vunpack.c.l.b16 %v6567
    %v6653 = vunpack.c.h.b16 %v6567
    %v6654 = vunpack.c.l.b16 %v6568
    %v6655 = vunpack.c.h.b16 %v6568
    %v6656 = vunpack.c.l.b16 %v6569
    %v6657 = vunpack.c.h.b16 %v6569
    %v6658 = vunpack.c.l.b16 %v6570
    %v6659 = vunpack.c.h.b16 %v6570
    %v6660 = vunpack.c.l.b16 %v6571
    %v6661 = vunpack.c.h.b16 %v6571
    %v6662 = vunpack.c.l.b16 %v6572
    %v6663 = vunpack.c.h.b16 %v6572
    %v6664 = vunpack.c.l.b16 %v6573
    %v6665 = vunpack.c.h.b16 %v6573
    %v6666 = vunpack.c.l.b16 %v6574
    %v6667 = vunpack.c.h.b16 %v6574
    %v6668 = vunpack.c.l.b16 %v6575
    %v6669 = vunpack.c.h.b16 %v6575
    %v6670 = vunpack.c.l.b16 %v6576
    %v6671 = vunpack.c.h.b16 %v6576
    %v6672 = vunpack.c.l.b16 %v6577
    %v6673 = vunpack.c.h.b16 %v6577
    %v6674 = vunpack.c.l.b16 %v6578
    %v6675 = vunpack.c.h.b16 %v6578
    %v6676 = vunpack.c.l.b16 %v6579
    %v6677 = vunpack.c.h.b16 %v6579
    %v6678 = vunpack.c.l.b16 %v6580
    %v6679 = vunpack.c.h.b16 %v6580
    %v6680 = vunpack.c.l.b16 %v6581
    %v6681 = vunpack.c.h.b16 %v6581
    %v6682 = vunpack.c.l.b16 %v6582
    %v6683 = vunpack.c.h.b16 %v6582
    %v6684 = vunpack.c.l.b16 %v6583
    %v6685 = vunpack.c.h.b16 %v6583
    %v6686 = vunpack.c.l.b16 %v6584
    %v6687 = vunpack.c.h.b16 %v6584
    %v6688 = vunpack.c.l.b16 %v6585
    %v6689 = vunpack.c.h.b16 %v6585
    %v6690 = vunpack.c.l.b16 %v6586
    %v6691 = vunpack.c.h.b16 %v6586
    %v6692 = vunpack.c.l.b16 %v6587
    %v6693 = vunpack.c.h.b16 %v6587
    %v6694 = vunpack.c.l.b16 %v6588
    %v6695 = vunpack.c.h.b16 %v6588
    %v6696 = vunpack.c.l.b16 %v6589
    %v6697 = vunpack.c.h.b16 %v6589
    %v6698 = vpack.c.b16 %v6636, %v6634
    %v6699 = vpack.c.b16 %v6637, %v6635
    %v6700 = vpack.c.b16 %v6640, %v6638
    %v6701 = vpack.c.b16 %v6641, %v6639
    %v6702 = vpack.c.b16 %v6644, %v6642
    %v6703 = vpack.c.b16 %v6645, %v6643
    %v6704 = vpack.c.b16 %v6648, %v6646
    %v6705 = vpack.c.b16 %v6649, %v6647
    %v6706 = vpack.c.b16 %v6652, %v6650
    %v6707 = vpack.c.b16 %v6653, %v6651
    %v6708 = vpack.c.b16 %v6656, %v6654
    %v6709 = vpack.c.b16 %v6657, %v6655
    %v6710 = vpack.c.b16 %v6660, %v6658
    %v6711 = vpack.c.b16 %v6661, %v6659
    %v6712 = vpack.c.b16 %v6664, %v6662
    %v6713 = vpack.c.b16 %v6665, %v6663
    %v6714 = vpack.c.b16 %v6668, %v6666
    %v6715 = vpack.c.b16 %v6669, %v6667
    %v6716 = vpack.c.b16 %v6672, %v6670
    %v6717 = vpack.c.b16 %v6673, %v6671
    %v6718 = vpack.c.b16 %v6676, %v6674
    %v6719 = vpack.c.b16 %v6677, %v6675
    %v6720 = vpack.c.b16 %v6680, %v6678
    %v6721 = vpack.c.b16 %v6681, %v6679
    %v6722 = vpack.c.b16 %v6684, %v6682
    %v6723 = vpack.c.b16 %v6685, %v6683
    %v6724 = vpack.c.b16 %v6688, %v6686
    %v6725 = vpack.c.b16 %v6689, %v6687
    %v6726 = vpack.c.b16 %v6692, %v6690
    %v6727 = vpack.c.b16 %v6693, %v6691
    %v6728 = vpack.c.b16 %v6696, %v6694
    %v6729 = vpack.c.b16 %v6697, %v6695
    %6762 = vmatprep.subr.bf16.mxu0 %v6699
    %6763 = vmatpush1.bf16.msra.mxu0 %v6698
    %6764 = vmatprep.subr.bf16.mxu0 %v6701
    %6765 = vmatpush1.bf16.msra.mxu0 %v6700
    %6766 = vmatprep.subr.bf16.mxu0 %v6703
    %6767 = vmatpush1.bf16.msra.mxu0 %v6702
    %6768 = vmatprep.subr.bf16.mxu0 %v6705
    %6769 = vmatpush1.bf16.msra.mxu0 %v6704
    %6770 = vmatprep.subr.bf16.mxu0 %v6707
    %6771 = vmatpush1.bf16.msra.mxu0 %v6706
    %6772 = vmatprep.subr.bf16.mxu0 %v6709
    %6773 = vmatpush1.bf16.msra.mxu0 %v6708
    %6774 = vmatprep.subr.bf16.mxu0 %v6711
    %6775 = vmatpush1.bf16.msra.mxu0 %v6710
    %6776 = vmatprep.subr.bf16.mxu0 %v6713
    %6777 = vmatpush1.bf16.msra.mxu0 %v6712
    %6778 = vmatprep.subr.bf16.mxu0 %v6715
    %6779 = vmatpush1.bf16.msra.mxu0 %v6714
    %6780 = vmatprep.subr.bf16.mxu0 %v6717
    %6781 = vmatpush1.bf16.msra.mxu0 %v6716
    %6782 = vmatprep.subr.bf16.mxu0 %v6719
    %6783 = vmatpush1.bf16.msra.mxu0 %v6718
    %6784 = vmatprep.subr.bf16.mxu0 %v6721
    %6785 = vmatpush1.bf16.msra.mxu0 %v6720
    %6786 = vmatprep.subr.bf16.mxu0 %v6723
    %6787 = vmatpush1.bf16.msra.mxu0 %v6722
    %6788 = vmatprep.subr.bf16.mxu0 %v6725
    %6789 = vmatpush1.bf16.msra.mxu0 %v6724
    %6790 = vmatprep.subr.bf16.mxu0 %v6727
    %6791 = vmatpush1.bf16.msra.mxu0 %v6726
    %6792 = vmatprep.subr.bf16.mxu0 %v6729
    %6793 = vmatpush1.bf16.msra.mxu0 %v6728
    %6794 = vmatprep.mubr.bf16.mxu0 %v6557
    %6795 = vmatmul.mubr.bf16.gmra.mrb[0].mxu0 %v6556
    %v6796 = vpop.f32.mrb[0].mxu0
    %v6797 = vadd.f32 %v6595, %v6796
    %v6798 = vpop.f32.mrb[0].mxu0
    %v6799 = vadd.f32 %v6599, %v6798
    %v6800 = vpop.f32.mrb[0].mxu0
    %v6801 = vadd.f32 %v6595, %v6800
    %v6802 = vpop.f32.mrb[0].mxu0
    %v6803 = vadd.f32 %v6599, %v6802
    %6804 = vdwg.mxu0
    %v6805 = vmax.f32 %v6797, 0.0
    %v6806 = vmax.f32 %v6799, 0.0
    %v6807 = vmax.f32 %v6801, 0.0
    %v6808 = vmax.f32 %v6803, 0.0
    %v6809 = vpack.c.bf16 %v6805, %v6805
    %v6810 = vpack.c.bf16 %v6806, %v6806
    %6811 = vmatprep.subr.bf16.mxu0 %v6810
    %6812 = vmatpush1.bf16.xpose.msra.mxu0 %v6809
    %6813 = vmatprep.subr.bf16.mxu0 0
    %6814 = vmatpush1.bf16.xpose.msra.mxu0 0
    %6815 = vmatprep.subr.bf16.mxu0 0
    %6816 = vmatpush1.bf16.xpose.msra.mxu0 0
    %6817 = vmatprep.subr.bf16.mxu0 0
    %6818 = vmatpush1.bf16.xpose.msra.mxu0 0
    %6819 = vmatprep.subr.bf16.mxu0 0
    %6820 = vmatpush1.bf16.xpose.msra.mxu0 0
    %6821 = vmatprep.subr.bf16.mxu0 0
    %6822 = vmatpush1.bf16.xpose.msra.mxu0 0
    %6823 = vmatprep.subr.bf16.mxu0 0
    %6824 = vmatpush1.bf16.xpose.msra.mxu0 0
    %6825 = vmatprep.subr.bf16.mxu0 0
    %6826 = vmatpush1.bf16.xpose.msra.mxu0 0
    %6827 = vmatprep.subr.bf16.mxu0 0
    %6828 = vmatpush1.bf16.xpose.msra.mxu0 0
    %6829 = vmatprep.subr.bf16.mxu0 0
    %6830 = vmatpush1.bf16.xpose.msra.mxu0 0
    %6831 = vmatprep.subr.bf16.mxu0 0
    %6832 = vmatpush1.bf16.xpose.msra.mxu0 0
    %6833 = vmatprep.subr.bf16.mxu0 0
    %6834 = vmatpush1.bf16.xpose.msra.mxu0 0
    %6835 = vmatprep.subr.bf16.mxu0 0
    %6836 = vmatpush1.bf16.xpose.msra.mxu0 0
    %6837 = vmatprep.subr.bf16.mxu0 0
    %6838 = vmatpush1.bf16.xpose.msra.mxu0 0
    %6839 = vmatprep.subr.bf16.mxu0 0
    %6840 = vmatpush1.bf16.xpose.msra.mxu0 0
    %6841 = vmatprep.subr.bf16.mxu0 0
    %6842 = vmatpush1.bf16.xpose.msra.mxu0 0
    %6843 = vmatprep.mubr.bf16.mxu0 %v6810
    %6844 = vmatmul.mubr.bf16.gmra.mrb[0].mxu0 %v6809
    %v6845 = vpop.f32.mrb[0].mxu0
    %v6846 = vadd.f32 0.0, %v6845
    %v6847 = vpop.f32.mrb[0].mxu0
    %v6848 = vpop.f32.mrb[0].mxu0
    %v6849 = vpop.f32.mrb[0].mxu0
    %6850 = vdwg.mxu0
    %v6851 = vsel %vm1810, %v6846, 0.0
    %6852 = vadd.xlane.f32.xlu0 %v6851
    %v6853 = vpop.xlane.xlu0 %6852
    %v6854 = vrot.slane %v6853, 4
    %v6855 = vadd.f32 %v6853, %v6854
    %v6856 = vrot.slane %v6855, 2
    %v6857 = vadd.f32 %v6855, %v6856
    %v6858 = vrot.slane %v6857, 1
    %v6859 = vadd.f32 %v6857, %v6858
    %s6860 = vtos %v6859
    %v6861 = vrcp.pop 64.0
    %s6862 = vtos %v6861
    %s6863 = smul.f32 %s6860, %s6862
    %v6864 = vstv %s6863
    %vm6865 = vcmp.gt.f32.partialorder %v6846, %v6864
    %v6866 = vsel %vm6865, 1, 0
    %v6867 = vcvt.s32.f32 %v6866
    %v6868 = vadd.f32 %v6867, %v1269
    %v6869 = vpack.c.bf16 %v6868, %v6868
    %v6870 = vpack.c.bf16 %v435, %v435
    %v6871 = vpack.c.bf16 %v436, %v436
    %v6873 = vsel %vm1810, %v6869, 0
    %v6876 = vsel %vm1833, %v6870, 0
    %v6879 = vsel %vm1833, %v6871, 0
    %6881 = vmatprep.subr.bf16.mxu0 %v6879
    %6882 = vmatpush1.bf16.msra.mxu0 %v6876
    %6883 = vmatprep.subr.bf16.mxu0 0
    %6884 = vmatpush1.bf16.msra.mxu0 0
    %6885 = vmatprep.subr.bf16.mxu0 0
    %6886 = vmatpush1.bf16.msra.mxu0 0
    %6887 = vmatprep.subr.bf16.mxu0 0
    %6888 = vmatpush1.bf16.msra.mxu0 0
    %6889 = vmatprep.subr.bf16.mxu0 0
    %6890 = vmatpush1.bf16.msra.mxu0 0
    %6891 = vmatprep.subr.bf16.mxu0 0
    %6892 = vmatpush1.bf16.msra.mxu0 0
    %6893 = vmatprep.subr.bf16.mxu0 0
    %6894 = vmatpush1.bf16.msra.mxu0 0
    %6895 = vmatprep.subr.bf16.mxu0 0
    %6896 = vmatpush1.bf16.msra.mxu0 0
    %6897 = vmatprep.subr.bf16.mxu0 0
    %6898 = vmatpush1.bf16.msra.mxu0 0
    %6899 = vmatprep.subr.bf16.mxu0 0
    %6900 = vmatpush1.bf16.msra.mxu0 0
    %6901 = vmatprep.subr.bf16.mxu0 0
    %6902 = vmatpush1.bf16.msra.mxu0 0
    %6903 = vmatprep.subr.bf16.mxu0 0
    %6904 = vmatpush1.bf16.msra.mxu0 0
    %6905 = vmatprep.subr.bf16.mxu0 0
    %6906 = vmatpush1.bf16.msra.mxu0 0
    %6907 = vmatprep.subr.bf16.mxu0 0
    %6908 = vmatpush1.bf16.msra.mxu0 0
    %6909 = vmatprep.subr.bf16.mxu0 0
    %6910 = vmatpush1.bf16.msra.mxu0 0
    %6911 = vmatprep.subr.bf16.mxu0 0
    %6912 = vmatpush1.bf16.msra.mxu0 0
    %6913 = vmatprep.mubr.bf16.mxu0 0
    %6914 = vmatmul.mubr.bf16.gmra.mrb[0].mxu0 %v6873
    %v6915 = vpop.f32.mrb[0].mxu0
    %v6916 = vadd.f32 0.0, %v6915
    %v6917 = vpop.f32.mrb[0].mxu0
    %v6918 = vadd.f32 0.0, %v6917
    %v6919 = vpop.f32.mrb[0].mxu0
    %v6920 = vpop.f32.mrb[0].mxu0
    %6921 = vdwg.mxu0
    %v6922 = vpack.c.bf16 %v6807, %v6807
    %v6923 = vpack.c.bf16 %v6808, %v6808
    %6924 = vmatprep.subr.bf16.mxu0 %v6923
    %6925 = vmatpush1.bf16.xpose.msra.mxu0 %v6922
    %6926 = vmatprep.subr.bf16.mxu0 0
    %6927 = vmatpush1.bf16.xpose.msra.mxu0 0
    %6928 = vmatprep.subr.bf16.mxu0 0
    %6929 = vmatpush1.bf16.xpose.msra.mxu0 0
    %6930 = vmatprep.subr.bf16.mxu0 0
    %6931 = vmatpush1.bf16.xpose.msra.mxu0 0
    %6932 = vmatprep.subr.bf16.mxu0 0
    %6933 = vmatpush1.bf16.xpose.msra.mxu0 0
    %6934 = vmatprep.subr.bf16.mxu0 0
    %6935 = vmatpush1.bf16.xpose.msra.mxu0 0
    %6936 = vmatprep.subr.bf16.mxu0 0
    %6937 = vmatpush1.bf16.xpose.msra.mxu0 0
    %6938 = vmatprep.subr.bf16.mxu0 0
    %6939 = vmatpush1.bf16.xpose.msra.mxu0 0
    %6940 = vmatprep.subr.bf16.mxu0 0
    %6941 = vmatpush1.bf16.xpose.msra.mxu0 0
    %6942 = vmatprep.subr.bf16.mxu0 0
    %6943 = vmatpush1.bf16.xpose.msra.mxu0 0
    %6944 = vmatprep.subr.bf16.mxu0 0
    %6945 = vmatpush1.bf16.xpose.msra.mxu0 0
    %6946 = vmatprep.subr.bf16.mxu0 0
    %6947 = vmatpush1.bf16.xpose.msra.mxu0 0
    %6948 = vmatprep.subr.bf16.mxu0 0
    %6949 = vmatpush1.bf16.xpose.msra.mxu0 0
    %6950 = vmatprep.subr.bf16.mxu0 0
    %6951 = vmatpush1.bf16.xpose.msra.mxu0 0
    %6952 = vmatprep.subr.bf16.mxu0 0
    %6953 = vmatpush1.bf16.xpose.msra.mxu0 0
    %6954 = vmatprep.subr.bf16.mxu0 0
    %6955 = vmatpush1.bf16.xpose.msra.mxu0 0
    %6956 = vmatprep.mubr.bf16.mxu0 %v6923
    %6957 = vmatmul.mubr.bf16.gmra.mrb[0].mxu0 %v6922
    %v6958 = vpop.f32.mrb[0].mxu0
    %v6959 = vadd.f32 0.0, %v6958
    %v6960 = vpop.f32.mrb[0].mxu0
    %v6961 = vpop.f32.mrb[0].mxu0
    %v6962 = vpop.f32.mrb[0].mxu0
    %6963 = vdwg.mxu0
    %v6964 = vsel %vm1810, %v6959, 0.0
    %6965 = vadd.xlane.f32.xlu0 %v6964
    %v6966 = vpop.xlane.xlu0 %6965
    %v6967 = vrot.slane %v6966, 4
    %v6968 = vadd.f32 %v6966, %v6967
    %v6969 = vrot.slane %v6968, 2
    %v6970 = vadd.f32 %v6968, %v6969
    %v6971 = vrot.slane %v6970, 1
    %v6972 = vadd.f32 %v6970, %v6971
    %s6973 = vtos %v6972
    %v6974 = vrcp.pop 64.0
    %s6975 = vtos %v6974
    %s6976 = smul.f32 %s6973, %s6975
    %v6977 = vstv %s6976
    %vm6978 = vcmp.gt.f32.partialorder %v6959, %v6977
    %v6979 = vsel %vm6978, 1, 0
    %v6980 = vcvt.s32.f32 %v6979
    %v6981 = vadd.f32 %v6980, %v1269
    %v6982 = vpack.c.bf16 %v6981, %v6981
    %v6983 = vpack.c.bf16 %v1259, %v1259
    %v6984 = vpack.c.bf16 %v1260, %v1260
    %v6986 = vsel %vm1810, %v6982, 0
    %v6989 = vsel %vm1833, %v6983, 0
    %v6992 = vsel %vm1833, %v6984, 0
    %6994 = vmatprep.subr.bf16.mxu0 %v6992
    %6995 = vmatpush1.bf16.msra.mxu0 %v6989
    %6996 = vmatprep.subr.bf16.mxu0 0
    %6997 = vmatpush1.bf16.msra.mxu0 0
    %6998 = vmatprep.subr.bf16.mxu0 0
    %6999 = vmatpush1.bf16.msra.mxu0 0
    %7000 = vmatprep.subr.bf16.mxu0 0
    %7001 = vmatpush1.bf16.msra.mxu0 0
    %7002 = vmatprep.subr.bf16.mxu0 0
    %7003 = vmatpush1.bf16.msra.mxu0 0
    %7004 = vmatprep.subr.bf16.mxu0 0
    %7005 = vmatpush1.bf16.msra.mxu0 0
    %7006 = vmatprep.subr.bf16.mxu0 0
    %7007 = vmatpush1.bf16.msra.mxu0 0
    %7008 = vmatprep.subr.bf16.mxu0 0
    %7009 = vmatpush1.bf16.msra.mxu0 0
    %7010 = vmatprep.subr.bf16.mxu0 0
    %7011 = vmatpush1.bf16.msra.mxu0 0
    %7012 = vmatprep.subr.bf16.mxu0 0
    %7013 = vmatpush1.bf16.msra.mxu0 0
    %7014 = vmatprep.subr.bf16.mxu0 0
    %7015 = vmatpush1.bf16.msra.mxu0 0
    %7016 = vmatprep.subr.bf16.mxu0 0
    %7017 = vmatpush1.bf16.msra.mxu0 0
    %7018 = vmatprep.subr.bf16.mxu0 0
    %7019 = vmatpush1.bf16.msra.mxu0 0
    %7020 = vmatprep.subr.bf16.mxu0 0
    %7021 = vmatpush1.bf16.msra.mxu0 0
    %7022 = vmatprep.subr.bf16.mxu0 0
    %7023 = vmatpush1.bf16.msra.mxu0 0
    %7024 = vmatprep.subr.bf16.mxu0 0
    %7025 = vmatpush1.bf16.msra.mxu0 0
    %7026 = vmatprep.mubr.bf16.mxu0 0
    %7027 = vmatmul.mubr.bf16.gmra.mrb[0].mxu0 %v6986
    %v7028 = vpop.f32.mrb[0].mxu0
    %v7029 = vadd.f32 0.0, %v7028
    %v7030 = vpop.f32.mrb[0].mxu0
    %v7031 = vadd.f32 0.0, %v7030
    %v7032 = vpop.f32.mrb[0].mxu0
    %v7033 = vpop.f32.mrb[0].mxu0
    %7034 = vdwg.mxu0
    %v7035 = vpack.c.bf16 %v7029, %v6916
    %v7036 = vpack.c.bf16 %v7031, %v6918
    %v7037 = vld [vmem:[#allocation23] sm:$0xff]
    %v7038 = vld [vmem:[#allocation23 + $0x8] sm:$0xff]
    %v7039 = vld [vmem:[#allocation23 + $0x10] sm:$0xff]
    %v7040 = vld [vmem:[#allocation23 + $0x18] sm:$0xff]
    %v7041 = vld [vmem:[#allocation23 + $0x20] sm:$0xff]
    %v7042 = vld [vmem:[#allocation23 + $0x28] sm:$0xff]
    %v7043 = vld [vmem:[#allocation23 + $0x30] sm:$0xff]
    %v7044 = vld [vmem:[#allocation23 + $0x38] sm:$0xff]
    %v7045 = vld [vmem:[#allocation23 + $0x40] sm:$0xff]
    %v7046 = vld [vmem:[#allocation23 + $0x48] sm:$0xff]
    %v7047 = vld [vmem:[#allocation23 + $0x50] sm:$0xff]
    %v7048 = vld [vmem:[#allocation23 + $0x58] sm:$0xff]
    %v7049 = vld [vmem:[#allocation23 + $0x60] sm:$0xff]
    %v7050 = vld [vmem:[#allocation23 + $0x68] sm:$0xff]
    %v7051 = vld [vmem:[#allocation23 + $0x70] sm:$0xff]
    %v7052 = vld [vmem:[#allocation23 + $0x78] sm:$0xff]
    %v7053 = vld [vmem:[#allocation23 + $0x80] sm:$0xff]
    %v7054 = vld [vmem:[#allocation23 + $0x88] sm:$0xff]
    %v7055 = vld [vmem:[#allocation23 + $0x90] sm:$0xff]
    %v7056 = vld [vmem:[#allocation23 + $0x98] sm:$0xff]
    %v7057 = vld [vmem:[#allocation23 + $0xa0] sm:$0xff]
    %v7058 = vld [vmem:[#allocation23 + $0xa8] sm:$0xff]
    %v7059 = vld [vmem:[#allocation23 + $0xb0] sm:$0xff]
    %v7060 = vld [vmem:[#allocation23 + $0xb8] sm:$0xff]
    %v7061 = vld [vmem:[#allocation23 + $0xc0] sm:$0xff]
    %v7062 = vld [vmem:[#allocation23 + $0xc8] sm:$0xff]
    %v7063 = vld [vmem:[#allocation23 + $0xd0] sm:$0xff]
    %v7064 = vld [vmem:[#allocation23 + $0xd8] sm:$0xff]
    %v7065 = vld [vmem:[#allocation23 + $0xe0] sm:$0xff]
    %v7066 = vld [vmem:[#allocation23 + $0xe8] sm:$0xff]
    %v7067 = vld [vmem:[#allocation23 + $0xf0] sm:$0xff]
    %v7068 = vld [vmem:[#allocation23 + $0xf8] sm:$0xff]
    %v7069 = vld [vmem:[%s43] sm:$0x3]
    %v7071 = vlaneseq
    %v7072 = vshrl.u32 %v7071, 7
    %v7073 = vsub.s32 0, %v7072
    %v7074 = vrot.slane %v7069, %v7073
    %v7075 = vlaneseq
    %v7076 = vshrl.u32 %v7075, 7
    %v7077 = vsub.s32 1, %v7076
    %v7078 = vrot.slane %v7069, %v7077
    %v7113 = vunpack.c.l.b16 %v7037
    %v7114 = vunpack.c.h.b16 %v7037
    %v7115 = vunpack.c.l.b16 %v7038
    %v7116 = vunpack.c.h.b16 %v7038
    %v7117 = vunpack.c.l.b16 %v7039
    %v7118 = vunpack.c.h.b16 %v7039
    %v7119 = vunpack.c.l.b16 %v7040
    %v7120 = vunpack.c.h.b16 %v7040
    %v7121 = vunpack.c.l.b16 %v7041
    %v7122 = vunpack.c.h.b16 %v7041
    %v7123 = vunpack.c.l.b16 %v7042
    %v7124 = vunpack.c.h.b16 %v7042
    %v7125 = vunpack.c.l.b16 %v7043
    %v7126 = vunpack.c.h.b16 %v7043
    %v7127 = vunpack.c.l.b16 %v7044
    %v7128 = vunpack.c.h.b16 %v7044
    %v7129 = vunpack.c.l.b16 %v7045
    %v7130 = vunpack.c.h.b16 %v7045
    %v7131 = vunpack.c.l.b16 %v7046
    %v7132 = vunpack.c.h.b16 %v7046
    %v7133 = vunpack.c.l.b16 %v7047
    %v7134 = vunpack.c.h.b16 %v7047
    %v7135 = vunpack.c.l.b16 %v7048
    %v7136 = vunpack.c.h.b16 %v7048
    %v7137 = vunpack.c.l.b16 %v7049
    %v7138 = vunpack.c.h.b16 %v7049
    %v7139 = vunpack.c.l.b16 %v7050
    %v7140 = vunpack.c.h.b16 %v7050
    %v7141 = vunpack.c.l.b16 %v7051
    %v7142 = vunpack.c.h.b16 %v7051
    %v7143 = vunpack.c.l.b16 %v7052
    %v7144 = vunpack.c.h.b16 %v7052
    %v7145 = vunpack.c.l.b16 %v7053
    %v7146 = vunpack.c.h.b16 %v7053
    %v7147 = vunpack.c.l.b16 %v7054
    %v7148 = vunpack.c.h.b16 %v7054
    %v7149 = vunpack.c.l.b16 %v7055
    %v7150 = vunpack.c.h.b16 %v7055
    %v7151 = vunpack.c.l.b16 %v7056
    %v7152 = vunpack.c.h.b16 %v7056
    %v7153 = vunpack.c.l.b16 %v7057
    %v7154 = vunpack.c.h.b16 %v7057
    %v7155 = vunpack.c.l.b16 %v7058
    %v7156 = vunpack.c.h.b16 %v7058
    %v7157 = vunpack.c.l.b16 %v7059
    %v7158 = vunpack.c.h.b16 %v7059
    %v7159 = vunpack.c.l.b16 %v7060
    %v7160 = vunpack.c.h.b16 %v7060
    %v7161 = vunpack.c.l.b16 %v7061
    %v7162 = vunpack.c.h.b16 %v7061
    %v7163 = vunpack.c.l.b16 %v7062
    %v7164 = vunpack.c.h.b16 %v7062
    %v7165 = vunpack.c.l.b16 %v7063
    %v7166 = vunpack.c.h.b16 %v7063
    %v7167 = vunpack.c.l.b16 %v7064
    %v7168 = vunpack.c.h.b16 %v7064
    %v7169 = vunpack.c.l.b16 %v7065
    %v7170 = vunpack.c.h.b16 %v7065
    %v7171 = vunpack.c.l.b16 %v7066
    %v7172 = vunpack.c.h.b16 %v7066
    %v7173 = vunpack.c.l.b16 %v7067
    %v7174 = vunpack.c.h.b16 %v7067
    %v7175 = vunpack.c.l.b16 %v7068
    %v7176 = vunpack.c.h.b16 %v7068
    %v7177 = vpack.c.b16 %v7115, %v7113
    %v7178 = vpack.c.b16 %v7116, %v7114
    %v7179 = vpack.c.b16 %v7119, %v7117
    %v7180 = vpack.c.b16 %v7120, %v7118
    %v7181 = vpack.c.b16 %v7123, %v7121
    %v7182 = vpack.c.b16 %v7124, %v7122
    %v7183 = vpack.c.b16 %v7127, %v7125
    %v7184 = vpack.c.b16 %v7128, %v7126
    %v7185 = vpack.c.b16 %v7131, %v7129
    %v7186 = vpack.c.b16 %v7132, %v7130
    %v7187 = vpack.c.b16 %v7135, %v7133
    %v7188 = vpack.c.b16 %v7136, %v7134
    %v7189 = vpack.c.b16 %v7139, %v7137
    %v7190 = vpack.c.b16 %v7140, %v7138
    %v7191 = vpack.c.b16 %v7143, %v7141
    %v7192 = vpack.c.b16 %v7144, %v7142
    %v7193 = vpack.c.b16 %v7147, %v7145
    %v7194 = vpack.c.b16 %v7148, %v7146
    %v7195 = vpack.c.b16 %v7151, %v7149
    %v7196 = vpack.c.b16 %v7152, %v7150
    %v7197 = vpack.c.b16 %v7155, %v7153
    %v7198 = vpack.c.b16 %v7156, %v7154
    %v7199 = vpack.c.b16 %v7159, %v7157
    %v7200 = vpack.c.b16 %v7160, %v7158
    %v7201 = vpack.c.b16 %v7163, %v7161
    %v7202 = vpack.c.b16 %v7164, %v7162
    %v7203 = vpack.c.b16 %v7167, %v7165
    %v7204 = vpack.c.b16 %v7168, %v7166
    %v7205 = vpack.c.b16 %v7171, %v7169
    %v7206 = vpack.c.b16 %v7172, %v7170
    %v7207 = vpack.c.b16 %v7175, %v7173
    %v7208 = vpack.c.b16 %v7176, %v7174
    %7241 = vmatprep.subr.bf16.mxu0 %v7178
    %7242 = vmatpush1.bf16.msra.mxu0 %v7177
    %7243 = vmatprep.subr.bf16.mxu0 %v7180
    %7244 = vmatpush1.bf16.msra.mxu0 %v7179
    %7245 = vmatprep.subr.bf16.mxu0 %v7182
    %7246 = vmatpush1.bf16.msra.mxu0 %v7181
    %7247 = vmatprep.subr.bf16.mxu0 %v7184
    %7248 = vmatpush1.bf16.msra.mxu0 %v7183
    %7249 = vmatprep.subr.bf16.mxu0 %v7186
    %7250 = vmatpush1.bf16.msra.mxu0 %v7185
    %7251 = vmatprep.subr.bf16.mxu0 %v7188
    %7252 = vmatpush1.bf16.msra.mxu0 %v7187
    %7253 = vmatprep.subr.bf16.mxu0 %v7190
    %7254 = vmatpush1.bf16.msra.mxu0 %v7189
    %7255 = vmatprep.subr.bf16.mxu0 %v7192
    %7256 = vmatpush1.bf16.msra.mxu0 %v7191
    %7257 = vmatprep.subr.bf16.mxu0 %v7194
    %7258 = vmatpush1.bf16.msra.mxu0 %v7193
    %7259 = vmatprep.subr.bf16.mxu0 %v7196
    %7260 = vmatpush1.bf16.msra.mxu0 %v7195
    %7261 = vmatprep.subr.bf16.mxu0 %v7198
    %7262 = vmatpush1.bf16.msra.mxu0 %v7197
    %7263 = vmatprep.subr.bf16.mxu0 %v7200
    %7264 = vmatpush1.bf16.msra.mxu0 %v7199
    %7265 = vmatprep.subr.bf16.mxu0 %v7202
    %7266 = vmatpush1.bf16.msra.mxu0 %v7201
    %7267 = vmatprep.subr.bf16.mxu0 %v7204
    %7268 = vmatpush1.bf16.msra.mxu0 %v7203
    %7269 = vmatprep.subr.bf16.mxu0 %v7206
    %7270 = vmatpush1.bf16.msra.mxu0 %v7205
    %7271 = vmatprep.subr.bf16.mxu0 %v7208
    %7272 = vmatpush1.bf16.msra.mxu0 %v7207
    %7273 = vmatprep.mubr.bf16.mxu0 %v7036
    %7274 = vmatmul.mubr.bf16.gmra.mrb[0].mxu0 %v7035
    %v7275 = vpop.f32.mrb[0].mxu0
    %v7276 = vadd.f32 %v7074, %v7275
    %v7277 = vpop.f32.mrb[0].mxu0
    %v7278 = vadd.f32 %v7078, %v7277
    %v7279 = vpop.f32.mrb[0].mxu0
    %v7280 = vadd.f32 %v7074, %v7279
    %v7281 = vpop.f32.mrb[0].mxu0
    %v7282 = vadd.f32 %v7078, %v7281
    %7283 = vdwg.mxu0
    %v7284 = vmax.f32 %v7276, 0.0
    %v7285 = vmax.f32 %v7278, 0.0
    %v7286 = vmax.f32 %v7280, 0.0
    %v7287 = vmax.f32 %v7282, 0.0
    %v7288 = vpack.c.bf16 %v7286, %v7284
    %v7289 = vpack.c.bf16 %v7287, %v7285
    %v7290 = vld [vmem:[#allocation24] sm:$0xff]
    %v7291 = vld [vmem:[#allocation24 + $0x8] sm:$0xff]
    %v7292 = vld [vmem:[#allocation24 + $0x10] sm:$0xff]
    %v7293 = vld [vmem:[#allocation24 + $0x18] sm:$0xff]
    %v7294 = vld [vmem:[#allocation24 + $0x20] sm:$0xff]
    %v7295 = vld [vmem:[#allocation24 + $0x28] sm:$0xff]
    %v7296 = vld [vmem:[#allocation24 + $0x30] sm:$0xff]
    %v7297 = vld [vmem:[#allocation24 + $0x38] sm:$0xff]
    %v7298 = vld [vmem:[#allocation24 + $0x40] sm:$0xff]
    %v7299 = vld [vmem:[#allocation24 + $0x48] sm:$0xff]
    %v7300 = vld [vmem:[#allocation24 + $0x50] sm:$0xff]
    %v7301 = vld [vmem:[#allocation24 + $0x58] sm:$0xff]
    %v7302 = vld [vmem:[#allocation24 + $0x60] sm:$0xff]
    %v7303 = vld [vmem:[#allocation24 + $0x68] sm:$0xff]
    %v7304 = vld [vmem:[#allocation24 + $0x70] sm:$0xff]
    %v7305 = vld [vmem:[#allocation24 + $0x78] sm:$0xff]
    %v7306 = vld [vmem:[#allocation24 + $0x80] sm:$0xff]
    %v7307 = vld [vmem:[#allocation24 + $0x88] sm:$0xff]
    %v7308 = vld [vmem:[#allocation24 + $0x90] sm:$0xff]
    %v7309 = vld [vmem:[#allocation24 + $0x98] sm:$0xff]
    %v7310 = vld [vmem:[#allocation24 + $0xa0] sm:$0xff]
    %v7311 = vld [vmem:[#allocation24 + $0xa8] sm:$0xff]
    %v7312 = vld [vmem:[#allocation24 + $0xb0] sm:$0xff]
    %v7313 = vld [vmem:[#allocation24 + $0xb8] sm:$0xff]
    %v7314 = vld [vmem:[#allocation24 + $0xc0] sm:$0xff]
    %v7315 = vld [vmem:[#allocation24 + $0xc8] sm:$0xff]
    %v7316 = vld [vmem:[#allocation24 + $0xd0] sm:$0xff]
    %v7317 = vld [vmem:[#allocation24 + $0xd8] sm:$0xff]
    %v7318 = vld [vmem:[#allocation24 + $0xe0] sm:$0xff]
    %v7319 = vld [vmem:[#allocation24 + $0xe8] sm:$0xff]
    %v7320 = vld [vmem:[#allocation24 + $0xf0] sm:$0xff]
    %v7321 = vld [vmem:[#allocation24 + $0xf8] sm:$0xff]
    %v7322 = vld [vmem:[%s47] sm:$0x3]
    %v7324 = vlaneseq
    %v7325 = vshrl.u32 %v7324, 7
    %v7326 = vsub.s32 0, %v7325
    %v7327 = vrot.slane %v7322, %v7326
    %v7328 = vlaneseq
    %v7329 = vshrl.u32 %v7328, 7
    %v7330 = vsub.s32 1, %v7329
    %v7331 = vrot.slane %v7322, %v7330
    %v7366 = vunpack.c.l.b16 %v7290
    %v7367 = vunpack.c.h.b16 %v7290
    %v7368 = vunpack.c.l.b16 %v7291
    %v7369 = vunpack.c.h.b16 %v7291
    %v7370 = vunpack.c.l.b16 %v7292
    %v7371 = vunpack.c.h.b16 %v7292
    %v7372 = vunpack.c.l.b16 %v7293
    %v7373 = vunpack.c.h.b16 %v7293
    %v7374 = vunpack.c.l.b16 %v7294
    %v7375 = vunpack.c.h.b16 %v7294
    %v7376 = vunpack.c.l.b16 %v7295
    %v7377 = vunpack.c.h.b16 %v7295
    %v7378 = vunpack.c.l.b16 %v7296
    %v7379 = vunpack.c.h.b16 %v7296
    %v7380 = vunpack.c.l.b16 %v7297
    %v7381 = vunpack.c.h.b16 %v7297
    %v7382 = vunpack.c.l.b16 %v7298
    %v7383 = vunpack.c.h.b16 %v7298
    %v7384 = vunpack.c.l.b16 %v7299
    %v7385 = vunpack.c.h.b16 %v7299
    %v7386 = vunpack.c.l.b16 %v7300
    %v7387 = vunpack.c.h.b16 %v7300
    %v7388 = vunpack.c.l.b16 %v7301
    %v7389 = vunpack.c.h.b16 %v7301
    %v7390 = vunpack.c.l.b16 %v7302
    %v7391 = vunpack.c.h.b16 %v7302
    %v7392 = vunpack.c.l.b16 %v7303
    %v7393 = vunpack.c.h.b16 %v7303
    %v7394 = vunpack.c.l.b16 %v7304
    %v7395 = vunpack.c.h.b16 %v7304
    %v7396 = vunpack.c.l.b16 %v7305
    %v7397 = vunpack.c.h.b16 %v7305
    %v7398 = vunpack.c.l.b16 %v7306
    %v7399 = vunpack.c.h.b16 %v7306
    %v7400 = vunpack.c.l.b16 %v7307
    %v7401 = vunpack.c.h.b16 %v7307
    %v7402 = vunpack.c.l.b16 %v7308
    %v7403 = vunpack.c.h.b16 %v7308
    %v7404 = vunpack.c.l.b16 %v7309
    %v7405 = vunpack.c.h.b16 %v7309
    %v7406 = vunpack.c.l.b16 %v7310
    %v7407 = vunpack.c.h.b16 %v7310
    %v7408 = vunpack.c.l.b16 %v7311
    %v7409 = vunpack.c.h.b16 %v7311
    %v7410 = vunpack.c.l.b16 %v7312
    %v7411 = vunpack.c.h.b16 %v7312
    %v7412 = vunpack.c.l.b16 %v7313
    %v7413 = vunpack.c.h.b16 %v7313
    %v7414 = vunpack.c.l.b16 %v7314
    %v7415 = vunpack.c.h.b16 %v7314
    %v7416 = vunpack.c.l.b16 %v7315
    %v7417 = vunpack.c.h.b16 %v7315
    %v7418 = vunpack.c.l.b16 %v7316
    %v7419 = vunpack.c.h.b16 %v7316
    %v7420 = vunpack.c.l.b16 %v7317
    %v7421 = vunpack.c.h.b16 %v7317
    %v7422 = vunpack.c.l.b16 %v7318
    %v7423 = vunpack.c.h.b16 %v7318
    %v7424 = vunpack.c.l.b16 %v7319
    %v7425 = vunpack.c.h.b16 %v7319
    %v7426 = vunpack.c.l.b16 %v7320
    %v7427 = vunpack.c.h.b16 %v7320
    %v7428 = vunpack.c.l.b16 %v7321
    %v7429 = vunpack.c.h.b16 %v7321
    %v7430 = vpack.c.b16 %v7368, %v7366
    %v7431 = vpack.c.b16 %v7369, %v7367
    %v7432 = vpack.c.b16 %v7372, %v7370
    %v7433 = vpack.c.b16 %v7373, %v7371
    %v7434 = vpack.c.b16 %v7376, %v7374
    %v7435 = vpack.c.b16 %v7377, %v7375
    %v7436 = vpack.c.b16 %v7380, %v7378
    %v7437 = vpack.c.b16 %v7381, %v7379
    %v7438 = vpack.c.b16 %v7384, %v7382
    %v7439 = vpack.c.b16 %v7385, %v7383
    %v7440 = vpack.c.b16 %v7388, %v7386
    %v7441 = vpack.c.b16 %v7389, %v7387
    %v7442 = vpack.c.b16 %v7392, %v7390
    %v7443 = vpack.c.b16 %v7393, %v7391
    %v7444 = vpack.c.b16 %v7396, %v7394
    %v7445 = vpack.c.b16 %v7397, %v7395
    %v7446 = vpack.c.b16 %v7400, %v7398
    %v7447 = vpack.c.b16 %v7401, %v7399
    %v7448 = vpack.c.b16 %v7404, %v7402
    %v7449 = vpack.c.b16 %v7405, %v7403
    %v7450 = vpack.c.b16 %v7408, %v7406
    %v7451 = vpack.c.b16 %v7409, %v7407
    %v7452 = vpack.c.b16 %v7412, %v7410
    %v7453 = vpack.c.b16 %v7413, %v7411
    %v7454 = vpack.c.b16 %v7416, %v7414
    %v7455 = vpack.c.b16 %v7417, %v7415
    %v7456 = vpack.c.b16 %v7420, %v7418
    %v7457 = vpack.c.b16 %v7421, %v7419
    %v7458 = vpack.c.b16 %v7424, %v7422
    %v7459 = vpack.c.b16 %v7425, %v7423
    %v7460 = vpack.c.b16 %v7428, %v7426
    %v7461 = vpack.c.b16 %v7429, %v7427
    %7494 = vmatprep.subr.bf16.mxu0 %v7431
    %7495 = vmatpush1.bf16.msra.mxu0 %v7430
    %7496 = vmatprep.subr.bf16.mxu0 %v7433
    %7497 = vmatpush1.bf16.msra.mxu0 %v7432
    %7498 = vmatprep.subr.bf16.mxu0 %v7435
    %7499 = vmatpush1.bf16.msra.mxu0 %v7434
    %7500 = vmatprep.subr.bf16.mxu0 %v7437
    %7501 = vmatpush1.bf16.msra.mxu0 %v7436
    %7502 = vmatprep.subr.bf16.mxu0 %v7439
    %7503 = vmatpush1.bf16.msra.mxu0 %v7438
    %7504 = vmatprep.subr.bf16.mxu0 %v7441
    %7505 = vmatpush1.bf16.msra.mxu0 %v7440
    %7506 = vmatprep.subr.bf16.mxu0 %v7443
    %7507 = vmatpush1.bf16.msra.mxu0 %v7442
    %7508 = vmatprep.subr.bf16.mxu0 %v7445
    %7509 = vmatpush1.bf16.msra.mxu0 %v7444
    %7510 = vmatprep.subr.bf16.mxu0 %v7447
    %7511 = vmatpush1.bf16.msra.mxu0 %v7446
    %7512 = vmatprep.subr.bf16.mxu0 %v7449
    %7513 = vmatpush1.bf16.msra.mxu0 %v7448
    %7514 = vmatprep.subr.bf16.mxu0 %v7451
    %7515 = vmatpush1.bf16.msra.mxu0 %v7450
    %7516 = vmatprep.subr.bf16.mxu0 %v7453
    %7517 = vmatpush1.bf16.msra.mxu0 %v7452
    %7518 = vmatprep.subr.bf16.mxu0 %v7455
    %7519 = vmatpush1.bf16.msra.mxu0 %v7454
    %7520 = vmatprep.subr.bf16.mxu0 %v7457
    %7521 = vmatpush1.bf16.msra.mxu0 %v7456
    %7522 = vmatprep.subr.bf16.mxu0 %v7459
    %7523 = vmatpush1.bf16.msra.mxu0 %v7458
    %7524 = vmatprep.subr.bf16.mxu0 %v7461
    %7525 = vmatpush1.bf16.msra.mxu0 %v7460
    %7526 = vmatprep.mubr.bf16.mxu0 %v7289
    %7527 = vmatmul.mubr.bf16.gmra.mrb[0].mxu0 %v7288
    %v7528 = vpop.f32.mrb[0].mxu0
    %v7529 = vadd.f32 %v7327, %v7528
    %v7530 = vpop.f32.mrb[0].mxu0
    %v7531 = vadd.f32 %v7331, %v7530
    %v7532 = vpop.f32.mrb[0].mxu0
    %v7533 = vadd.f32 %v7327, %v7532
    %v7534 = vpop.f32.mrb[0].mxu0
    %v7535 = vadd.f32 %v7331, %v7534
    %7536 = vdwg.mxu0
    %v7537 = vadd.f32 %v7529, 0.0
    %v7538 = vadd.f32 %v7531, 0.0
    %v7539 = vadd.f32 %v7533, 0.0
    %v7540 = vadd.f32 %v7535, 0.0
    %v7541 = vpack.c.bf16 %v7533, %v7529
    %v7542 = vpack.c.bf16 %v7535, %v7531
    %7543 = vmatprep.subr.bf16.mxu0 %v6446
    %7544 = vmatpush1.bf16.msra.mxu0 %v6445
    %7545 = vmatprep.subr.bf16.mxu0 %v6448
    %7546 = vmatpush1.bf16.msra.mxu0 %v6447
    %7547 = vmatprep.subr.bf16.mxu0 %v6450
    %7548 = vmatpush1.bf16.msra.mxu0 %v6449
    %7549 = vmatprep.subr.bf16.mxu0 %v6452
    %7550 = vmatpush1.bf16.msra.mxu0 %v6451
    %7551 = vmatprep.subr.bf16.mxu0 %v6454
    %7552 = vmatpush1.bf16.msra.mxu0 %v6453
    %7553 = vmatprep.subr.bf16.mxu0 %v6456
    %7554 = vmatpush1.bf16.msra.mxu0 %v6455
    %7555 = vmatprep.subr.bf16.mxu0 %v6458
    %7556 = vmatpush1.bf16.msra.mxu0 %v6457
    %7557 = vmatprep.subr.bf16.mxu0 %v6460
    %7558 = vmatpush1.bf16.msra.mxu0 %v6459
    %7559 = vmatprep.subr.bf16.mxu0 %v6462
    %7560 = vmatpush1.bf16.msra.mxu0 %v6461
    %7561 = vmatprep.subr.bf16.mxu0 %v6464
    %7562 = vmatpush1.bf16.msra.mxu0 %v6463
    %7563 = vmatprep.subr.bf16.mxu0 %v6466
    %7564 = vmatpush1.bf16.msra.mxu0 %v6465
    %7565 = vmatprep.subr.bf16.mxu0 %v6468
    %7566 = vmatpush1.bf16.msra.mxu0 %v6467
    %7567 = vmatprep.subr.bf16.mxu0 %v6470
    %7568 = vmatpush1.bf16.msra.mxu0 %v6469
    %7569 = vmatprep.subr.bf16.mxu0 %v6472
    %7570 = vmatpush1.bf16.msra.mxu0 %v6471
    %7571 = vmatprep.subr.bf16.mxu0 %v6474
    %7572 = vmatpush1.bf16.msra.mxu0 %v6473
    %7573 = vmatprep.subr.bf16.mxu0 %v6476
    %7574 = vmatpush1.bf16.msra.mxu0 %v6475
    %7575 = vmatprep.mubr.bf16.mxu0 %v7542
    %7576 = vmatmul.mubr.bf16.gmra.mrb[0].mxu0 %v7541
    %v7577 = vpop.f32.mrb[0].mxu0
    %v7578 = vadd.f32 %v6342, %v7577
    %v7579 = vpop.f32.mrb[0].mxu0
    %v7580 = vadd.f32 %v6346, %v7579
    %v7581 = vpop.f32.mrb[0].mxu0
    %v7582 = vadd.f32 %v6342, %v7581
    %v7583 = vpop.f32.mrb[0].mxu0
    %v7584 = vadd.f32 %v6346, %v7583
    %7585 = vdwg.mxu0
    %v7586 = vmax.f32 %v7578, 0.0
    %v7587 = vmax.f32 %v7580, 0.0
    %v7588 = vmax.f32 %v7582, 0.0
    %v7589 = vmax.f32 %v7584, 0.0
    %v7590 = vpack.c.bf16 %v7588, %v7586
    %v7591 = vpack.c.bf16 %v7589, %v7587
    %7592 = vmatprep.subr.bf16.mxu0 %v6699
    %7593 = vmatpush1.bf16.msra.mxu0 %v6698
    %7594 = vmatprep.subr.bf16.mxu0 %v6701
    %7595 = vmatpush1.bf16.msra.mxu0 %v6700
    %7596 = vmatprep.subr.bf16.mxu0 %v6703
    %7597 = vmatpush1.bf16.msra.mxu0 %v6702
    %7598 = vmatprep.subr.bf16.mxu0 %v6705
    %7599 = vmatpush1.bf16.msra.mxu0 %v6704
    %7600 = vmatprep.subr.bf16.mxu0 %v6707
    %7601 = vmatpush1.bf16.msra.mxu0 %v6706
    %7602 = vmatprep.subr.bf16.mxu0 %v6709
    %7603 = vmatpush1.bf16.msra.mxu0 %v6708
    %7604 = vmatprep.subr.bf16.mxu0 %v6711
    %7605 = vmatpush1.bf16.msra.mxu0 %v6710
    %7606 = vmatprep.subr.bf16.mxu0 %v6713
    %7607 = vmatpush1.bf16.msra.mxu0 %v6712
    %7608 = vmatprep.subr.bf16.mxu0 %v6715
    %7609 = vmatpush1.bf16.msra.mxu0 %v6714
    %7610 = vmatprep.subr.bf16.mxu0 %v6717
    %7611 = vmatpush1.bf16.msra.mxu0 %v6716
    %7612 = vmatprep.subr.bf16.mxu0 %v6719
    %7613 = vmatpush1.bf16.msra.mxu0 %v6718
    %7614 = vmatprep.subr.bf16.mxu0 %v6721
    %7615 = vmatpush1.bf16.msra.mxu0 %v6720
    %7616 = vmatprep.subr.bf16.mxu0 %v6723
    %7617 = vmatpush1.bf16.msra.mxu0 %v6722
    %7618 = vmatprep.subr.bf16.mxu0 %v6725
    %7619 = vmatpush1.bf16.msra.mxu0 %v6724
    %7620 = vmatprep.subr.bf16.mxu0 %v6727
    %7621 = vmatpush1.bf16.msra.mxu0 %v6726
    %7622 = vmatprep.subr.bf16.mxu0 %v6729
    %7623 = vmatpush1.bf16.msra.mxu0 %v6728
    %7624 = vmatprep.mubr.bf16.mxu0 %v7591
    %7625 = vmatmul.mubr.bf16.gmra.mrb[0].mxu0 %v7590
    %v7626 = vpop.f32.mrb[0].mxu0
    %v7627 = vadd.f32 %v6595, %v7626
    %v7628 = vpop.f32.mrb[0].mxu0
    %v7629 = vadd.f32 %v6599, %v7628
    %v7630 = vpop.f32.mrb[0].mxu0
    %v7631 = vadd.f32 %v6595, %v7630
    %v7632 = vpop.f32.mrb[0].mxu0
    %v7633 = vadd.f32 %v6599, %v7632
    %7634 = vdwg.mxu0
    %v7635 = vmax.f32 %v7627, 0.0
    %v7636 = vmax.f32 %v7629, 0.0
    %v7637 = vmax.f32 %v7631, 0.0
    %v7638 = vmax.f32 %v7633, 0.0
    %v7639 = vpack.c.bf16 %v7635, %v7635
    %v7640 = vpack.c.bf16 %v7636, %v7636
    %7641 = vmatprep.subr.bf16.mxu0 %v7640
    %7642 = vmatpush1.bf16.xpose.msra.mxu0 %v7639
    %7643 = vmatprep.subr.bf16.mxu0 0
    %7644 = vmatpush1.bf16.xpose.msra.mxu0 0
    %7645 = vmatprep.subr.bf16.mxu0 0
    %7646 = vmatpush1.bf16.xpose.msra.mxu0 0
    %7647 = vmatprep.subr.bf16.mxu0 0
    %7648 = vmatpush1.bf16.xpose.msra.mxu0 0
    %7649 = vmatprep.subr.bf16.mxu0 0
    %7650 = vmatpush1.bf16.xpose.msra.mxu0 0
    %7651 = vmatprep.subr.bf16.mxu0 0
    %7652 = vmatpush1.bf16.xpose.msra.mxu0 0
    %7653 = vmatprep.subr.bf16.mxu0 0
    %7654 = vmatpush1.bf16.xpose.msra.mxu0 0
    %7655 = vmatprep.subr.bf16.mxu0 0
    %7656 = vmatpush1.bf16.xpose.msra.mxu0 0
    %7657 = vmatprep.subr.bf16.mxu0 0
    %7658 = vmatpush1.bf16.xpose.msra.mxu0 0
    %7659 = vmatprep.subr.bf16.mxu0 0
    %7660 = vmatpush1.bf16.xpose.msra.mxu0 0
    %7661 = vmatprep.subr.bf16.mxu0 0
    %7662 = vmatpush1.bf16.xpose.msra.mxu0 0
    %7663 = vmatprep.subr.bf16.mxu0 0
    %7664 = vmatpush1.bf16.xpose.msra.mxu0 0
    %7665 = vmatprep.subr.bf16.mxu0 0
    %7666 = vmatpush1.bf16.xpose.msra.mxu0 0
    %7667 = vmatprep.subr.bf16.mxu0 0
    %7668 = vmatpush1.bf16.xpose.msra.mxu0 0
    %7669 = vmatprep.subr.bf16.mxu0 0
    %7670 = vmatpush1.bf16.xpose.msra.mxu0 0
    %7671 = vmatprep.subr.bf16.mxu0 0
    %7672 = vmatpush1.bf16.xpose.msra.mxu0 0
    %7673 = vmatprep.mubr.bf16.mxu0 %v7640
    %7674 = vmatmul.mubr.bf16.gmra.mrb[0].mxu0 %v7639
    %v7675 = vpop.f32.mrb[0].mxu0
    %v7676 = vadd.f32 0.0, %v7675
    %v7677 = vpop.f32.mrb[0].mxu0
    %v7678 = vpop.f32.mrb[0].mxu0
    %v7679 = vpop.f32.mrb[0].mxu0
    %7680 = vdwg.mxu0
    %v7681 = vsel %vm1810, %v7676, 0.0
    %7682 = vadd.xlane.f32.xlu0 %v7681
    %v7683 = vpop.xlane.xlu0 %7682
    %v7684 = vrot.slane %v7683, 4
    %v7685 = vadd.f32 %v7683, %v7684
    %v7686 = vrot.slane %v7685, 2
    %v7687 = vadd.f32 %v7685, %v7686
    %v7688 = vrot.slane %v7687, 1
    %v7689 = vadd.f32 %v7687, %v7688
    %s7690 = vtos %v7689
    %v7691 = vrcp.pop 64.0
    %s7692 = vtos %v7691
    %s7693 = smul.f32 %s7690, %s7692
    %v7694 = vstv %s7693
    %vm7695 = vcmp.gt.f32.partialorder %v7676, %v7694
    %v7696 = vsel %vm7695, 1, 0
    %v7697 = vcvt.s32.f32 %v7696
    %v7698 = vadd.f32 %v7697, %v1269
    %v7699 = vpack.c.bf16 %v7698, %v7698
    %v7700 = vpack.c.bf16 %v7529, %v7529
    %v7701 = vpack.c.bf16 %v7531, %v7531
    %v7703 = vsel %vm1810, %v7699, 0
    %v7706 = vsel %vm1833, %v7700, 0
    %v7709 = vsel %vm1833, %v7701, 0
    %7711 = vmatprep.subr.bf16.mxu0 %v7709
    %7712 = vmatpush1.bf16.msra.mxu0 %v7706
    %7713 = vmatprep.subr.bf16.mxu0 0
    %7714 = vmatpush1.bf16.msra.mxu0 0
    %7715 = vmatprep.subr.bf16.mxu0 0
    %7716 = vmatpush1.bf16.msra.mxu0 0
    %7717 = vmatprep.subr.bf16.mxu0 0
    %7718 = vmatpush1.bf16.msra.mxu0 0
    %7719 = vmatprep.subr.bf16.mxu0 0
    %7720 = vmatpush1.bf16.msra.mxu0 0
    %7721 = vmatprep.subr.bf16.mxu0 0
    %7722 = vmatpush1.bf16.msra.mxu0 0
    %7723 = vmatprep.subr.bf16.mxu0 0
    %7724 = vmatpush1.bf16.msra.mxu0 0
    %7725 = vmatprep.subr.bf16.mxu0 0
    %7726 = vmatpush1.bf16.msra.mxu0 0
    %7727 = vmatprep.subr.bf16.mxu0 0
    %7728 = vmatpush1.bf16.msra.mxu0 0
    %7729 = vmatprep.subr.bf16.mxu0 0
    %7730 = vmatpush1.bf16.msra.mxu0 0
    %7731 = vmatprep.subr.bf16.mxu0 0
    %7732 = vmatpush1.bf16.msra.mxu0 0
    %7733 = vmatprep.subr.bf16.mxu0 0
    %7734 = vmatpush1.bf16.msra.mxu0 0
    %7735 = vmatprep.subr.bf16.mxu0 0
    %7736 = vmatpush1.bf16.msra.mxu0 0
    %7737 = vmatprep.subr.bf16.mxu0 0
    %7738 = vmatpush1.bf16.msra.mxu0 0
    %7739 = vmatprep.subr.bf16.mxu0 0
    %7740 = vmatpush1.bf16.msra.mxu0 0
    %7741 = vmatprep.subr.bf16.mxu0 0
    %7742 = vmatpush1.bf16.msra.mxu0 0
    %7743 = vmatprep.mubr.bf16.mxu0 0
    %7744 = vmatmul.mubr.bf16.gmra.mrb[0].mxu0 %v7703
    %v7745 = vpop.f32.mrb[0].mxu0
    %v7746 = vadd.f32 0.0, %v7745
    %v7747 = vpop.f32.mrb[0].mxu0
    %v7748 = vadd.f32 0.0, %v7747
    %v7749 = vpop.f32.mrb[0].mxu0
    %v7750 = vpop.f32.mrb[0].mxu0
    %7751 = vdwg.mxu0
    %v7752 = vpack.c.bf16 %v7637, %v7637
    %v7753 = vpack.c.bf16 %v7638, %v7638
    %7754 = vmatprep.subr.bf16.mxu0 %v7753
    %7755 = vmatpush1.bf16.xpose.msra.mxu0 %v7752
    %7756 = vmatprep.subr.bf16.mxu0 0
    %7757 = vmatpush1.bf16.xpose.msra.mxu0 0
    %7758 = vmatprep.subr.bf16.mxu0 0
    %7759 = vmatpush1.bf16.xpose.msra.mxu0 0
    %7760 = vmatprep.subr.bf16.mxu0 0
    %7761 = vmatpush1.bf16.xpose.msra.mxu0 0
    %7762 = vmatprep.subr.bf16.mxu0 0
    %7763 = vmatpush1.bf16.xpose.msra.mxu0 0
    %7764 = vmatprep.subr.bf16.mxu0 0
    %7765 = vmatpush1.bf16.xpose.msra.mxu0 0
    %7766 = vmatprep.subr.bf16.mxu0 0
    %7767 = vmatpush1.bf16.xpose.msra.mxu0 0
    %7768 = vmatprep.subr.bf16.mxu0 0
    %7769 = vmatpush1.bf16.xpose.msra.mxu0 0
    %7770 = vmatprep.subr.bf16.mxu0 0
    %7771 = vmatpush1.bf16.xpose.msra.mxu0 0
    %7772 = vmatprep.subr.bf16.mxu0 0
    %7773 = vmatpush1.bf16.xpose.msra.mxu0 0
    %7774 = vmatprep.subr.bf16.mxu0 0
    %7775 = vmatpush1.bf16.xpose.msra.mxu0 0
    %7776 = vmatprep.subr.bf16.mxu0 0
    %7777 = vmatpush1.bf16.xpose.msra.mxu0 0
    %7778 = vmatprep.subr.bf16.mxu0 0
    %7779 = vmatpush1.bf16.xpose.msra.mxu0 0
    %7780 = vmatprep.subr.bf16.mxu0 0
    %7781 = vmatpush1.bf16.xpose.msra.mxu0 0
    %7782 = vmatprep.subr.bf16.mxu0 0
    %7783 = vmatpush1.bf16.xpose.msra.mxu0 0
    %7784 = vmatprep.subr.bf16.mxu0 0
    %7785 = vmatpush1.bf16.xpose.msra.mxu0 0
    %7786 = vmatprep.mubr.bf16.mxu0 %v7753
    %7787 = vmatmul.mubr.bf16.gmra.mrb[0].mxu0 %v7752
    %v7788 = vpop.f32.mrb[0].mxu0
    %v7789 = vadd.f32 0.0, %v7788
    %v7790 = vpop.f32.mrb[0].mxu0
    %v7791 = vpop.f32.mrb[0].mxu0
    %v7792 = vpop.f32.mrb[0].mxu0
    %7793 = vdwg.mxu0
    %v7794 = vsel %vm1810, %v7789, 0.0
    %7795 = vadd.xlane.f32.xlu0 %v7794
    %v7796 = vpop.xlane.xlu0 %7795
    %v7797 = vrot.slane %v7796, 4
    %v7798 = vadd.f32 %v7796, %v7797
    %v7799 = vrot.slane %v7798, 2
    %v7800 = vadd.f32 %v7798, %v7799
    %v7801 = vrot.slane %v7800, 1
    %v7802 = vadd.f32 %v7800, %v7801
    %s7803 = vtos %v7802
    %v7804 = vrcp.pop 64.0
    %s7805 = vtos %v7804
    %s7806 = smul.f32 %s7803, %s7805
    %v7807 = vstv %s7806
    %vm7808 = vcmp.gt.f32.partialorder %v7789, %v7807
    %v7809 = vsel %vm7808, 1, 0
    %v7810 = vcvt.s32.f32 %v7809
    %v7811 = vadd.f32 %v7810, %v1269
    %v7812 = vpack.c.bf16 %v7811, %v7811
    %v7813 = vpack.c.bf16 %v7533, %v7533
    %v7814 = vpack.c.bf16 %v7535, %v7535
    %v7816 = vsel %vm1810, %v7812, 0
    %v7819 = vsel %vm1833, %v7813, 0
    %v7822 = vsel %vm1833, %v7814, 0
    %7824 = vmatprep.subr.bf16.mxu0 %v7822
    %7825 = vmatpush1.bf16.msra.mxu0 %v7819
    %7826 = vmatprep.subr.bf16.mxu0 0
    %7827 = vmatpush1.bf16.msra.mxu0 0
    %7828 = vmatprep.subr.bf16.mxu0 0
    %7829 = vmatpush1.bf16.msra.mxu0 0
    %7830 = vmatprep.subr.bf16.mxu0 0
    %7831 = vmatpush1.bf16.msra.mxu0 0
    %7832 = vmatprep.subr.bf16.mxu0 0
    %7833 = vmatpush1.bf16.msra.mxu0 0
    %7834 = vmatprep.subr.bf16.mxu0 0
    %7835 = vmatpush1.bf16.msra.mxu0 0
    %7836 = vmatprep.subr.bf16.mxu0 0
    %7837 = vmatpush1.bf16.msra.mxu0 0
    %7838 = vmatprep.subr.bf16.mxu0 0
    %7839 = vmatpush1.bf16.msra.mxu0 0
    %7840 = vmatprep.subr.bf16.mxu0 0
    %7841 = vmatpush1.bf16.msra.mxu0 0
    %7842 = vmatprep.subr.bf16.mxu0 0
    %7843 = vmatpush1.bf16.msra.mxu0 0
    %7844 = vmatprep.subr.bf16.mxu0 0
    %7845 = vmatpush1.bf16.msra.mxu0 0
    %7846 = vmatprep.subr.bf16.mxu0 0
    %7847 = vmatpush1.bf16.msra.mxu0 0
    %7848 = vmatprep.subr.bf16.mxu0 0
    %7849 = vmatpush1.bf16.msra.mxu0 0
    %7850 = vmatprep.subr.bf16.mxu0 0
    %7851 = vmatpush1.bf16.msra.mxu0 0
    %7852 = vmatprep.subr.bf16.mxu0 0
    %7853 = vmatpush1.bf16.msra.mxu0 0
    %7854 = vmatprep.subr.bf16.mxu0 0
    %7855 = vmatpush1.bf16.msra.mxu0 0
    %7856 = vmatprep.mubr.bf16.mxu0 0
    %7857 = vmatmul.mubr.bf16.gmra.mrb[0].mxu0 %v7816
    %v7858 = vpop.f32.mrb[0].mxu0
    %v7859 = vadd.f32 0.0, %v7858
    %v7860 = vpop.f32.mrb[0].mxu0
    %v7861 = vadd.f32 0.0, %v7860
    %v7862 = vpop.f32.mrb[0].mxu0
    %v7863 = vpop.f32.mrb[0].mxu0
    %7864 = vdwg.mxu0
    %v7865 = vpack.c.bf16 %v7859, %v7746
    %v7866 = vpack.c.bf16 %v7861, %v7748
    %s7867 = scalar_lea.vmem [#allocation23], 256
    %v7868 = vld [vmem:[%s7867] sm:$0xff]
    %v7869 = vld [vmem:[%s7867 + $0x8] sm:$0xff]
    %v7870 = vld [vmem:[%s7867 + $0x10] sm:$0xff]
    %v7871 = vld [vmem:[%s7867 + $0x18] sm:$0xff]
    %v7872 = vld [vmem:[%s7867 + $0x20] sm:$0xff]
    %v7873 = vld [vmem:[%s7867 + $0x28] sm:$0xff]
    %v7874 = vld [vmem:[%s7867 + $0x30] sm:$0xff]
    %v7875 = vld [vmem:[%s7867 + $0x38] sm:$0xff]
    %v7876 = vld [vmem:[%s7867 + $0x40] sm:$0xff]
    %v7877 = vld [vmem:[%s7867 + $0x48] sm:$0xff]
    %v7878 = vld [vmem:[%s7867 + $0x50] sm:$0xff]
    %v7879 = vld [vmem:[%s7867 + $0x58] sm:$0xff]
    %v7880 = vld [vmem:[%s7867 + $0x60] sm:$0xff]
    %v7881 = vld [vmem:[%s7867 + $0x68] sm:$0xff]
    %v7882 = vld [vmem:[%s7867 + $0x70] sm:$0xff]
    %v7883 = vld [vmem:[%s7867 + $0x78] sm:$0xff]
    %v7884 = vld [vmem:[%s7867 + $0x80] sm:$0xff]
    %v7885 = vld [vmem:[%s7867 + $0x88] sm:$0xff]
    %v7886 = vld [vmem:[%s7867 + $0x90] sm:$0xff]
    %v7887 = vld [vmem:[%s7867 + $0x98] sm:$0xff]
    %v7888 = vld [vmem:[%s7867 + $0xa0] sm:$0xff]
    %v7889 = vld [vmem:[%s7867 + $0xa8] sm:$0xff]
    %v7890 = vld [vmem:[%s7867 + $0xb0] sm:$0xff]
    %v7891 = vld [vmem:[%s7867 + $0xb8] sm:$0xff]
    %v7892 = vld [vmem:[%s7867 + $0xc0] sm:$0xff]
    %v7893 = vld [vmem:[%s7867 + $0xc8] sm:$0xff]
    %v7894 = vld [vmem:[%s7867 + $0xd0] sm:$0xff]
    %v7895 = vld [vmem:[%s7867 + $0xd8] sm:$0xff]
    %v7896 = vld [vmem:[%s7867 + $0xe0] sm:$0xff]
    %v7897 = vld [vmem:[%s7867 + $0xe8] sm:$0xff]
    %v7898 = vld [vmem:[%s7867 + $0xf0] sm:$0xff]
    %v7899 = vld [vmem:[%s7867 + $0xf8] sm:$0xff]
    %s7900 = scalar_lea.vmem %s43, 2
    %v7901 = vld [vmem:[%s7900] sm:$0x3]
    %v7903 = vlaneseq
    %v7904 = vshrl.u32 %v7903, 7
    %v7905 = vsub.s32 0, %v7904
    %v7906 = vrot.slane %v7901, %v7905
    %v7907 = vlaneseq
    %v7908 = vshrl.u32 %v7907, 7
    %v7909 = vsub.s32 1, %v7908
    %v7910 = vrot.slane %v7901, %v7909
    %v7945 = vunpack.c.l.b16 %v7868
    %v7946 = vunpack.c.h.b16 %v7868
    %v7947 = vunpack.c.l.b16 %v7869
    %v7948 = vunpack.c.h.b16 %v7869
    %v7949 = vunpack.c.l.b16 %v7870
    %v7950 = vunpack.c.h.b16 %v7870
    %v7951 = vunpack.c.l.b16 %v7871
    %v7952 = vunpack.c.h.b16 %v7871
    %v7953 = vunpack.c.l.b16 %v7872
    %v7954 = vunpack.c.h.b16 %v7872
    %v7955 = vunpack.c.l.b16 %v7873
    %v7956 = vunpack.c.h.b16 %v7873
    %v7957 = vunpack.c.l.b16 %v7874
    %v7958 = vunpack.c.h.b16 %v7874
    %v7959 = vunpack.c.l.b16 %v7875
    %v7960 = vunpack.c.h.b16 %v7875
    %v7961 = vunpack.c.l.b16 %v7876
    %v7962 = vunpack.c.h.b16 %v7876
    %v7963 = vunpack.c.l.b16 %v7877
    %v7964 = vunpack.c.h.b16 %v7877
    %v7965 = vunpack.c.l.b16 %v7878
    %v7966 = vunpack.c.h.b16 %v7878
    %v7967 = vunpack.c.l.b16 %v7879
    %v7968 = vunpack.c.h.b16 %v7879
    %v7969 = vunpack.c.l.b16 %v7880
    %v7970 = vunpack.c.h.b16 %v7880
    %v7971 = vunpack.c.l.b16 %v7881
    %v7972 = vunpack.c.h.b16 %v7881
    %v7973 = vunpack.c.l.b16 %v7882
    %v7974 = vunpack.c.h.b16 %v7882
    %v7975 = vunpack.c.l.b16 %v7883
    %v7976 = vunpack.c.h.b16 %v7883
    %v7977 = vunpack.c.l.b16 %v7884
    %v7978 = vunpack.c.h.b16 %v7884
    %v7979 = vunpack.c.l.b16 %v7885
    %v7980 = vunpack.c.h.b16 %v7885
    %v7981 = vunpack.c.l.b16 %v7886
    %v7982 = vunpack.c.h.b16 %v7886
    %v7983 = vunpack.c.l.b16 %v7887
    %v7984 = vunpack.c.h.b16 %v7887
    %v7985 = vunpack.c.l.b16 %v7888
    %v7986 = vunpack.c.h.b16 %v7888
    %v7987 = vunpack.c.l.b16 %v7889
    %v7988 = vunpack.c.h.b16 %v7889
    %v7989 = vunpack.c.l.b16 %v7890
    %v7990 = vunpack.c.h.b16 %v7890
    %v7991 = vunpack.c.l.b16 %v7891
    %v7992 = vunpack.c.h.b16 %v7891
    %v7993 = vunpack.c.l.b16 %v7892
    %v7994 = vunpack.c.h.b16 %v7892
    %v7995 = vunpack.c.l.b16 %v7893
    %v7996 = vunpack.c.h.b16 %v7893
    %v7997 = vunpack.c.l.b16 %v7894
    %v7998 = vunpack.c.h.b16 %v7894
    %v7999 = vunpack.c.l.b16 %v7895
    %v8000 = vunpack.c.h.b16 %v7895
    %v8001 = vunpack.c.l.b16 %v7896
    %v8002 = vunpack.c.h.b16 %v7896
    %v8003 = vunpack.c.l.b16 %v7897
    %v8004 = vunpack.c.h.b16 %v7897
    %v8005 = vunpack.c.l.b16 %v7898
    %v8006 = vunpack.c.h.b16 %v7898
    %v8007 = vunpack.c.l.b16 %v7899
    %v8008 = vunpack.c.h.b16 %v7899
    %v8009 = vpack.c.b16 %v7947, %v7945
    %v8010 = vpack.c.b16 %v7948, %v7946
    %v8011 = vpack.c.b16 %v7951, %v7949
    %v8012 = vpack.c.b16 %v7952, %v7950
    %v8013 = vpack.c.b16 %v7955, %v7953
    %v8014 = vpack.c.b16 %v7956, %v7954
    %v8015 = vpack.c.b16 %v7959, %v7957
    %v8016 = vpack.c.b16 %v7960, %v7958
    %v8017 = vpack.c.b16 %v7963, %v7961
    %v8018 = vpack.c.b16 %v7964, %v7962
    %v8019 = vpack.c.b16 %v7967, %v7965
    %v8020 = vpack.c.b16 %v7968, %v7966
    %v8021 = vpack.c.b16 %v7971, %v7969
    %v8022 = vpack.c.b16 %v7972, %v7970
    %v8023 = vpack.c.b16 %v7975, %v7973
    %v8024 = vpack.c.b16 %v7976, %v7974
    %v8025 = vpack.c.b16 %v7979, %v7977
    %v8026 = vpack.c.b16 %v7980, %v7978
    %v8027 = vpack.c.b16 %v7983, %v7981
    %v8028 = vpack.c.b16 %v7984, %v7982
    %v8029 = vpack.c.b16 %v7987, %v7985
    %v8030 = vpack.c.b16 %v7988, %v7986
    %v8031 = vpack.c.b16 %v7991, %v7989
    %v8032 = vpack.c.b16 %v7992, %v7990
    %v8033 = vpack.c.b16 %v7995, %v7993
    %v8034 = vpack.c.b16 %v7996, %v7994
    %v8035 = vpack.c.b16 %v7999, %v7997
    %v8036 = vpack.c.b16 %v8000, %v7998
    %v8037 = vpack.c.b16 %v8003, %v8001
    %v8038 = vpack.c.b16 %v8004, %v8002
    %v8039 = vpack.c.b16 %v8007, %v8005
    %v8040 = vpack.c.b16 %v8008, %v8006
    %8073 = vmatprep.subr.bf16.mxu0 %v8010
    %8074 = vmatpush1.bf16.msra.mxu0 %v8009
    %8075 = vmatprep.subr.bf16.mxu0 %v8012
    %8076 = vmatpush1.bf16.msra.mxu0 %v8011
    %8077 = vmatprep.subr.bf16.mxu0 %v8014
    %8078 = vmatpush1.bf16.msra.mxu0 %v8013
    %8079 = vmatprep.subr.bf16.mxu0 %v8016
    %8080 = vmatpush1.bf16.msra.mxu0 %v8015
    %8081 = vmatprep.subr.bf16.mxu0 %v8018
    %8082 = vmatpush1.bf16.msra.mxu0 %v8017
    %8083 = vmatprep.subr.bf16.mxu0 %v8020
    %8084 = vmatpush1.bf16.msra.mxu0 %v8019
    %8085 = vmatprep.subr.bf16.mxu0 %v8022
    %8086 = vmatpush1.bf16.msra.mxu0 %v8021
    %8087 = vmatprep.subr.bf16.mxu0 %v8024
    %8088 = vmatpush1.bf16.msra.mxu0 %v8023
    %8089 = vmatprep.subr.bf16.mxu0 %v8026
    %8090 = vmatpush1.bf16.msra.mxu0 %v8025
    %8091 = vmatprep.subr.bf16.mxu0 %v8028
    %8092 = vmatpush1.bf16.msra.mxu0 %v8027
    %8093 = vmatprep.subr.bf16.mxu0 %v8030
    %8094 = vmatpush1.bf16.msra.mxu0 %v8029
    %8095 = vmatprep.subr.bf16.mxu0 %v8032
    %8096 = vmatpush1.bf16.msra.mxu0 %v8031
    %8097 = vmatprep.subr.bf16.mxu0 %v8034
    %8098 = vmatpush1.bf16.msra.mxu0 %v8033
    %8099 = vmatprep.subr.bf16.mxu0 %v8036
    %8100 = vmatpush1.bf16.msra.mxu0 %v8035
    %8101 = vmatprep.subr.bf16.mxu0 %v8038
    %8102 = vmatpush1.bf16.msra.mxu0 %v8037
    %8103 = vmatprep.subr.bf16.mxu0 %v8040
    %8104 = vmatpush1.bf16.msra.mxu0 %v8039
    %8105 = vmatprep.mubr.bf16.mxu0 %v7866
    %8106 = vmatmul.mubr.bf16.gmra.mrb[0].mxu0 %v7865
    %v8107 = vpop.f32.mrb[0].mxu0
    %v8108 = vadd.f32 %v7906, %v8107
    %v8109 = vpop.f32.mrb[0].mxu0
    %v8110 = vadd.f32 %v7910, %v8109
    %v8111 = vpop.f32.mrb[0].mxu0
    %v8112 = vadd.f32 %v7906, %v8111
    %v8113 = vpop.f32.mrb[0].mxu0
    %v8114 = vadd.f32 %v7910, %v8113
    %8115 = vdwg.mxu0
    %v8116 = vmax.f32 %v8108, 0.0
    %v8117 = vmax.f32 %v8110, 0.0
    %v8118 = vmax.f32 %v8112, 0.0
    %v8119 = vmax.f32 %v8114, 0.0
    %v8120 = vpack.c.bf16 %v8118, %v8116
    %v8121 = vpack.c.bf16 %v8119, %v8117
    %s8122 = scalar_lea.vmem [#allocation24], 256
    %v8123 = vld [vmem:[%s8122] sm:$0xff]
    %v8124 = vld [vmem:[%s8122 + $0x8] sm:$0xff]
    %v8125 = vld [vmem:[%s8122 + $0x10] sm:$0xff]
    %v8126 = vld [vmem:[%s8122 + $0x18] sm:$0xff]
    %v8127 = vld [vmem:[%s8122 + $0x20] sm:$0xff]
    %v8128 = vld [vmem:[%s8122 + $0x28] sm:$0xff]
    %v8129 = vld [vmem:[%s8122 + $0x30] sm:$0xff]
    %v8130 = vld [vmem:[%s8122 + $0x38] sm:$0xff]
    %v8131 = vld [vmem:[%s8122 + $0x40] sm:$0xff]
    %v8132 = vld [vmem:[%s8122 + $0x48] sm:$0xff]
    %v8133 = vld [vmem:[%s8122 + $0x50] sm:$0xff]
    %v8134 = vld [vmem:[%s8122 + $0x58] sm:$0xff]
    %v8135 = vld [vmem:[%s8122 + $0x60] sm:$0xff]
    %v8136 = vld [vmem:[%s8122 + $0x68] sm:$0xff]
    %v8137 = vld [vmem:[%s8122 + $0x70] sm:$0xff]
    %v8138 = vld [vmem:[%s8122 + $0x78] sm:$0xff]
    %v8139 = vld [vmem:[%s8122 + $0x80] sm:$0xff]
    %v8140 = vld [vmem:[%s8122 + $0x88] sm:$0xff]
    %v8141 = vld [vmem:[%s8122 + $0x90] sm:$0xff]
    %v8142 = vld [vmem:[%s8122 + $0x98] sm:$0xff]
    %v8143 = vld [vmem:[%s8122 + $0xa0] sm:$0xff]
    %v8144 = vld [vmem:[%s8122 + $0xa8] sm:$0xff]
    %v8145 = vld [vmem:[%s8122 + $0xb0] sm:$0xff]
    %v8146 = vld [vmem:[%s8122 + $0xb8] sm:$0xff]
    %v8147 = vld [vmem:[%s8122 + $0xc0] sm:$0xff]
    %v8148 = vld [vmem:[%s8122 + $0xc8] sm:$0xff]
    %v8149 = vld [vmem:[%s8122 + $0xd0] sm:$0xff]
    %v8150 = vld [vmem:[%s8122 + $0xd8] sm:$0xff]
    %v8151 = vld [vmem:[%s8122 + $0xe0] sm:$0xff]
    %v8152 = vld [vmem:[%s8122 + $0xe8] sm:$0xff]
    %v8153 = vld [vmem:[%s8122 + $0xf0] sm:$0xff]
    %v8154 = vld [vmem:[%s8122 + $0xf8] sm:$0xff]
    %s8155 = scalar_lea.vmem %s47, 2
    %v8156 = vld [vmem:[%s8155] sm:$0x3]
    %v8158 = vlaneseq
    %v8159 = vshrl.u32 %v8158, 7
    %v8160 = vsub.s32 0, %v8159
    %v8161 = vrot.slane %v8156, %v8160
    %v8162 = vlaneseq
    %v8163 = vshrl.u32 %v8162, 7
    %v8164 = vsub.s32 1, %v8163
    %v8165 = vrot.slane %v8156, %v8164
    %v8200 = vunpack.c.l.b16 %v8123
    %v8201 = vunpack.c.h.b16 %v8123
    %v8202 = vunpack.c.l.b16 %v8124
    %v8203 = vunpack.c.h.b16 %v8124
    %v8204 = vunpack.c.l.b16 %v8125
    %v8205 = vunpack.c.h.b16 %v8125
    %v8206 = vunpack.c.l.b16 %v8126
    %v8207 = vunpack.c.h.b16 %v8126
    %v8208 = vunpack.c.l.b16 %v8127
    %v8209 = vunpack.c.h.b16 %v8127
    %v8210 = vunpack.c.l.b16 %v8128
    %v8211 = vunpack.c.h.b16 %v8128
    %v8212 = vunpack.c.l.b16 %v8129
    %v8213 = vunpack.c.h.b16 %v8129
    %v8214 = vunpack.c.l.b16 %v8130
    %v8215 = vunpack.c.h.b16 %v8130
    %v8216 = vunpack.c.l.b16 %v8131
    %v8217 = vunpack.c.h.b16 %v8131
    %v8218 = vunpack.c.l.b16 %v8132
    %v8219 = vunpack.c.h.b16 %v8132
    %v8220 = vunpack.c.l.b16 %v8133
    %v8221 = vunpack.c.h.b16 %v8133
    %v8222 = vunpack.c.l.b16 %v8134
    %v8223 = vunpack.c.h.b16 %v8134
    %v8224 = vunpack.c.l.b16 %v8135
    %v8225 = vunpack.c.h.b16 %v8135
    %v8226 = vunpack.c.l.b16 %v8136
    %v8227 = vunpack.c.h.b16 %v8136
    %v8228 = vunpack.c.l.b16 %v8137
    %v8229 = vunpack.c.h.b16 %v8137
    %v8230 = vunpack.c.l.b16 %v8138
    %v8231 = vunpack.c.h.b16 %v8138
    %v8232 = vunpack.c.l.b16 %v8139
    %v8233 = vunpack.c.h.b16 %v8139
    %v8234 = vunpack.c.l.b16 %v8140
    %v8235 = vunpack.c.h.b16 %v8140
    %v8236 = vunpack.c.l.b16 %v8141
    %v8237 = vunpack.c.h.b16 %v8141
    %v8238 = vunpack.c.l.b16 %v8142
    %v8239 = vunpack.c.h.b16 %v8142
    %v8240 = vunpack.c.l.b16 %v8143
    %v8241 = vunpack.c.h.b16 %v8143
    %v8242 = vunpack.c.l.b16 %v8144
    %v8243 = vunpack.c.h.b16 %v8144
    %v8244 = vunpack.c.l.b16 %v8145
    %v8245 = vunpack.c.h.b16 %v8145
    %v8246 = vunpack.c.l.b16 %v8146
    %v8247 = vunpack.c.h.b16 %v8146
    %v8248 = vunpack.c.l.b16 %v8147
    %v8249 = vunpack.c.h.b16 %v8147
    %v8250 = vunpack.c.l.b16 %v8148
    %v8251 = vunpack.c.h.b16 %v8148
    %v8252 = vunpack.c.l.b16 %v8149
    %v8253 = vunpack.c.h.b16 %v8149
    %v8254 = vunpack.c.l.b16 %v8150
    %v8255 = vunpack.c.h.b16 %v8150
    %v8256 = vunpack.c.l.b16 %v8151
    %v8257 = vunpack.c.h.b16 %v8151
    %v8258 = vunpack.c.l.b16 %v8152
    %v8259 = vunpack.c.h.b16 %v8152
    %v8260 = vunpack.c.l.b16 %v8153
    %v8261 = vunpack.c.h.b16 %v8153
    %v8262 = vunpack.c.l.b16 %v8154
    %v8263 = vunpack.c.h.b16 %v8154
    %v8264 = vpack.c.b16 %v8202, %v8200
    %v8265 = vpack.c.b16 %v8203, %v8201
    %v8266 = vpack.c.b16 %v8206, %v8204
    %v8267 = vpack.c.b16 %v8207, %v8205
    %v8268 = vpack.c.b16 %v8210, %v8208
    %v8269 = vpack.c.b16 %v8211, %v8209
    %v8270 = vpack.c.b16 %v8214, %v8212
    %v8271 = vpack.c.b16 %v8215, %v8213
    %v8272 = vpack.c.b16 %v8218, %v8216
    %v8273 = vpack.c.b16 %v8219, %v8217
    %v8274 = vpack.c.b16 %v8222, %v8220
    %v8275 = vpack.c.b16 %v8223, %v8221
    %v8276 = vpack.c.b16 %v8226, %v8224
    %v8277 = vpack.c.b16 %v8227, %v8225
    %v8278 = vpack.c.b16 %v8230, %v8228
    %v8279 = vpack.c.b16 %v8231, %v8229
    %v8280 = vpack.c.b16 %v8234, %v8232
    %v8281 = vpack.c.b16 %v8235, %v8233
    %v8282 = vpack.c.b16 %v8238, %v8236
    %v8283 = vpack.c.b16 %v8239, %v8237
    %v8284 = vpack.c.b16 %v8242, %v8240
    %v8285 = vpack.c.b16 %v8243, %v8241
    %v8286 = vpack.c.b16 %v8246, %v8244
    %v8287 = vpack.c.b16 %v8247, %v8245
    %v8288 = vpack.c.b16 %v8250, %v8248
    %v8289 = vpack.c.b16 %v8251, %v8249
    %v8290 = vpack.c.b16 %v8254, %v8252
    %v8291 = vpack.c.b16 %v8255, %v8253
    %v8292 = vpack.c.b16 %v8258, %v8256
    %v8293 = vpack.c.b16 %v8259, %v8257
    %v8294 = vpack.c.b16 %v8262, %v8260
    %v8295 = vpack.c.b16 %v8263, %v8261
    %8328 = vmatprep.subr.bf16.mxu0 %v8265
    %8329 = vmatpush1.bf16.msra.mxu0 %v8264
    %8330 = vmatprep.subr.bf16.mxu0 %v8267
    %8331 = vmatpush1.bf16.msra.mxu0 %v8266
    %8332 = vmatprep.subr.bf16.mxu0 %v8269
    %8333 = vmatpush1.bf16.msra.mxu0 %v8268
    %8334 = vmatprep.subr.bf16.mxu0 %v8271
    %8335 = vmatpush1.bf16.msra.mxu0 %v8270
    %8336 = vmatprep.subr.bf16.mxu0 %v8273
    %8337 = vmatpush1.bf16.msra.mxu0 %v8272
    %8338 = vmatprep.subr.bf16.mxu0 %v8275
    %8339 = vmatpush1.bf16.msra.mxu0 %v8274
    %8340 = vmatprep.subr.bf16.mxu0 %v8277
    %8341 = vmatpush1.bf16.msra.mxu0 %v8276
    %8342 = vmatprep.subr.bf16.mxu0 %v8279
    %8343 = vmatpush1.bf16.msra.mxu0 %v8278
    %8344 = vmatprep.subr.bf16.mxu0 %v8281
    %8345 = vmatpush1.bf16.msra.mxu0 %v8280
    %8346 = vmatprep.subr.bf16.mxu0 %v8283
    %8347 = vmatpush1.bf16.msra.mxu0 %v8282
    %8348 = vmatprep.subr.bf16.mxu0 %v8285
    %8349 = vmatpush1.bf16.msra.mxu0 %v8284
    %8350 = vmatprep.subr.bf16.mxu0 %v8287
    %8351 = vmatpush1.bf16.msra.mxu0 %v8286
    %8352 = vmatprep.subr.bf16.mxu0 %v8289
    %8353 = vmatpush1.bf16.msra.mxu0 %v8288
    %8354 = vmatprep.subr.bf16.mxu0 %v8291
    %8355 = vmatpush1.bf16.msra.mxu0 %v8290
    %8356 = vmatprep.subr.bf16.mxu0 %v8293
    %8357 = vmatpush1.bf16.msra.mxu0 %v8292
    %8358 = vmatprep.subr.bf16.mxu0 %v8295
    %8359 = vmatpush1.bf16.msra.mxu0 %v8294
    %8360 = vmatprep.mubr.bf16.mxu0 %v8121
    %8361 = vmatmul.mubr.bf16.gmra.mrb[0].mxu0 %v8120
    %v8362 = vpop.f32.mrb[0].mxu0
    %v8363 = vadd.f32 %v8161, %v8362
    %v8364 = vpop.f32.mrb[0].mxu0
    %v8365 = vadd.f32 %v8165, %v8364
    %v8366 = vpop.f32.mrb[0].mxu0
    %v8367 = vadd.f32 %v8161, %v8366
    %v8368 = vpop.f32.mrb[0].mxu0
    %v8369 = vadd.f32 %v8165, %v8368
    %8370 = vdwg.mxu0
    %v8371 = vadd.f32 %v7537, %v8363
    %v8372 = vadd.f32 %v7538, %v8365
    %v8373 = vadd.f32 %v7539, %v8367
    %v8374 = vadd.f32 %v7540, %v8369
    %v8375 = vpack.c.bf16 %v8367, %v8363
    %v8376 = vpack.c.bf16 %v8369, %v8365
    %8377 = vmatprep.subr.bf16.mxu0 %v6446
    %8378 = vmatpush1.bf16.msra.mxu0 %v6445
    %8379 = vmatprep.subr.bf16.mxu0 %v6448
    %8380 = vmatpush1.bf16.msra.mxu0 %v6447
    %8381 = vmatprep.subr.bf16.mxu0 %v6450
    %8382 = vmatpush1.bf16.msra.mxu0 %v6449
    %8383 = vmatprep.subr.bf16.mxu0 %v6452
    %8384 = vmatpush1.bf16.msra.mxu0 %v6451
    %8385 = vmatprep.subr.bf16.mxu0 %v6454
    %8386 = vmatpush1.bf16.msra.mxu0 %v6453
    %8387 = vmatprep.subr.bf16.mxu0 %v6456
    %8388 = vmatpush1.bf16.msra.mxu0 %v6455
    %8389 = vmatprep.subr.bf16.mxu0 %v6458
    %8390 = vmatpush1.bf16.msra.mxu0 %v6457
    %8391 = vmatprep.subr.bf16.mxu0 %v6460
    %8392 = vmatpush1.bf16.msra.mxu0 %v6459
    %8393 = vmatprep.subr.bf16.mxu0 %v6462
    %8394 = vmatpush1.bf16.msra.mxu0 %v6461
    %8395 = vmatprep.subr.bf16.mxu0 %v6464
    %8396 = vmatpush1.bf16.msra.mxu0 %v6463
    %8397 = vmatprep.subr.bf16.mxu0 %v6466
    %8398 = vmatpush1.bf16.msra.mxu0 %v6465
    %8399 = vmatprep.subr.bf16.mxu0 %v6468
    %8400 = vmatpush1.bf16.msra.mxu0 %v6467
    %8401 = vmatprep.subr.bf16.mxu0 %v6470
    %8402 = vmatpush1.bf16.msra.mxu0 %v6469
    %8403 = vmatprep.subr.bf16.mxu0 %v6472
    %8404 = vmatpush1.bf16.msra.mxu0 %v6471
    %8405 = vmatprep.subr.bf16.mxu0 %v6474
    %8406 = vmatpush1.bf16.msra.mxu0 %v6473
    %8407 = vmatprep.subr.bf16.mxu0 %v6476
    %8408 = vmatpush1.bf16.msra.mxu0 %v6475
    %8409 = vmatprep.mubr.bf16.mxu0 %v8376
    %8410 = vmatmul.mubr.bf16.gmra.mrb[0].mxu0 %v8375
    %v8411 = vpop.f32.mrb[0].mxu0
    %v8412 = vadd.f32 %v6342, %v8411
    %v8413 = vpop.f32.mrb[0].mxu0
    %v8414 = vadd.f32 %v6346, %v8413
    %v8415 = vpop.f32.mrb[0].mxu0
    %v8416 = vadd.f32 %v6342, %v8415
    %v8417 = vpop.f32.mrb[0].mxu0
    %v8418 = vadd.f32 %v6346, %v8417
    %8419 = vdwg.mxu0
    %v8420 = vmax.f32 %v8412, 0.0
    %v8421 = vmax.f32 %v8414, 0.0
    %v8422 = vmax.f32 %v8416, 0.0
    %v8423 = vmax.f32 %v8418, 0.0
    %v8424 = vpack.c.bf16 %v8422, %v8420
    %v8425 = vpack.c.bf16 %v8423, %v8421
    %8426 = vmatprep.subr.bf16.mxu0 %v6699
    %8427 = vmatpush1.bf16.msra.mxu0 %v6698
    %8428 = vmatprep.subr.bf16.mxu0 %v6701
    %8429 = vmatpush1.bf16.msra.mxu0 %v6700
    %8430 = vmatprep.subr.bf16.mxu0 %v6703
    %8431 = vmatpush1.bf16.msra.mxu0 %v6702
    %8432 = vmatprep.subr.bf16.mxu0 %v6705
    %8433 = vmatpush1.bf16.msra.mxu0 %v6704
    %8434 = vmatprep.subr.bf16.mxu0 %v6707
    %8435 = vmatpush1.bf16.msra.mxu0 %v6706
    %8436 = vmatprep.subr.bf16.mxu0 %v6709
    %8437 = vmatpush1.bf16.msra.mxu0 %v6708
    %8438 = vmatprep.subr.bf16.mxu0 %v6711
    %8439 = vmatpush1.bf16.msra.mxu0 %v6710
    %8440 = vmatprep.subr.bf16.mxu0 %v6713
    %8441 = vmatpush1.bf16.msra.mxu0 %v6712
    %8442 = vmatprep.subr.bf16.mxu0 %v6715
    %8443 = vmatpush1.bf16.msra.mxu0 %v6714
    %8444 = vmatprep.subr.bf16.mxu0 %v6717
    %8445 = vmatpush1.bf16.msra.mxu0 %v6716
    %8446 = vmatprep.subr.bf16.mxu0 %v6719
    %8447 = vmatpush1.bf16.msra.mxu0 %v6718
    %8448 = vmatprep.subr.bf16.mxu0 %v6721
    %8449 = vmatpush1.bf16.msra.mxu0 %v6720
    %8450 = vmatprep.subr.bf16.mxu0 %v6723
    %8451 = vmatpush1.bf16.msra.mxu0 %v6722
    %8452 = vmatprep.subr.bf16.mxu0 %v6725
    %8453 = vmatpush1.bf16.msra.mxu0 %v6724
    %8454 = vmatprep.subr.bf16.mxu0 %v6727
    %8455 = vmatpush1.bf16.msra.mxu0 %v6726
    %8456 = vmatprep.subr.bf16.mxu0 %v6729
    %8457 = vmatpush1.bf16.msra.mxu0 %v6728
    %8458 = vmatprep.mubr.bf16.mxu0 %v8425
    %8459 = vmatmul.mubr.bf16.gmra.mrb[0].mxu0 %v8424
    %v8460 = vpop.f32.mrb[0].mxu0
    %v8461 = vadd.f32 %v6595, %v8460
    %v8462 = vpop.f32.mrb[0].mxu0
    %v8463 = vadd.f32 %v6599, %v8462
    %v8464 = vpop.f32.mrb[0].mxu0
    %v8465 = vadd.f32 %v6595, %v8464
    %v8466 = vpop.f32.mrb[0].mxu0
    %v8467 = vadd.f32 %v6599, %v8466
    %8468 = vdwg.mxu0
    %v8469 = vmax.f32 %v8461, 0.0
    %v8470 = vmax.f32 %v8463, 0.0
    %v8471 = vmax.f32 %v8465, 0.0
    %v8472 = vmax.f32 %v8467, 0.0
    %v8473 = vpack.c.bf16 %v8469, %v8469
    %v8474 = vpack.c.bf16 %v8470, %v8470
    %8475 = vmatprep.subr.bf16.mxu0 %v8474
    %8476 = vmatpush1.bf16.xpose.msra.mxu0 %v8473
    %8477 = vmatprep.subr.bf16.mxu0 0
    %8478 = vmatpush1.bf16.xpose.msra.mxu0 0
    %8479 = vmatprep.subr.bf16.mxu0 0
    %8480 = vmatpush1.bf16.xpose.msra.mxu0 0
    %8481 = vmatprep.subr.bf16.mxu0 0
    %8482 = vmatpush1.bf16.xpose.msra.mxu0 0
    %8483 = vmatprep.subr.bf16.mxu0 0
    %8484 = vmatpush1.bf16.xpose.msra.mxu0 0
    %8485 = vmatprep.subr.bf16.mxu0 0
    %8486 = vmatpush1.bf16.xpose.msra.mxu0 0
    %8487 = vmatprep.subr.bf16.mxu0 0
    %8488 = vmatpush1.bf16.xpose.msra.mxu0 0
    %8489 = vmatprep.subr.bf16.mxu0 0
    %8490 = vmatpush1.bf16.xpose.msra.mxu0 0
    %8491 = vmatprep.subr.bf16.mxu0 0
    %8492 = vmatpush1.bf16.xpose.msra.mxu0 0
    %8493 = vmatprep.subr.bf16.mxu0 0
    %8494 = vmatpush1.bf16.xpose.msra.mxu0 0
    %8495 = vmatprep.subr.bf16.mxu0 0
    %8496 = vmatpush1.bf16.xpose.msra.mxu0 0
    %8497 = vmatprep.subr.bf16.mxu0 0
    %8498 = vmatpush1.bf16.xpose.msra.mxu0 0
    %8499 = vmatprep.subr.bf16.mxu0 0
    %8500 = vmatpush1.bf16.xpose.msra.mxu0 0
    %8501 = vmatprep.subr.bf16.mxu0 0
    %8502 = vmatpush1.bf16.xpose.msra.mxu0 0
    %8503 = vmatprep.subr.bf16.mxu0 0
    %8504 = vmatpush1.bf16.xpose.msra.mxu0 0
    %8505 = vmatprep.subr.bf16.mxu0 0
    %8506 = vmatpush1.bf16.xpose.msra.mxu0 0
    %8507 = vmatprep.mubr.bf16.mxu0 %v8474
    %8508 = vmatmul.mubr.bf16.gmra.mrb[0].mxu0 %v8473
    %v8509 = vpop.f32.mrb[0].mxu0
    %v8510 = vadd.f32 0.0, %v8509
    %v8511 = vpop.f32.mrb[0].mxu0
    %v8512 = vpop.f32.mrb[0].mxu0
    %v8513 = vpop.f32.mrb[0].mxu0
    %8514 = vdwg.mxu0
    %v8515 = vsel %vm1810, %v8510, 0.0
    %8516 = vadd.xlane.f32.xlu0 %v8515
    %v8517 = vpop.xlane.xlu0 %8516
    %v8518 = vrot.slane %v8517, 4
    %v8519 = vadd.f32 %v8517, %v8518
    %v8520 = vrot.slane %v8519, 2
    %v8521 = vadd.f32 %v8519, %v8520
    %v8522 = vrot.slane %v8521, 1
    %v8523 = vadd.f32 %v8521, %v8522
    %s8524 = vtos %v8523
    %v8525 = vrcp.pop 64.0
    %s8526 = vtos %v8525
    %s8527 = smul.f32 %s8524, %s8526
    %v8528 = vstv %s8527
    %vm8529 = vcmp.gt.f32.partialorder %v8510, %v8528
    %v8530 = vsel %vm8529, 1, 0
    %v8531 = vcvt.s32.f32 %v8530
    %v8532 = vadd.f32 %v8531, %v1269
    %v8533 = vpack.c.bf16 %v8532, %v8532
    %v8534 = vpack.c.bf16 %v8363, %v8363
    %v8535 = vpack.c.bf16 %v8365, %v8365
    %v8537 = vsel %vm1810, %v8533, 0
    %v8540 = vsel %vm1833, %v8534, 0
    %v8543 = vsel %vm1833, %v8535, 0
    %8545 = vmatprep.subr.bf16.mxu0 %v8543
    %8546 = vmatpush1.bf16.msra.mxu0 %v8540
    %8547 = vmatprep.subr.bf16.mxu0 0
    %8548 = vmatpush1.bf16.msra.mxu0 0
    %8549 = vmatprep.subr.bf16.mxu0 0
    %8550 = vmatpush1.bf16.msra.mxu0 0
    %8551 = vmatprep.subr.bf16.mxu0 0
    %8552 = vmatpush1.bf16.msra.mxu0 0
    %8553 = vmatprep.subr.bf16.mxu0 0
    %8554 = vmatpush1.bf16.msra.mxu0 0
    %8555 = vmatprep.subr.bf16.mxu0 0
    %8556 = vmatpush1.bf16.msra.mxu0 0
    %8557 = vmatprep.subr.bf16.mxu0 0
    %8558 = vmatpush1.bf16.msra.mxu0 0
    %8559 = vmatprep.subr.bf16.mxu0 0
    %8560 = vmatpush1.bf16.msra.mxu0 0
    %8561 = vmatprep.subr.bf16.mxu0 0
    %8562 = vmatpush1.bf16.msra.mxu0 0
    %8563 = vmatprep.subr.bf16.mxu0 0
    %8564 = vmatpush1.bf16.msra.mxu0 0
    %8565 = vmatprep.subr.bf16.mxu0 0
    %8566 = vmatpush1.bf16.msra.mxu0 0
    %8567 = vmatprep.subr.bf16.mxu0 0
    %8568 = vmatpush1.bf16.msra.mxu0 0
    %8569 = vmatprep.subr.bf16.mxu0 0
    %8570 = vmatpush1.bf16.msra.mxu0 0
    %8571 = vmatprep.subr.bf16.mxu0 0
    %8572 = vmatpush1.bf16.msra.mxu0 0
    %8573 = vmatprep.subr.bf16.mxu0 0
    %8574 = vmatpush1.bf16.msra.mxu0 0
    %8575 = vmatprep.subr.bf16.mxu0 0
    %8576 = vmatpush1.bf16.msra.mxu0 0
    %8577 = vmatprep.mubr.bf16.mxu0 0
    %8578 = vmatmul.mubr.bf16.gmra.mrb[0].mxu0 %v8537
    %v8579 = vpop.f32.mrb[0].mxu0
    %v8580 = vadd.f32 0.0, %v8579
    %v8581 = vpop.f32.mrb[0].mxu0
    %v8582 = vadd.f32 0.0, %v8581
    %v8583 = vpop.f32.mrb[0].mxu0
    %v8584 = vpop.f32.mrb[0].mxu0
    %8585 = vdwg.mxu0
    %v8586 = vpack.c.bf16 %v8471, %v8471
    %v8587 = vpack.c.bf16 %v8472, %v8472
    %8588 = vmatprep.subr.bf16.mxu0 %v8587
    %8589 = vmatpush1.bf16.xpose.msra.mxu0 %v8586
    %8590 = vmatprep.subr.bf16.mxu0 0
    %8591 = vmatpush1.bf16.xpose.msra.mxu0 0
    %8592 = vmatprep.subr.bf16.mxu0 0
    %8593 = vmatpush1.bf16.xpose.msra.mxu0 0
    %8594 = vmatprep.subr.bf16.mxu0 0
    %8595 = vmatpush1.bf16.xpose.msra.mxu0 0
    %8596 = vmatprep.subr.bf16.mxu0 0
    %8597 = vmatpush1.bf16.xpose.msra.mxu0 0
    %8598 = vmatprep.subr.bf16.mxu0 0
    %8599 = vmatpush1.bf16.xpose.msra.mxu0 0
    %8600 = vmatprep.subr.bf16.mxu0 0
    %8601 = vmatpush1.bf16.xpose.msra.mxu0 0
    %8602 = vmatprep.subr.bf16.mxu0 0
    %8603 = vmatpush1.bf16.xpose.msra.mxu0 0
    %8604 = vmatprep.subr.bf16.mxu0 0
    %8605 = vmatpush1.bf16.xpose.msra.mxu0 0
    %8606 = vmatprep.subr.bf16.mxu0 0
    %8607 = vmatpush1.bf16.xpose.msra.mxu0 0
    %8608 = vmatprep.subr.bf16.mxu0 0
    %8609 = vmatpush1.bf16.xpose.msra.mxu0 0
    %8610 = vmatprep.subr.bf16.mxu0 0
    %8611 = vmatpush1.bf16.xpose.msra.mxu0 0
    %8612 = vmatprep.subr.bf16.mxu0 0
    %8613 = vmatpush1.bf16.xpose.msra.mxu0 0
    %8614 = vmatprep.subr.bf16.mxu0 0
    %8615 = vmatpush1.bf16.xpose.msra.mxu0 0
    %8616 = vmatprep.subr.bf16.mxu0 0
    %8617 = vmatpush1.bf16.xpose.msra.mxu0 0
    %8618 = vmatprep.subr.bf16.mxu0 0
    %8619 = vmatpush1.bf16.xpose.msra.mxu0 0
    %8620 = vmatprep.mubr.bf16.mxu0 %v8587
    %8621 = vmatmul.mubr.bf16.gmra.mrb[0].mxu0 %v8586
    %v8622 = vpop.f32.mrb[0].mxu0
    %v8623 = vadd.f32 0.0, %v8622
    %v8624 = vpop.f32.mrb[0].mxu0
    %v8625 = vpop.f32.mrb[0].mxu0
    %v8626 = vpop.f32.mrb[0].mxu0
    %8627 = vdwg.mxu0
    %v8628 = vsel %vm1810, %v8623, 0.0
    %8629 = vadd.xlane.f32.xlu0 %v8628
    %v8630 = vpop.xlane.xlu0 %8629
    %v8631 = vrot.slane %v8630, 4
    %v8632 = vadd.f32 %v8630, %v8631
    %v8633 = vrot.slane %v8632, 2
    %v8634 = vadd.f32 %v8632, %v8633
    %v8635 = vrot.slane %v8634, 1
    %v8636 = vadd.f32 %v8634, %v8635
    %s8637 = vtos %v8636
    %v8638 = vrcp.pop 64.0
    %s8639 = vtos %v8638
    %s8640 = smul.f32 %s8637, %s8639
    %v8641 = vstv %s8640
    %vm8642 = vcmp.gt.f32.partialorder %v8623, %v8641
    %v8643 = vsel %vm8642, 1, 0
    %v8644 = vcvt.s32.f32 %v8643
    %v8645 = vadd.f32 %v8644, %v1269
    %v8646 = vpack.c.bf16 %v8645, %v8645
    %v8647 = vpack.c.bf16 %v8367, %v8367
    %v8648 = vpack.c.bf16 %v8369, %v8369
    %v8650 = vsel %vm1810, %v8646, 0
    %v8653 = vsel %vm1833, %v8647, 0
    %v8656 = vsel %vm1833, %v8648, 0
    %8658 = vmatprep.subr.bf16.mxu0 %v8656
    %8659 = vmatpush1.bf16.msra.mxu0 %v8653
    %8660 = vmatprep.subr.bf16.mxu0 0
    %8661 = vmatpush1.bf16.msra.mxu0 0
    %8662 = vmatprep.subr.bf16.mxu0 0
    %8663 = vmatpush1.bf16.msra.mxu0 0
    %8664 = vmatprep.subr.bf16.mxu0 0
    %8665 = vmatpush1.bf16.msra.mxu0 0
    %8666 = vmatprep.subr.bf16.mxu0 0
    %8667 = vmatpush1.bf16.msra.mxu0 0
    %8668 = vmatprep.subr.bf16.mxu0 0
    %8669 = vmatpush1.bf16.msra.mxu0 0
    %8670 = vmatprep.subr.bf16.mxu0 0
    %8671 = vmatpush1.bf16.msra.mxu0 0
    %8672 = vmatprep.subr.bf16.mxu0 0
    %8673 = vmatpush1.bf16.msra.mxu0 0
    %8674 = vmatprep.subr.bf16.mxu0 0
    %8675 = vmatpush1.bf16.msra.mxu0 0
    %8676 = vmatprep.subr.bf16.mxu0 0
    %8677 = vmatpush1.bf16.msra.mxu0 0
    %8678 = vmatprep.subr.bf16.mxu0 0
    %8679 = vmatpush1.bf16.msra.mxu0 0
    %8680 = vmatprep.subr.bf16.mxu0 0
    %8681 = vmatpush1.bf16.msra.mxu0 0
    %8682 = vmatprep.subr.bf16.mxu0 0
    %8683 = vmatpush1.bf16.msra.mxu0 0
    %8684 = vmatprep.subr.bf16.mxu0 0
    %8685 = vmatpush1.bf16.msra.mxu0 0
    %8686 = vmatprep.subr.bf16.mxu0 0
    %8687 = vmatpush1.bf16.msra.mxu0 0
    %8688 = vmatprep.subr.bf16.mxu0 0
    %8689 = vmatpush1.bf16.msra.mxu0 0
    %8690 = vmatprep.mubr.bf16.mxu0 0
    %8691 = vmatmul.mubr.bf16.gmra.mrb[0].mxu0 %v8650
    %v8692 = vpop.f32.mrb[0].mxu0
    %v8693 = vadd.f32 0.0, %v8692
    %v8694 = vpop.f32.mrb[0].mxu0
    %v8695 = vadd.f32 0.0, %v8694
    %v8696 = vpop.f32.mrb[0].mxu0
    %v8697 = vpop.f32.mrb[0].mxu0
    %8698 = vdwg.mxu0
    %v8699 = vpack.c.bf16 %v8693, %v8580
    %v8700 = vpack.c.bf16 %v8695, %v8582
    %s8701 = scalar_lea.vmem [#allocation23], 512
    %v8702 = vld [vmem:[%s8701] sm:$0xff]
    %v8703 = vld [vmem:[%s8701 + $0x8] sm:$0xff]
    %v8704 = vld [vmem:[%s8701 + $0x10] sm:$0xff]
    %v8705 = vld [vmem:[%s8701 + $0x18] sm:$0xff]
    %v8706 = vld [vmem:[%s8701 + $0x20] sm:$0xff]
    %v8707 = vld [vmem:[%s8701 + $0x28] sm:$0xff]
    %v8708 = vld [vmem:[%s8701 + $0x30] sm:$0xff]
    %v8709 = vld [vmem:[%s8701 + $0x38] sm:$0xff]
    %v8710 = vld [vmem:[%s8701 + $0x40] sm:$0xff]
    %v8711 = vld [vmem:[%s8701 + $0x48] sm:$0xff]
    %v8712 = vld [vmem:[%s8701 + $0x50] sm:$0xff]
    %v8713 = vld [vmem:[%s8701 + $0x58] sm:$0xff]
    %v8714 = vld [vmem:[%s8701 + $0x60] sm:$0xff]
    %v8715 = vld [vmem:[%s8701 + $0x68] sm:$0xff]
    %v8716 = vld [vmem:[%s8701 + $0x70] sm:$0xff]
    %v8717 = vld [vmem:[%s8701 + $0x78] sm:$0xff]
    %v8718 = vld [vmem:[%s8701 + $0x80] sm:$0xff]
    %v8719 = vld [vmem:[%s8701 + $0x88] sm:$0xff]
    %v8720 = vld [vmem:[%s8701 + $0x90] sm:$0xff]
    %v8721 = vld [vmem:[%s8701 + $0x98] sm:$0xff]
    %v8722 = vld [vmem:[%s8701 + $0xa0] sm:$0xff]
    %v8723 = vld [vmem:[%s8701 + $0xa8] sm:$0xff]
    %v8724 = vld [vmem:[%s8701 + $0xb0] sm:$0xff]
    %v8725 = vld [vmem:[%s8701 + $0xb8] sm:$0xff]
    %v8726 = vld [vmem:[%s8701 + $0xc0] sm:$0xff]
    %v8727 = vld [vmem:[%s8701 + $0xc8] sm:$0xff]
    %v8728 = vld [vmem:[%s8701 + $0xd0] sm:$0xff]
    %v8729 = vld [vmem:[%s8701 + $0xd8] sm:$0xff]
    %v8730 = vld [vmem:[%s8701 + $0xe0] sm:$0xff]
    %v8731 = vld [vmem:[%s8701 + $0xe8] sm:$0xff]
    %v8732 = vld [vmem:[%s8701 + $0xf0] sm:$0xff]
    %v8733 = vld [vmem:[%s8701 + $0xf8] sm:$0xff]
    %s8734 = scalar_lea.vmem %s43, 4
    %v8735 = vld [vmem:[%s8734] sm:$0x3]
    %v8737 = vlaneseq
    %v8738 = vshrl.u32 %v8737, 7
    %v8739 = vsub.s32 0, %v8738
    %v8740 = vrot.slane %v8735, %v8739
    %v8741 = vlaneseq
    %v8742 = vshrl.u32 %v8741, 7
    %v8743 = vsub.s32 1, %v8742
    %v8744 = vrot.slane %v8735, %v8743
    %v8779 = vunpack.c.l.b16 %v8702
    %v8780 = vunpack.c.h.b16 %v8702
    %v8781 = vunpack.c.l.b16 %v8703
    %v8782 = vunpack.c.h.b16 %v8703
    %v8783 = vunpack.c.l.b16 %v8704
    %v8784 = vunpack.c.h.b16 %v8704
    %v8785 = vunpack.c.l.b16 %v8705
    %v8786 = vunpack.c.h.b16 %v8705
    %v8787 = vunpack.c.l.b16 %v8706
    %v8788 = vunpack.c.h.b16 %v8706
    %v8789 = vunpack.c.l.b16 %v8707
    %v8790 = vunpack.c.h.b16 %v8707
    %v8791 = vunpack.c.l.b16 %v8708
    %v8792 = vunpack.c.h.b16 %v8708
    %v8793 = vunpack.c.l.b16 %v8709
    %v8794 = vunpack.c.h.b16 %v8709
    %v8795 = vunpack.c.l.b16 %v8710
    %v8796 = vunpack.c.h.b16 %v8710
    %v8797 = vunpack.c.l.b16 %v8711
    %v8798 = vunpack.c.h.b16 %v8711
    %v8799 = vunpack.c.l.b16 %v8712
    %v8800 = vunpack.c.h.b16 %v8712
    %v8801 = vunpack.c.l.b16 %v8713
    %v8802 = vunpack.c.h.b16 %v8713
    %v8803 = vunpack.c.l.b16 %v8714
    %v8804 = vunpack.c.h.b16 %v8714
    %v8805 = vunpack.c.l.b16 %v8715
    %v8806 = vunpack.c.h.b16 %v8715
    %v8807 = vunpack.c.l.b16 %v8716
    %v8808 = vunpack.c.h.b16 %v8716
    %v8809 = vunpack.c.l.b16 %v8717
    %v8810 = vunpack.c.h.b16 %v8717
    %v8811 = vunpack.c.l.b16 %v8718
    %v8812 = vunpack.c.h.b16 %v8718
    %v8813 = vunpack.c.l.b16 %v8719
    %v8814 = vunpack.c.h.b16 %v8719
    %v8815 = vunpack.c.l.b16 %v8720
    %v8816 = vunpack.c.h.b16 %v8720
    %v8817 = vunpack.c.l.b16 %v8721
    %v8818 = vunpack.c.h.b16 %v8721
    %v8819 = vunpack.c.l.b16 %v8722
    %v8820 = vunpack.c.h.b16 %v8722
    %v8821 = vunpack.c.l.b16 %v8723
    %v8822 = vunpack.c.h.b16 %v8723
    %v8823 = vunpack.c.l.b16 %v8724
    %v8824 = vunpack.c.h.b16 %v8724
    %v8825 = vunpack.c.l.b16 %v8725
    %v8826 = vunpack.c.h.b16 %v8725
    %v8827 = vunpack.c.l.b16 %v8726
    %v8828 = vunpack.c.h.b16 %v8726
    %v8829 = vunpack.c.l.b16 %v8727
    %v8830 = vunpack.c.h.b16 %v8727
    %v8831 = vunpack.c.l.b16 %v8728
    %v8832 = vunpack.c.h.b16 %v8728
    %v8833 = vunpack.c.l.b16 %v8729
    %v8834 = vunpack.c.h.b16 %v8729
    %v8835 = vunpack.c.l.b16 %v8730
    %v8836 = vunpack.c.h.b16 %v8730
    %v8837 = vunpack.c.l.b16 %v8731
    %v8838 = vunpack.c.h.b16 %v8731
    %v8839 = vunpack.c.l.b16 %v8732
    %v8840 = vunpack.c.h.b16 %v8732
    %v8841 = vunpack.c.l.b16 %v8733
    %v8842 = vunpack.c.h.b16 %v8733
    %v8843 = vpack.c.b16 %v8781, %v8779
    %v8844 = vpack.c.b16 %v8782, %v8780
    %v8845 = vpack.c.b16 %v8785, %v8783
    %v8846 = vpack.c.b16 %v8786, %v8784
    %v8847 = vpack.c.b16 %v8789, %v8787
    %v8848 = vpack.c.b16 %v8790, %v8788
    %v8849 = vpack.c.b16 %v8793, %v8791
    %v8850 = vpack.c.b16 %v8794, %v8792
    %v8851 = vpack.c.b16 %v8797, %v8795
    %v8852 = vpack.c.b16 %v8798, %v8796
    %v8853 = vpack.c.b16 %v8801, %v8799
    %v8854 = vpack.c.b16 %v8802, %v8800
    %v8855 = vpack.c.b16 %v8805, %v8803
    %v8856 = vpack.c.b16 %v8806, %v8804
    %v8857 = vpack.c.b16 %v8809, %v8807
    %v8858 = vpack.c.b16 %v8810, %v8808
    %v8859 = vpack.c.b16 %v8813, %v8811
    %v8860 = vpack.c.b16 %v8814, %v8812
    %v8861 = vpack.c.b16 %v8817, %v8815
    %v8862 = vpack.c.b16 %v8818, %v8816
    %v8863 = vpack.c.b16 %v8821, %v8819
    %v8864 = vpack.c.b16 %v8822, %v8820
    %v8865 = vpack.c.b16 %v8825, %v8823
    %v8866 = vpack.c.b16 %v8826, %v8824
    %v8867 = vpack.c.b16 %v8829, %v8827
    %v8868 = vpack.c.b16 %v8830, %v8828
    %v8869 = vpack.c.b16 %v8833, %v8831
    %v8870 = vpack.c.b16 %v8834, %v8832
    %v8871 = vpack.c.b16 %v8837, %v8835
    %v8872 = vpack.c.b16 %v8838, %v8836
    %v8873 = vpack.c.b16 %v8841, %v8839
    %v8874 = vpack.c.b16 %v8842, %v8840
    %8907 = vmatprep.subr.bf16.mxu0 %v8844
    %8908 = vmatpush1.bf16.msra.mxu0 %v8843
    %8909 = vmatprep.subr.bf16.mxu0 %v8846
    %8910 = vmatpush1.bf16.msra.mxu0 %v8845
    %8911 = vmatprep.subr.bf16.mxu0 %v8848
    %8912 = vmatpush1.bf16.msra.mxu0 %v8847
    %8913 = vmatprep.subr.bf16.mxu0 %v8850
    %8914 = vmatpush1.bf16.msra.mxu0 %v8849
    %8915 = vmatprep.subr.bf16.mxu0 %v8852
    %8916 = vmatpush1.bf16.msra.mxu0 %v8851
    %8917 = vmatprep.subr.bf16.mxu0 %v8854
    %8918 = vmatpush1.bf16.msra.mxu0 %v8853
    %8919 = vmatprep.subr.bf16.mxu0 %v8856
    %8920 = vmatpush1.bf16.msra.mxu0 %v8855
    %8921 = vmatprep.subr.bf16.mxu0 %v8858
    %8922 = vmatpush1.bf16.msra.mxu0 %v8857
    %8923 = vmatprep.subr.bf16.mxu0 %v8860
    %8924 = vmatpush1.bf16.msra.mxu0 %v8859
    %8925 = vmatprep.subr.bf16.mxu0 %v8862
    %8926 = vmatpush1.bf16.msra.mxu0 %v8861
    %8927 = vmatprep.subr.bf16.mxu0 %v8864
    %8928 = vmatpush1.bf16.msra.mxu0 %v8863
    %8929 = vmatprep.subr.bf16.mxu0 %v8866
    %8930 = vmatpush1.bf16.msra.mxu0 %v8865
    %8931 = vmatprep.subr.bf16.mxu0 %v8868
    %8932 = vmatpush1.bf16.msra.mxu0 %v8867
    %8933 = vmatprep.subr.bf16.mxu0 %v8870
    %8934 = vmatpush1.bf16.msra.mxu0 %v8869
    %8935 = vmatprep.subr.bf16.mxu0 %v8872
    %8936 = vmatpush1.bf16.msra.mxu0 %v8871
    %8937 = vmatprep.subr.bf16.mxu0 %v8874
    %8938 = vmatpush1.bf16.msra.mxu0 %v8873
    %8939 = vmatprep.mubr.bf16.mxu0 %v8700
    %8940 = vmatmul.mubr.bf16.gmra.mrb[0].mxu0 %v8699
    %v8941 = vpop.f32.mrb[0].mxu0
    %v8942 = vadd.f32 %v8740, %v8941
    %v8943 = vpop.f32.mrb[0].mxu0
    %v8944 = vadd.f32 %v8744, %v8943
    %v8945 = vpop.f32.mrb[0].mxu0
    %v8946 = vadd.f32 %v8740, %v8945
    %v8947 = vpop.f32.mrb[0].mxu0
    %v8948 = vadd.f32 %v8744, %v8947
    %8949 = vdwg.mxu0
    %v8950 = vmax.f32 %v8942, 0.0
    %v8951 = vmax.f32 %v8944, 0.0
    %v8952 = vmax.f32 %v8946, 0.0
    %v8953 = vmax.f32 %v8948, 0.0
    %v8954 = vpack.c.bf16 %v8952, %v8950
    %v8955 = vpack.c.bf16 %v8953, %v8951
    %s8956 = scalar_lea.vmem [#allocation24], 512
    %v8957 = vld [vmem:[%s8956] sm:$0xff]
    %v8958 = vld [vmem:[%s8956 + $0x8] sm:$0xff]
    %v8959 = vld [vmem:[%s8956 + $0x10] sm:$0xff]
    %v8960 = vld [vmem:[%s8956 + $0x18] sm:$0xff]
    %v8961 = vld [vmem:[%s8956 + $0x20] sm:$0xff]
    %v8962 = vld [vmem:[%s8956 + $0x28] sm:$0xff]
    %v8963 = vld [vmem:[%s8956 + $0x30] sm:$0xff]
    %v8964 = vld [vmem:[%s8956 + $0x38] sm:$0xff]
    %v8965 = vld [vmem:[%s8956 + $0x40] sm:$0xff]
    %v8966 = vld [vmem:[%s8956 + $0x48] sm:$0xff]
    %v8967 = vld [vmem:[%s8956 + $0x50] sm:$0xff]
    %v8968 = vld [vmem:[%s8956 + $0x58] sm:$0xff]
    %v8969 = vld [vmem:[%s8956 + $0x60] sm:$0xff]
    %v8970 = vld [vmem:[%s8956 + $0x68] sm:$0xff]
    %v8971 = vld [vmem:[%s8956 + $0x70] sm:$0xff]
    %v8972 = vld [vmem:[%s8956 + $0x78] sm:$0xff]
    %v8973 = vld [vmem:[%s8956 + $0x80] sm:$0xff]
    %v8974 = vld [vmem:[%s8956 + $0x88] sm:$0xff]
    %v8975 = vld [vmem:[%s8956 + $0x90] sm:$0xff]
    %v8976 = vld [vmem:[%s8956 + $0x98] sm:$0xff]
    %v8977 = vld [vmem:[%s8956 + $0xa0] sm:$0xff]
    %v8978 = vld [vmem:[%s8956 + $0xa8] sm:$0xff]
    %v8979 = vld [vmem:[%s8956 + $0xb0] sm:$0xff]
    %v8980 = vld [vmem:[%s8956 + $0xb8] sm:$0xff]
    %v8981 = vld [vmem:[%s8956 + $0xc0] sm:$0xff]
    %v8982 = vld [vmem:[%s8956 + $0xc8] sm:$0xff]
    %v8983 = vld [vmem:[%s8956 + $0xd0] sm:$0xff]
    %v8984 = vld [vmem:[%s8956 + $0xd8] sm:$0xff]
    %v8985 = vld [vmem:[%s8956 + $0xe0] sm:$0xff]
    %v8986 = vld [vmem:[%s8956 + $0xe8] sm:$0xff]
    %v8987 = vld [vmem:[%s8956 + $0xf0] sm:$0xff]
    %v8988 = vld [vmem:[%s8956 + $0xf8] sm:$0xff]
    %s8989 = scalar_lea.vmem %s47, 4
    %v8990 = vld [vmem:[%s8989] sm:$0x3]
    %v8992 = vlaneseq
    %v8993 = vshrl.u32 %v8992, 7
    %v8994 = vsub.s32 0, %v8993
    %v8995 = vrot.slane %v8990, %v8994
    %v8996 = vlaneseq
    %v8997 = vshrl.u32 %v8996, 7
    %v8998 = vsub.s32 1, %v8997
    %v8999 = vrot.slane %v8990, %v8998
    %v9034 = vunpack.c.l.b16 %v8957
    %v9035 = vunpack.c.h.b16 %v8957
    %v9036 = vunpack.c.l.b16 %v8958
    %v9037 = vunpack.c.h.b16 %v8958
    %v9038 = vunpack.c.l.b16 %v8959
    %v9039 = vunpack.c.h.b16 %v8959
    %v9040 = vunpack.c.l.b16 %v8960
    %v9041 = vunpack.c.h.b16 %v8960
    %v9042 = vunpack.c.l.b16 %v8961
    %v9043 = vunpack.c.h.b16 %v8961
    %v9044 = vunpack.c.l.b16 %v8962
    %v9045 = vunpack.c.h.b16 %v8962
    %v9046 = vunpack.c.l.b16 %v8963
    %v9047 = vunpack.c.h.b16 %v8963
    %v9048 = vunpack.c.l.b16 %v8964
    %v9049 = vunpack.c.h.b16 %v8964
    %v9050 = vunpack.c.l.b16 %v8965
    %v9051 = vunpack.c.h.b16 %v8965
    %v9052 = vunpack.c.l.b16 %v8966
    %v9053 = vunpack.c.h.b16 %v8966
    %v9054 = vunpack.c.l.b16 %v8967
    %v9055 = vunpack.c.h.b16 %v8967
    %v9056 = vunpack.c.l.b16 %v8968
    %v9057 = vunpack.c.h.b16 %v8968
    %v9058 = vunpack.c.l.b16 %v8969
    %v9059 = vunpack.c.h.b16 %v8969
    %v9060 = vunpack.c.l.b16 %v8970
    %v9061 = vunpack.c.h.b16 %v8970
    %v9062 = vunpack.c.l.b16 %v8971
    %v9063 = vunpack.c.h.b16 %v8971
    %v9064 = vunpack.c.l.b16 %v8972
    %v9065 = vunpack.c.h.b16 %v8972
    %v9066 = vunpack.c.l.b16 %v8973
    %v9067 = vunpack.c.h.b16 %v8973
    %v9068 = vunpack.c.l.b16 %v8974
    %v9069 = vunpack.c.h.b16 %v8974
    %v9070 = vunpack.c.l.b16 %v8975
    %v9071 = vunpack.c.h.b16 %v8975
    %v9072 = vunpack.c.l.b16 %v8976
    %v9073 = vunpack.c.h.b16 %v8976
    %v9074 = vunpack.c.l.b16 %v8977
    %v9075 = vunpack.c.h.b16 %v8977
    %v9076 = vunpack.c.l.b16 %v8978
    %v9077 = vunpack.c.h.b16 %v8978
    %v9078 = vunpack.c.l.b16 %v8979
    %v9079 = vunpack.c.h.b16 %v8979
    %v9080 = vunpack.c.l.b16 %v8980
    %v9081 = vunpack.c.h.b16 %v8980
    %v9082 = vunpack.c.l.b16 %v8981
    %v9083 = vunpack.c.h.b16 %v8981
    %v9084 = vunpack.c.l.b16 %v8982
    %v9085 = vunpack.c.h.b16 %v8982
    %v9086 = vunpack.c.l.b16 %v8983
    %v9087 = vunpack.c.h.b16 %v8983
    %v9088 = vunpack.c.l.b16 %v8984
    %v9089 = vunpack.c.h.b16 %v8984
    %v9090 = vunpack.c.l.b16 %v8985
    %v9091 = vunpack.c.h.b16 %v8985
    %v9092 = vunpack.c.l.b16 %v8986
    %v9093 = vunpack.c.h.b16 %v8986
    %v9094 = vunpack.c.l.b16 %v8987
    %v9095 = vunpack.c.h.b16 %v8987
    %v9096 = vunpack.c.l.b16 %v8988
    %v9097 = vunpack.c.h.b16 %v8988
    %v9098 = vpack.c.b16 %v9036, %v9034
    %v9099 = vpack.c.b16 %v9037, %v9035
    %v9100 = vpack.c.b16 %v9040, %v9038
    %v9101 = vpack.c.b16 %v9041, %v9039
    %v9102 = vpack.c.b16 %v9044, %v9042
    %v9103 = vpack.c.b16 %v9045, %v9043
    %v9104 = vpack.c.b16 %v9048, %v9046
    %v9105 = vpack.c.b16 %v9049, %v9047
    %v9106 = vpack.c.b16 %v9052, %v9050
    %v9107 = vpack.c.b16 %v9053, %v9051
    %v9108 = vpack.c.b16 %v9056, %v9054
    %v9109 = vpack.c.b16 %v9057, %v9055
    %v9110 = vpack.c.b16 %v9060, %v9058
    %v9111 = vpack.c.b16 %v9061, %v9059
    %v9112 = vpack.c.b16 %v9064, %v9062
    %v9113 = vpack.c.b16 %v9065, %v9063
    %v9114 = vpack.c.b16 %v9068, %v9066
    %v9115 = vpack.c.b16 %v9069, %v9067
    %v9116 = vpack.c.b16 %v9072, %v9070
    %v9117 = vpack.c.b16 %v9073, %v9071
    %v9118 = vpack.c.b16 %v9076, %v9074
    %v9119 = vpack.c.b16 %v9077, %v9075
    %v9120 = vpack.c.b16 %v9080, %v9078
    %v9121 = vpack.c.b16 %v9081, %v9079
    %v9122 = vpack.c.b16 %v9084, %v9082
    %v9123 = vpack.c.b16 %v9085, %v9083
    %v9124 = vpack.c.b16 %v9088, %v9086
    %v9125 = vpack.c.b16 %v9089, %v9087
    %v9126 = vpack.c.b16 %v9092, %v9090
    %v9127 = vpack.c.b16 %v9093, %v9091
    %v9128 = vpack.c.b16 %v9096, %v9094
    %v9129 = vpack.c.b16 %v9097, %v9095
    %9162 = vmatprep.subr.bf16.mxu0 %v9099
    %9163 = vmatpush1.bf16.msra.mxu0 %v9098
    %9164 = vmatprep.subr.bf16.mxu0 %v9101
    %9165 = vmatpush1.bf16.msra.mxu0 %v9100
    %9166 = vmatprep.subr.bf16.mxu0 %v9103
    %9167 = vmatpush1.bf16.msra.mxu0 %v9102
    %9168 = vmatprep.subr.bf16.mxu0 %v9105
    %9169 = vmatpush1.bf16.msra.mxu0 %v9104
    %9170 = vmatprep.subr.bf16.mxu0 %v9107
    %9171 = vmatpush1.bf16.msra.mxu0 %v9106
    %9172 = vmatprep.subr.bf16.mxu0 %v9109
    %9173 = vmatpush1.bf16.msra.mxu0 %v9108
    %9174 = vmatprep.subr.bf16.mxu0 %v9111
    %9175 = vmatpush1.bf16.msra.mxu0 %v9110
    %9176 = vmatprep.subr.bf16.mxu0 %v9113
    %9177 = vmatpush1.bf16.msra.mxu0 %v9112
    %9178 = vmatprep.subr.bf16.mxu0 %v9115
    %9179 = vmatpush1.bf16.msra.mxu0 %v9114
    %9180 = vmatprep.subr.bf16.mxu0 %v9117
    %9181 = vmatpush1.bf16.msra.mxu0 %v9116
    %9182 = vmatprep.subr.bf16.mxu0 %v9119
    %9183 = vmatpush1.bf16.msra.mxu0 %v9118
    %9184 = vmatprep.subr.bf16.mxu0 %v9121
    %9185 = vmatpush1.bf16.msra.mxu0 %v9120
    %9186 = vmatprep.subr.bf16.mxu0 %v9123
    %9187 = vmatpush1.bf16.msra.mxu0 %v9122
    %9188 = vmatprep.subr.bf16.mxu0 %v9125
    %9189 = vmatpush1.bf16.msra.mxu0 %v9124
    %9190 = vmatprep.subr.bf16.mxu0 %v9127
    %9191 = vmatpush1.bf16.msra.mxu0 %v9126
    %9192 = vmatprep.subr.bf16.mxu0 %v9129
    %9193 = vmatpush1.bf16.msra.mxu0 %v9128
    %9194 = vmatprep.mubr.bf16.mxu0 %v8955
    %9195 = vmatmul.mubr.bf16.gmra.mrb[0].mxu0 %v8954
    %v9196 = vpop.f32.mrb[0].mxu0
    %v9197 = vadd.f32 %v8995, %v9196
    %v9198 = vpop.f32.mrb[0].mxu0
    %v9199 = vadd.f32 %v8999, %v9198
    %v9200 = vpop.f32.mrb[0].mxu0
    %v9201 = vadd.f32 %v8995, %v9200
    %v9202 = vpop.f32.mrb[0].mxu0
    %v9203 = vadd.f32 %v8999, %v9202
    %9204 = vdwg.mxu0
    %v9205 = vadd.f32 %v8371, %v9197
    %v9206 = vadd.f32 %v8372, %v9199
    %v9207 = vadd.f32 %v8373, %v9201
    %v9208 = vadd.f32 %v8374, %v9203
    %v9209 = vmul.f32 %v9205, %v3785
    %v9210 = vmul.f32 %v9206, %v3785
    %v9211 = vmul.f32 %v9207, %v3785
    %v9212 = vmul.f32 %v9208, %v3785
    %v9213 = vsub.f32 %v3786, %v9211
    %v9214 = vsub.f32 %v3787, %v9212
    %v9215 = vmul.f32 %v9213, %v9213
    %v9216 = vmul.f32 %v9214, %v9214
    %v9217 = vadd.f32 %v9215, %v9216
    %9218 = vadd.xlane.f32.xlu0 %v9217
    %v9219 = vpop.xlane.xlu0 %9218
    %v9220 = vrot.slane %v9219, 4
    %v9221 = vadd.f32 %v9219, %v9220
    %v9222 = vrot.slane %v9221, 2
    %v9223 = vadd.f32 %v9221, %v9222
    %v9224 = vrot.slane %v9223, 1
    %v9225 = vadd.f32 %v9223, %v9224
    %s9226 = vtos %v9225
    %v9227 = vrcp.pop 2048.0
    %s9228 = vtos %v9227
    %s9229 = smul.f32 %s9226, %s9228
    %s9230 = scalar_lea.smem [#allocation36], 0
    %9231 = sst [smem:[%s9230]] %s9229
    %v9232 = vsub.f32 %v9209, %v9211
    %v9233 = vsub.f32 %v9210, %v9212
    %v9234 = vmul.f32 %v9232, %v9232
    %v9235 = vmul.f32 %v9233, %v9233
    %v9236 = vadd.f32 %v9234, %v9235
    %9237 = vadd.xlane.f32.xlu0 %v9236
    %v9238 = vpop.xlane.xlu0 %9237
    %v9239 = vrot.slane %v9238, 4
    %v9240 = vadd.f32 %v9238, %v9239
    %v9241 = vrot.slane %v9240, 2
    %v9242 = vadd.f32 %v9240, %v9241
    %v9243 = vrot.slane %v9242, 1
    %v9244 = vadd.f32 %v9242, %v9243
    %s9245 = vtos %v9244
    %v9246 = vrcp.pop 2048.0
    %s9247 = vtos %v9246
    %s9248 = smul.f32 %s9245, %s9247
    %s9249 = scalar_lea.smem [#allocation36], 1
    %9250 = sst [smem:[%s9249]] %s9248
    %v9251 = vsub.f32 %v6301, %v9211
    %v9252 = vsub.f32 %v6302, %v9212
    %v9253 = vmul.f32 %v9251, %v9251
    %v9254 = vmul.f32 %v9252, %v9252
    %v9255 = vadd.f32 %v9253, %v9254
    %9256 = vadd.xlane.f32.xlu0 %v9255
    %v9257 = vpop.xlane.xlu0 %9256
    %v9258 = vrot.slane %v9257, 4
    %v9259 = vadd.f32 %v9257, %v9258
    %v9260 = vrot.slane %v9259, 2
    %v9261 = vadd.f32 %v9259, %v9260
    %v9262 = vrot.slane %v9261, 1
    %v9263 = vadd.f32 %v9261, %v9262
    %s9264 = vtos %v9263
    %v9265 = vrcp.pop 2048.0
    %s9266 = vtos %v9265
    %s9267 = smul.f32 %s9264, %s9266
    %s9268 = scalar_lea.smem [#allocation36], 2
    %9269 = sst [smem:[%s9268]] %s9267
    // Predicated region
    $region214: #{graph_cross_sample_debias_forward.1} parent=1 // pred_check
      _
    $region215: #{graph_cross_sample_debias_forward.1} parent=1 // pred_check_branch
      %9271 = sbr.rel (0) target = $region217
    $region216: #{graph_cross_sample_debias_forward.1} parent=1 // pred_region
      _
    $region217: #{graph_cross_sample_debias_forward.1} parent=1 // pred_fallthru
      _
    // Predicated region
    $region218: #{graph_cross_sample_debias_forward.1} parent=1 // pred_check
      _
    $region219: #{graph_cross_sample_debias_forward.1} parent=1 // pred_check_branch
      %9273 = sbr.rel (0) target = $region221
    $region220: #{graph_cross_sample_debias_forward.1} parent=1 // pred_region
      %s9275 = ssub.s32 16, 16
      %9276 = vsyncadd [#allocation5], %s9275
      %s9278 = sshll.u32 %s67, 4
      %s9279 = int_to_ptr.vmem [resolvable:$true] %s9278
      %9281 = dma.smem_to_vmem [#allocation36], 16, %s9279, [#allocation5]
    $region221: #{graph_cross_sample_debias_forward.1} parent=1 // pred_fallthru
      _
    // Predicated region
    $region222: #{graph_cross_sample_debias_forward.1} parent=1 // pred_check
      _
    $region223: #{graph_cross_sample_debias_forward.1} parent=1 // pred_check_branch
      %9283 = sbr.rel (0) target = $region225
    $region224: #{graph_cross_sample_debias_forward.1} parent=1 // pred_region
      _
    $region225: #{graph_cross_sample_debias_forward.1} parent=1 // pred_fallthru
      _
    // Predicated region
    $region226: #{graph_cross_sample_debias_forward.1} parent=1 // pred_check
      _
    $region227: #{graph_cross_sample_debias_forward.1} parent=1 // pred_check_branch
      %9285 = sbr.rel (0) target = $region229
    $region228: #{graph_cross_sample_debias_forward.1} parent=1 // pred_region
      %9286 = dma.done [#allocation5], 16
    $region229: #{graph_cross_sample_debias_forward.1} parent=1 // pred_fallthru
      _
    %9287 = sfence
    %9288 = vsyncpa [#allocation4], 1
    %9289 = vsyncpa [#allocation7], 1
    %9290 = vsyncpa [#allocation10], 1
    %9291 = vsyncpa [#allocation13], 1
    %9292 = vsyncpa [#allocation16], 1
    %9293 = vsyncpa [#allocation19], 1
    %9294 = vsyncpa [#allocation22], 1
    %9295 = vsyncpa [#allocation25], 1
    %9296 = vsyncpa [#allocation28], 1
    %9297 = vsyncpa [#allocation31], 1
    %9298 = vsyncpa [#allocation34], 1
    %9299 = vsyncpa [#allocation5], 1

</llo_original>
